<compile_context>
chip_gen: v5e
topology: v5e:2x2
jax: 0.10.0
libtpu: 0.0.40
codegen_flags: <defaults>
</compile_context>

<pallas_src>
import jax
import jax.numpy as jnp
from jax.experimental import pallas as pl
from jax.experimental.pallas import tpu as pltpu

EPS = 1e-5      # nn.BatchNorm2d default eps
LANES = 128     # TPU lane width


def _bn(acc, gamma, beta, inv_n):
    """Training-mode BatchNorm over axis 0 (single-pass stats)."""
    mean = jnp.sum(acc, axis=0, keepdims=True) * inv_n
    ex2 = jnp.sum(acc * acc, axis=0, keepdims=True) * inv_n
    var = jnp.maximum(ex2 - mean * mean, 0.0)
    return (acc - mean) * jax.lax.rsqrt(var + EPS) * gamma + beta


def residual_block_kernel(xpad_ref, w1_ref, w2_ref,
                          g1_ref, b1_ref, g2_ref, b2_ref,
                          o_ref, ypad_ref):
    B, Hp, Wp, C = xpad_ref.shape          # C is already lane-padded (x128)
    H, W = Hp - 2, Wp - 2
    M = B * H * W
    inv_n = 1.0 / M

    # ---- conv1: single im2col matmul on the MXU (bf16 operands, f32 acc) ----
    slabs1 = []
    for dy in range(3):
        for dx in range(3):
            s = xpad_ref[:, dy:dy + H, dx:dx + W, :]          # sliced ref load
            slabs1.append(s.reshape(M, C).astype(jnp.bfloat16))
    patches1 = jnp.concatenate(slabs1, axis=-1)               # (M, 9C) bf16
    acc1 = jnp.dot(patches1, w1_ref[...],
                   preferred_element_type=jnp.float32)        # (M, C) f32

    # ---- BN1 (batch stats) + ReLU ----
    y1 = jnp.maximum(_bn(acc1, g1_ref[...], b1_ref[...], inv_n), 0.0)

    # ---- stage y1 with a 1-pixel halo; zero only the halo ----
    zrow = jnp.zeros((B, 1, Wp, C), jnp.float32)
    zcol = jnp.zeros((B, Hp, 1, C), jnp.float32)
    ypad_ref[:, 0:1, :, :] = zrow
    ypad_ref[:, H + 1:H + 2, :, :] = zrow
    ypad_ref[:, :, 0:1, :] = zcol
    ypad_ref[:, :, W + 1:W + 2, :] = zcol
    ypad_ref[:, 1:H + 1, 1:W + 1, :] = y1.reshape(B, H, W, C)

    # ---- conv2: single im2col matmul ----
    slabs2 = []
    for dy in range(3):
        for dx in range(3):
            s = ypad_ref[:, dy:dy + H, dx:dx + W, :]
            slabs2.append(s.reshape(M, C).astype(jnp.bfloat16))
    patches2 = jnp.concatenate(slabs2, axis=-1)
    acc2 = jnp.dot(patches2, w2_ref[...],
                   preferred_element_type=jnp.float32)

    # ---- BN2 + identity residual (interior of padded input) + ReLU ----
    y2 = _bn(acc2, g2_ref[...], b2_ref[...], inv_n)
    res = xpad_ref[:, 1:H + 1, 1:W + 1, :].reshape(M, C)
    o_ref[...] = jnp.maximum(y2 + res, 0.0).reshape(B, H, W, C)


def residual_block(x_nchw, w1_hwio, w2_hwio, g1, b1, g2, b2):
    """x_nchw: (B, C, H, W) float32, matching the PyTorch input convention."""
    x = jnp.transpose(x_nchw, (0, 2, 3, 1)).astype(jnp.float32)   # NHWC
    B, H, W, C = x.shape
    Cf = w1_hwio.shape[-1]
    assert C == Cf, "downsample=None + stride=1 requires identity residual"
    Cp = ((C + LANES - 1) // LANES) * LANES

    # Pad channels to the lane width and add the 1-pixel spatial halo.
    xpad = jnp.pad(x, ((0, 0), (1, 1), (1, 1), (0, Cp - C)))

    def prep_w(w):
        wp = jnp.pad(w.astype(jnp.float32),
                     ((0, 0), (0, 0), (0, Cp - C), (0, Cp - C)))
        return wp.reshape(9 * Cp, Cp).astype(jnp.bfloat16)

    def prep_v(v):
        return jnp.pad(v.astype(jnp.float32), (0, Cp - C)).reshape(1, Cp)

    w1p, w2p = prep_w(w1_hwio), prep_w(w2_hwio)
    g1p, b1p, g2p, b2p = prep_v(g1), prep_v(b1), prep_v(g2), prep_v(b2)

    out = pl.pallas_call(
        residual_block_kernel,
        out_shape=jax.ShapeDtypeStruct((B, H, W, Cp), jnp.float32),
        grid=(1,),
        in_specs=[
            pl.BlockSpec((B, H + 2, W + 2, Cp), lambda i: (0, 0, 0, 0)),
            pl.BlockSpec((9 * Cp, Cp), lambda i: (0, 0)),
            pl.BlockSpec((9 * Cp, Cp), lambda i: (0, 0)),
            pl.BlockSpec((1, Cp), lambda i: (0, 0)),
            pl.BlockSpec((1, Cp), lambda i: (0, 0)),
            pl.BlockSpec((1, Cp), lambda i: (0, 0)),
            pl.BlockSpec((1, Cp), lambda i: (0, 0)),
        ],
        out_specs=pl.BlockSpec((B, H, W, Cp), lambda i: (0, 0, 0, 0)),
        scratch_shapes=[pltpu.VMEM((B, H + 2, W + 2, Cp), jnp.float32)],
        compiler_params=pltpu.CompilerParams(
            dimension_semantics=("arbitrary",)),
    )(xpad, w1p, w2p, g1p, b1p, g2p, b2p)

    # Drop the lane-padding channels and return to NCHW.
    return jnp.transpose(out[..., :C], (0, 3, 1, 2))


def reference_forward(x_nchw, w1_hwio, w2_hwio, g1, b1, g2, b2):
    """Pure-JAX reference mirroring the PyTorch forward (training-mode BN)."""
    x = jnp.transpose(x_nchw, (0, 2, 3, 1))
    dn = ('NHWC', 'HWIO', 'NHWC')

    def bn(c, g, b):
        m = jnp.mean(c, axis=(0, 1, 2))
        v = jnp.mean((c - m) ** 2, axis=(0, 1, 2))
        return (c - m) * jax.lax.rsqrt(v + EPS) * g + b

    c1 = jax.lax.conv_general_dilated(x, w1_hwio, (1, 1), 'SAME',
                                      dimension_numbers=dn,
                                      precision=jax.lax.Precision.HIGHEST)
    y1 = jnp.maximum(bn(c1, g1, b1), 0.0)
    c2 = jax.lax.conv_general_dilated(y1, w2_hwio, (1, 1), 'SAME',
                                      dimension_numbers=dn,
                                      precision=jax.lax.Precision.HIGHEST)
    y2 = bn(c2, g2, b2)
    out = jnp.maximum(y2 + x, 0.0)
    return jnp.transpose(out, (0, 3, 1, 2))


if __name__ == "__main__":
    key = jax.random.PRNGKey(0)
    B, C, H, W = 2, 4, 16, 16   # in_channels == n_filters == 4, stride=1
    k_x, k_w1, k_w2, k_g1, k_b1, k_g2, k_b2 = jax.random.split(key, 7)

    x = jax.random.normal(k_x, (B, C, H, W), jnp.float32)
    # conv weights in HWIO, Kaiming-like scale
    w1 = jax.random.normal(k_w1, (3, 3, C, C), jnp.float32) * (2.0 / (9 * C)) ** 0.5
    w2 = jax.random.normal(k_w2, (3, 3, C, C), jnp.float32) * (2.0 / (9 * C)) ** 0.5
    # BN affine params (deterministic, non-trivial)
    g1 = 1.0 + 0.1 * jax.random.normal(k_g1, (C,), jnp.float32)
    b1 = 0.1 * jax.random.normal(k_b1, (C,), jnp.float32)
    g2 = 1.0 + 0.1 * jax.random.normal(k_g2, (C,), jnp.float32)
    b2 = 0.1 * jax.random.normal(k_b2, (C,), jnp.float32)

    out = residual_block(x, w1, w2, g1, b1, g2, b2)
    out = jax.block_until_ready(out)

    ref = reference_forward(x, w1, w2, g1, b1, g2, b2)
    err = float(jnp.max(jnp.abs(out - ref)))
    assert err < 5e-2, f"kernel mismatch vs reference, max abs err = {err}"
    print("KERNEL_OK")
</pallas_src>

<mosaic_0001>
module attributes {stable_mosaic.version = 11 : i64} {
  func.func @residual_block_kernel(%arg0: i32, %arg1: memref<2x18x18x128xf32, #tpu.memory_space<vmem>>, %arg2: memref<1152x128xbf16, #tpu.memory_space<vmem>>, %arg3: memref<1152x128xbf16, #tpu.memory_space<vmem>>, %arg4: memref<1x128xf32, #tpu.memory_space<vmem>>, %arg5: memref<1x128xf32, #tpu.memory_space<vmem>>, %arg6: memref<1x128xf32, #tpu.memory_space<vmem>>, %arg7: memref<1x128xf32, #tpu.memory_space<vmem>>, %arg8: memref<2x16x16x128xf32, #tpu.memory_space<vmem>>, %arg9: memref<2x18x18x128xf32, #tpu.memory_space<vmem>>) attributes {dimension_semantics = [#tpu.dimension_semantics<arbitrary>], iteration_bounds = array<i64: 1>, scalar_prefetch = 0 : i64, scratch_operands = 1 : i64, tpu.core_type = #tpu.core_type<tc>, window_params = [{pipeline_mode = #tpu.pipeline_mode<synchronous>, transform_indices = @transform_0, window_bounds = array<i64: 2, 18, 18, 128>}, {pipeline_mode = #tpu.pipeline_mode<synchronous>, transform_indices = @transform_1, window_bounds = array<i64: 1152, 128>}, {pipeline_mode = #tpu.pipeline_mode<synchronous>, transform_indices = @transform_2, window_bounds = array<i64: 1152, 128>}, {pipeline_mode = #tpu.pipeline_mode<synchronous>, transform_indices = @transform_3, window_bounds = array<i64: 1, 128>}, {pipeline_mode = #tpu.pipeline_mode<synchronous>, transform_indices = @transform_4, window_bounds = array<i64: 1, 128>}, {pipeline_mode = #tpu.pipeline_mode<synchronous>, transform_indices = @transform_5, window_bounds = array<i64: 1, 128>}, {pipeline_mode = #tpu.pipeline_mode<synchronous>, transform_indices = @transform_6, window_bounds = array<i64: 1, 128>}, {pipeline_mode = #tpu.pipeline_mode<synchronous>, transform_indices = @transform_7, window_bounds = array<i64: 2, 16, 16, 128>}]} {
    %c0 = arith.constant 0 : index
    %c0_0 = arith.constant 0 : index
    %c0_1 = arith.constant 0 : index
    %c0_2 = arith.constant 0 : index
    %0 = vector.load %arg1[%c0, %c0_0, %c0_1, %c0_2] : memref<2x18x18x128xf32, #tpu.memory_space<vmem>>, vector<2x16x16x128xf32>
    %1 = vector.shape_cast %0 : vector<2x16x16x128xf32> to vector<512x128xf32>
    %2 = arith.truncf %1 : vector<512x128xf32> to vector<512x128xbf16>
    %c0_3 = arith.constant 0 : index
    %c0_4 = arith.constant 0 : index
    %c1 = arith.constant 1 : index
    %c0_5 = arith.constant 0 : index
    %3 = vector.load %arg1[%c0_3, %c0_4, %c1, %c0_5] : memref<2x18x18x128xf32, #tpu.memory_space<vmem>>, vector<2x16x16x128xf32>
    %4 = vector.shape_cast %3 : vector<2x16x16x128xf32> to vector<512x128xf32>
    %5 = arith.truncf %4 : vector<512x128xf32> to vector<512x128xbf16>
    %c0_6 = arith.constant 0 : index
    %c0_7 = arith.constant 0 : index
    %c2 = arith.constant 2 : index
    %c0_8 = arith.constant 0 : index
    %6 = vector.load %arg1[%c0_6, %c0_7, %c2, %c0_8] : memref<2x18x18x128xf32, #tpu.memory_space<vmem>>, vector<2x16x16x128xf32>
    %7 = vector.shape_cast %6 : vector<2x16x16x128xf32> to vector<512x128xf32>
    %8 = arith.truncf %7 : vector<512x128xf32> to vector<512x128xbf16>
    %c0_9 = arith.constant 0 : index
    %c1_10 = arith.constant 1 : index
    %c0_11 = arith.constant 0 : index
    %c0_12 = arith.constant 0 : index
    %9 = vector.load %arg1[%c0_9, %c1_10, %c0_11, %c0_12] : memref<2x18x18x128xf32, #tpu.memory_space<vmem>>, vector<2x16x16x128xf32>
    %10 = vector.shape_cast %9 : vector<2x16x16x128xf32> to vector<512x128xf32>
    %11 = arith.truncf %10 : vector<512x128xf32> to vector<512x128xbf16>
    %c0_13 = arith.constant 0 : index
    %c1_14 = arith.constant 1 : index
    %c1_15 = arith.constant 1 : index
    %c0_16 = arith.constant 0 : index
    %12 = vector.load %arg1[%c0_13, %c1_14, %c1_15, %c0_16] : memref<2x18x18x128xf32, #tpu.memory_space<vmem>>, vector<2x16x16x128xf32>
    %13 = vector.shape_cast %12 : vector<2x16x16x128xf32> to vector<512x128xf32>
    %14 = arith.truncf %13 : vector<512x128xf32> to vector<512x128xbf16>
    %c0_17 = arith.constant 0 : index
    %c1_18 = arith.constant 1 : index
    %c2_19 = arith.constant 2 : index
    %c0_20 = arith.constant 0 : index
    %15 = vector.load %arg1[%c0_17, %c1_18, %c2_19, %c0_20] : memref<2x18x18x128xf32, #tpu.memory_space<vmem>>, vector<2x16x16x128xf32>
    %16 = vector.shape_cast %15 : vector<2x16x16x128xf32> to vector<512x128xf32>
    %17 = arith.truncf %16 : vector<512x128xf32> to vector<512x128xbf16>
    %c0_21 = arith.constant 0 : index
    %c2_22 = arith.constant 2 : index
    %c0_23 = arith.constant 0 : index
    %c0_24 = arith.constant 0 : index
    %18 = vector.load %arg1[%c0_21, %c2_22, %c0_23, %c0_24] : memref<2x18x18x128xf32, #tpu.memory_space<vmem>>, vector<2x16x16x128xf32>
    %19 = vector.shape_cast %18 : vector<2x16x16x128xf32> to vector<512x128xf32>
    %20 = arith.truncf %19 : vector<512x128xf32> to vector<512x128xbf16>
    %c0_25 = arith.constant 0 : index
    %c2_26 = arith.constant 2 : index
    %c1_27 = arith.constant 1 : index
    %c0_28 = arith.constant 0 : index
    %21 = vector.load %arg1[%c0_25, %c2_26, %c1_27, %c0_28] : memref<2x18x18x128xf32, #tpu.memory_space<vmem>>, vector<2x16x16x128xf32>
    %22 = vector.shape_cast %21 : vector<2x16x16x128xf32> to vector<512x128xf32>
    %23 = arith.truncf %22 : vector<512x128xf32> to vector<512x128xbf16>
    %c0_29 = arith.constant 0 : index
    %c2_30 = arith.constant 2 : index
    %c2_31 = arith.constant 2 : index
    %c0_32 = arith.constant 0 : index
    %24 = vector.load %arg1[%c0_29, %c2_30, %c2_31, %c0_32] : memref<2x18x18x128xf32, #tpu.memory_space<vmem>>, vector<2x16x16x128xf32>
    %25 = vector.shape_cast %24 : vector<2x16x16x128xf32> to vector<512x128xf32>
    %26 = arith.truncf %25 : vector<512x128xf32> to vector<512x128xbf16>
    %27 = tpu.concatenate %2, %5, %8, %11, %14, %17, %20, %23, %26 in 1 : vector<512x128xbf16>, vector<512x128xbf16>, vector<512x128xbf16>, vector<512x128xbf16>, vector<512x128xbf16>, vector<512x128xbf16>, vector<512x128xbf16>, vector<512x128xbf16>, vector<512x128xbf16> -> vector<512x1152xbf16>
    %c0_33 = arith.constant 0 : index
    %c0_34 = arith.constant 0 : index
    %28 = vector.load %arg2[%c0_33, %c0_34] : memref<1152x128xbf16, #tpu.memory_space<vmem>>, vector<1152x128xbf16>
    %cst = arith.constant dense<0.000000e+00> : vector<512x128xf32>
    %29 = tpu.matmul %27, %28, %cst {dimension_numbers = #tpu.dot_dimension_numbers<[1], [0], [0], [1], [0, 0, 1, 1], [], []>} : vector<512x1152xbf16>, vector<1152x128xbf16>, vector<512x128xf32> -> vector<512x128xf32>
    %c0_35 = arith.constant 0 : index
    %c0_36 = arith.constant 0 : index
    %30 = vector.load %arg4[%c0_35, %c0_36] : memref<1x128xf32, #tpu.memory_space<vmem>>, vector<1x128xf32>
    %c0_37 = arith.constant 0 : index
    %c0_38 = arith.constant 0 : index
    %31 = vector.load %arg5[%c0_37, %c0_38] : memref<1x128xf32, #tpu.memory_space<vmem>>, vector<1x128xf32>
    %cst_39 = arith.constant dense<0.000000e+00> : vector<128xf32>
    %32 = vector.multi_reduction <add>, %29, %cst_39 [0] : vector<512x128xf32> to vector<128xf32>
    %33 = vector.shape_cast %32 : vector<128xf32> to vector<1x128xf32>
    %cst_40 = arith.constant 0.001953125 : f32
    %34 = vector.broadcast %cst_40 : f32 to vector<1x128xf32>
    %35 = arith.mulf %33, %34 : vector<1x128xf32>
    %36 = arith.mulf %29, %29 : vector<512x128xf32>
    %cst_41 = arith.constant dense<0.000000e+00> : vector<128xf32>
    %37 = vector.multi_reduction <add>, %36, %cst_41 [0] : vector<512x128xf32> to vector<128xf32>
    %38 = vector.shape_cast %37 : vector<128xf32> to vector<1x128xf32>
    %cst_42 = arith.constant 0.001953125 : f32
    %39 = vector.broadcast %cst_42 : f32 to vector<1x128xf32>
    %40 = arith.mulf %38, %39 : vector<1x128xf32>
    %41 = arith.mulf %35, %35 : vector<1x128xf32>
    %42 = arith.subf %40, %41 : vector<1x128xf32>
    %cst_43 = arith.constant 0.000000e+00 : f32
    %43 = vector.broadcast %cst_43 : f32 to vector<1x128xf32>
    %44 = arith.maximumf %42, %43 : vector<1x128xf32>
    %45 = vector.broadcast %35 : vector<1x128xf32> to vector<512x128xf32>
    %46 = arith.subf %29, %45 : vector<512x128xf32>
    %cst_44 = arith.constant 9.99999974E-6 : f32
    %47 = vector.broadcast %cst_44 : f32 to vector<1x128xf32>
    %48 = arith.addf %44, %47 : vector<1x128xf32>
    %49 = math.rsqrt %48 : vector<1x128xf32>
    %50 = vector.broadcast %49 : vector<1x128xf32> to vector<512x128xf32>
    %51 = arith.mulf %46, %50 : vector<512x128xf32>
    %52 = vector.broadcast %30 : vector<1x128xf32> to vector<512x128xf32>
    %53 = arith.mulf %51, %52 : vector<512x128xf32>
    %54 = vector.broadcast %31 : vector<1x128xf32> to vector<512x128xf32>
    %55 = arith.addf %53, %54 : vector<512x128xf32>
    %cst_45 = arith.constant 0.000000e+00 : f32
    %56 = vector.broadcast %cst_45 : f32 to vector<512x128xf32>
    %57 = arith.maximumf %55, %56 : vector<512x128xf32>
    %cst_46 = arith.constant 0.000000e+00 : f32
    %58 = vector.broadcast %cst_46 : f32 to vector<2x1x18x128xf32>
    %cst_47 = arith.constant 0.000000e+00 : f32
    %59 = vector.broadcast %cst_47 : f32 to vector<2x18x1x128xf32>
    %c0_48 = arith.constant 0 : index
    %c0_49 = arith.constant 0 : index
    %c0_50 = arith.constant 0 : index
    %c0_51 = arith.constant 0 : index
    %60 = vector.load %arg9[%c0_48, %c0_49, %c0_50, %c0_51] : memref<2x18x18x128xf32, #tpu.memory_space<vmem>>, vector<2x1x18x128xf32>
    tpu.vector_store %arg9[%c0_48, %c0_49, %c0_50, %c0_51], %58 {strides = array<i32>} : memref<2x18x18x128xf32, #tpu.memory_space<vmem>>, vector<2x1x18x128xf32>,
    %c0_52 = arith.constant 0 : index
    %c17 = arith.constant 17 : index
    %c0_53 = arith.constant 0 : index
    %c0_54 = arith.constant 0 : index
    %61 = vector.load %arg9[%c0_52, %c17, %c0_53, %c0_54] : memref<2x18x18x128xf32, #tpu.memory_space<vmem>>, vector<2x1x18x128xf32>
    tpu.vector_store %arg9[%c0_52, %c17, %c0_53, %c0_54], %58 {strides = array<i32>} : memref<2x18x18x128xf32, #tpu.memory_space<vmem>>, vector<2x1x18x128xf32>,
    %c0_55 = arith.constant 0 : index
    %c0_56 = arith.constant 0 : index
    %c0_57 = arith.constant 0 : index
    %c0_58 = arith.constant 0 : index
    %62 = vector.load %arg9[%c0_55, %c0_56, %c0_57, %c0_58] : memref<2x18x18x128xf32, #tpu.memory_space<vmem>>, vector<2x18x1x128xf32>
    tpu.vector_store %arg9[%c0_55, %c0_56, %c0_57, %c0_58], %59 {strides = array<i32>} : memref<2x18x18x128xf32, #tpu.memory_space<vmem>>, vector<2x18x1x128xf32>,
    %c0_59 = arith.constant 0 : index
    %c0_60 = arith.constant 0 : index
    %c17_61 = arith.constant 17 : index
    %c0_62 = arith.constant 0 : index
    %63 = vector.load %arg9[%c0_59, %c0_60, %c17_61, %c0_62] : memref<2x18x18x128xf32, #tpu.memory_space<vmem>>, vector<2x18x1x128xf32>
    tpu.vector_store %arg9[%c0_59, %c0_60, %c17_61, %c0_62], %59 {strides = array<i32>} : memref<2x18x18x128xf32, #tpu.memory_space<vmem>>, vector<2x18x1x128xf32>,
    %64 = vector.shape_cast %57 : vector<512x128xf32> to vector<2x16x16x128xf32>
    %c0_63 = arith.constant 0 : index
    %c1_64 = arith.constant 1 : index
    %c1_65 = arith.constant 1 : index
    %c0_66 = arith.constant 0 : index
    %65 = vector.load %arg9[%c0_63, %c1_64, %c1_65, %c0_66] : memref<2x18x18x128xf32, #tpu.memory_space<vmem>>, vector<2x16x16x128xf32>
    tpu.vector_store %arg9[%c0_63, %c1_64, %c1_65, %c0_66], %64 {strides = array<i32>} : memref<2x18x18x128xf32, #tpu.memory_space<vmem>>, vector<2x16x16x128xf32>,
    %c0_67 = arith.constant 0 : index
    %c0_68 = arith.constant 0 : index
    %c0_69 = arith.constant 0 : index
    %c0_70 = arith.constant 0 : index
    %66 = vector.load %arg9[%c0_67, %c0_68, %c0_69, %c0_70] : memref<2x18x18x128xf32, #tpu.memory_space<vmem>>, vector<2x16x16x128xf32>
    %67 = vector.shape_cast %66 : vector<2x16x16x128xf32> to vector<512x128xf32>
    %68 = arith.truncf %67 : vector<512x128xf32> to vector<512x128xbf16>
    %c0_71 = arith.constant 0 : index
    %c0_72 = arith.constant 0 : index
    %c1_73 = arith.constant 1 : index
    %c0_74 = arith.constant 0 : index
    %69 = vector.load %arg9[%c0_71, %c0_72, %c1_73, %c0_74] : memref<2x18x18x128xf32, #tpu.memory_space<vmem>>, vector<2x16x16x128xf32>
    %70 = vector.shape_cast %69 : vector<2x16x16x128xf32> to vector<512x128xf32>
    %71 = arith.truncf %70 : vector<512x128xf32> to vector<512x128xbf16>
    %c0_75 = arith.constant 0 : index
    %c0_76 = arith.constant 0 : index
    %c2_77 = arith.constant 2 : index
    %c0_78 = arith.constant 0 : index
    %72 = vector.load %arg9[%c0_75, %c0_76, %c2_77, %c0_78] : memref<2x18x18x128xf32, #tpu.memory_space<vmem>>, vector<2x16x16x128xf32>
    %73 = vector.shape_cast %72 : vector<2x16x16x128xf32> to vector<512x128xf32>
    %74 = arith.truncf %73 : vector<512x128xf32> to vector<512x128xbf16>
    %c0_79 = arith.constant 0 : index
    %c1_80 = arith.constant 1 : index
    %c0_81 = arith.constant 0 : index
    %c0_82 = arith.constant 0 : index
    %75 = vector.load %arg9[%c0_79, %c1_80, %c0_81, %c0_82] : memref<2x18x18x128xf32, #tpu.memory_space<vmem>>, vector<2x16x16x128xf32>
    %76 = vector.shape_cast %75 : vector<2x16x16x128xf32> to vector<512x128xf32>
    %77 = arith.truncf %76 : vector<512x128xf32> to vector<512x128xbf16>
    %c0_83 = arith.constant 0 : index
    %c1_84 = arith.constant 1 : index
    %c1_85 = arith.constant 1 : index
    %c0_86 = arith.constant 0 : index
    %78 = vector.load %arg9[%c0_83, %c1_84, %c1_85, %c0_86] : memref<2x18x18x128xf32, #tpu.memory_space<vmem>>, vector<2x16x16x128xf32>
    %79 = vector.shape_cast %78 : vector<2x16x16x128xf32> to vector<512x128xf32>
    %80 = arith.truncf %79 : vector<512x128xf32> to vector<512x128xbf16>
    %c0_87 = arith.constant 0 : index
    %c1_88 = arith.constant 1 : index
    %c2_89 = arith.constant 2 : index
    %c0_90 = arith.constant 0 : index
    %81 = vector.load %arg9[%c0_87, %c1_88, %c2_89, %c0_90] : memref<2x18x18x128xf32, #tpu.memory_space<vmem>>, vector<2x16x16x128xf32>
    %82 = vector.shape_cast %81 : vector<2x16x16x128xf32> to vector<512x128xf32>
    %83 = arith.truncf %82 : vector<512x128xf32> to vector<512x128xbf16>
    %c0_91 = arith.constant 0 : index
    %c2_92 = arith.constant 2 : index
    %c0_93 = arith.constant 0 : index
    %c0_94 = arith.constant 0 : index
    %84 = vector.load %arg9[%c0_91, %c2_92, %c0_93, %c0_94] : memref<2x18x18x128xf32, #tpu.memory_space<vmem>>, vector<2x16x16x128xf32>
    %85 = vector.shape_cast %84 : vector<2x16x16x128xf32> to vector<512x128xf32>
    %86 = arith.truncf %85 : vector<512x128xf32> to vector<512x128xbf16>
    %c0_95 = arith.constant 0 : index
    %c2_96 = arith.constant 2 : index
    %c1_97 = arith.constant 1 : index
    %c0_98 = arith.constant 0 : index
    %87 = vector.load %arg9[%c0_95, %c2_96, %c1_97, %c0_98] : memref<2x18x18x128xf32, #tpu.memory_space<vmem>>, vector<2x16x16x128xf32>
    %88 = vector.shape_cast %87 : vector<2x16x16x128xf32> to vector<512x128xf32>
    %89 = arith.truncf %88 : vector<512x128xf32> to vector<512x128xbf16>
    %c0_99 = arith.constant 0 : index
    %c2_100 = arith.constant 2 : index
    %c2_101 = arith.constant 2 : index
    %c0_102 = arith.constant 0 : index
    %90 = vector.load %arg9[%c0_99, %c2_100, %c2_101, %c0_102] : memref<2x18x18x128xf32, #tpu.memory_space<vmem>>, vector<2x16x16x128xf32>
    %91 = vector.shape_cast %90 : vector<2x16x16x128xf32> to vector<512x128xf32>
    %92 = arith.truncf %91 : vector<512x128xf32> to vector<512x128xbf16>
    %93 = tpu.concatenate %68, %71, %74, %77, %80, %83, %86, %89, %92 in 1 : vector<512x128xbf16>, vector<512x128xbf16>, vector<512x128xbf16>, vector<512x128xbf16>, vector<512x128xbf16>, vector<512x128xbf16>, vector<512x128xbf16>, vector<512x128xbf16>, vector<512x128xbf16> -> vector<512x1152xbf16>
    %c0_103 = arith.constant 0 : index
    %c0_104 = arith.constant 0 : index
    %94 = vector.load %arg3[%c0_103, %c0_104] : memref<1152x128xbf16, #tpu.memory_space<vmem>>, vector<1152x128xbf16>
    %cst_105 = arith.constant dense<0.000000e+00> : vector<512x128xf32>
    %95 = tpu.matmul %93, %94, %cst_105 {dimension_numbers = #tpu.dot_dimension_numbers<[1], [0], [0], [1], [0, 0, 1, 1], [], []>} : vector<512x1152xbf16>, vector<1152x128xbf16>, vector<512x128xf32> -> vector<512x128xf32>
    %c0_106 = arith.constant 0 : index
    %c0_107 = arith.constant 0 : index
    %96 = vector.load %arg6[%c0_106, %c0_107] : memref<1x128xf32, #tpu.memory_space<vmem>>, vector<1x128xf32>
    %c0_108 = arith.constant 0 : index
    %c0_109 = arith.constant 0 : index
    %97 = vector.load %arg7[%c0_108, %c0_109] : memref<1x128xf32, #tpu.memory_space<vmem>>, vector<1x128xf32>
    %cst_110 = arith.constant dense<0.000000e+00> : vector<128xf32>
    %98 = vector.multi_reduction <add>, %95, %cst_110 [0] : vector<512x128xf32> to vector<128xf32>
    %99 = vector.shape_cast %98 : vector<128xf32> to vector<1x128xf32>
    %cst_111 = arith.constant 0.001953125 : f32
    %100 = vector.broadcast %cst_111 : f32 to vector<1x128xf32>
    %101 = arith.mulf %99, %100 : vector<1x128xf32>
    %102 = arith.mulf %95, %95 : vector<512x128xf32>
    %cst_112 = arith.constant dense<0.000000e+00> : vector<128xf32>
    %103 = vector.multi_reduction <add>, %102, %cst_112 [0] : vector<512x128xf32> to vector<128xf32>
    %104 = vector.shape_cast %103 : vector<128xf32> to vector<1x128xf32>
    %cst_113 = arith.constant 0.001953125 : f32
    %105 = vector.broadcast %cst_113 : f32 to vector<1x128xf32>
    %106 = arith.mulf %104, %105 : vector<1x128xf32>
    %107 = arith.mulf %101, %101 : vector<1x128xf32>
    %108 = arith.subf %106, %107 : vector<1x128xf32>
    %cst_114 = arith.constant 0.000000e+00 : f32
    %109 = vector.broadcast %cst_114 : f32 to vector<1x128xf32>
    %110 = arith.maximumf %108, %109 : vector<1x128xf32>
    %111 = vector.broadcast %101 : vector<1x128xf32> to vector<512x128xf32>
    %112 = arith.subf %95, %111 : vector<512x128xf32>
    %cst_115 = arith.constant 9.99999974E-6 : f32
    %113 = vector.broadcast %cst_115 : f32 to vector<1x128xf32>
    %114 = arith.addf %110, %113 : vector<1x128xf32>
    %115 = math.rsqrt %114 : vector<1x128xf32>
    %116 = vector.broadcast %115 : vector<1x128xf32> to vector<512x128xf32>
    %117 = arith.mulf %112, %116 : vector<512x128xf32>
    %118 = vector.broadcast %96 : vector<1x128xf32> to vector<512x128xf32>
    %119 = arith.mulf %117, %118 : vector<512x128xf32>
    %120 = vector.broadcast %97 : vector<1x128xf32> to vector<512x128xf32>
    %121 = arith.addf %119, %120 : vector<512x128xf32>
    %c0_116 = arith.constant 0 : index
    %c1_117 = arith.constant 1 : index
    %c1_118 = arith.constant 1 : index
    %c0_119 = arith.constant 0 : index
    %122 = vector.load %arg1[%c0_116, %c1_117, %c1_118, %c0_119] : memref<2x18x18x128xf32, #tpu.memory_space<vmem>>, vector<2x16x16x128xf32>
    %123 = vector.shape_cast %122 : vector<2x16x16x128xf32> to vector<512x128xf32>
    %124 = arith.addf %121, %123 : vector<512x128xf32>
    %cst_120 = arith.constant 0.000000e+00 : f32
    %125 = vector.broadcast %cst_120 : f32 to vector<512x128xf32>
    %126 = arith.maximumf %124, %125 : vector<512x128xf32>
    %127 = vector.shape_cast %126 : vector<512x128xf32> to vector<2x16x16x128xf32>
    %c0_121 = arith.constant 0 : index
    %c0_122 = arith.constant 0 : index
    %c0_123 = arith.constant 0 : index
    %c0_124 = arith.constant 0 : index
    %128 = vector.load %arg8[%c0_121, %c0_122, %c0_123, %c0_124] : memref<2x16x16x128xf32, #tpu.memory_space<vmem>>, vector<2x16x16x128xf32>
    tpu.vector_store %arg8[%c0_121, %c0_122, %c0_123, %c0_124], %127 {strides = array<i32>} : memref<2x16x16x128xf32, #tpu.memory_space<vmem>>, vector<2x16x16x128xf32>,
    return
  }
  func.func @transform_0(%arg0: i32) -> (i32, i32, i32, i32) {
    %c0_i32 = arith.constant 0 : i32
    %c0_i32_0 = arith.constant 0 : i32
    %c0_i32_1 = arith.constant 0 : i32
    %c0_i32_2 = arith.constant 0 : i32
    %c0_i32_3 = arith.constant 0 : i32
    return %c0_i32, %c0_i32_0, %c0_i32_1, %c0_i32_2 : i32, i32, i32, i32
  }
  func.func @transform_1(%arg0: i32) -> (i32, i32) {
    %c0_i32 = arith.constant 0 : i32
    %c0_i32_0 = arith.constant 0 : i32
    %c0_i32_1 = arith.constant 0 : i32
    return %c0_i32, %c0_i32_0 : i32, i32
  }
  func.func @transform_2(%arg0: i32) -> (i32, i32) {
    %c0_i32 = arith.constant 0 : i32
    %c0_i32_0 = arith.constant 0 : i32
    %c0_i32_1 = arith.constant 0 : i32
    return %c0_i32, %c0_i32_0 : i32, i32
  }
  func.func @transform_3(%arg0: i32) -> (i32, i32) {
    %c0_i32 = arith.constant 0 : i32
    %c0_i32_0 = arith.constant 0 : i32
    %c0_i32_1 = arith.constant 0 : i32
    return %c0_i32, %c0_i32_0 : i32, i32
  }
  func.func @transform_4(%arg0: i32) -> (i32, i32) {
    %c0_i32 = arith.constant 0 : i32
    %c0_i32_0 = arith.constant 0 : i32
    %c0_i32_1 = arith.constant 0 : i32
    return %c0_i32, %c0_i32_0 : i32, i32
  }
  func.func @transform_5(%arg0: i32) -> (i32, i32) {
    %c0_i32 = arith.constant 0 : i32
    %c0_i32_0 = arith.constant 0 : i32
    %c0_i32_1 = arith.constant 0 : i32
    return %c0_i32, %c0_i32_0 : i32, i32
  }
  func.func @transform_6(%arg0: i32) -> (i32, i32) {
    %c0_i32 = arith.constant 0 : i32
    %c0_i32_0 = arith.constant 0 : i32
    %c0_i32_1 = arith.constant 0 : i32
    return %c0_i32, %c0_i32_0 : i32, i32
  }
  func.func @transform_7(%arg0: i32) -> (i32, i32, i32, i32) {
    %c0_i32 = arith.constant 0 : i32
    %c0_i32_0 = arith.constant 0 : i32
    %c0_i32_1 = arith.constant 0 : i32
    %c0_i32_2 = arith.constant 0 : i32
    %c0_i32_3 = arith.constant 0 : i32
    return %c0_i32, %c0_i32_0, %c0_i32_1, %c0_i32_2 : i32, i32, i32, i32
  }
}

</mosaic_0001>

<llo_original>
// kernel: tpu_custom_call.1
$region0: #{tpu_custom_call.1}
  #allocation0 [shape = 'u32[]', space=smem, size = 0x4, offset = 0x4, fixed_abs, tag = 'smem constant byte address 0x4 - core index']
  #allocation1 [shape = 'u32[72,128]{1,0:T(1,128)}', space=vmem, size = 0x9000, scoped, tag = 'internal scratch']
  #allocation2 [shape = 'f32[2,18,18,128]{3,2,1,0:T(8,128)}', space=vmem, size = 0x6c000, scoped, tag = 'scratch operand']
  %s0 = inlined_call_operand.vmem [shape: f32[2,18,18,128], index: 0, kind: input, shape index: {}]
  %s1 = inlined_call_operand.vmem [shape: bf16[1152,128], index: 1, kind: input, shape index: {}]
  %s2 = inlined_call_operand.vmem [shape: bf16[1152,128], index: 2, kind: input, shape index: {}]
  %s3 = inlined_call_operand.vmem [shape: f32[1,128], index: 3, kind: input, shape index: {}]
  %s4 = inlined_call_operand.vmem [shape: f32[1,128], index: 4, kind: input, shape index: {}]
  %s5 = inlined_call_operand.vmem [shape: f32[1,128], index: 5, kind: input, shape index: {}]
  %s6 = inlined_call_operand.vmem [shape: f32[1,128], index: 6, kind: input, shape index: {}]
  %s7 = inlined_call_operand.hbm [shape: f32[2,16,16,128], index: 7, kind: output, shape index: {}]
  %s8 = sld [smem:[#allocation0]]
  $region38: #{tpu_custom_call.1} parent=0
    _
  %s10 = ssub.s32 1, %s8
  %s11 = scalar_select 0, %s10, %s8
  $region1: #{tpu_custom_call.1} parent=0
    #allocation3 [shape = 'u8[262144]{0}', space=vmem, size = 0x40000, scoped, tag = 'output window, operand 0, single buffered']
    #allocation4 [shape = 's32[1]{0}', space=sflag, size = 0x4, scoped, tag = 'scoped memory for tpu_custom_call.1']
    %12 = vsyncpa [#allocation4], 0
    // Predicated region
    $region2: #{tpu_custom_call.1} parent=1 // pred_check
      _
    $region3: #{tpu_custom_call.1} parent=1 // pred_check_branch
      %14 = sbr.rel (0) target = $region5
    $region4: #{tpu_custom_call.1} parent=1 // pred_region
      _
    $region5: #{tpu_custom_call.1} parent=1 // pred_fallthru
      _
    // Predicated region
    $region6: #{tpu_custom_call.1} parent=1 // pred_check
      _
    $region7: #{tpu_custom_call.1} parent=1 // pred_check_branch
      %16 = sbr.rel (0) target = $region9
    $region8: #{tpu_custom_call.1} parent=1 // pred_region
      _
    $region9: #{tpu_custom_call.1} parent=1 // pred_fallthru
      _
    // Predicated region
    $region10: #{tpu_custom_call.1} parent=1 // pred_check
      _
    $region11: #{tpu_custom_call.1} parent=1 // pred_check_branch
      %18 = sbr.rel (0) target = $region13
    $region12: #{tpu_custom_call.1} parent=1 // pred_region
      _
    $region13: #{tpu_custom_call.1} parent=1 // pred_fallthru
      _
    // Predicated region
    $region14: #{tpu_custom_call.1} parent=1 // pred_check
      _
    $region15: #{tpu_custom_call.1} parent=1 // pred_check_branch
      %20 = sbr.rel (0) target = $region17
    $region16: #{tpu_custom_call.1} parent=1 // pred_region
      _
    $region17: #{tpu_custom_call.1} parent=1 // pred_fallthru
      _
    // Predicated region
    $region18: #{tpu_custom_call.1} parent=1 // pred_check
      _
    $region19: #{tpu_custom_call.1} parent=1 // pred_check_branch
      %22 = sbr.rel (0) target = $region21
    $region20: #{tpu_custom_call.1} parent=1 // pred_region
      _
    $region21: #{tpu_custom_call.1} parent=1 // pred_fallthru
      _
    // Predicated region
    $region22: #{tpu_custom_call.1} parent=1 // pred_check
      _
    $region23: #{tpu_custom_call.1} parent=1 // pred_check_branch
      %24 = sbr.rel (0) target = $region25
    $region24: #{tpu_custom_call.1} parent=1 // pred_region
      _
    $region25: #{tpu_custom_call.1} parent=1 // pred_fallthru
      _
    // Predicated region
    $region26: #{tpu_custom_call.1} parent=1 // pred_check
      _
    $region27: #{tpu_custom_call.1} parent=1 // pred_check_branch
      %26 = sbr.rel (0) target = $region29
    $region28: #{tpu_custom_call.1} parent=1 // pred_region
      _
    $region29: #{tpu_custom_call.1} parent=1 // pred_fallthru
      _
    %v27 = vld [vmem:[%s0] sm:$0xff]
    %v28 = vld [vmem:[%s0 + $0x8] sm:$0xff]
    %v29 = vld [vmem:[%s0 + $0x18] sm:$0xff]
    %v30 = vld [vmem:[%s0 + $0x20] sm:$0xff]
    %v31 = vld [vmem:[%s0 + $0x30] sm:$0xff]
    %v32 = vld [vmem:[%s0 + $0x38] sm:$0xff]
    %v33 = vld [vmem:[%s0 + $0x48] sm:$0xff]
    %v34 = vld [vmem:[%s0 + $0x50] sm:$0xff]
    %v35 = vld [vmem:[%s0 + $0x60] sm:$0xff]
    %v36 = vld [vmem:[%s0 + $0x68] sm:$0xff]
    %v37 = vld [vmem:[%s0 + $0x78] sm:$0xff]
    %v38 = vld [vmem:[%s0 + $0x80] sm:$0xff]
    %v39 = vld [vmem:[%s0 + $0x90] sm:$0xff]
    %v40 = vld [vmem:[%s0 + $0x98] sm:$0xff]
    %v41 = vld [vmem:[%s0 + $0xa8] sm:$0xff]
    %v42 = vld [vmem:[%s0 + $0xb0] sm:$0xff]
    %v43 = vld [vmem:[%s0 + $0xc0] sm:$0xff]
    %v44 = vld [vmem:[%s0 + $0xc8] sm:$0xff]
    %v45 = vld [vmem:[%s0 + $0xd8] sm:$0xff]
    %v46 = vld [vmem:[%s0 + $0xe0] sm:$0xff]
    %v47 = vld [vmem:[%s0 + $0xf0] sm:$0xff]
    %v48 = vld [vmem:[%s0 + $0xf8] sm:$0xff]
    %v49 = vld [vmem:[%s0 + $0x108] sm:$0xff]
    %v50 = vld [vmem:[%s0 + $0x110] sm:$0xff]
    %v51 = vld [vmem:[%s0 + $0x120] sm:$0xff]
    %v52 = vld [vmem:[%s0 + $0x128] sm:$0xff]
    %v53 = vld [vmem:[%s0 + $0x138] sm:$0xff]
    %v54 = vld [vmem:[%s0 + $0x140] sm:$0xff]
    %v55 = vld [vmem:[%s0 + $0x150] sm:$0xff]
    %v56 = vld [vmem:[%s0 + $0x158] sm:$0xff]
    %v57 = vld [vmem:[%s0 + $0x168] sm:$0xff]
    %v58 = vld [vmem:[%s0 + $0x170] sm:$0xff]
    %v59 = vld [vmem:[%s0 + $0x1b0] sm:$0xff]
    %v60 = vld [vmem:[%s0 + $0x1b8] sm:$0xff]
    %v61 = vld [vmem:[%s0 + $0x1c8] sm:$0xff]
    %v62 = vld [vmem:[%s0 + $0x1d0] sm:$0xff]
    %v63 = vld [vmem:[%s0 + $0x1e0] sm:$0xff]
    %v64 = vld [vmem:[%s0 + $0x1e8] sm:$0xff]
    %v65 = vld [vmem:[%s0 + $0x1f8] sm:$0xff]
    %v66 = vld [vmem:[%s0 + $0x200] sm:$0xff]
    %v67 = vld [vmem:[%s0 + $0x210] sm:$0xff]
    %v68 = vld [vmem:[%s0 + $0x218] sm:$0xff]
    %v69 = vld [vmem:[%s0 + $0x228] sm:$0xff]
    %v70 = vld [vmem:[%s0 + $0x230] sm:$0xff]
    %v71 = vld [vmem:[%s0 + $0x240] sm:$0xff]
    %v72 = vld [vmem:[%s0 + $0x248] sm:$0xff]
    %v73 = vld [vmem:[%s0 + $0x258] sm:$0xff]
    %v74 = vld [vmem:[%s0 + $0x260] sm:$0xff]
    %v75 = vld [vmem:[%s0 + $0x270] sm:$0xff]
    %v76 = vld [vmem:[%s0 + $0x278] sm:$0xff]
    %v77 = vld [vmem:[%s0 + $0x288] sm:$0xff]
    %v78 = vld [vmem:[%s0 + $0x290] sm:$0xff]
    %v79 = vld [vmem:[%s0 + $0x2a0] sm:$0xff]
    %v80 = vld [vmem:[%s0 + $0x2a8] sm:$0xff]
    %v81 = vld [vmem:[%s0 + $0x2b8] sm:$0xff]
    %v82 = vld [vmem:[%s0 + $0x2c0] sm:$0xff]
    %v83 = vld [vmem:[%s0 + $0x2d0] sm:$0xff]
    %v84 = vld [vmem:[%s0 + $0x2d8] sm:$0xff]
    %v85 = vld [vmem:[%s0 + $0x2e8] sm:$0xff]
    %v86 = vld [vmem:[%s0 + $0x2f0] sm:$0xff]
    %v87 = vld [vmem:[%s0 + $0x300] sm:$0xff]
    %v88 = vld [vmem:[%s0 + $0x308] sm:$0xff]
    %v89 = vld [vmem:[%s0 + $0x318] sm:$0xff]
    %v90 = vld [vmem:[%s0 + $0x320] sm:$0xff]
    %v91 = vpack.c.bf16 %v27, %v27
    %v92 = vpack.c.bf16 %v28, %v28
    %v93 = vpack.c.bf16 %v29, %v29
    %v94 = vpack.c.bf16 %v30, %v30
    %v95 = vpack.c.bf16 %v31, %v31
    %v96 = vpack.c.bf16 %v32, %v32
    %v97 = vpack.c.bf16 %v33, %v33
    %v98 = vpack.c.bf16 %v34, %v34
    %v99 = vpack.c.bf16 %v35, %v35
    %v100 = vpack.c.bf16 %v36, %v36
    %v101 = vpack.c.bf16 %v37, %v37
    %v102 = vpack.c.bf16 %v38, %v38
    %v103 = vpack.c.bf16 %v39, %v39
    %v104 = vpack.c.bf16 %v40, %v40
    %v105 = vpack.c.bf16 %v41, %v41
    %v106 = vpack.c.bf16 %v42, %v42
    %v107 = vpack.c.bf16 %v43, %v43
    %v108 = vpack.c.bf16 %v44, %v44
    %v109 = vpack.c.bf16 %v45, %v45
    %v110 = vpack.c.bf16 %v46, %v46
    %v111 = vpack.c.bf16 %v47, %v47
    %v112 = vpack.c.bf16 %v48, %v48
    %v113 = vpack.c.bf16 %v49, %v49
    %v114 = vpack.c.bf16 %v50, %v50
    %v115 = vpack.c.bf16 %v51, %v51
    %v116 = vpack.c.bf16 %v52, %v52
    %v117 = vpack.c.bf16 %v53, %v53
    %v118 = vpack.c.bf16 %v54, %v54
    %v119 = vpack.c.bf16 %v55, %v55
    %v120 = vpack.c.bf16 %v56, %v56
    %v121 = vpack.c.bf16 %v57, %v57
    %v122 = vpack.c.bf16 %v58, %v58
    %v123 = vpack.c.bf16 %v59, %v59
    %v124 = vpack.c.bf16 %v60, %v60
    %v125 = vpack.c.bf16 %v61, %v61
    %v126 = vpack.c.bf16 %v62, %v62
    %v127 = vpack.c.bf16 %v63, %v63
    %v128 = vpack.c.bf16 %v64, %v64
    %v129 = vpack.c.bf16 %v65, %v65
    %v130 = vpack.c.bf16 %v66, %v66
    %v131 = vpack.c.bf16 %v67, %v67
    %v132 = vpack.c.bf16 %v68, %v68
    %v133 = vpack.c.bf16 %v69, %v69
    %v134 = vpack.c.bf16 %v70, %v70
    %v135 = vpack.c.bf16 %v71, %v71
    %v136 = vpack.c.bf16 %v72, %v72
    %v137 = vpack.c.bf16 %v73, %v73
    %v138 = vpack.c.bf16 %v74, %v74
    %v139 = vpack.c.bf16 %v75, %v75
    %v140 = vpack.c.bf16 %v76, %v76
    %v141 = vpack.c.bf16 %v77, %v77
    %v142 = vpack.c.bf16 %v78, %v78
    %v143 = vpack.c.bf16 %v79, %v79
    %v144 = vpack.c.bf16 %v80, %v80
    %v145 = vpack.c.bf16 %v81, %v81
    %v146 = vpack.c.bf16 %v82, %v82
    %v147 = vpack.c.bf16 %v83, %v83
    %v148 = vpack.c.bf16 %v84, %v84
    %v149 = vpack.c.bf16 %v85, %v85
    %v150 = vpack.c.bf16 %v86, %v86
    %v151 = vpack.c.bf16 %v87, %v87
    %v152 = vpack.c.bf16 %v88, %v88
    %v153 = vpack.c.bf16 %v89, %v89
    %v154 = vpack.c.bf16 %v90, %v90
    %v155 = vld [vmem:[%s0 + $0x1] sm:$0xff]
    %v156 = vld [vmem:[%s0 + $0x9] sm:$0xff]
    %v157 = vld [vmem:[%s0 + $0x19] sm:$0xff]
    %v158 = vld [vmem:[%s0 + $0x21] sm:$0xff]
    %v159 = vld [vmem:[%s0 + $0x31] sm:$0xff]
    %v160 = vld [vmem:[%s0 + $0x39] sm:$0xff]
    %v161 = vld [vmem:[%s0 + $0x49] sm:$0xff]
    %v162 = vld [vmem:[%s0 + $0x51] sm:$0xff]
    %v163 = vld [vmem:[%s0 + $0x61] sm:$0xff]
    %v164 = vld [vmem:[%s0 + $0x69] sm:$0xff]
    %v165 = vld [vmem:[%s0 + $0x79] sm:$0xff]
    %v166 = vld [vmem:[%s0 + $0x81] sm:$0xff]
    %v167 = vld [vmem:[%s0 + $0x91] sm:$0xff]
    %v168 = vld [vmem:[%s0 + $0x99] sm:$0xff]
    %v169 = vld [vmem:[%s0 + $0xa9] sm:$0xff]
    %v170 = vld [vmem:[%s0 + $0xb1] sm:$0xff]
    %v171 = vld [vmem:[%s0 + $0xc1] sm:$0xff]
    %v172 = vld [vmem:[%s0 + $0xc9] sm:$0xff]
    %v173 = vld [vmem:[%s0 + $0xd9] sm:$0xff]
    %v174 = vld [vmem:[%s0 + $0xe1] sm:$0xff]
    %v175 = vld [vmem:[%s0 + $0xf1] sm:$0xff]
    %v176 = vld [vmem:[%s0 + $0xf9] sm:$0xff]
    %v177 = vld [vmem:[%s0 + $0x109] sm:$0xff]
    %v178 = vld [vmem:[%s0 + $0x111] sm:$0xff]
    %v179 = vld [vmem:[%s0 + $0x121] sm:$0xff]
    %v180 = vld [vmem:[%s0 + $0x129] sm:$0xff]
    %v181 = vld [vmem:[%s0 + $0x139] sm:$0xff]
    %v182 = vld [vmem:[%s0 + $0x141] sm:$0xff]
    %v183 = vld [vmem:[%s0 + $0x151] sm:$0xff]
    %v184 = vld [vmem:[%s0 + $0x159] sm:$0xff]
    %v185 = vld [vmem:[%s0 + $0x169] sm:$0xff]
    %v186 = vld [vmem:[%s0 + $0x171] sm:$0xff]
    %v187 = vld [vmem:[%s0 + $0x1b1] sm:$0xff]
    %v188 = vld [vmem:[%s0 + $0x1b9] sm:$0xff]
    %v189 = vld [vmem:[%s0 + $0x1c9] sm:$0xff]
    %v190 = vld [vmem:[%s0 + $0x1d1] sm:$0xff]
    %v191 = vld [vmem:[%s0 + $0x1e1] sm:$0xff]
    %v192 = vld [vmem:[%s0 + $0x1e9] sm:$0xff]
    %v193 = vld [vmem:[%s0 + $0x1f9] sm:$0xff]
    %v194 = vld [vmem:[%s0 + $0x201] sm:$0xff]
    %v195 = vld [vmem:[%s0 + $0x211] sm:$0xff]
    %v196 = vld [vmem:[%s0 + $0x219] sm:$0xff]
    %v197 = vld [vmem:[%s0 + $0x229] sm:$0xff]
    %v198 = vld [vmem:[%s0 + $0x231] sm:$0xff]
    %v199 = vld [vmem:[%s0 + $0x241] sm:$0xff]
    %v200 = vld [vmem:[%s0 + $0x249] sm:$0xff]
    %v201 = vld [vmem:[%s0 + $0x259] sm:$0xff]
    %v202 = vld [vmem:[%s0 + $0x261] sm:$0xff]
    %v203 = vld [vmem:[%s0 + $0x271] sm:$0xff]
    %v204 = vld [vmem:[%s0 + $0x279] sm:$0xff]
    %v205 = vld [vmem:[%s0 + $0x289] sm:$0xff]
    %v206 = vld [vmem:[%s0 + $0x291] sm:$0xff]
    %v207 = vld [vmem:[%s0 + $0x2a1] sm:$0xff]
    %v208 = vld [vmem:[%s0 + $0x2a9] sm:$0xff]
    %v209 = vld [vmem:[%s0 + $0x2b9] sm:$0xff]
    %v210 = vld [vmem:[%s0 + $0x2c1] sm:$0xff]
    %v211 = vld [vmem:[%s0 + $0x2d1] sm:$0xff]
    %v212 = vld [vmem:[%s0 + $0x2d9] sm:$0xff]
    %v213 = vld [vmem:[%s0 + $0x2e9] sm:$0xff]
    %v214 = vld [vmem:[%s0 + $0x2f1] sm:$0xff]
    %v215 = vld [vmem:[%s0 + $0x301] sm:$0xff]
    %v216 = vld [vmem:[%s0 + $0x309] sm:$0xff]
    %v217 = vld [vmem:[%s0 + $0x319] sm:$0xff]
    %v218 = vld [vmem:[%s0 + $0x321] sm:$0xff]
    %v219 = vpack.c.bf16 %v155, %v155
    %v220 = vpack.c.bf16 %v156, %v156
    %v221 = vpack.c.bf16 %v157, %v157
    %v222 = vpack.c.bf16 %v158, %v158
    %v223 = vpack.c.bf16 %v159, %v159
    %v224 = vpack.c.bf16 %v160, %v160
    %v225 = vpack.c.bf16 %v161, %v161
    %v226 = vpack.c.bf16 %v162, %v162
    %v227 = vpack.c.bf16 %v163, %v163
    %v228 = vpack.c.bf16 %v164, %v164
    %v229 = vpack.c.bf16 %v165, %v165
    %v230 = vpack.c.bf16 %v166, %v166
    %v231 = vpack.c.bf16 %v167, %v167
    %v232 = vpack.c.bf16 %v168, %v168
    %v233 = vpack.c.bf16 %v169, %v169
    %v234 = vpack.c.bf16 %v170, %v170
    %v235 = vpack.c.bf16 %v171, %v171
    %v236 = vpack.c.bf16 %v172, %v172
    %v237 = vpack.c.bf16 %v173, %v173
    %v238 = vpack.c.bf16 %v174, %v174
    %v239 = vpack.c.bf16 %v175, %v175
    %v240 = vpack.c.bf16 %v176, %v176
    %v241 = vpack.c.bf16 %v177, %v177
    %v242 = vpack.c.bf16 %v178, %v178
    %v243 = vpack.c.bf16 %v179, %v179
    %v244 = vpack.c.bf16 %v180, %v180
    %v245 = vpack.c.bf16 %v181, %v181
    %v246 = vpack.c.bf16 %v182, %v182
    %v247 = vpack.c.bf16 %v183, %v183
    %v248 = vpack.c.bf16 %v184, %v184
    %v249 = vpack.c.bf16 %v185, %v185
    %v250 = vpack.c.bf16 %v186, %v186
    %v251 = vpack.c.bf16 %v187, %v187
    %v252 = vpack.c.bf16 %v188, %v188
    %v253 = vpack.c.bf16 %v189, %v189
    %v254 = vpack.c.bf16 %v190, %v190
    %v255 = vpack.c.bf16 %v191, %v191
    %v256 = vpack.c.bf16 %v192, %v192
    %v257 = vpack.c.bf16 %v193, %v193
    %v258 = vpack.c.bf16 %v194, %v194
    %v259 = vpack.c.bf16 %v195, %v195
    %v260 = vpack.c.bf16 %v196, %v196
    %v261 = vpack.c.bf16 %v197, %v197
    %v262 = vpack.c.bf16 %v198, %v198
    %v263 = vpack.c.bf16 %v199, %v199
    %v264 = vpack.c.bf16 %v200, %v200
    %v265 = vpack.c.bf16 %v201, %v201
    %v266 = vpack.c.bf16 %v202, %v202
    %v267 = vpack.c.bf16 %v203, %v203
    %v268 = vpack.c.bf16 %v204, %v204
    %v269 = vpack.c.bf16 %v205, %v205
    %v270 = vpack.c.bf16 %v206, %v206
    %v271 = vpack.c.bf16 %v207, %v207
    %v272 = vpack.c.bf16 %v208, %v208
    %v273 = vpack.c.bf16 %v209, %v209
    %v274 = vpack.c.bf16 %v210, %v210
    %v275 = vpack.c.bf16 %v211, %v211
    %v276 = vpack.c.bf16 %v212, %v212
    %v277 = vpack.c.bf16 %v213, %v213
    %v278 = vpack.c.bf16 %v214, %v214
    %v279 = vpack.c.bf16 %v215, %v215
    %v280 = vpack.c.bf16 %v216, %v216
    %v281 = vpack.c.bf16 %v217, %v217
    %v282 = vpack.c.bf16 %v218, %v218
    %v283 = vld [vmem:[%s0 + $0x2] sm:$0xff]
    %v284 = vld [vmem:[%s0 + $0xa] sm:$0xff]
    %v285 = vld [vmem:[%s0 + $0x1a] sm:$0xff]
    %v286 = vld [vmem:[%s0 + $0x22] sm:$0xff]
    %v287 = vld [vmem:[%s0 + $0x32] sm:$0xff]
    %v288 = vld [vmem:[%s0 + $0x3a] sm:$0xff]
    %v289 = vld [vmem:[%s0 + $0x4a] sm:$0xff]
    %v290 = vld [vmem:[%s0 + $0x52] sm:$0xff]
    %v291 = vld [vmem:[%s0 + $0x62] sm:$0xff]
    %v292 = vld [vmem:[%s0 + $0x6a] sm:$0xff]
    %v293 = vld [vmem:[%s0 + $0x7a] sm:$0xff]
    %v294 = vld [vmem:[%s0 + $0x82] sm:$0xff]
    %v295 = vld [vmem:[%s0 + $0x92] sm:$0xff]
    %v296 = vld [vmem:[%s0 + $0x9a] sm:$0xff]
    %v297 = vld [vmem:[%s0 + $0xaa] sm:$0xff]
    %v298 = vld [vmem:[%s0 + $0xb2] sm:$0xff]
    %v299 = vld [vmem:[%s0 + $0xc2] sm:$0xff]
    %v300 = vld [vmem:[%s0 + $0xca] sm:$0xff]
    %v301 = vld [vmem:[%s0 + $0xda] sm:$0xff]
    %v302 = vld [vmem:[%s0 + $0xe2] sm:$0xff]
    %v303 = vld [vmem:[%s0 + $0xf2] sm:$0xff]
    %v304 = vld [vmem:[%s0 + $0xfa] sm:$0xff]
    %v305 = vld [vmem:[%s0 + $0x10a] sm:$0xff]
    %v306 = vld [vmem:[%s0 + $0x112] sm:$0xff]
    %v307 = vld [vmem:[%s0 + $0x122] sm:$0xff]
    %v308 = vld [vmem:[%s0 + $0x12a] sm:$0xff]
    %v309 = vld [vmem:[%s0 + $0x13a] sm:$0xff]
    %v310 = vld [vmem:[%s0 + $0x142] sm:$0xff]
    %v311 = vld [vmem:[%s0 + $0x152] sm:$0xff]
    %v312 = vld [vmem:[%s0 + $0x15a] sm:$0xff]
    %v313 = vld [vmem:[%s0 + $0x16a] sm:$0xff]
    %v314 = vld [vmem:[%s0 + $0x172] sm:$0xff]
    %v315 = vld [vmem:[%s0 + $0x1b2] sm:$0xff]
    %v316 = vld [vmem:[%s0 + $0x1ba] sm:$0xff]
    %v317 = vld [vmem:[%s0 + $0x1ca] sm:$0xff]
    %v318 = vld [vmem:[%s0 + $0x1d2] sm:$0xff]
    %v319 = vld [vmem:[%s0 + $0x1e2] sm:$0xff]
    %v320 = vld [vmem:[%s0 + $0x1ea] sm:$0xff]
    %v321 = vld [vmem:[%s0 + $0x1fa] sm:$0xff]
    %v322 = vld [vmem:[%s0 + $0x202] sm:$0xff]
    %v323 = vld [vmem:[%s0 + $0x212] sm:$0xff]
    %v324 = vld [vmem:[%s0 + $0x21a] sm:$0xff]
    %v325 = vld [vmem:[%s0 + $0x22a] sm:$0xff]
    %v326 = vld [vmem:[%s0 + $0x232] sm:$0xff]
    %v327 = vld [vmem:[%s0 + $0x242] sm:$0xff]
    %v328 = vld [vmem:[%s0 + $0x24a] sm:$0xff]
    %v329 = vld [vmem:[%s0 + $0x25a] sm:$0xff]
    %v330 = vld [vmem:[%s0 + $0x262] sm:$0xff]
    %v331 = vld [vmem:[%s0 + $0x272] sm:$0xff]
    %v332 = vld [vmem:[%s0 + $0x27a] sm:$0xff]
    %v333 = vld [vmem:[%s0 + $0x28a] sm:$0xff]
    %v334 = vld [vmem:[%s0 + $0x292] sm:$0xff]
    %v335 = vld [vmem:[%s0 + $0x2a2] sm:$0xff]
    %v336 = vld [vmem:[%s0 + $0x2aa] sm:$0xff]
    %v337 = vld [vmem:[%s0 + $0x2ba] sm:$0xff]
    %v338 = vld [vmem:[%s0 + $0x2c2] sm:$0xff]
    %v339 = vld [vmem:[%s0 + $0x2d2] sm:$0xff]
    %v340 = vld [vmem:[%s0 + $0x2da] sm:$0xff]
    %v341 = vld [vmem:[%s0 + $0x2ea] sm:$0xff]
    %v342 = vld [vmem:[%s0 + $0x2f2] sm:$0xff]
    %v343 = vld [vmem:[%s0 + $0x302] sm:$0xff]
    %v344 = vld [vmem:[%s0 + $0x30a] sm:$0xff]
    %v345 = vld [vmem:[%s0 + $0x31a] sm:$0xff]
    %v346 = vld [vmem:[%s0 + $0x322] sm:$0xff]
    %v347 = vpack.c.bf16 %v283, %v283
    %v348 = vpack.c.bf16 %v284, %v284
    %v349 = vpack.c.bf16 %v285, %v285
    %v350 = vpack.c.bf16 %v286, %v286
    %v351 = vpack.c.bf16 %v287, %v287
    %v352 = vpack.c.bf16 %v288, %v288
    %v353 = vpack.c.bf16 %v289, %v289
    %v354 = vpack.c.bf16 %v290, %v290
    %v355 = vpack.c.bf16 %v291, %v291
    %v356 = vpack.c.bf16 %v292, %v292
    %v357 = vpack.c.bf16 %v293, %v293
    %v358 = vpack.c.bf16 %v294, %v294
    %v359 = vpack.c.bf16 %v295, %v295
    %v360 = vpack.c.bf16 %v296, %v296
    %v361 = vpack.c.bf16 %v297, %v297
    %v362 = vpack.c.bf16 %v298, %v298
    %v363 = vpack.c.bf16 %v299, %v299
    %v364 = vpack.c.bf16 %v300, %v300
    %v365 = vpack.c.bf16 %v301, %v301
    %v366 = vpack.c.bf16 %v302, %v302
    %v367 = vpack.c.bf16 %v303, %v303
    %v368 = vpack.c.bf16 %v304, %v304
    %v369 = vpack.c.bf16 %v305, %v305
    %v370 = vpack.c.bf16 %v306, %v306
    %v371 = vpack.c.bf16 %v307, %v307
    %v372 = vpack.c.bf16 %v308, %v308
    %v373 = vpack.c.bf16 %v309, %v309
    %v374 = vpack.c.bf16 %v310, %v310
    %v375 = vpack.c.bf16 %v311, %v311
    %v376 = vpack.c.bf16 %v312, %v312
    %v377 = vpack.c.bf16 %v313, %v313
    %v378 = vpack.c.bf16 %v314, %v314
    %v379 = vpack.c.bf16 %v315, %v315
    %v380 = vpack.c.bf16 %v316, %v316
    %v381 = vpack.c.bf16 %v317, %v317
    %v382 = vpack.c.bf16 %v318, %v318
    %v383 = vpack.c.bf16 %v319, %v319
    %v384 = vpack.c.bf16 %v320, %v320
    %v385 = vpack.c.bf16 %v321, %v321
    %v386 = vpack.c.bf16 %v322, %v322
    %v387 = vpack.c.bf16 %v323, %v323
    %v388 = vpack.c.bf16 %v324, %v324
    %v389 = vpack.c.bf16 %v325, %v325
    %v390 = vpack.c.bf16 %v326, %v326
    %v391 = vpack.c.bf16 %v327, %v327
    %v392 = vpack.c.bf16 %v328, %v328
    %v393 = vpack.c.bf16 %v329, %v329
    %v394 = vpack.c.bf16 %v330, %v330
    %v395 = vpack.c.bf16 %v331, %v331
    %v396 = vpack.c.bf16 %v332, %v332
    %v397 = vpack.c.bf16 %v333, %v333
    %v398 = vpack.c.bf16 %v334, %v334
    %v399 = vpack.c.bf16 %v335, %v335
    %v400 = vpack.c.bf16 %v336, %v336
    %v401 = vpack.c.bf16 %v337, %v337
    %v402 = vpack.c.bf16 %v338, %v338
    %v403 = vpack.c.bf16 %v339, %v339
    %v404 = vpack.c.bf16 %v340, %v340
    %v405 = vpack.c.bf16 %v341, %v341
    %v406 = vpack.c.bf16 %v342, %v342
    %v407 = vpack.c.bf16 %v343, %v343
    %v408 = vpack.c.bf16 %v344, %v344
    %v409 = vpack.c.bf16 %v345, %v345
    %v410 = vpack.c.bf16 %v346, %v346
    %s411 = scalar_lea.vmem %s0, 24
    %v412 = vld [vmem:[%s411] sm:$0xff]
    %v413 = vld [vmem:[%s411 + $0x8] sm:$0xff]
    %v414 = vld [vmem:[%s411 + $0x18] sm:$0xff]
    %v415 = vld [vmem:[%s411 + $0x20] sm:$0xff]
    %v416 = vld [vmem:[%s411 + $0x30] sm:$0xff]
    %v417 = vld [vmem:[%s411 + $0x38] sm:$0xff]
    %v418 = vld [vmem:[%s411 + $0x48] sm:$0xff]
    %v419 = vld [vmem:[%s411 + $0x50] sm:$0xff]
    %v420 = vld [vmem:[%s411 + $0x60] sm:$0xff]
    %v421 = vld [vmem:[%s411 + $0x68] sm:$0xff]
    %v422 = vld [vmem:[%s411 + $0x78] sm:$0xff]
    %v423 = vld [vmem:[%s411 + $0x80] sm:$0xff]
    %v424 = vld [vmem:[%s411 + $0x90] sm:$0xff]
    %v425 = vld [vmem:[%s411 + $0x98] sm:$0xff]
    %v426 = vld [vmem:[%s411 + $0xa8] sm:$0xff]
    %v427 = vld [vmem:[%s411 + $0xb0] sm:$0xff]
    %v428 = vld [vmem:[%s411 + $0xc0] sm:$0xff]
    %v429 = vld [vmem:[%s411 + $0xc8] sm:$0xff]
    %v430 = vld [vmem:[%s411 + $0xd8] sm:$0xff]
    %v431 = vld [vmem:[%s411 + $0xe0] sm:$0xff]
    %v432 = vld [vmem:[%s411 + $0xf0] sm:$0xff]
    %v433 = vld [vmem:[%s411 + $0xf8] sm:$0xff]
    %v434 = vld [vmem:[%s411 + $0x108] sm:$0xff]
    %v435 = vld [vmem:[%s411 + $0x110] sm:$0xff]
    %v436 = vld [vmem:[%s411 + $0x120] sm:$0xff]
    %v437 = vld [vmem:[%s411 + $0x128] sm:$0xff]
    %v438 = vld [vmem:[%s411 + $0x138] sm:$0xff]
    %v439 = vld [vmem:[%s411 + $0x140] sm:$0xff]
    %v440 = vld [vmem:[%s411 + $0x150] sm:$0xff]
    %v441 = vld [vmem:[%s411 + $0x158] sm:$0xff]
    %v442 = vld [vmem:[%s411 + $0x168] sm:$0xff]
    %v443 = vld [vmem:[%s411 + $0x170] sm:$0xff]
    %v444 = vld [vmem:[%s411 + $0x1b0] sm:$0xff]
    %v445 = vld [vmem:[%s411 + $0x1b8] sm:$0xff]
    %v446 = vld [vmem:[%s411 + $0x1c8] sm:$0xff]
    %v447 = vld [vmem:[%s411 + $0x1d0] sm:$0xff]
    %v448 = vld [vmem:[%s411 + $0x1e0] sm:$0xff]
    %v449 = vld [vmem:[%s411 + $0x1e8] sm:$0xff]
    %v450 = vld [vmem:[%s411 + $0x1f8] sm:$0xff]
    %v451 = vld [vmem:[%s411 + $0x200] sm:$0xff]
    %v452 = vld [vmem:[%s411 + $0x210] sm:$0xff]
    %v453 = vld [vmem:[%s411 + $0x218] sm:$0xff]
    %v454 = vld [vmem:[%s411 + $0x228] sm:$0xff]
    %v455 = vld [vmem:[%s411 + $0x230] sm:$0xff]
    %v456 = vld [vmem:[%s411 + $0x240] sm:$0xff]
    %v457 = vld [vmem:[%s411 + $0x248] sm:$0xff]
    %v458 = vld [vmem:[%s411 + $0x258] sm:$0xff]
    %v459 = vld [vmem:[%s411 + $0x260] sm:$0xff]
    %v460 = vld [vmem:[%s411 + $0x270] sm:$0xff]
    %v461 = vld [vmem:[%s411 + $0x278] sm:$0xff]
    %v462 = vld [vmem:[%s411 + $0x288] sm:$0xff]
    %v463 = vld [vmem:[%s411 + $0x290] sm:$0xff]
    %v464 = vld [vmem:[%s411 + $0x2a0] sm:$0xff]
    %v465 = vld [vmem:[%s411 + $0x2a8] sm:$0xff]
    %v466 = vld [vmem:[%s411 + $0x2b8] sm:$0xff]
    %v467 = vld [vmem:[%s411 + $0x2c0] sm:$0xff]
    %v468 = vld [vmem:[%s411 + $0x2d0] sm:$0xff]
    %v469 = vld [vmem:[%s411 + $0x2d8] sm:$0xff]
    %v470 = vld [vmem:[%s411 + $0x2e8] sm:$0xff]
    %v471 = vld [vmem:[%s411 + $0x2f0] sm:$0xff]
    %v472 = vld [vmem:[%s411 + $0x300] sm:$0xff]
    %v473 = vld [vmem:[%s411 + $0x308] sm:$0xff]
    %v474 = vld [vmem:[%s411 + $0x318] sm:$0xff]
    %v475 = vld [vmem:[%s411 + $0x320] sm:$0xff]
    %v476 = vpack.c.bf16 %v412, %v412
    %v477 = vpack.c.bf16 %v413, %v413
    %v478 = vpack.c.bf16 %v414, %v414
    %v479 = vpack.c.bf16 %v415, %v415
    %v480 = vpack.c.bf16 %v416, %v416
    %v481 = vpack.c.bf16 %v417, %v417
    %v482 = vpack.c.bf16 %v418, %v418
    %v483 = vpack.c.bf16 %v419, %v419
    %v484 = vpack.c.bf16 %v420, %v420
    %v485 = vpack.c.bf16 %v421, %v421
    %v486 = vpack.c.bf16 %v422, %v422
    %v487 = vpack.c.bf16 %v423, %v423
    %v488 = vpack.c.bf16 %v424, %v424
    %v489 = vpack.c.bf16 %v425, %v425
    %v490 = vpack.c.bf16 %v426, %v426
    %v491 = vpack.c.bf16 %v427, %v427
    %v492 = vpack.c.bf16 %v428, %v428
    %v493 = vpack.c.bf16 %v429, %v429
    %v494 = vpack.c.bf16 %v430, %v430
    %v495 = vpack.c.bf16 %v431, %v431
    %v496 = vpack.c.bf16 %v432, %v432
    %v497 = vpack.c.bf16 %v433, %v433
    %v498 = vpack.c.bf16 %v434, %v434
    %v499 = vpack.c.bf16 %v435, %v435
    %v500 = vpack.c.bf16 %v436, %v436
    %v501 = vpack.c.bf16 %v437, %v437
    %v502 = vpack.c.bf16 %v438, %v438
    %v503 = vpack.c.bf16 %v439, %v439
    %v504 = vpack.c.bf16 %v440, %v440
    %v505 = vpack.c.bf16 %v441, %v441
    %v506 = vpack.c.bf16 %v442, %v442
    %v507 = vpack.c.bf16 %v443, %v443
    %v508 = vpack.c.bf16 %v444, %v444
    %v509 = vpack.c.bf16 %v445, %v445
    %v510 = vpack.c.bf16 %v446, %v446
    %v511 = vpack.c.bf16 %v447, %v447
    %v512 = vpack.c.bf16 %v448, %v448
    %v513 = vpack.c.bf16 %v449, %v449
    %v514 = vpack.c.bf16 %v450, %v450
    %v515 = vpack.c.bf16 %v451, %v451
    %v516 = vpack.c.bf16 %v452, %v452
    %v517 = vpack.c.bf16 %v453, %v453
    %v518 = vpack.c.bf16 %v454, %v454
    %v519 = vpack.c.bf16 %v455, %v455
    %v520 = vpack.c.bf16 %v456, %v456
    %v521 = vpack.c.bf16 %v457, %v457
    %v522 = vpack.c.bf16 %v458, %v458
    %v523 = vpack.c.bf16 %v459, %v459
    %v524 = vpack.c.bf16 %v460, %v460
    %v525 = vpack.c.bf16 %v461, %v461
    %v526 = vpack.c.bf16 %v462, %v462
    %v527 = vpack.c.bf16 %v463, %v463
    %v528 = vpack.c.bf16 %v464, %v464
    %v529 = vpack.c.bf16 %v465, %v465
    %v530 = vpack.c.bf16 %v466, %v466
    %v531 = vpack.c.bf16 %v467, %v467
    %v532 = vpack.c.bf16 %v468, %v468
    %v533 = vpack.c.bf16 %v469, %v469
    %v534 = vpack.c.bf16 %v470, %v470
    %v535 = vpack.c.bf16 %v471, %v471
    %v536 = vpack.c.bf16 %v472, %v472
    %v537 = vpack.c.bf16 %v473, %v473
    %v538 = vpack.c.bf16 %v474, %v474
    %v539 = vpack.c.bf16 %v475, %v475
    %v540 = vld [vmem:[%s411 + $0x1] sm:$0xff]
    %v541 = vld [vmem:[%s411 + $0x9] sm:$0xff]
    %v542 = vld [vmem:[%s411 + $0x19] sm:$0xff]
    %v543 = vld [vmem:[%s411 + $0x21] sm:$0xff]
    %v544 = vld [vmem:[%s411 + $0x31] sm:$0xff]
    %v545 = vld [vmem:[%s411 + $0x39] sm:$0xff]
    %v546 = vld [vmem:[%s411 + $0x49] sm:$0xff]
    %v547 = vld [vmem:[%s411 + $0x51] sm:$0xff]
    %v548 = vld [vmem:[%s411 + $0x61] sm:$0xff]
    %v549 = vld [vmem:[%s411 + $0x69] sm:$0xff]
    %v550 = vld [vmem:[%s411 + $0x79] sm:$0xff]
    %v551 = vld [vmem:[%s411 + $0x81] sm:$0xff]
    %v552 = vld [vmem:[%s411 + $0x91] sm:$0xff]
    %v553 = vld [vmem:[%s411 + $0x99] sm:$0xff]
    %v554 = vld [vmem:[%s411 + $0xa9] sm:$0xff]
    %v555 = vld [vmem:[%s411 + $0xb1] sm:$0xff]
    %v556 = vld [vmem:[%s411 + $0xc1] sm:$0xff]
    %v557 = vld [vmem:[%s411 + $0xc9] sm:$0xff]
    %v558 = vld [vmem:[%s411 + $0xd9] sm:$0xff]
    %v559 = vld [vmem:[%s411 + $0xe1] sm:$0xff]
    %v560 = vld [vmem:[%s411 + $0xf1] sm:$0xff]
    %v561 = vld [vmem:[%s411 + $0xf9] sm:$0xff]
    %v562 = vld [vmem:[%s411 + $0x109] sm:$0xff]
    %v563 = vld [vmem:[%s411 + $0x111] sm:$0xff]
    %v564 = vld [vmem:[%s411 + $0x121] sm:$0xff]
    %v565 = vld [vmem:[%s411 + $0x129] sm:$0xff]
    %v566 = vld [vmem:[%s411 + $0x139] sm:$0xff]
    %v567 = vld [vmem:[%s411 + $0x141] sm:$0xff]
    %v568 = vld [vmem:[%s411 + $0x151] sm:$0xff]
    %v569 = vld [vmem:[%s411 + $0x159] sm:$0xff]
    %v570 = vld [vmem:[%s411 + $0x169] sm:$0xff]
    %v571 = vld [vmem:[%s411 + $0x171] sm:$0xff]
    %v572 = vld [vmem:[%s411 + $0x1b1] sm:$0xff]
    %v573 = vld [vmem:[%s411 + $0x1b9] sm:$0xff]
    %v574 = vld [vmem:[%s411 + $0x1c9] sm:$0xff]
    %v575 = vld [vmem:[%s411 + $0x1d1] sm:$0xff]
    %v576 = vld [vmem:[%s411 + $0x1e1] sm:$0xff]
    %v577 = vld [vmem:[%s411 + $0x1e9] sm:$0xff]
    %v578 = vld [vmem:[%s411 + $0x1f9] sm:$0xff]
    %v579 = vld [vmem:[%s411 + $0x201] sm:$0xff]
    %v580 = vld [vmem:[%s411 + $0x211] sm:$0xff]
    %v581 = vld [vmem:[%s411 + $0x219] sm:$0xff]
    %v582 = vld [vmem:[%s411 + $0x229] sm:$0xff]
    %v583 = vld [vmem:[%s411 + $0x231] sm:$0xff]
    %v584 = vld [vmem:[%s411 + $0x241] sm:$0xff]
    %v585 = vld [vmem:[%s411 + $0x249] sm:$0xff]
    %v586 = vld [vmem:[%s411 + $0x259] sm:$0xff]
    %v587 = vld [vmem:[%s411 + $0x261] sm:$0xff]
    %v588 = vld [vmem:[%s411 + $0x271] sm:$0xff]
    %v589 = vld [vmem:[%s411 + $0x279] sm:$0xff]
    %v590 = vld [vmem:[%s411 + $0x289] sm:$0xff]
    %v591 = vld [vmem:[%s411 + $0x291] sm:$0xff]
    %v592 = vld [vmem:[%s411 + $0x2a1] sm:$0xff]
    %v593 = vld [vmem:[%s411 + $0x2a9] sm:$0xff]
    %v594 = vld [vmem:[%s411 + $0x2b9] sm:$0xff]
    %v595 = vld [vmem:[%s411 + $0x2c1] sm:$0xff]
    %v596 = vld [vmem:[%s411 + $0x2d1] sm:$0xff]
    %v597 = vld [vmem:[%s411 + $0x2d9] sm:$0xff]
    %v598 = vld [vmem:[%s411 + $0x2e9] sm:$0xff]
    %v599 = vld [vmem:[%s411 + $0x2f1] sm:$0xff]
    %v600 = vld [vmem:[%s411 + $0x301] sm:$0xff]
    %v601 = vld [vmem:[%s411 + $0x309] sm:$0xff]
    %v602 = vld [vmem:[%s411 + $0x319] sm:$0xff]
    %v603 = vld [vmem:[%s411 + $0x321] sm:$0xff]
    %v604 = vpack.c.bf16 %v540, %v540
    %v605 = vpack.c.bf16 %v541, %v541
    %v606 = vpack.c.bf16 %v542, %v542
    %v607 = vpack.c.bf16 %v543, %v543
    %v608 = vpack.c.bf16 %v544, %v544
    %v609 = vpack.c.bf16 %v545, %v545
    %v610 = vpack.c.bf16 %v546, %v546
    %v611 = vpack.c.bf16 %v547, %v547
    %v612 = vpack.c.bf16 %v548, %v548
    %v613 = vpack.c.bf16 %v549, %v549
    %v614 = vpack.c.bf16 %v550, %v550
    %v615 = vpack.c.bf16 %v551, %v551
    %v616 = vpack.c.bf16 %v552, %v552
    %v617 = vpack.c.bf16 %v553, %v553
    %v618 = vpack.c.bf16 %v554, %v554
    %v619 = vpack.c.bf16 %v555, %v555
    %v620 = vpack.c.bf16 %v556, %v556
    %v621 = vpack.c.bf16 %v557, %v557
    %v622 = vpack.c.bf16 %v558, %v558
    %v623 = vpack.c.bf16 %v559, %v559
    %v624 = vpack.c.bf16 %v560, %v560
    %v625 = vpack.c.bf16 %v561, %v561
    %v626 = vpack.c.bf16 %v562, %v562
    %v627 = vpack.c.bf16 %v563, %v563
    %v628 = vpack.c.bf16 %v564, %v564
    %v629 = vpack.c.bf16 %v565, %v565
    %v630 = vpack.c.bf16 %v566, %v566
    %v631 = vpack.c.bf16 %v567, %v567
    %v632 = vpack.c.bf16 %v568, %v568
    %v633 = vpack.c.bf16 %v569, %v569
    %v634 = vpack.c.bf16 %v570, %v570
    %v635 = vpack.c.bf16 %v571, %v571
    %v636 = vpack.c.bf16 %v572, %v572
    %v637 = vpack.c.bf16 %v573, %v573
    %v638 = vpack.c.bf16 %v574, %v574
    %v639 = vpack.c.bf16 %v575, %v575
    %v640 = vpack.c.bf16 %v576, %v576
    %v641 = vpack.c.bf16 %v577, %v577
    %v642 = vpack.c.bf16 %v578, %v578
    %v643 = vpack.c.bf16 %v579, %v579
    %v644 = vpack.c.bf16 %v580, %v580
    %v645 = vpack.c.bf16 %v581, %v581
    %v646 = vpack.c.bf16 %v582, %v582
    %v647 = vpack.c.bf16 %v583, %v583
    %v648 = vpack.c.bf16 %v584, %v584
    %v649 = vpack.c.bf16 %v585, %v585
    %v650 = vpack.c.bf16 %v586, %v586
    %v651 = vpack.c.bf16 %v587, %v587
    %v652 = vpack.c.bf16 %v588, %v588
    %v653 = vpack.c.bf16 %v589, %v589
    %v654 = vpack.c.bf16 %v590, %v590
    %v655 = vpack.c.bf16 %v591, %v591
    %v656 = vpack.c.bf16 %v592, %v592
    %v657 = vpack.c.bf16 %v593, %v593
    %v658 = vpack.c.bf16 %v594, %v594
    %v659 = vpack.c.bf16 %v595, %v595
    %v660 = vpack.c.bf16 %v596, %v596
    %v661 = vpack.c.bf16 %v597, %v597
    %v662 = vpack.c.bf16 %v598, %v598
    %v663 = vpack.c.bf16 %v599, %v599
    %v664 = vpack.c.bf16 %v600, %v600
    %v665 = vpack.c.bf16 %v601, %v601
    %v666 = vpack.c.bf16 %v602, %v602
    %v667 = vpack.c.bf16 %v603, %v603
    %v668 = vld [vmem:[%s411 + $0x2] sm:$0xff]
    %v669 = vld [vmem:[%s411 + $0xa] sm:$0xff]
    %v670 = vld [vmem:[%s411 + $0x1a] sm:$0xff]
    %v671 = vld [vmem:[%s411 + $0x22] sm:$0xff]
    %v672 = vld [vmem:[%s411 + $0x32] sm:$0xff]
    %v673 = vld [vmem:[%s411 + $0x3a] sm:$0xff]
    %v674 = vld [vmem:[%s411 + $0x4a] sm:$0xff]
    %v675 = vld [vmem:[%s411 + $0x52] sm:$0xff]
    %v676 = vld [vmem:[%s411 + $0x62] sm:$0xff]
    %v677 = vld [vmem:[%s411 + $0x6a] sm:$0xff]
    %v678 = vld [vmem:[%s411 + $0x7a] sm:$0xff]
    %v679 = vld [vmem:[%s411 + $0x82] sm:$0xff]
    %v680 = vld [vmem:[%s411 + $0x92] sm:$0xff]
    %v681 = vld [vmem:[%s411 + $0x9a] sm:$0xff]
    %v682 = vld [vmem:[%s411 + $0xaa] sm:$0xff]
    %v683 = vld [vmem:[%s411 + $0xb2] sm:$0xff]
    %v684 = vld [vmem:[%s411 + $0xc2] sm:$0xff]
    %v685 = vld [vmem:[%s411 + $0xca] sm:$0xff]
    %v686 = vld [vmem:[%s411 + $0xda] sm:$0xff]
    %v687 = vld [vmem:[%s411 + $0xe2] sm:$0xff]
    %v688 = vld [vmem:[%s411 + $0xf2] sm:$0xff]
    %v689 = vld [vmem:[%s411 + $0xfa] sm:$0xff]
    %v690 = vld [vmem:[%s411 + $0x10a] sm:$0xff]
    %v691 = vld [vmem:[%s411 + $0x112] sm:$0xff]
    %v692 = vld [vmem:[%s411 + $0x122] sm:$0xff]
    %v693 = vld [vmem:[%s411 + $0x12a] sm:$0xff]
    %v694 = vld [vmem:[%s411 + $0x13a] sm:$0xff]
    %v695 = vld [vmem:[%s411 + $0x142] sm:$0xff]
    %v696 = vld [vmem:[%s411 + $0x152] sm:$0xff]
    %v697 = vld [vmem:[%s411 + $0x15a] sm:$0xff]
    %v698 = vld [vmem:[%s411 + $0x16a] sm:$0xff]
    %v699 = vld [vmem:[%s411 + $0x172] sm:$0xff]
    %v700 = vld [vmem:[%s411 + $0x1b2] sm:$0xff]
    %v701 = vld [vmem:[%s411 + $0x1ba] sm:$0xff]
    %v702 = vld [vmem:[%s411 + $0x1ca] sm:$0xff]
    %v703 = vld [vmem:[%s411 + $0x1d2] sm:$0xff]
    %v704 = vld [vmem:[%s411 + $0x1e2] sm:$0xff]
    %v705 = vld [vmem:[%s411 + $0x1ea] sm:$0xff]
    %v706 = vld [vmem:[%s411 + $0x1fa] sm:$0xff]
    %v707 = vld [vmem:[%s411 + $0x202] sm:$0xff]
    %v708 = vld [vmem:[%s411 + $0x212] sm:$0xff]
    %v709 = vld [vmem:[%s411 + $0x21a] sm:$0xff]
    %v710 = vld [vmem:[%s411 + $0x22a] sm:$0xff]
    %v711 = vld [vmem:[%s411 + $0x232] sm:$0xff]
    %v712 = vld [vmem:[%s411 + $0x242] sm:$0xff]
    %v713 = vld [vmem:[%s411 + $0x24a] sm:$0xff]
    %v714 = vld [vmem:[%s411 + $0x25a] sm:$0xff]
    %v715 = vld [vmem:[%s411 + $0x262] sm:$0xff]
    %v716 = vld [vmem:[%s411 + $0x272] sm:$0xff]
    %v717 = vld [vmem:[%s411 + $0x27a] sm:$0xff]
    %v718 = vld [vmem:[%s411 + $0x28a] sm:$0xff]
    %v719 = vld [vmem:[%s411 + $0x292] sm:$0xff]
    %v720 = vld [vmem:[%s411 + $0x2a2] sm:$0xff]
    %v721 = vld [vmem:[%s411 + $0x2aa] sm:$0xff]
    %v722 = vld [vmem:[%s411 + $0x2ba] sm:$0xff]
    %v723 = vld [vmem:[%s411 + $0x2c2] sm:$0xff]
    %v724 = vld [vmem:[%s411 + $0x2d2] sm:$0xff]
    %v725 = vld [vmem:[%s411 + $0x2da] sm:$0xff]
    %v726 = vld [vmem:[%s411 + $0x2ea] sm:$0xff]
    %v727 = vld [vmem:[%s411 + $0x2f2] sm:$0xff]
    %v728 = vld [vmem:[%s411 + $0x302] sm:$0xff]
    %v729 = vld [vmem:[%s411 + $0x30a] sm:$0xff]
    %v730 = vld [vmem:[%s411 + $0x31a] sm:$0xff]
    %v731 = vld [vmem:[%s411 + $0x322] sm:$0xff]
    %v732 = vpack.c.bf16 %v668, %v668
    %v733 = vpack.c.bf16 %v669, %v669
    %v734 = vpack.c.bf16 %v670, %v670
    %v735 = vpack.c.bf16 %v671, %v671
    %v736 = vpack.c.bf16 %v672, %v672
    %v737 = vpack.c.bf16 %v673, %v673
    %v738 = vpack.c.bf16 %v674, %v674
    %v739 = vpack.c.bf16 %v675, %v675
    %v740 = vpack.c.bf16 %v676, %v676
    %v741 = vpack.c.bf16 %v677, %v677
    %v742 = vpack.c.bf16 %v678, %v678
    %v743 = vpack.c.bf16 %v679, %v679
    %v744 = vpack.c.bf16 %v680, %v680
    %v745 = vpack.c.bf16 %v681, %v681
    %v746 = vpack.c.bf16 %v682, %v682
    %v747 = vpack.c.bf16 %v683, %v683
    %v748 = vpack.c.bf16 %v684, %v684
    %v749 = vpack.c.bf16 %v685, %v685
    %v750 = vpack.c.bf16 %v686, %v686
    %v751 = vpack.c.bf16 %v687, %v687
    %v752 = vpack.c.bf16 %v688, %v688
    %v753 = vpack.c.bf16 %v689, %v689
    %v754 = vpack.c.bf16 %v690, %v690
    %v755 = vpack.c.bf16 %v691, %v691
    %v756 = vpack.c.bf16 %v692, %v692
    %v757 = vpack.c.bf16 %v693, %v693
    %v758 = vpack.c.bf16 %v694, %v694
    %v759 = vpack.c.bf16 %v695, %v695
    %v760 = vpack.c.bf16 %v696, %v696
    %v761 = vpack.c.bf16 %v697, %v697
    %v762 = vpack.c.bf16 %v698, %v698
    %v763 = vpack.c.bf16 %v699, %v699
    %v764 = vpack.c.bf16 %v700, %v700
    %v765 = vpack.c.bf16 %v701, %v701
    %v766 = vpack.c.bf16 %v702, %v702
    %v767 = vpack.c.bf16 %v703, %v703
    %v768 = vpack.c.bf16 %v704, %v704
    %v769 = vpack.c.bf16 %v705, %v705
    %v770 = vpack.c.bf16 %v706, %v706
    %v771 = vpack.c.bf16 %v707, %v707
    %v772 = vpack.c.bf16 %v708, %v708
    %v773 = vpack.c.bf16 %v709, %v709
    %v774 = vpack.c.bf16 %v710, %v710
    %v775 = vpack.c.bf16 %v711, %v711
    %v776 = vpack.c.bf16 %v712, %v712
    %v777 = vpack.c.bf16 %v713, %v713
    %v778 = vpack.c.bf16 %v714, %v714
    %v779 = vpack.c.bf16 %v715, %v715
    %v780 = vpack.c.bf16 %v716, %v716
    %v781 = vpack.c.bf16 %v717, %v717
    %v782 = vpack.c.bf16 %v718, %v718
    %v783 = vpack.c.bf16 %v719, %v719
    %v784 = vpack.c.bf16 %v720, %v720
    %v785 = vpack.c.bf16 %v721, %v721
    %v786 = vpack.c.bf16 %v722, %v722
    %v787 = vpack.c.bf16 %v723, %v723
    %v788 = vpack.c.bf16 %v724, %v724
    %v789 = vpack.c.bf16 %v725, %v725
    %v790 = vpack.c.bf16 %v726, %v726
    %v791 = vpack.c.bf16 %v727, %v727
    %v792 = vpack.c.bf16 %v728, %v728
    %v793 = vpack.c.bf16 %v729, %v729
    %v794 = vpack.c.bf16 %v730, %v730
    %v795 = vpack.c.bf16 %v731, %v731
    %s796 = scalar_lea.vmem %s0, 48
    %v797 = vld [vmem:[%s796] sm:$0xff]
    %v798 = vld [vmem:[%s796 + $0x8] sm:$0xff]
    %v799 = vld [vmem:[%s796 + $0x18] sm:$0xff]
    %v800 = vld [vmem:[%s796 + $0x20] sm:$0xff]
    %v801 = vld [vmem:[%s796 + $0x30] sm:$0xff]
    %v802 = vld [vmem:[%s796 + $0x38] sm:$0xff]
    %v803 = vld [vmem:[%s796 + $0x48] sm:$0xff]
    %v804 = vld [vmem:[%s796 + $0x50] sm:$0xff]
    %v805 = vld [vmem:[%s796 + $0x60] sm:$0xff]
    %v806 = vld [vmem:[%s796 + $0x68] sm:$0xff]
    %v807 = vld [vmem:[%s796 + $0x78] sm:$0xff]
    %v808 = vld [vmem:[%s796 + $0x80] sm:$0xff]
    %v809 = vld [vmem:[%s796 + $0x90] sm:$0xff]
    %v810 = vld [vmem:[%s796 + $0x98] sm:$0xff]
    %v811 = vld [vmem:[%s796 + $0xa8] sm:$0xff]
    %v812 = vld [vmem:[%s796 + $0xb0] sm:$0xff]
    %v813 = vld [vmem:[%s796 + $0xc0] sm:$0xff]
    %v814 = vld [vmem:[%s796 + $0xc8] sm:$0xff]
    %v815 = vld [vmem:[%s796 + $0xd8] sm:$0xff]
    %v816 = vld [vmem:[%s796 + $0xe0] sm:$0xff]
    %v817 = vld [vmem:[%s796 + $0xf0] sm:$0xff]
    %v818 = vld [vmem:[%s796 + $0xf8] sm:$0xff]
    %v819 = vld [vmem:[%s796 + $0x108] sm:$0xff]
    %v820 = vld [vmem:[%s796 + $0x110] sm:$0xff]
    %v821 = vld [vmem:[%s796 + $0x120] sm:$0xff]
    %v822 = vld [vmem:[%s796 + $0x128] sm:$0xff]
    %v823 = vld [vmem:[%s796 + $0x138] sm:$0xff]
    %v824 = vld [vmem:[%s796 + $0x140] sm:$0xff]
    %v825 = vld [vmem:[%s796 + $0x150] sm:$0xff]
    %v826 = vld [vmem:[%s796 + $0x158] sm:$0xff]
    %v827 = vld [vmem:[%s796 + $0x168] sm:$0xff]
    %v828 = vld [vmem:[%s796 + $0x170] sm:$0xff]
    %v829 = vld [vmem:[%s796 + $0x1b0] sm:$0xff]
    %v830 = vld [vmem:[%s796 + $0x1b8] sm:$0xff]
    %v831 = vld [vmem:[%s796 + $0x1c8] sm:$0xff]
    %v832 = vld [vmem:[%s796 + $0x1d0] sm:$0xff]
    %v833 = vld [vmem:[%s796 + $0x1e0] sm:$0xff]
    %v834 = vld [vmem:[%s796 + $0x1e8] sm:$0xff]
    %v835 = vld [vmem:[%s796 + $0x1f8] sm:$0xff]
    %v836 = vld [vmem:[%s796 + $0x200] sm:$0xff]
    %v837 = vld [vmem:[%s796 + $0x210] sm:$0xff]
    %v838 = vld [vmem:[%s796 + $0x218] sm:$0xff]
    %v839 = vld [vmem:[%s796 + $0x228] sm:$0xff]
    %v840 = vld [vmem:[%s796 + $0x230] sm:$0xff]
    %v841 = vld [vmem:[%s796 + $0x240] sm:$0xff]
    %v842 = vld [vmem:[%s796 + $0x248] sm:$0xff]
    %v843 = vld [vmem:[%s796 + $0x258] sm:$0xff]
    %v844 = vld [vmem:[%s796 + $0x260] sm:$0xff]
    %v845 = vld [vmem:[%s796 + $0x270] sm:$0xff]
    %v846 = vld [vmem:[%s796 + $0x278] sm:$0xff]
    %v847 = vld [vmem:[%s796 + $0x288] sm:$0xff]
    %v848 = vld [vmem:[%s796 + $0x290] sm:$0xff]
    %v849 = vld [vmem:[%s796 + $0x2a0] sm:$0xff]
    %v850 = vld [vmem:[%s796 + $0x2a8] sm:$0xff]
    %v851 = vld [vmem:[%s796 + $0x2b8] sm:$0xff]
    %v852 = vld [vmem:[%s796 + $0x2c0] sm:$0xff]
    %v853 = vld [vmem:[%s796 + $0x2d0] sm:$0xff]
    %v854 = vld [vmem:[%s796 + $0x2d8] sm:$0xff]
    %v855 = vld [vmem:[%s796 + $0x2e8] sm:$0xff]
    %v856 = vld [vmem:[%s796 + $0x2f0] sm:$0xff]
    %v857 = vld [vmem:[%s796 + $0x300] sm:$0xff]
    %v858 = vld [vmem:[%s796 + $0x308] sm:$0xff]
    %v859 = vld [vmem:[%s796 + $0x318] sm:$0xff]
    %v860 = vld [vmem:[%s796 + $0x320] sm:$0xff]
    %v861 = vpack.c.bf16 %v797, %v797
    %v862 = vpack.c.bf16 %v798, %v798
    %v863 = vpack.c.bf16 %v799, %v799
    %v864 = vpack.c.bf16 %v800, %v800
    %v865 = vpack.c.bf16 %v801, %v801
    %v866 = vpack.c.bf16 %v802, %v802
    %v867 = vpack.c.bf16 %v803, %v803
    %v868 = vpack.c.bf16 %v804, %v804
    %v869 = vpack.c.bf16 %v805, %v805
    %v870 = vpack.c.bf16 %v806, %v806
    %v871 = vpack.c.bf16 %v807, %v807
    %v872 = vpack.c.bf16 %v808, %v808
    %v873 = vpack.c.bf16 %v809, %v809
    %v874 = vpack.c.bf16 %v810, %v810
    %v875 = vpack.c.bf16 %v811, %v811
    %v876 = vpack.c.bf16 %v812, %v812
    %v877 = vpack.c.bf16 %v813, %v813
    %v878 = vpack.c.bf16 %v814, %v814
    %v879 = vpack.c.bf16 %v815, %v815
    %v880 = vpack.c.bf16 %v816, %v816
    %v881 = vpack.c.bf16 %v817, %v817
    %v882 = vpack.c.bf16 %v818, %v818
    %v883 = vpack.c.bf16 %v819, %v819
    %v884 = vpack.c.bf16 %v820, %v820
    %v885 = vpack.c.bf16 %v821, %v821
    %v886 = vpack.c.bf16 %v822, %v822
    %v887 = vpack.c.bf16 %v823, %v823
    %v888 = vpack.c.bf16 %v824, %v824
    %v889 = vpack.c.bf16 %v825, %v825
    %v890 = vpack.c.bf16 %v826, %v826
    %v891 = vpack.c.bf16 %v827, %v827
    %v892 = vpack.c.bf16 %v828, %v828
    %v893 = vpack.c.bf16 %v829, %v829
    %v894 = vpack.c.bf16 %v830, %v830
    %v895 = vpack.c.bf16 %v831, %v831
    %v896 = vpack.c.bf16 %v832, %v832
    %v897 = vpack.c.bf16 %v833, %v833
    %v898 = vpack.c.bf16 %v834, %v834
    %v899 = vpack.c.bf16 %v835, %v835
    %v900 = vpack.c.bf16 %v836, %v836
    %v901 = vpack.c.bf16 %v837, %v837
    %v902 = vpack.c.bf16 %v838, %v838
    %v903 = vpack.c.bf16 %v839, %v839
    %v904 = vpack.c.bf16 %v840, %v840
    %v905 = vpack.c.bf16 %v841, %v841
    %v906 = vpack.c.bf16 %v842, %v842
    %v907 = vpack.c.bf16 %v843, %v843
    %v908 = vpack.c.bf16 %v844, %v844
    %v909 = vpack.c.bf16 %v845, %v845
    %v910 = vpack.c.bf16 %v846, %v846
    %v911 = vpack.c.bf16 %v847, %v847
    %v912 = vpack.c.bf16 %v848, %v848
    %v913 = vpack.c.bf16 %v849, %v849
    %v914 = vpack.c.bf16 %v850, %v850
    %v915 = vpack.c.bf16 %v851, %v851
    %v916 = vpack.c.bf16 %v852, %v852
    %v917 = vpack.c.bf16 %v853, %v853
    %v918 = vpack.c.bf16 %v854, %v854
    %v919 = vpack.c.bf16 %v855, %v855
    %v920 = vpack.c.bf16 %v856, %v856
    %v921 = vpack.c.bf16 %v857, %v857
    %v922 = vpack.c.bf16 %v858, %v858
    %v923 = vpack.c.bf16 %v859, %v859
    %v924 = vpack.c.bf16 %v860, %v860
    %v925 = vld [vmem:[%s796 + $0x1] sm:$0xff]
    %v926 = vld [vmem:[%s796 + $0x9] sm:$0xff]
    %v927 = vld [vmem:[%s796 + $0x19] sm:$0xff]
    %v928 = vld [vmem:[%s796 + $0x21] sm:$0xff]
    %v929 = vld [vmem:[%s796 + $0x31] sm:$0xff]
    %v930 = vld [vmem:[%s796 + $0x39] sm:$0xff]
    %v931 = vld [vmem:[%s796 + $0x49] sm:$0xff]
    %v932 = vld [vmem:[%s796 + $0x51] sm:$0xff]
    %v933 = vld [vmem:[%s796 + $0x61] sm:$0xff]
    %v934 = vld [vmem:[%s796 + $0x69] sm:$0xff]
    %v935 = vld [vmem:[%s796 + $0x79] sm:$0xff]
    %v936 = vld [vmem:[%s796 + $0x81] sm:$0xff]
    %v937 = vld [vmem:[%s796 + $0x91] sm:$0xff]
    %v938 = vld [vmem:[%s796 + $0x99] sm:$0xff]
    %v939 = vld [vmem:[%s796 + $0xa9] sm:$0xff]
    %v940 = vld [vmem:[%s796 + $0xb1] sm:$0xff]
    %v941 = vld [vmem:[%s796 + $0xc1] sm:$0xff]
    %v942 = vld [vmem:[%s796 + $0xc9] sm:$0xff]
    %v943 = vld [vmem:[%s796 + $0xd9] sm:$0xff]
    %v944 = vld [vmem:[%s796 + $0xe1] sm:$0xff]
    %v945 = vld [vmem:[%s796 + $0xf1] sm:$0xff]
    %v946 = vld [vmem:[%s796 + $0xf9] sm:$0xff]
    %v947 = vld [vmem:[%s796 + $0x109] sm:$0xff]
    %v948 = vld [vmem:[%s796 + $0x111] sm:$0xff]
    %v949 = vld [vmem:[%s796 + $0x121] sm:$0xff]
    %v950 = vld [vmem:[%s796 + $0x129] sm:$0xff]
    %v951 = vld [vmem:[%s796 + $0x139] sm:$0xff]
    %v952 = vld [vmem:[%s796 + $0x141] sm:$0xff]
    %v953 = vld [vmem:[%s796 + $0x151] sm:$0xff]
    %v954 = vld [vmem:[%s796 + $0x159] sm:$0xff]
    %v955 = vld [vmem:[%s796 + $0x169] sm:$0xff]
    %v956 = vld [vmem:[%s796 + $0x171] sm:$0xff]
    %v957 = vld [vmem:[%s796 + $0x1b1] sm:$0xff]
    %v958 = vld [vmem:[%s796 + $0x1b9] sm:$0xff]
    %v959 = vld [vmem:[%s796 + $0x1c9] sm:$0xff]
    %v960 = vld [vmem:[%s796 + $0x1d1] sm:$0xff]
    %v961 = vld [vmem:[%s796 + $0x1e1] sm:$0xff]
    %v962 = vld [vmem:[%s796 + $0x1e9] sm:$0xff]
    %v963 = vld [vmem:[%s796 + $0x1f9] sm:$0xff]
    %v964 = vld [vmem:[%s796 + $0x201] sm:$0xff]
    %v965 = vld [vmem:[%s796 + $0x211] sm:$0xff]
    %v966 = vld [vmem:[%s796 + $0x219] sm:$0xff]
    %v967 = vld [vmem:[%s796 + $0x229] sm:$0xff]
    %v968 = vld [vmem:[%s796 + $0x231] sm:$0xff]
    %v969 = vld [vmem:[%s796 + $0x241] sm:$0xff]
    %v970 = vld [vmem:[%s796 + $0x249] sm:$0xff]
    %v971 = vld [vmem:[%s796 + $0x259] sm:$0xff]
    %v972 = vld [vmem:[%s796 + $0x261] sm:$0xff]
    %v973 = vld [vmem:[%s796 + $0x271] sm:$0xff]
    %v974 = vld [vmem:[%s796 + $0x279] sm:$0xff]
    %v975 = vld [vmem:[%s796 + $0x289] sm:$0xff]
    %v976 = vld [vmem:[%s796 + $0x291] sm:$0xff]
    %v977 = vld [vmem:[%s796 + $0x2a1] sm:$0xff]
    %v978 = vld [vmem:[%s796 + $0x2a9] sm:$0xff]
    %v979 = vld [vmem:[%s796 + $0x2b9] sm:$0xff]
    %v980 = vld [vmem:[%s796 + $0x2c1] sm:$0xff]
    %v981 = vld [vmem:[%s796 + $0x2d1] sm:$0xff]
    %v982 = vld [vmem:[%s796 + $0x2d9] sm:$0xff]
    %v983 = vld [vmem:[%s796 + $0x2e9] sm:$0xff]
    %v984 = vld [vmem:[%s796 + $0x2f1] sm:$0xff]
    %v985 = vld [vmem:[%s796 + $0x301] sm:$0xff]
    %v986 = vld [vmem:[%s796 + $0x309] sm:$0xff]
    %v987 = vld [vmem:[%s796 + $0x319] sm:$0xff]
    %v988 = vld [vmem:[%s796 + $0x321] sm:$0xff]
    %v989 = vpack.c.bf16 %v925, %v925
    %v990 = vpack.c.bf16 %v926, %v926
    %v991 = vpack.c.bf16 %v927, %v927
    %v992 = vpack.c.bf16 %v928, %v928
    %v993 = vpack.c.bf16 %v929, %v929
    %v994 = vpack.c.bf16 %v930, %v930
    %v995 = vpack.c.bf16 %v931, %v931
    %v996 = vpack.c.bf16 %v932, %v932
    %v997 = vpack.c.bf16 %v933, %v933
    %v998 = vpack.c.bf16 %v934, %v934
    %v999 = vpack.c.bf16 %v935, %v935
    %v1000 = vpack.c.bf16 %v936, %v936
    %v1001 = vpack.c.bf16 %v937, %v937
    %v1002 = vpack.c.bf16 %v938, %v938
    %v1003 = vpack.c.bf16 %v939, %v939
    %v1004 = vpack.c.bf16 %v940, %v940
    %v1005 = vpack.c.bf16 %v941, %v941
    %v1006 = vpack.c.bf16 %v942, %v942
    %v1007 = vpack.c.bf16 %v943, %v943
    %v1008 = vpack.c.bf16 %v944, %v944
    %v1009 = vpack.c.bf16 %v945, %v945
    %v1010 = vpack.c.bf16 %v946, %v946
    %v1011 = vpack.c.bf16 %v947, %v947
    %v1012 = vpack.c.bf16 %v948, %v948
    %v1013 = vpack.c.bf16 %v949, %v949
    %v1014 = vpack.c.bf16 %v950, %v950
    %v1015 = vpack.c.bf16 %v951, %v951
    %v1016 = vpack.c.bf16 %v952, %v952
    %v1017 = vpack.c.bf16 %v953, %v953
    %v1018 = vpack.c.bf16 %v954, %v954
    %v1019 = vpack.c.bf16 %v955, %v955
    %v1020 = vpack.c.bf16 %v956, %v956
    %v1021 = vpack.c.bf16 %v957, %v957
    %v1022 = vpack.c.bf16 %v958, %v958
    %v1023 = vpack.c.bf16 %v959, %v959
    %v1024 = vpack.c.bf16 %v960, %v960
    %v1025 = vpack.c.bf16 %v961, %v961
    %v1026 = vpack.c.bf16 %v962, %v962
    %v1027 = vpack.c.bf16 %v963, %v963
    %v1028 = vpack.c.bf16 %v964, %v964
    %v1029 = vpack.c.bf16 %v965, %v965
    %v1030 = vpack.c.bf16 %v966, %v966
    %v1031 = vpack.c.bf16 %v967, %v967
    %v1032 = vpack.c.bf16 %v968, %v968
    %v1033 = vpack.c.bf16 %v969, %v969
    %v1034 = vpack.c.bf16 %v970, %v970
    %v1035 = vpack.c.bf16 %v971, %v971
    %v1036 = vpack.c.bf16 %v972, %v972
    %v1037 = vpack.c.bf16 %v973, %v973
    %v1038 = vpack.c.bf16 %v974, %v974
    %v1039 = vpack.c.bf16 %v975, %v975
    %v1040 = vpack.c.bf16 %v976, %v976
    %v1041 = vpack.c.bf16 %v977, %v977
    %v1042 = vpack.c.bf16 %v978, %v978
    %v1043 = vpack.c.bf16 %v979, %v979
    %v1044 = vpack.c.bf16 %v980, %v980
    %v1045 = vpack.c.bf16 %v981, %v981
    %v1046 = vpack.c.bf16 %v982, %v982
    %v1047 = vpack.c.bf16 %v983, %v983
    %v1048 = vpack.c.bf16 %v984, %v984
    %v1049 = vpack.c.bf16 %v985, %v985
    %v1050 = vpack.c.bf16 %v986, %v986
    %v1051 = vpack.c.bf16 %v987, %v987
    %v1052 = vpack.c.bf16 %v988, %v988
    %v1053 = vld [vmem:[%s796 + $0x2] sm:$0xff]
    %v1054 = vld [vmem:[%s796 + $0xa] sm:$0xff]
    %v1055 = vld [vmem:[%s796 + $0x1a] sm:$0xff]
    %v1056 = vld [vmem:[%s796 + $0x22] sm:$0xff]
    %v1057 = vld [vmem:[%s796 + $0x32] sm:$0xff]
    %v1058 = vld [vmem:[%s796 + $0x3a] sm:$0xff]
    %v1059 = vld [vmem:[%s796 + $0x4a] sm:$0xff]
    %v1060 = vld [vmem:[%s796 + $0x52] sm:$0xff]
    %v1061 = vld [vmem:[%s796 + $0x62] sm:$0xff]
    %v1062 = vld [vmem:[%s796 + $0x6a] sm:$0xff]
    %v1063 = vld [vmem:[%s796 + $0x7a] sm:$0xff]
    %v1064 = vld [vmem:[%s796 + $0x82] sm:$0xff]
    %v1065 = vld [vmem:[%s796 + $0x92] sm:$0xff]
    %v1066 = vld [vmem:[%s796 + $0x9a] sm:$0xff]
    %v1067 = vld [vmem:[%s796 + $0xaa] sm:$0xff]
    %v1068 = vld [vmem:[%s796 + $0xb2] sm:$0xff]
    %v1069 = vld [vmem:[%s796 + $0xc2] sm:$0xff]
    %v1070 = vld [vmem:[%s796 + $0xca] sm:$0xff]
    %v1071 = vld [vmem:[%s796 + $0xda] sm:$0xff]
    %v1072 = vld [vmem:[%s796 + $0xe2] sm:$0xff]
    %v1073 = vld [vmem:[%s796 + $0xf2] sm:$0xff]
    %v1074 = vld [vmem:[%s796 + $0xfa] sm:$0xff]
    %v1075 = vld [vmem:[%s796 + $0x10a] sm:$0xff]
    %v1076 = vld [vmem:[%s796 + $0x112] sm:$0xff]
    %v1077 = vld [vmem:[%s796 + $0x122] sm:$0xff]
    %v1078 = vld [vmem:[%s796 + $0x12a] sm:$0xff]
    %v1079 = vld [vmem:[%s796 + $0x13a] sm:$0xff]
    %v1080 = vld [vmem:[%s796 + $0x142] sm:$0xff]
    %v1081 = vld [vmem:[%s796 + $0x152] sm:$0xff]
    %v1082 = vld [vmem:[%s796 + $0x15a] sm:$0xff]
    %v1083 = vld [vmem:[%s796 + $0x16a] sm:$0xff]
    %v1084 = vld [vmem:[%s796 + $0x172] sm:$0xff]
    %v1085 = vld [vmem:[%s796 + $0x1b2] sm:$0xff]
    %v1086 = vld [vmem:[%s796 + $0x1ba] sm:$0xff]
    %v1087 = vld [vmem:[%s796 + $0x1ca] sm:$0xff]
    %v1088 = vld [vmem:[%s796 + $0x1d2] sm:$0xff]
    %v1089 = vld [vmem:[%s796 + $0x1e2] sm:$0xff]
    %v1090 = vld [vmem:[%s796 + $0x1ea] sm:$0xff]
    %v1091 = vld [vmem:[%s796 + $0x1fa] sm:$0xff]
    %v1092 = vld [vmem:[%s796 + $0x202] sm:$0xff]
    %v1093 = vld [vmem:[%s796 + $0x212] sm:$0xff]
    %v1094 = vld [vmem:[%s796 + $0x21a] sm:$0xff]
    %v1095 = vld [vmem:[%s796 + $0x22a] sm:$0xff]
    %v1096 = vld [vmem:[%s796 + $0x232] sm:$0xff]
    %v1097 = vld [vmem:[%s796 + $0x242] sm:$0xff]
    %v1098 = vld [vmem:[%s796 + $0x24a] sm:$0xff]
    %v1099 = vld [vmem:[%s796 + $0x25a] sm:$0xff]
    %v1100 = vld [vmem:[%s796 + $0x262] sm:$0xff]
    %v1101 = vld [vmem:[%s796 + $0x272] sm:$0xff]
    %v1102 = vld [vmem:[%s796 + $0x27a] sm:$0xff]
    %v1103 = vld [vmem:[%s796 + $0x28a] sm:$0xff]
    %v1104 = vld [vmem:[%s796 + $0x292] sm:$0xff]
    %v1105 = vld [vmem:[%s796 + $0x2a2] sm:$0xff]
    %v1106 = vld [vmem:[%s796 + $0x2aa] sm:$0xff]
    %v1107 = vld [vmem:[%s796 + $0x2ba] sm:$0xff]
    %v1108 = vld [vmem:[%s796 + $0x2c2] sm:$0xff]
    %v1109 = vld [vmem:[%s796 + $0x2d2] sm:$0xff]
    %v1110 = vld [vmem:[%s796 + $0x2da] sm:$0xff]
    %v1111 = vld [vmem:[%s796 + $0x2ea] sm:$0xff]
    %v1112 = vld [vmem:[%s796 + $0x2f2] sm:$0xff]
    %v1113 = vld [vmem:[%s796 + $0x302] sm:$0xff]
    %v1114 = vld [vmem:[%s796 + $0x30a] sm:$0xff]
    %v1115 = vld [vmem:[%s796 + $0x31a] sm:$0xff]
    %v1116 = vld [vmem:[%s796 + $0x322] sm:$0xff]
    %v1117 = vpack.c.bf16 %v1053, %v1053
    %v1118 = vpack.c.bf16 %v1054, %v1054
    %v1119 = vpack.c.bf16 %v1055, %v1055
    %v1120 = vpack.c.bf16 %v1056, %v1056
    %v1121 = vpack.c.bf16 %v1057, %v1057
    %v1122 = vpack.c.bf16 %v1058, %v1058
    %v1123 = vpack.c.bf16 %v1059, %v1059
    %v1124 = vpack.c.bf16 %v1060, %v1060
    %v1125 = vpack.c.bf16 %v1061, %v1061
    %v1126 = vpack.c.bf16 %v1062, %v1062
    %v1127 = vpack.c.bf16 %v1063, %v1063
    %v1128 = vpack.c.bf16 %v1064, %v1064
    %v1129 = vpack.c.bf16 %v1065, %v1065
    %v1130 = vpack.c.bf16 %v1066, %v1066
    %v1131 = vpack.c.bf16 %v1067, %v1067
    %v1132 = vpack.c.bf16 %v1068, %v1068
    %v1133 = vpack.c.bf16 %v1069, %v1069
    %v1134 = vpack.c.bf16 %v1070, %v1070
    %v1135 = vpack.c.bf16 %v1071, %v1071
    %v1136 = vpack.c.bf16 %v1072, %v1072
    %v1137 = vpack.c.bf16 %v1073, %v1073
    %v1138 = vpack.c.bf16 %v1074, %v1074
    %v1139 = vpack.c.bf16 %v1075, %v1075
    %v1140 = vpack.c.bf16 %v1076, %v1076
    %v1141 = vpack.c.bf16 %v1077, %v1077
    %v1142 = vpack.c.bf16 %v1078, %v1078
    %v1143 = vpack.c.bf16 %v1079, %v1079
    %v1144 = vpack.c.bf16 %v1080, %v1080
    %v1145 = vpack.c.bf16 %v1081, %v1081
    %v1146 = vpack.c.bf16 %v1082, %v1082
    %v1147 = vpack.c.bf16 %v1083, %v1083
    %v1148 = vpack.c.bf16 %v1084, %v1084
    %v1149 = vpack.c.bf16 %v1085, %v1085
    %v1150 = vpack.c.bf16 %v1086, %v1086
    %v1151 = vpack.c.bf16 %v1087, %v1087
    %v1152 = vpack.c.bf16 %v1088, %v1088
    %v1153 = vpack.c.bf16 %v1089, %v1089
    %v1154 = vpack.c.bf16 %v1090, %v1090
    %v1155 = vpack.c.bf16 %v1091, %v1091
    %v1156 = vpack.c.bf16 %v1092, %v1092
    %v1157 = vpack.c.bf16 %v1093, %v1093
    %v1158 = vpack.c.bf16 %v1094, %v1094
    %v1159 = vpack.c.bf16 %v1095, %v1095
    %v1160 = vpack.c.bf16 %v1096, %v1096
    %v1161 = vpack.c.bf16 %v1097, %v1097
    %v1162 = vpack.c.bf16 %v1098, %v1098
    %v1163 = vpack.c.bf16 %v1099, %v1099
    %v1164 = vpack.c.bf16 %v1100, %v1100
    %v1165 = vpack.c.bf16 %v1101, %v1101
    %v1166 = vpack.c.bf16 %v1102, %v1102
    %v1167 = vpack.c.bf16 %v1103, %v1103
    %v1168 = vpack.c.bf16 %v1104, %v1104
    %v1169 = vpack.c.bf16 %v1105, %v1105
    %v1170 = vpack.c.bf16 %v1106, %v1106
    %v1171 = vpack.c.bf16 %v1107, %v1107
    %v1172 = vpack.c.bf16 %v1108, %v1108
    %v1173 = vpack.c.bf16 %v1109, %v1109
    %v1174 = vpack.c.bf16 %v1110, %v1110
    %v1175 = vpack.c.bf16 %v1111, %v1111
    %v1176 = vpack.c.bf16 %v1112, %v1112
    %v1177 = vpack.c.bf16 %v1113, %v1113
    %v1178 = vpack.c.bf16 %v1114, %v1114
    %v1179 = vpack.c.bf16 %v1115, %v1115
    %v1180 = vpack.c.bf16 %v1116, %v1116
    %v1245 = vunpack.c.l.b16 %v91
    %v1246 = vunpack.c.l.b16 %v92
    %v1247 = vunpack.c.l.b16 %v93
    %v1248 = vunpack.c.l.b16 %v94
    %v1249 = vunpack.c.l.b16 %v95
    %v1250 = vunpack.c.l.b16 %v96
    %v1251 = vunpack.c.l.b16 %v97
    %v1252 = vunpack.c.l.b16 %v98
    %v1253 = vunpack.c.l.b16 %v99
    %v1254 = vunpack.c.l.b16 %v100
    %v1255 = vunpack.c.l.b16 %v101
    %v1256 = vunpack.c.l.b16 %v102
    %v1257 = vunpack.c.l.b16 %v103
    %v1258 = vunpack.c.l.b16 %v104
    %v1259 = vunpack.c.l.b16 %v105
    %v1260 = vunpack.c.l.b16 %v106
    %v1261 = vunpack.c.l.b16 %v107
    %v1262 = vunpack.c.l.b16 %v108
    %v1263 = vunpack.c.l.b16 %v109
    %v1264 = vunpack.c.l.b16 %v110
    %v1265 = vunpack.c.l.b16 %v111
    %v1266 = vunpack.c.l.b16 %v112
    %v1267 = vunpack.c.l.b16 %v113
    %v1268 = vunpack.c.l.b16 %v114
    %v1269 = vunpack.c.l.b16 %v115
    %v1270 = vunpack.c.l.b16 %v116
    %v1271 = vunpack.c.l.b16 %v117
    %v1272 = vunpack.c.l.b16 %v118
    %v1273 = vunpack.c.l.b16 %v119
    %v1274 = vunpack.c.l.b16 %v120
    %v1275 = vunpack.c.l.b16 %v121
    %v1276 = vunpack.c.l.b16 %v122
    %v1277 = vunpack.c.l.b16 %v123
    %v1278 = vunpack.c.l.b16 %v124
    %v1279 = vunpack.c.l.b16 %v125
    %v1280 = vunpack.c.l.b16 %v126
    %v1281 = vunpack.c.l.b16 %v127
    %v1282 = vunpack.c.l.b16 %v128
    %v1283 = vunpack.c.l.b16 %v129
    %v1284 = vunpack.c.l.b16 %v130
    %v1285 = vunpack.c.l.b16 %v131
    %v1286 = vunpack.c.l.b16 %v132
    %v1287 = vunpack.c.l.b16 %v133
    %v1288 = vunpack.c.l.b16 %v134
    %v1289 = vunpack.c.l.b16 %v135
    %v1290 = vunpack.c.l.b16 %v136
    %v1291 = vunpack.c.l.b16 %v137
    %v1292 = vunpack.c.l.b16 %v138
    %v1293 = vunpack.c.l.b16 %v139
    %v1294 = vunpack.c.l.b16 %v140
    %v1295 = vunpack.c.l.b16 %v141
    %v1296 = vunpack.c.l.b16 %v142
    %v1297 = vunpack.c.l.b16 %v143
    %v1298 = vunpack.c.l.b16 %v144
    %v1299 = vunpack.c.l.b16 %v145
    %v1300 = vunpack.c.l.b16 %v146
    %v1301 = vunpack.c.l.b16 %v147
    %v1302 = vunpack.c.l.b16 %v148
    %v1303 = vunpack.c.l.b16 %v149
    %v1304 = vunpack.c.l.b16 %v150
    %v1305 = vunpack.c.l.b16 %v151
    %v1306 = vunpack.c.l.b16 %v152
    %v1307 = vunpack.c.l.b16 %v153
    %v1308 = vunpack.c.l.b16 %v154
    %v1309 = vpack.c.b16 %v1246, %v1245
    %v1310 = vpack.c.b16 %v1248, %v1247
    %v1311 = vpack.c.b16 %v1250, %v1249
    %v1312 = vpack.c.b16 %v1252, %v1251
    %v1313 = vpack.c.b16 %v1254, %v1253
    %v1314 = vpack.c.b16 %v1256, %v1255
    %v1315 = vpack.c.b16 %v1258, %v1257
    %v1316 = vpack.c.b16 %v1260, %v1259
    %v1317 = vpack.c.b16 %v1262, %v1261
    %v1318 = vpack.c.b16 %v1264, %v1263
    %v1319 = vpack.c.b16 %v1266, %v1265
    %v1320 = vpack.c.b16 %v1268, %v1267
    %v1321 = vpack.c.b16 %v1270, %v1269
    %v1322 = vpack.c.b16 %v1272, %v1271
    %v1323 = vpack.c.b16 %v1274, %v1273
    %v1324 = vpack.c.b16 %v1276, %v1275
    %v1325 = vpack.c.b16 %v1278, %v1277
    %v1326 = vpack.c.b16 %v1280, %v1279
    %v1327 = vpack.c.b16 %v1282, %v1281
    %v1328 = vpack.c.b16 %v1284, %v1283
    %v1329 = vpack.c.b16 %v1286, %v1285
    %v1330 = vpack.c.b16 %v1288, %v1287
    %v1331 = vpack.c.b16 %v1290, %v1289
    %v1332 = vpack.c.b16 %v1292, %v1291
    %v1333 = vpack.c.b16 %v1294, %v1293
    %v1334 = vpack.c.b16 %v1296, %v1295
    %v1335 = vpack.c.b16 %v1298, %v1297
    %v1336 = vpack.c.b16 %v1300, %v1299
    %v1337 = vpack.c.b16 %v1302, %v1301
    %v1338 = vpack.c.b16 %v1304, %v1303
    %v1339 = vpack.c.b16 %v1306, %v1305
    %v1340 = vpack.c.b16 %v1308, %v1307
    %v1437 = vunpack.c.l.b16 %v219
    %v1438 = vunpack.c.l.b16 %v220
    %v1439 = vunpack.c.l.b16 %v221
    %v1440 = vunpack.c.l.b16 %v222
    %v1441 = vunpack.c.l.b16 %v223
    %v1442 = vunpack.c.l.b16 %v224
    %v1443 = vunpack.c.l.b16 %v225
    %v1444 = vunpack.c.l.b16 %v226
    %v1445 = vunpack.c.l.b16 %v227
    %v1446 = vunpack.c.l.b16 %v228
    %v1447 = vunpack.c.l.b16 %v229
    %v1448 = vunpack.c.l.b16 %v230
    %v1449 = vunpack.c.l.b16 %v231
    %v1450 = vunpack.c.l.b16 %v232
    %v1451 = vunpack.c.l.b16 %v233
    %v1452 = vunpack.c.l.b16 %v234
    %v1453 = vunpack.c.l.b16 %v235
    %v1454 = vunpack.c.l.b16 %v236
    %v1455 = vunpack.c.l.b16 %v237
    %v1456 = vunpack.c.l.b16 %v238
    %v1457 = vunpack.c.l.b16 %v239
    %v1458 = vunpack.c.l.b16 %v240
    %v1459 = vunpack.c.l.b16 %v241
    %v1460 = vunpack.c.l.b16 %v242
    %v1461 = vunpack.c.l.b16 %v243
    %v1462 = vunpack.c.l.b16 %v244
    %v1463 = vunpack.c.l.b16 %v245
    %v1464 = vunpack.c.l.b16 %v246
    %v1465 = vunpack.c.l.b16 %v247
    %v1466 = vunpack.c.l.b16 %v248
    %v1467 = vunpack.c.l.b16 %v249
    %v1468 = vunpack.c.l.b16 %v250
    %v1469 = vunpack.c.l.b16 %v251
    %v1470 = vunpack.c.l.b16 %v252
    %v1471 = vunpack.c.l.b16 %v253
    %v1472 = vunpack.c.l.b16 %v254
    %v1473 = vunpack.c.l.b16 %v255
    %v1474 = vunpack.c.l.b16 %v256
    %v1475 = vunpack.c.l.b16 %v257
    %v1476 = vunpack.c.l.b16 %v258
    %v1477 = vunpack.c.l.b16 %v259
    %v1478 = vunpack.c.l.b16 %v260
    %v1479 = vunpack.c.l.b16 %v261
    %v1480 = vunpack.c.l.b16 %v262
    %v1481 = vunpack.c.l.b16 %v263
    %v1482 = vunpack.c.l.b16 %v264
    %v1483 = vunpack.c.l.b16 %v265
    %v1484 = vunpack.c.l.b16 %v266
    %v1485 = vunpack.c.l.b16 %v267
    %v1486 = vunpack.c.l.b16 %v268
    %v1487 = vunpack.c.l.b16 %v269
    %v1488 = vunpack.c.l.b16 %v270
    %v1489 = vunpack.c.l.b16 %v271
    %v1490 = vunpack.c.l.b16 %v272
    %v1491 = vunpack.c.l.b16 %v273
    %v1492 = vunpack.c.l.b16 %v274
    %v1493 = vunpack.c.l.b16 %v275
    %v1494 = vunpack.c.l.b16 %v276
    %v1495 = vunpack.c.l.b16 %v277
    %v1496 = vunpack.c.l.b16 %v278
    %v1497 = vunpack.c.l.b16 %v279
    %v1498 = vunpack.c.l.b16 %v280
    %v1499 = vunpack.c.l.b16 %v281
    %v1500 = vunpack.c.l.b16 %v282
    %v1501 = vpack.c.b16 %v1438, %v1437
    %v1502 = vpack.c.b16 %v1440, %v1439
    %v1503 = vpack.c.b16 %v1442, %v1441
    %v1504 = vpack.c.b16 %v1444, %v1443
    %v1505 = vpack.c.b16 %v1446, %v1445
    %v1506 = vpack.c.b16 %v1448, %v1447
    %v1507 = vpack.c.b16 %v1450, %v1449
    %v1508 = vpack.c.b16 %v1452, %v1451
    %v1509 = vpack.c.b16 %v1454, %v1453
    %v1510 = vpack.c.b16 %v1456, %v1455
    %v1511 = vpack.c.b16 %v1458, %v1457
    %v1512 = vpack.c.b16 %v1460, %v1459
    %v1513 = vpack.c.b16 %v1462, %v1461
    %v1514 = vpack.c.b16 %v1464, %v1463
    %v1515 = vpack.c.b16 %v1466, %v1465
    %v1516 = vpack.c.b16 %v1468, %v1467
    %v1517 = vpack.c.b16 %v1470, %v1469
    %v1518 = vpack.c.b16 %v1472, %v1471
    %v1519 = vpack.c.b16 %v1474, %v1473
    %v1520 = vpack.c.b16 %v1476, %v1475
    %v1521 = vpack.c.b16 %v1478, %v1477
    %v1522 = vpack.c.b16 %v1480, %v1479
    %v1523 = vpack.c.b16 %v1482, %v1481
    %v1524 = vpack.c.b16 %v1484, %v1483
    %v1525 = vpack.c.b16 %v1486, %v1485
    %v1526 = vpack.c.b16 %v1488, %v1487
    %v1527 = vpack.c.b16 %v1490, %v1489
    %v1528 = vpack.c.b16 %v1492, %v1491
    %v1529 = vpack.c.b16 %v1494, %v1493
    %v1530 = vpack.c.b16 %v1496, %v1495
    %v1531 = vpack.c.b16 %v1498, %v1497
    %v1532 = vpack.c.b16 %v1500, %v1499
    %v1629 = vunpack.c.l.b16 %v347
    %v1630 = vunpack.c.l.b16 %v348
    %v1631 = vunpack.c.l.b16 %v349
    %v1632 = vunpack.c.l.b16 %v350
    %v1633 = vunpack.c.l.b16 %v351
    %v1634 = vunpack.c.l.b16 %v352
    %v1635 = vunpack.c.l.b16 %v353
    %v1636 = vunpack.c.l.b16 %v354
    %v1637 = vunpack.c.l.b16 %v355
    %v1638 = vunpack.c.l.b16 %v356
    %v1639 = vunpack.c.l.b16 %v357
    %v1640 = vunpack.c.l.b16 %v358
    %v1641 = vunpack.c.l.b16 %v359
    %v1642 = vunpack.c.l.b16 %v360
    %v1643 = vunpack.c.l.b16 %v361
    %v1644 = vunpack.c.l.b16 %v362
    %v1645 = vunpack.c.l.b16 %v363
    %v1646 = vunpack.c.l.b16 %v364
    %v1647 = vunpack.c.l.b16 %v365
    %v1648 = vunpack.c.l.b16 %v366
    %v1649 = vunpack.c.l.b16 %v367
    %v1650 = vunpack.c.l.b16 %v368
    %v1651 = vunpack.c.l.b16 %v369
    %v1652 = vunpack.c.l.b16 %v370
    %v1653 = vunpack.c.l.b16 %v371
    %v1654 = vunpack.c.l.b16 %v372
    %v1655 = vunpack.c.l.b16 %v373
    %v1656 = vunpack.c.l.b16 %v374
    %v1657 = vunpack.c.l.b16 %v375
    %v1658 = vunpack.c.l.b16 %v376
    %v1659 = vunpack.c.l.b16 %v377
    %v1660 = vunpack.c.l.b16 %v378
    %v1661 = vunpack.c.l.b16 %v379
    %v1662 = vunpack.c.l.b16 %v380
    %v1663 = vunpack.c.l.b16 %v381
    %v1664 = vunpack.c.l.b16 %v382
    %v1665 = vunpack.c.l.b16 %v383
    %v1666 = vunpack.c.l.b16 %v384
    %v1667 = vunpack.c.l.b16 %v385
    %v1668 = vunpack.c.l.b16 %v386
    %v1669 = vunpack.c.l.b16 %v387
    %v1670 = vunpack.c.l.b16 %v388
    %v1671 = vunpack.c.l.b16 %v389
    %v1672 = vunpack.c.l.b16 %v390
    %v1673 = vunpack.c.l.b16 %v391
    %v1674 = vunpack.c.l.b16 %v392
    %v1675 = vunpack.c.l.b16 %v393
    %v1676 = vunpack.c.l.b16 %v394
    %v1677 = vunpack.c.l.b16 %v395
    %v1678 = vunpack.c.l.b16 %v396
    %v1679 = vunpack.c.l.b16 %v397
    %v1680 = vunpack.c.l.b16 %v398
    %v1681 = vunpack.c.l.b16 %v399
    %v1682 = vunpack.c.l.b16 %v400
    %v1683 = vunpack.c.l.b16 %v401
    %v1684 = vunpack.c.l.b16 %v402
    %v1685 = vunpack.c.l.b16 %v403
    %v1686 = vunpack.c.l.b16 %v404
    %v1687 = vunpack.c.l.b16 %v405
    %v1688 = vunpack.c.l.b16 %v406
    %v1689 = vunpack.c.l.b16 %v407
    %v1690 = vunpack.c.l.b16 %v408
    %v1691 = vunpack.c.l.b16 %v409
    %v1692 = vunpack.c.l.b16 %v410
    %v1693 = vpack.c.b16 %v1630, %v1629
    %v1694 = vpack.c.b16 %v1632, %v1631
    %v1695 = vpack.c.b16 %v1634, %v1633
    %v1696 = vpack.c.b16 %v1636, %v1635
    %v1697 = vpack.c.b16 %v1638, %v1637
    %v1698 = vpack.c.b16 %v1640, %v1639
    %v1699 = vpack.c.b16 %v1642, %v1641
    %v1700 = vpack.c.b16 %v1644, %v1643
    %v1701 = vpack.c.b16 %v1646, %v1645
    %v1702 = vpack.c.b16 %v1648, %v1647
    %v1703 = vpack.c.b16 %v1650, %v1649
    %v1704 = vpack.c.b16 %v1652, %v1651
    %v1705 = vpack.c.b16 %v1654, %v1653
    %v1706 = vpack.c.b16 %v1656, %v1655
    %v1707 = vpack.c.b16 %v1658, %v1657
    %v1708 = vpack.c.b16 %v1660, %v1659
    %v1709 = vpack.c.b16 %v1662, %v1661
    %v1710 = vpack.c.b16 %v1664, %v1663
    %v1711 = vpack.c.b16 %v1666, %v1665
    %v1712 = vpack.c.b16 %v1668, %v1667
    %v1713 = vpack.c.b16 %v1670, %v1669
    %v1714 = vpack.c.b16 %v1672, %v1671
    %v1715 = vpack.c.b16 %v1674, %v1673
    %v1716 = vpack.c.b16 %v1676, %v1675
    %v1717 = vpack.c.b16 %v1678, %v1677
    %v1718 = vpack.c.b16 %v1680, %v1679
    %v1719 = vpack.c.b16 %v1682, %v1681
    %v1720 = vpack.c.b16 %v1684, %v1683
    %v1721 = vpack.c.b16 %v1686, %v1685
    %v1722 = vpack.c.b16 %v1688, %v1687
    %v1723 = vpack.c.b16 %v1690, %v1689
    %v1724 = vpack.c.b16 %v1692, %v1691
    %v1821 = vunpack.c.l.b16 %v476
    %v1822 = vunpack.c.l.b16 %v477
    %v1823 = vunpack.c.l.b16 %v478
    %v1824 = vunpack.c.l.b16 %v479
    %v1825 = vunpack.c.l.b16 %v480
    %v1826 = vunpack.c.l.b16 %v481
    %v1827 = vunpack.c.l.b16 %v482
    %v1828 = vunpack.c.l.b16 %v483
    %v1829 = vunpack.c.l.b16 %v484
    %v1830 = vunpack.c.l.b16 %v485
    %v1831 = vunpack.c.l.b16 %v486
    %v1832 = vunpack.c.l.b16 %v487
    %v1833 = vunpack.c.l.b16 %v488
    %v1834 = vunpack.c.l.b16 %v489
    %v1835 = vunpack.c.l.b16 %v490
    %v1836 = vunpack.c.l.b16 %v491
    %v1837 = vunpack.c.l.b16 %v492
    %v1838 = vunpack.c.l.b16 %v493
    %v1839 = vunpack.c.l.b16 %v494
    %v1840 = vunpack.c.l.b16 %v495
    %v1841 = vunpack.c.l.b16 %v496
    %v1842 = vunpack.c.l.b16 %v497
    %v1843 = vunpack.c.l.b16 %v498
    %v1844 = vunpack.c.l.b16 %v499
    %v1845 = vunpack.c.l.b16 %v500
    %v1846 = vunpack.c.l.b16 %v501
    %v1847 = vunpack.c.l.b16 %v502
    %v1848 = vunpack.c.l.b16 %v503
    %v1849 = vunpack.c.l.b16 %v504
    %v1850 = vunpack.c.l.b16 %v505
    %v1851 = vunpack.c.l.b16 %v506
    %v1852 = vunpack.c.l.b16 %v507
    %v1853 = vunpack.c.l.b16 %v508
    %v1854 = vunpack.c.l.b16 %v509
    %v1855 = vunpack.c.l.b16 %v510
    %v1856 = vunpack.c.l.b16 %v511
    %v1857 = vunpack.c.l.b16 %v512
    %v1858 = vunpack.c.l.b16 %v513
    %v1859 = vunpack.c.l.b16 %v514
    %v1860 = vunpack.c.l.b16 %v515
    %v1861 = vunpack.c.l.b16 %v516
    %v1862 = vunpack.c.l.b16 %v517
    %v1863 = vunpack.c.l.b16 %v518
    %v1864 = vunpack.c.l.b16 %v519
    %v1865 = vunpack.c.l.b16 %v520
    %v1866 = vunpack.c.l.b16 %v521
    %v1867 = vunpack.c.l.b16 %v522
    %v1868 = vunpack.c.l.b16 %v523
    %v1869 = vunpack.c.l.b16 %v524
    %v1870 = vunpack.c.l.b16 %v525
    %v1871 = vunpack.c.l.b16 %v526
    %v1872 = vunpack.c.l.b16 %v527
    %v1873 = vunpack.c.l.b16 %v528
    %v1874 = vunpack.c.l.b16 %v529
    %v1875 = vunpack.c.l.b16 %v530
    %v1876 = vunpack.c.l.b16 %v531
    %v1877 = vunpack.c.l.b16 %v532
    %v1878 = vunpack.c.l.b16 %v533
    %v1879 = vunpack.c.l.b16 %v534
    %v1880 = vunpack.c.l.b16 %v535
    %v1881 = vunpack.c.l.b16 %v536
    %v1882 = vunpack.c.l.b16 %v537
    %v1883 = vunpack.c.l.b16 %v538
    %v1884 = vunpack.c.l.b16 %v539
    %v1885 = vpack.c.b16 %v1822, %v1821
    %v1886 = vpack.c.b16 %v1824, %v1823
    %v1887 = vpack.c.b16 %v1826, %v1825
    %v1888 = vpack.c.b16 %v1828, %v1827
    %v1889 = vpack.c.b16 %v1830, %v1829
    %v1890 = vpack.c.b16 %v1832, %v1831
    %v1891 = vpack.c.b16 %v1834, %v1833
    %v1892 = vpack.c.b16 %v1836, %v1835
    %v1893 = vpack.c.b16 %v1838, %v1837
    %v1894 = vpack.c.b16 %v1840, %v1839
    %v1895 = vpack.c.b16 %v1842, %v1841
    %v1896 = vpack.c.b16 %v1844, %v1843
    %v1897 = vpack.c.b16 %v1846, %v1845
    %v1898 = vpack.c.b16 %v1848, %v1847
    %v1899 = vpack.c.b16 %v1850, %v1849
    %v1900 = vpack.c.b16 %v1852, %v1851
    %v1901 = vpack.c.b16 %v1854, %v1853
    %v1902 = vpack.c.b16 %v1856, %v1855
    %v1903 = vpack.c.b16 %v1858, %v1857
    %v1904 = vpack.c.b16 %v1860, %v1859
    %v1905 = vpack.c.b16 %v1862, %v1861
    %v1906 = vpack.c.b16 %v1864, %v1863
    %v1907 = vpack.c.b16 %v1866, %v1865
    %v1908 = vpack.c.b16 %v1868, %v1867
    %v1909 = vpack.c.b16 %v1870, %v1869
    %v1910 = vpack.c.b16 %v1872, %v1871
    %v1911 = vpack.c.b16 %v1874, %v1873
    %v1912 = vpack.c.b16 %v1876, %v1875
    %v1913 = vpack.c.b16 %v1878, %v1877
    %v1914 = vpack.c.b16 %v1880, %v1879
    %v1915 = vpack.c.b16 %v1882, %v1881
    %v1916 = vpack.c.b16 %v1884, %v1883
    %v2013 = vunpack.c.l.b16 %v604
    %v2014 = vunpack.c.l.b16 %v605
    %v2015 = vunpack.c.l.b16 %v606
    %v2016 = vunpack.c.l.b16 %v607
    %v2017 = vunpack.c.l.b16 %v608
    %v2018 = vunpack.c.l.b16 %v609
    %v2019 = vunpack.c.l.b16 %v610
    %v2020 = vunpack.c.l.b16 %v611
    %v2021 = vunpack.c.l.b16 %v612
    %v2022 = vunpack.c.l.b16 %v613
    %v2023 = vunpack.c.l.b16 %v614
    %v2024 = vunpack.c.l.b16 %v615
    %v2025 = vunpack.c.l.b16 %v616
    %v2026 = vunpack.c.l.b16 %v617
    %v2027 = vunpack.c.l.b16 %v618
    %v2028 = vunpack.c.l.b16 %v619
    %v2029 = vunpack.c.l.b16 %v620
    %v2030 = vunpack.c.l.b16 %v621
    %v2031 = vunpack.c.l.b16 %v622
    %v2032 = vunpack.c.l.b16 %v623
    %v2033 = vunpack.c.l.b16 %v624
    %v2034 = vunpack.c.l.b16 %v625
    %v2035 = vunpack.c.l.b16 %v626
    %v2036 = vunpack.c.l.b16 %v627
    %v2037 = vunpack.c.l.b16 %v628
    %v2038 = vunpack.c.l.b16 %v629
    %v2039 = vunpack.c.l.b16 %v630
    %v2040 = vunpack.c.l.b16 %v631
    %v2041 = vunpack.c.l.b16 %v632
    %v2042 = vunpack.c.l.b16 %v633
    %v2043 = vunpack.c.l.b16 %v634
    %v2044 = vunpack.c.l.b16 %v635
    %v2045 = vunpack.c.l.b16 %v636
    %v2046 = vunpack.c.l.b16 %v637
    %v2047 = vunpack.c.l.b16 %v638
    %v2048 = vunpack.c.l.b16 %v639
    %v2049 = vunpack.c.l.b16 %v640
    %v2050 = vunpack.c.l.b16 %v641
    %v2051 = vunpack.c.l.b16 %v642
    %v2052 = vunpack.c.l.b16 %v643
    %v2053 = vunpack.c.l.b16 %v644
    %v2054 = vunpack.c.l.b16 %v645
    %v2055 = vunpack.c.l.b16 %v646
    %v2056 = vunpack.c.l.b16 %v647
    %v2057 = vunpack.c.l.b16 %v648
    %v2058 = vunpack.c.l.b16 %v649
    %v2059 = vunpack.c.l.b16 %v650
    %v2060 = vunpack.c.l.b16 %v651
    %v2061 = vunpack.c.l.b16 %v652
    %v2062 = vunpack.c.l.b16 %v653
    %v2063 = vunpack.c.l.b16 %v654
    %v2064 = vunpack.c.l.b16 %v655
    %v2065 = vunpack.c.l.b16 %v656
    %v2066 = vunpack.c.l.b16 %v657
    %v2067 = vunpack.c.l.b16 %v658
    %v2068 = vunpack.c.l.b16 %v659
    %v2069 = vunpack.c.l.b16 %v660
    %v2070 = vunpack.c.l.b16 %v661
    %v2071 = vunpack.c.l.b16 %v662
    %v2072 = vunpack.c.l.b16 %v663
    %v2073 = vunpack.c.l.b16 %v664
    %v2074 = vunpack.c.l.b16 %v665
    %v2075 = vunpack.c.l.b16 %v666
    %v2076 = vunpack.c.l.b16 %v667
    %v2077 = vpack.c.b16 %v2014, %v2013
    %v2078 = vpack.c.b16 %v2016, %v2015
    %v2079 = vpack.c.b16 %v2018, %v2017
    %v2080 = vpack.c.b16 %v2020, %v2019
    %v2081 = vpack.c.b16 %v2022, %v2021
    %v2082 = vpack.c.b16 %v2024, %v2023
    %v2083 = vpack.c.b16 %v2026, %v2025
    %v2084 = vpack.c.b16 %v2028, %v2027
    %v2085 = vpack.c.b16 %v2030, %v2029
    %v2086 = vpack.c.b16 %v2032, %v2031
    %v2087 = vpack.c.b16 %v2034, %v2033
    %v2088 = vpack.c.b16 %v2036, %v2035
    %v2089 = vpack.c.b16 %v2038, %v2037
    %v2090 = vpack.c.b16 %v2040, %v2039
    %v2091 = vpack.c.b16 %v2042, %v2041
    %v2092 = vpack.c.b16 %v2044, %v2043
    %v2093 = vpack.c.b16 %v2046, %v2045
    %v2094 = vpack.c.b16 %v2048, %v2047
    %v2095 = vpack.c.b16 %v2050, %v2049
    %v2096 = vpack.c.b16 %v2052, %v2051
    %v2097 = vpack.c.b16 %v2054, %v2053
    %v2098 = vpack.c.b16 %v2056, %v2055
    %v2099 = vpack.c.b16 %v2058, %v2057
    %v2100 = vpack.c.b16 %v2060, %v2059
    %v2101 = vpack.c.b16 %v2062, %v2061
    %v2102 = vpack.c.b16 %v2064, %v2063
    %v2103 = vpack.c.b16 %v2066, %v2065
    %v2104 = vpack.c.b16 %v2068, %v2067
    %v2105 = vpack.c.b16 %v2070, %v2069
    %v2106 = vpack.c.b16 %v2072, %v2071
    %v2107 = vpack.c.b16 %v2074, %v2073
    %v2108 = vpack.c.b16 %v2076, %v2075
    %v2205 = vunpack.c.l.b16 %v732
    %v2206 = vunpack.c.l.b16 %v733
    %v2207 = vunpack.c.l.b16 %v734
    %v2208 = vunpack.c.l.b16 %v735
    %v2209 = vunpack.c.l.b16 %v736
    %v2210 = vunpack.c.l.b16 %v737
    %v2211 = vunpack.c.l.b16 %v738
    %v2212 = vunpack.c.l.b16 %v739
    %v2213 = vunpack.c.l.b16 %v740
    %v2214 = vunpack.c.l.b16 %v741
    %v2215 = vunpack.c.l.b16 %v742
    %v2216 = vunpack.c.l.b16 %v743
    %v2217 = vunpack.c.l.b16 %v744
    %v2218 = vunpack.c.l.b16 %v745
    %v2219 = vunpack.c.l.b16 %v746
    %v2220 = vunpack.c.l.b16 %v747
    %v2221 = vunpack.c.l.b16 %v748
    %v2222 = vunpack.c.l.b16 %v749
    %v2223 = vunpack.c.l.b16 %v750
    %v2224 = vunpack.c.l.b16 %v751
    %v2225 = vunpack.c.l.b16 %v752
    %v2226 = vunpack.c.l.b16 %v753
    %v2227 = vunpack.c.l.b16 %v754
    %v2228 = vunpack.c.l.b16 %v755
    %v2229 = vunpack.c.l.b16 %v756
    %v2230 = vunpack.c.l.b16 %v757
    %v2231 = vunpack.c.l.b16 %v758
    %v2232 = vunpack.c.l.b16 %v759
    %v2233 = vunpack.c.l.b16 %v760
    %v2234 = vunpack.c.l.b16 %v761
    %v2235 = vunpack.c.l.b16 %v762
    %v2236 = vunpack.c.l.b16 %v763
    %v2237 = vunpack.c.l.b16 %v764
    %v2238 = vunpack.c.l.b16 %v765
    %v2239 = vunpack.c.l.b16 %v766
    %v2240 = vunpack.c.l.b16 %v767
    %v2241 = vunpack.c.l.b16 %v768
    %v2242 = vunpack.c.l.b16 %v769
    %v2243 = vunpack.c.l.b16 %v770
    %v2244 = vunpack.c.l.b16 %v771
    %v2245 = vunpack.c.l.b16 %v772
    %v2246 = vunpack.c.l.b16 %v773
    %v2247 = vunpack.c.l.b16 %v774
    %v2248 = vunpack.c.l.b16 %v775
    %v2249 = vunpack.c.l.b16 %v776
    %v2250 = vunpack.c.l.b16 %v777
    %v2251 = vunpack.c.l.b16 %v778
    %v2252 = vunpack.c.l.b16 %v779
    %v2253 = vunpack.c.l.b16 %v780
    %v2254 = vunpack.c.l.b16 %v781
    %v2255 = vunpack.c.l.b16 %v782
    %v2256 = vunpack.c.l.b16 %v783
    %v2257 = vunpack.c.l.b16 %v784
    %v2258 = vunpack.c.l.b16 %v785
    %v2259 = vunpack.c.l.b16 %v786
    %v2260 = vunpack.c.l.b16 %v787
    %v2261 = vunpack.c.l.b16 %v788
    %v2262 = vunpack.c.l.b16 %v789
    %v2263 = vunpack.c.l.b16 %v790
    %v2264 = vunpack.c.l.b16 %v791
    %v2265 = vunpack.c.l.b16 %v792
    %v2266 = vunpack.c.l.b16 %v793
    %v2267 = vunpack.c.l.b16 %v794
    %v2268 = vunpack.c.l.b16 %v795
    %v2269 = vpack.c.b16 %v2206, %v2205
    %v2270 = vpack.c.b16 %v2208, %v2207
    %v2271 = vpack.c.b16 %v2210, %v2209
    %v2272 = vpack.c.b16 %v2212, %v2211
    %v2273 = vpack.c.b16 %v2214, %v2213
    %v2274 = vpack.c.b16 %v2216, %v2215
    %v2275 = vpack.c.b16 %v2218, %v2217
    %v2276 = vpack.c.b16 %v2220, %v2219
    %v2277 = vpack.c.b16 %v2222, %v2221
    %v2278 = vpack.c.b16 %v2224, %v2223
    %v2279 = vpack.c.b16 %v2226, %v2225
    %v2280 = vpack.c.b16 %v2228, %v2227
    %v2281 = vpack.c.b16 %v2230, %v2229
    %v2282 = vpack.c.b16 %v2232, %v2231
    %v2283 = vpack.c.b16 %v2234, %v2233
    %v2284 = vpack.c.b16 %v2236, %v2235
    %v2285 = vpack.c.b16 %v2238, %v2237
    %v2286 = vpack.c.b16 %v2240, %v2239
    %v2287 = vpack.c.b16 %v2242, %v2241
    %v2288 = vpack.c.b16 %v2244, %v2243
    %v2289 = vpack.c.b16 %v2246, %v2245
    %v2290 = vpack.c.b16 %v2248, %v2247
    %v2291 = vpack.c.b16 %v2250, %v2249
    %v2292 = vpack.c.b16 %v2252, %v2251
    %v2293 = vpack.c.b16 %v2254, %v2253
    %v2294 = vpack.c.b16 %v2256, %v2255
    %v2295 = vpack.c.b16 %v2258, %v2257
    %v2296 = vpack.c.b16 %v2260, %v2259
    %v2297 = vpack.c.b16 %v2262, %v2261
    %v2298 = vpack.c.b16 %v2264, %v2263
    %v2299 = vpack.c.b16 %v2266, %v2265
    %v2300 = vpack.c.b16 %v2268, %v2267
    %v2397 = vunpack.c.l.b16 %v861
    %v2398 = vunpack.c.l.b16 %v862
    %v2399 = vunpack.c.l.b16 %v863
    %v2400 = vunpack.c.l.b16 %v864
    %v2401 = vunpack.c.l.b16 %v865
    %v2402 = vunpack.c.l.b16 %v866
    %v2403 = vunpack.c.l.b16 %v867
    %v2404 = vunpack.c.l.b16 %v868
    %v2405 = vunpack.c.l.b16 %v869
    %v2406 = vunpack.c.l.b16 %v870
    %v2407 = vunpack.c.l.b16 %v871
    %v2408 = vunpack.c.l.b16 %v872
    %v2409 = vunpack.c.l.b16 %v873
    %v2410 = vunpack.c.l.b16 %v874
    %v2411 = vunpack.c.l.b16 %v875
    %v2412 = vunpack.c.l.b16 %v876
    %v2413 = vunpack.c.l.b16 %v877
    %v2414 = vunpack.c.l.b16 %v878
    %v2415 = vunpack.c.l.b16 %v879
    %v2416 = vunpack.c.l.b16 %v880
    %v2417 = vunpack.c.l.b16 %v881
    %v2418 = vunpack.c.l.b16 %v882
    %v2419 = vunpack.c.l.b16 %v883
    %v2420 = vunpack.c.l.b16 %v884
    %v2421 = vunpack.c.l.b16 %v885
    %v2422 = vunpack.c.l.b16 %v886
    %v2423 = vunpack.c.l.b16 %v887
    %v2424 = vunpack.c.l.b16 %v888
    %v2425 = vunpack.c.l.b16 %v889
    %v2426 = vunpack.c.l.b16 %v890
    %v2427 = vunpack.c.l.b16 %v891
    %v2428 = vunpack.c.l.b16 %v892
    %v2429 = vunpack.c.l.b16 %v893
    %v2430 = vunpack.c.l.b16 %v894
    %v2431 = vunpack.c.l.b16 %v895
    %v2432 = vunpack.c.l.b16 %v896
    %v2433 = vunpack.c.l.b16 %v897
    %v2434 = vunpack.c.l.b16 %v898
    %v2435 = vunpack.c.l.b16 %v899
    %v2436 = vunpack.c.l.b16 %v900
    %v2437 = vunpack.c.l.b16 %v901
    %v2438 = vunpack.c.l.b16 %v902
    %v2439 = vunpack.c.l.b16 %v903
    %v2440 = vunpack.c.l.b16 %v904
    %v2441 = vunpack.c.l.b16 %v905
    %v2442 = vunpack.c.l.b16 %v906
    %v2443 = vunpack.c.l.b16 %v907
    %v2444 = vunpack.c.l.b16 %v908
    %v2445 = vunpack.c.l.b16 %v909
    %v2446 = vunpack.c.l.b16 %v910
    %v2447 = vunpack.c.l.b16 %v911
    %v2448 = vunpack.c.l.b16 %v912
    %v2449 = vunpack.c.l.b16 %v913
    %v2450 = vunpack.c.l.b16 %v914
    %v2451 = vunpack.c.l.b16 %v915
    %v2452 = vunpack.c.l.b16 %v916
    %v2453 = vunpack.c.l.b16 %v917
    %v2454 = vunpack.c.l.b16 %v918
    %v2455 = vunpack.c.l.b16 %v919
    %v2456 = vunpack.c.l.b16 %v920
    %v2457 = vunpack.c.l.b16 %v921
    %v2458 = vunpack.c.l.b16 %v922
    %v2459 = vunpack.c.l.b16 %v923
    %v2460 = vunpack.c.l.b16 %v924
    %v2461 = vpack.c.b16 %v2398, %v2397
    %v2462 = vpack.c.b16 %v2400, %v2399
    %v2463 = vpack.c.b16 %v2402, %v2401
    %v2464 = vpack.c.b16 %v2404, %v2403
    %v2465 = vpack.c.b16 %v2406, %v2405
    %v2466 = vpack.c.b16 %v2408, %v2407
    %v2467 = vpack.c.b16 %v2410, %v2409
    %v2468 = vpack.c.b16 %v2412, %v2411
    %v2469 = vpack.c.b16 %v2414, %v2413
    %v2470 = vpack.c.b16 %v2416, %v2415
    %v2471 = vpack.c.b16 %v2418, %v2417
    %v2472 = vpack.c.b16 %v2420, %v2419
    %v2473 = vpack.c.b16 %v2422, %v2421
    %v2474 = vpack.c.b16 %v2424, %v2423
    %v2475 = vpack.c.b16 %v2426, %v2425
    %v2476 = vpack.c.b16 %v2428, %v2427
    %v2477 = vpack.c.b16 %v2430, %v2429
    %v2478 = vpack.c.b16 %v2432, %v2431
    %v2479 = vpack.c.b16 %v2434, %v2433
    %v2480 = vpack.c.b16 %v2436, %v2435
    %v2481 = vpack.c.b16 %v2438, %v2437
    %v2482 = vpack.c.b16 %v2440, %v2439
    %v2483 = vpack.c.b16 %v2442, %v2441
    %v2484 = vpack.c.b16 %v2444, %v2443
    %v2485 = vpack.c.b16 %v2446, %v2445
    %v2486 = vpack.c.b16 %v2448, %v2447
    %v2487 = vpack.c.b16 %v2450, %v2449
    %v2488 = vpack.c.b16 %v2452, %v2451
    %v2489 = vpack.c.b16 %v2454, %v2453
    %v2490 = vpack.c.b16 %v2456, %v2455
    %v2491 = vpack.c.b16 %v2458, %v2457
    %v2492 = vpack.c.b16 %v2460, %v2459
    %v2589 = vunpack.c.l.b16 %v989
    %v2590 = vunpack.c.l.b16 %v990
    %v2591 = vunpack.c.l.b16 %v991
    %v2592 = vunpack.c.l.b16 %v992
    %v2593 = vunpack.c.l.b16 %v993
    %v2594 = vunpack.c.l.b16 %v994
    %v2595 = vunpack.c.l.b16 %v995
    %v2596 = vunpack.c.l.b16 %v996
    %v2597 = vunpack.c.l.b16 %v997
    %v2598 = vunpack.c.l.b16 %v998
    %v2599 = vunpack.c.l.b16 %v999
    %v2600 = vunpack.c.l.b16 %v1000
    %v2601 = vunpack.c.l.b16 %v1001
    %v2602 = vunpack.c.l.b16 %v1002
    %v2603 = vunpack.c.l.b16 %v1003
    %v2604 = vunpack.c.l.b16 %v1004
    %v2605 = vunpack.c.l.b16 %v1005
    %v2606 = vunpack.c.l.b16 %v1006
    %v2607 = vunpack.c.l.b16 %v1007
    %v2608 = vunpack.c.l.b16 %v1008
    %v2609 = vunpack.c.l.b16 %v1009
    %v2610 = vunpack.c.l.b16 %v1010
    %v2611 = vunpack.c.l.b16 %v1011
    %v2612 = vunpack.c.l.b16 %v1012
    %v2613 = vunpack.c.l.b16 %v1013
    %v2614 = vunpack.c.l.b16 %v1014
    %v2615 = vunpack.c.l.b16 %v1015
    %v2616 = vunpack.c.l.b16 %v1016
    %v2617 = vunpack.c.l.b16 %v1017
    %v2618 = vunpack.c.l.b16 %v1018
    %v2619 = vunpack.c.l.b16 %v1019
    %v2620 = vunpack.c.l.b16 %v1020
    %v2621 = vunpack.c.l.b16 %v1021
    %v2622 = vunpack.c.l.b16 %v1022
    %v2623 = vunpack.c.l.b16 %v1023
    %v2624 = vunpack.c.l.b16 %v1024
    %v2625 = vunpack.c.l.b16 %v1025
    %v2626 = vunpack.c.l.b16 %v1026
    %v2627 = vunpack.c.l.b16 %v1027
    %v2628 = vunpack.c.l.b16 %v1028
    %v2629 = vunpack.c.l.b16 %v1029
    %v2630 = vunpack.c.l.b16 %v1030
    %v2631 = vunpack.c.l.b16 %v1031
    %v2632 = vunpack.c.l.b16 %v1032
    %v2633 = vunpack.c.l.b16 %v1033
    %v2634 = vunpack.c.l.b16 %v1034
    %v2635 = vunpack.c.l.b16 %v1035
    %v2636 = vunpack.c.l.b16 %v1036
    %v2637 = vunpack.c.l.b16 %v1037
    %v2638 = vunpack.c.l.b16 %v1038
    %v2639 = vunpack.c.l.b16 %v1039
    %v2640 = vunpack.c.l.b16 %v1040
    %v2641 = vunpack.c.l.b16 %v1041
    %v2642 = vunpack.c.l.b16 %v1042
    %v2643 = vunpack.c.l.b16 %v1043
    %v2644 = vunpack.c.l.b16 %v1044
    %v2645 = vunpack.c.l.b16 %v1045
    %v2646 = vunpack.c.l.b16 %v1046
    %v2647 = vunpack.c.l.b16 %v1047
    %v2648 = vunpack.c.l.b16 %v1048
    %v2649 = vunpack.c.l.b16 %v1049
    %v2650 = vunpack.c.l.b16 %v1050
    %v2651 = vunpack.c.l.b16 %v1051
    %v2652 = vunpack.c.l.b16 %v1052
    %v2653 = vpack.c.b16 %v2590, %v2589
    %v2654 = vpack.c.b16 %v2592, %v2591
    %v2655 = vpack.c.b16 %v2594, %v2593
    %v2656 = vpack.c.b16 %v2596, %v2595
    %v2657 = vpack.c.b16 %v2598, %v2597
    %v2658 = vpack.c.b16 %v2600, %v2599
    %v2659 = vpack.c.b16 %v2602, %v2601
    %v2660 = vpack.c.b16 %v2604, %v2603
    %v2661 = vpack.c.b16 %v2606, %v2605
    %v2662 = vpack.c.b16 %v2608, %v2607
    %v2663 = vpack.c.b16 %v2610, %v2609
    %v2664 = vpack.c.b16 %v2612, %v2611
    %v2665 = vpack.c.b16 %v2614, %v2613
    %v2666 = vpack.c.b16 %v2616, %v2615
    %v2667 = vpack.c.b16 %v2618, %v2617
    %v2668 = vpack.c.b16 %v2620, %v2619
    %v2669 = vpack.c.b16 %v2622, %v2621
    %v2670 = vpack.c.b16 %v2624, %v2623
    %v2671 = vpack.c.b16 %v2626, %v2625
    %v2672 = vpack.c.b16 %v2628, %v2627
    %v2673 = vpack.c.b16 %v2630, %v2629
    %v2674 = vpack.c.b16 %v2632, %v2631
    %v2675 = vpack.c.b16 %v2634, %v2633
    %v2676 = vpack.c.b16 %v2636, %v2635
    %v2677 = vpack.c.b16 %v2638, %v2637
    %v2678 = vpack.c.b16 %v2640, %v2639
    %v2679 = vpack.c.b16 %v2642, %v2641
    %v2680 = vpack.c.b16 %v2644, %v2643
    %v2681 = vpack.c.b16 %v2646, %v2645
    %v2682 = vpack.c.b16 %v2648, %v2647
    %v2683 = vpack.c.b16 %v2650, %v2649
    %v2684 = vpack.c.b16 %v2652, %v2651
    %v2781 = vunpack.c.l.b16 %v1117
    %v2782 = vunpack.c.l.b16 %v1118
    %v2783 = vunpack.c.l.b16 %v1119
    %v2784 = vunpack.c.l.b16 %v1120
    %v2785 = vunpack.c.l.b16 %v1121
    %v2786 = vunpack.c.l.b16 %v1122
    %v2787 = vunpack.c.l.b16 %v1123
    %v2788 = vunpack.c.l.b16 %v1124
    %v2789 = vunpack.c.l.b16 %v1125
    %v2790 = vunpack.c.l.b16 %v1126
    %v2791 = vunpack.c.l.b16 %v1127
    %v2792 = vunpack.c.l.b16 %v1128
    %v2793 = vunpack.c.l.b16 %v1129
    %v2794 = vunpack.c.l.b16 %v1130
    %v2795 = vunpack.c.l.b16 %v1131
    %v2796 = vunpack.c.l.b16 %v1132
    %v2797 = vunpack.c.l.b16 %v1133
    %v2798 = vunpack.c.l.b16 %v1134
    %v2799 = vunpack.c.l.b16 %v1135
    %v2800 = vunpack.c.l.b16 %v1136
    %v2801 = vunpack.c.l.b16 %v1137
    %v2802 = vunpack.c.l.b16 %v1138
    %v2803 = vunpack.c.l.b16 %v1139
    %v2804 = vunpack.c.l.b16 %v1140
    %v2805 = vunpack.c.l.b16 %v1141
    %v2806 = vunpack.c.l.b16 %v1142
    %v2807 = vunpack.c.l.b16 %v1143
    %v2808 = vunpack.c.l.b16 %v1144
    %v2809 = vunpack.c.l.b16 %v1145
    %v2810 = vunpack.c.l.b16 %v1146
    %v2811 = vunpack.c.l.b16 %v1147
    %v2812 = vunpack.c.l.b16 %v1148
    %v2813 = vunpack.c.l.b16 %v1149
    %v2814 = vunpack.c.l.b16 %v1150
    %v2815 = vunpack.c.l.b16 %v1151
    %v2816 = vunpack.c.l.b16 %v1152
    %v2817 = vunpack.c.l.b16 %v1153
    %v2818 = vunpack.c.l.b16 %v1154
    %v2819 = vunpack.c.l.b16 %v1155
    %v2820 = vunpack.c.l.b16 %v1156
    %v2821 = vunpack.c.l.b16 %v1157
    %v2822 = vunpack.c.l.b16 %v1158
    %v2823 = vunpack.c.l.b16 %v1159
    %v2824 = vunpack.c.l.b16 %v1160
    %v2825 = vunpack.c.l.b16 %v1161
    %v2826 = vunpack.c.l.b16 %v1162
    %v2827 = vunpack.c.l.b16 %v1163
    %v2828 = vunpack.c.l.b16 %v1164
    %v2829 = vunpack.c.l.b16 %v1165
    %v2830 = vunpack.c.l.b16 %v1166
    %v2831 = vunpack.c.l.b16 %v1167
    %v2832 = vunpack.c.l.b16 %v1168
    %v2833 = vunpack.c.l.b16 %v1169
    %v2834 = vunpack.c.l.b16 %v1170
    %v2835 = vunpack.c.l.b16 %v1171
    %v2836 = vunpack.c.l.b16 %v1172
    %v2837 = vunpack.c.l.b16 %v1173
    %v2838 = vunpack.c.l.b16 %v1174
    %v2839 = vunpack.c.l.b16 %v1175
    %v2840 = vunpack.c.l.b16 %v1176
    %v2841 = vunpack.c.l.b16 %v1177
    %v2842 = vunpack.c.l.b16 %v1178
    %v2843 = vunpack.c.l.b16 %v1179
    %v2844 = vunpack.c.l.b16 %v1180
    %v2845 = vpack.c.b16 %v2782, %v2781
    %v2846 = vpack.c.b16 %v2784, %v2783
    %v2847 = vpack.c.b16 %v2786, %v2785
    %v2848 = vpack.c.b16 %v2788, %v2787
    %v2849 = vpack.c.b16 %v2790, %v2789
    %v2850 = vpack.c.b16 %v2792, %v2791
    %v2851 = vpack.c.b16 %v2794, %v2793
    %v2852 = vpack.c.b16 %v2796, %v2795
    %v2853 = vpack.c.b16 %v2798, %v2797
    %v2854 = vpack.c.b16 %v2800, %v2799
    %v2855 = vpack.c.b16 %v2802, %v2801
    %v2856 = vpack.c.b16 %v2804, %v2803
    %v2857 = vpack.c.b16 %v2806, %v2805
    %v2858 = vpack.c.b16 %v2808, %v2807
    %v2859 = vpack.c.b16 %v2810, %v2809
    %v2860 = vpack.c.b16 %v2812, %v2811
    %v2861 = vpack.c.b16 %v2814, %v2813
    %v2862 = vpack.c.b16 %v2816, %v2815
    %v2863 = vpack.c.b16 %v2818, %v2817
    %v2864 = vpack.c.b16 %v2820, %v2819
    %v2865 = vpack.c.b16 %v2822, %v2821
    %v2866 = vpack.c.b16 %v2824, %v2823
    %v2867 = vpack.c.b16 %v2826, %v2825
    %v2868 = vpack.c.b16 %v2828, %v2827
    %v2869 = vpack.c.b16 %v2830, %v2829
    %v2870 = vpack.c.b16 %v2832, %v2831
    %v2871 = vpack.c.b16 %v2834, %v2833
    %v2872 = vpack.c.b16 %v2836, %v2835
    %v2873 = vpack.c.b16 %v2838, %v2837
    %v2874 = vpack.c.b16 %v2840, %v2839
    %v2875 = vpack.c.b16 %v2842, %v2841
    %v2876 = vpack.c.b16 %v2844, %v2843
    %v2909 = vld [vmem:[%s1] sm:$0xf]
    %v2910 = vld [vmem:[%s1 + $0x4] sm:$0xf]
    %v2911 = vld [vmem:[%s1 + $0x8] sm:$0xf]
    %v2912 = vld [vmem:[%s1 + $0xc] sm:$0xf]
    %v2913 = vld [vmem:[%s1 + $0x10] sm:$0xf]
    %v2914 = vld [vmem:[%s1 + $0x14] sm:$0xf]
    %v2915 = vld [vmem:[%s1 + $0x18] sm:$0xf]
    %v2916 = vld [vmem:[%s1 + $0x1c] sm:$0xf]
    %v2917 = vld [vmem:[%s1 + $0x20] sm:$0xf]
    %v2918 = vld [vmem:[%s1 + $0x24] sm:$0xf]
    %v2919 = vld [vmem:[%s1 + $0x28] sm:$0xf]
    %v2920 = vld [vmem:[%s1 + $0x2c] sm:$0xf]
    %v2921 = vld [vmem:[%s1 + $0x30] sm:$0xf]
    %v2922 = vld [vmem:[%s1 + $0x34] sm:$0xf]
    %v2923 = vld [vmem:[%s1 + $0x38] sm:$0xf]
    %v2924 = vld [vmem:[%s1 + $0x3c] sm:$0xf]
    %v2925 = vld [vmem:[%s1 + $0x40] sm:$0xf]
    %v2926 = vld [vmem:[%s1 + $0x44] sm:$0xf]
    %v2927 = vld [vmem:[%s1 + $0x48] sm:$0xf]
    %v2928 = vld [vmem:[%s1 + $0x4c] sm:$0xf]
    %v2929 = vld [vmem:[%s1 + $0x50] sm:$0xf]
    %v2930 = vld [vmem:[%s1 + $0x54] sm:$0xf]
    %v2931 = vld [vmem:[%s1 + $0x58] sm:$0xf]
    %v2932 = vld [vmem:[%s1 + $0x5c] sm:$0xf]
    %v2933 = vld [vmem:[%s1 + $0x60] sm:$0xf]
    %v2934 = vld [vmem:[%s1 + $0x64] sm:$0xf]
    %v2935 = vld [vmem:[%s1 + $0x68] sm:$0xf]
    %v2936 = vld [vmem:[%s1 + $0x6c] sm:$0xf]
    %v2937 = vld [vmem:[%s1 + $0x70] sm:$0xf]
    %v2938 = vld [vmem:[%s1 + $0x74] sm:$0xf]
    %v2939 = vld [vmem:[%s1 + $0x78] sm:$0xf]
    %v2940 = vld [vmem:[%s1 + $0x7c] sm:$0xf]
    %v2941 = vld [vmem:[%s1 + $0x80] sm:$0xf]
    %v2942 = vld [vmem:[%s1 + $0x84] sm:$0xf]
    %v2943 = vld [vmem:[%s1 + $0x88] sm:$0xf]
    %v2944 = vld [vmem:[%s1 + $0x8c] sm:$0xf]
    %v2945 = vld [vmem:[%s1 + $0x90] sm:$0xf]
    %v2946 = vld [vmem:[%s1 + $0x94] sm:$0xf]
    %v2947 = vld [vmem:[%s1 + $0x98] sm:$0xf]
    %v2948 = vld [vmem:[%s1 + $0x9c] sm:$0xf]
    %v2949 = vld [vmem:[%s1 + $0xa0] sm:$0xf]
    %v2950 = vld [vmem:[%s1 + $0xa4] sm:$0xf]
    %v2951 = vld [vmem:[%s1 + $0xa8] sm:$0xf]
    %v2952 = vld [vmem:[%s1 + $0xac] sm:$0xf]
    %v2953 = vld [vmem:[%s1 + $0xb0] sm:$0xf]
    %v2954 = vld [vmem:[%s1 + $0xb4] sm:$0xf]
    %v2955 = vld [vmem:[%s1 + $0xb8] sm:$0xf]
    %v2956 = vld [vmem:[%s1 + $0xbc] sm:$0xf]
    %v2957 = vld [vmem:[%s1 + $0xc0] sm:$0xf]
    %v2958 = vld [vmem:[%s1 + $0xc4] sm:$0xf]
    %v2959 = vld [vmem:[%s1 + $0xc8] sm:$0xf]
    %v2960 = vld [vmem:[%s1 + $0xcc] sm:$0xf]
    %v2961 = vld [vmem:[%s1 + $0xd0] sm:$0xf]
    %v2962 = vld [vmem:[%s1 + $0xd4] sm:$0xf]
    %v2963 = vld [vmem:[%s1 + $0xd8] sm:$0xf]
    %v2964 = vld [vmem:[%s1 + $0xdc] sm:$0xf]
    %v2965 = vld [vmem:[%s1 + $0xe0] sm:$0xf]
    %v2966 = vld [vmem:[%s1 + $0xe4] sm:$0xf]
    %v2967 = vld [vmem:[%s1 + $0xe8] sm:$0xf]
    %v2968 = vld [vmem:[%s1 + $0xec] sm:$0xf]
    %v2969 = vld [vmem:[%s1 + $0xf0] sm:$0xf]
    %v2970 = vld [vmem:[%s1 + $0xf4] sm:$0xf]
    %v2971 = vld [vmem:[%s1 + $0xf8] sm:$0xf]
    %v2972 = vld [vmem:[%s1 + $0xfc] sm:$0xf]
    %v2973 = vld [vmem:[%s1 + $0x100] sm:$0xf]
    %v2974 = vld [vmem:[%s1 + $0x104] sm:$0xf]
    %v2975 = vld [vmem:[%s1 + $0x108] sm:$0xf]
    %v2976 = vld [vmem:[%s1 + $0x10c] sm:$0xf]
    %v2977 = vld [vmem:[%s1 + $0x110] sm:$0xf]
    %v2978 = vld [vmem:[%s1 + $0x114] sm:$0xf]
    %v2979 = vld [vmem:[%s1 + $0x118] sm:$0xf]
    %v2980 = vld [vmem:[%s1 + $0x11c] sm:$0xf]
    %v2981 = vld [vmem:[%s1 + $0x120] sm:$0xf]
    %v2982 = vld [vmem:[%s1 + $0x124] sm:$0xf]
    %v2983 = vld [vmem:[%s1 + $0x128] sm:$0xf]
    %v2984 = vld [vmem:[%s1 + $0x12c] sm:$0xf]
    %v2985 = vld [vmem:[%s1 + $0x130] sm:$0xf]
    %v2986 = vld [vmem:[%s1 + $0x134] sm:$0xf]
    %v2987 = vld [vmem:[%s1 + $0x138] sm:$0xf]
    %v2988 = vld [vmem:[%s1 + $0x13c] sm:$0xf]
    %v2989 = vld [vmem:[%s1 + $0x140] sm:$0xf]
    %v2990 = vld [vmem:[%s1 + $0x144] sm:$0xf]
    %v2991 = vld [vmem:[%s1 + $0x148] sm:$0xf]
    %v2992 = vld [vmem:[%s1 + $0x14c] sm:$0xf]
    %v2993 = vld [vmem:[%s1 + $0x150] sm:$0xf]
    %v2994 = vld [vmem:[%s1 + $0x154] sm:$0xf]
    %v2995 = vld [vmem:[%s1 + $0x158] sm:$0xf]
    %v2996 = vld [vmem:[%s1 + $0x15c] sm:$0xf]
    %v2997 = vld [vmem:[%s1 + $0x160] sm:$0xf]
    %v2998 = vld [vmem:[%s1 + $0x164] sm:$0xf]
    %v2999 = vld [vmem:[%s1 + $0x168] sm:$0xf]
    %v3000 = vld [vmem:[%s1 + $0x16c] sm:$0xf]
    %v3001 = vld [vmem:[%s1 + $0x170] sm:$0xf]
    %v3002 = vld [vmem:[%s1 + $0x174] sm:$0xf]
    %v3003 = vld [vmem:[%s1 + $0x178] sm:$0xf]
    %v3004 = vld [vmem:[%s1 + $0x17c] sm:$0xf]
    %v3005 = vld [vmem:[%s1 + $0x180] sm:$0xf]
    %v3006 = vld [vmem:[%s1 + $0x184] sm:$0xf]
    %v3007 = vld [vmem:[%s1 + $0x188] sm:$0xf]
    %v3008 = vld [vmem:[%s1 + $0x18c] sm:$0xf]
    %v3009 = vld [vmem:[%s1 + $0x190] sm:$0xf]
    %v3010 = vld [vmem:[%s1 + $0x194] sm:$0xf]
    %v3011 = vld [vmem:[%s1 + $0x198] sm:$0xf]
    %v3012 = vld [vmem:[%s1 + $0x19c] sm:$0xf]
    %v3013 = vld [vmem:[%s1 + $0x1a0] sm:$0xf]
    %v3014 = vld [vmem:[%s1 + $0x1a4] sm:$0xf]
    %v3015 = vld [vmem:[%s1 + $0x1a8] sm:$0xf]
    %v3016 = vld [vmem:[%s1 + $0x1ac] sm:$0xf]
    %v3017 = vld [vmem:[%s1 + $0x1b0] sm:$0xf]
    %v3018 = vld [vmem:[%s1 + $0x1b4] sm:$0xf]
    %v3019 = vld [vmem:[%s1 + $0x1b8] sm:$0xf]
    %v3020 = vld [vmem:[%s1 + $0x1bc] sm:$0xf]
    %v3021 = vld [vmem:[%s1 + $0x1c0] sm:$0xf]
    %v3022 = vld [vmem:[%s1 + $0x1c4] sm:$0xf]
    %v3023 = vld [vmem:[%s1 + $0x1c8] sm:$0xf]
    %v3024 = vld [vmem:[%s1 + $0x1cc] sm:$0xf]
    %v3025 = vld [vmem:[%s1 + $0x1d0] sm:$0xf]
    %v3026 = vld [vmem:[%s1 + $0x1d4] sm:$0xf]
    %v3027 = vld [vmem:[%s1 + $0x1d8] sm:$0xf]
    %v3028 = vld [vmem:[%s1 + $0x1dc] sm:$0xf]
    %v3029 = vld [vmem:[%s1 + $0x1e0] sm:$0xf]
    %v3030 = vld [vmem:[%s1 + $0x1e4] sm:$0xf]
    %v3031 = vld [vmem:[%s1 + $0x1e8] sm:$0xf]
    %v3032 = vld [vmem:[%s1 + $0x1ec] sm:$0xf]
    %v3033 = vld [vmem:[%s1 + $0x1f0] sm:$0xf]
    %v3034 = vld [vmem:[%s1 + $0x1f4] sm:$0xf]
    %v3035 = vld [vmem:[%s1 + $0x1f8] sm:$0xf]
    %v3036 = vld [vmem:[%s1 + $0x1fc] sm:$0xf]
    %v3037 = vld [vmem:[%s1 + $0x200] sm:$0xf]
    %v3038 = vld [vmem:[%s1 + $0x204] sm:$0xf]
    %v3039 = vld [vmem:[%s1 + $0x208] sm:$0xf]
    %v3040 = vld [vmem:[%s1 + $0x20c] sm:$0xf]
    %v3041 = vld [vmem:[%s1 + $0x210] sm:$0xf]
    %v3042 = vld [vmem:[%s1 + $0x214] sm:$0xf]
    %v3043 = vld [vmem:[%s1 + $0x218] sm:$0xf]
    %v3044 = vld [vmem:[%s1 + $0x21c] sm:$0xf]
    %v3045 = vld [vmem:[%s1 + $0x220] sm:$0xf]
    %v3046 = vld [vmem:[%s1 + $0x224] sm:$0xf]
    %v3047 = vld [vmem:[%s1 + $0x228] sm:$0xf]
    %v3048 = vld [vmem:[%s1 + $0x22c] sm:$0xf]
    %v3049 = vld [vmem:[%s1 + $0x230] sm:$0xf]
    %v3050 = vld [vmem:[%s1 + $0x234] sm:$0xf]
    %v3051 = vld [vmem:[%s1 + $0x238] sm:$0xf]
    %v3052 = vld [vmem:[%s1 + $0x23c] sm:$0xf]
    %v3197 = vunpack.c.l.b16 %v2909
    %v3198 = vunpack.c.l.b16 %v2910
    %v3199 = vunpack.c.l.b16 %v2911
    %v3200 = vunpack.c.l.b16 %v2912
    %v3201 = vunpack.c.l.b16 %v2913
    %v3202 = vunpack.c.l.b16 %v2914
    %v3203 = vunpack.c.l.b16 %v2915
    %v3204 = vunpack.c.l.b16 %v2916
    %v3205 = vunpack.c.l.b16 %v2917
    %v3206 = vunpack.c.l.b16 %v2918
    %v3207 = vunpack.c.l.b16 %v2919
    %v3208 = vunpack.c.l.b16 %v2920
    %v3209 = vunpack.c.l.b16 %v2921
    %v3210 = vunpack.c.l.b16 %v2922
    %v3211 = vunpack.c.l.b16 %v2923
    %v3212 = vunpack.c.l.b16 %v2924
    %v3213 = vunpack.c.l.b16 %v2925
    %v3214 = vunpack.c.l.b16 %v2926
    %v3215 = vunpack.c.l.b16 %v2927
    %v3216 = vunpack.c.l.b16 %v2928
    %v3217 = vunpack.c.l.b16 %v2929
    %v3218 = vunpack.c.l.b16 %v2930
    %v3219 = vunpack.c.l.b16 %v2931
    %v3220 = vunpack.c.l.b16 %v2932
    %v3221 = vunpack.c.l.b16 %v2933
    %v3222 = vunpack.c.l.b16 %v2934
    %v3223 = vunpack.c.l.b16 %v2935
    %v3224 = vunpack.c.l.b16 %v2936
    %v3225 = vunpack.c.l.b16 %v2937
    %v3226 = vunpack.c.l.b16 %v2938
    %v3227 = vunpack.c.l.b16 %v2939
    %v3228 = vunpack.c.l.b16 %v2940
    %v3229 = vunpack.c.l.b16 %v2941
    %v3230 = vunpack.c.l.b16 %v2942
    %v3231 = vunpack.c.l.b16 %v2943
    %v3232 = vunpack.c.l.b16 %v2944
    %v3233 = vunpack.c.l.b16 %v2945
    %v3234 = vunpack.c.l.b16 %v2946
    %v3235 = vunpack.c.l.b16 %v2947
    %v3236 = vunpack.c.l.b16 %v2948
    %v3237 = vunpack.c.l.b16 %v2949
    %v3238 = vunpack.c.l.b16 %v2950
    %v3239 = vunpack.c.l.b16 %v2951
    %v3240 = vunpack.c.l.b16 %v2952
    %v3241 = vunpack.c.l.b16 %v2953
    %v3242 = vunpack.c.l.b16 %v2954
    %v3243 = vunpack.c.l.b16 %v2955
    %v3244 = vunpack.c.l.b16 %v2956
    %v3245 = vunpack.c.l.b16 %v2957
    %v3246 = vunpack.c.l.b16 %v2958
    %v3247 = vunpack.c.l.b16 %v2959
    %v3248 = vunpack.c.l.b16 %v2960
    %v3249 = vunpack.c.l.b16 %v2961
    %v3250 = vunpack.c.l.b16 %v2962
    %v3251 = vunpack.c.l.b16 %v2963
    %v3252 = vunpack.c.l.b16 %v2964
    %v3253 = vunpack.c.l.b16 %v2965
    %v3254 = vunpack.c.l.b16 %v2966
    %v3255 = vunpack.c.l.b16 %v2967
    %v3256 = vunpack.c.l.b16 %v2968
    %v3257 = vunpack.c.l.b16 %v2969
    %v3258 = vunpack.c.l.b16 %v2970
    %v3259 = vunpack.c.l.b16 %v2971
    %v3260 = vunpack.c.l.b16 %v2972
    %v3261 = vunpack.c.l.b16 %v2973
    %v3262 = vunpack.c.l.b16 %v2974
    %v3263 = vunpack.c.l.b16 %v2975
    %v3264 = vunpack.c.l.b16 %v2976
    %v3265 = vunpack.c.l.b16 %v2977
    %v3266 = vunpack.c.l.b16 %v2978
    %v3267 = vunpack.c.l.b16 %v2979
    %v3268 = vunpack.c.l.b16 %v2980
    %v3269 = vunpack.c.l.b16 %v2981
    %v3270 = vunpack.c.l.b16 %v2982
    %v3271 = vunpack.c.l.b16 %v2983
    %v3272 = vunpack.c.l.b16 %v2984
    %v3273 = vunpack.c.l.b16 %v2985
    %v3274 = vunpack.c.l.b16 %v2986
    %v3275 = vunpack.c.l.b16 %v2987
    %v3276 = vunpack.c.l.b16 %v2988
    %v3277 = vunpack.c.l.b16 %v2989
    %v3278 = vunpack.c.l.b16 %v2990
    %v3279 = vunpack.c.l.b16 %v2991
    %v3280 = vunpack.c.l.b16 %v2992
    %v3281 = vunpack.c.l.b16 %v2993
    %v3282 = vunpack.c.l.b16 %v2994
    %v3283 = vunpack.c.l.b16 %v2995
    %v3284 = vunpack.c.l.b16 %v2996
    %v3285 = vunpack.c.l.b16 %v2997
    %v3286 = vunpack.c.l.b16 %v2998
    %v3287 = vunpack.c.l.b16 %v2999
    %v3288 = vunpack.c.l.b16 %v3000
    %v3289 = vunpack.c.l.b16 %v3001
    %v3290 = vunpack.c.l.b16 %v3002
    %v3291 = vunpack.c.l.b16 %v3003
    %v3292 = vunpack.c.l.b16 %v3004
    %v3293 = vunpack.c.l.b16 %v3005
    %v3294 = vunpack.c.l.b16 %v3006
    %v3295 = vunpack.c.l.b16 %v3007
    %v3296 = vunpack.c.l.b16 %v3008
    %v3297 = vunpack.c.l.b16 %v3009
    %v3298 = vunpack.c.l.b16 %v3010
    %v3299 = vunpack.c.l.b16 %v3011
    %v3300 = vunpack.c.l.b16 %v3012
    %v3301 = vunpack.c.l.b16 %v3013
    %v3302 = vunpack.c.l.b16 %v3014
    %v3303 = vunpack.c.l.b16 %v3015
    %v3304 = vunpack.c.l.b16 %v3016
    %v3305 = vunpack.c.l.b16 %v3017
    %v3306 = vunpack.c.l.b16 %v3018
    %v3307 = vunpack.c.l.b16 %v3019
    %v3308 = vunpack.c.l.b16 %v3020
    %v3309 = vunpack.c.l.b16 %v3021
    %v3310 = vunpack.c.l.b16 %v3022
    %v3311 = vunpack.c.l.b16 %v3023
    %v3312 = vunpack.c.l.b16 %v3024
    %v3313 = vunpack.c.l.b16 %v3025
    %v3314 = vunpack.c.l.b16 %v3026
    %v3315 = vunpack.c.l.b16 %v3027
    %v3316 = vunpack.c.l.b16 %v3028
    %v3317 = vunpack.c.l.b16 %v3029
    %v3318 = vunpack.c.l.b16 %v3030
    %v3319 = vunpack.c.l.b16 %v3031
    %v3320 = vunpack.c.l.b16 %v3032
    %v3321 = vunpack.c.l.b16 %v3033
    %v3322 = vunpack.c.l.b16 %v3034
    %v3323 = vunpack.c.l.b16 %v3035
    %v3324 = vunpack.c.l.b16 %v3036
    %v3325 = vunpack.c.l.b16 %v3037
    %v3326 = vunpack.c.l.b16 %v3038
    %v3327 = vunpack.c.l.b16 %v3039
    %v3328 = vunpack.c.l.b16 %v3040
    %v3329 = vunpack.c.l.b16 %v3041
    %v3330 = vunpack.c.l.b16 %v3042
    %v3331 = vunpack.c.l.b16 %v3043
    %v3332 = vunpack.c.l.b16 %v3044
    %v3333 = vunpack.c.l.b16 %v3045
    %v3334 = vunpack.c.l.b16 %v3046
    %v3335 = vunpack.c.l.b16 %v3047
    %v3336 = vunpack.c.l.b16 %v3048
    %v3337 = vunpack.c.l.b16 %v3049
    %v3338 = vunpack.c.l.b16 %v3050
    %v3339 = vunpack.c.l.b16 %v3051
    %v3340 = vunpack.c.l.b16 %v3052
    %v3341 = vpack.c.b16 %v3198, %v3197
    %v3342 = vpack.c.b16 %v3200, %v3199
    %v3343 = vpack.c.b16 %v3202, %v3201
    %v3344 = vpack.c.b16 %v3204, %v3203
    %v3345 = vpack.c.b16 %v3206, %v3205
    %v3346 = vpack.c.b16 %v3208, %v3207
    %v3347 = vpack.c.b16 %v3210, %v3209
    %v3348 = vpack.c.b16 %v3212, %v3211
    %v3349 = vpack.c.b16 %v3214, %v3213
    %v3350 = vpack.c.b16 %v3216, %v3215
    %v3351 = vpack.c.b16 %v3218, %v3217
    %v3352 = vpack.c.b16 %v3220, %v3219
    %v3353 = vpack.c.b16 %v3222, %v3221
    %v3354 = vpack.c.b16 %v3224, %v3223
    %v3355 = vpack.c.b16 %v3226, %v3225
    %v3356 = vpack.c.b16 %v3228, %v3227
    %v3357 = vpack.c.b16 %v3230, %v3229
    %v3358 = vpack.c.b16 %v3232, %v3231
    %v3359 = vpack.c.b16 %v3234, %v3233
    %v3360 = vpack.c.b16 %v3236, %v3235
    %v3361 = vpack.c.b16 %v3238, %v3237
    %v3362 = vpack.c.b16 %v3240, %v3239
    %v3363 = vpack.c.b16 %v3242, %v3241
    %v3364 = vpack.c.b16 %v3244, %v3243
    %v3365 = vpack.c.b16 %v3246, %v3245
    %v3366 = vpack.c.b16 %v3248, %v3247
    %v3367 = vpack.c.b16 %v3250, %v3249
    %v3368 = vpack.c.b16 %v3252, %v3251
    %v3369 = vpack.c.b16 %v3254, %v3253
    %v3370 = vpack.c.b16 %v3256, %v3255
    %v3371 = vpack.c.b16 %v3258, %v3257
    %v3372 = vpack.c.b16 %v3260, %v3259
    %v3373 = vpack.c.b16 %v3262, %v3261
    %v3374 = vpack.c.b16 %v3264, %v3263
    %v3375 = vpack.c.b16 %v3266, %v3265
    %v3376 = vpack.c.b16 %v3268, %v3267
    %v3377 = vpack.c.b16 %v3270, %v3269
    %v3378 = vpack.c.b16 %v3272, %v3271
    %v3379 = vpack.c.b16 %v3274, %v3273
    %v3380 = vpack.c.b16 %v3276, %v3275
    %v3381 = vpack.c.b16 %v3278, %v3277
    %v3382 = vpack.c.b16 %v3280, %v3279
    %v3383 = vpack.c.b16 %v3282, %v3281
    %v3384 = vpack.c.b16 %v3284, %v3283
    %v3385 = vpack.c.b16 %v3286, %v3285
    %v3386 = vpack.c.b16 %v3288, %v3287
    %v3387 = vpack.c.b16 %v3290, %v3289
    %v3388 = vpack.c.b16 %v3292, %v3291
    %v3389 = vpack.c.b16 %v3294, %v3293
    %v3390 = vpack.c.b16 %v3296, %v3295
    %v3391 = vpack.c.b16 %v3298, %v3297
    %v3392 = vpack.c.b16 %v3300, %v3299
    %v3393 = vpack.c.b16 %v3302, %v3301
    %v3394 = vpack.c.b16 %v3304, %v3303
    %v3395 = vpack.c.b16 %v3306, %v3305
    %v3396 = vpack.c.b16 %v3308, %v3307
    %v3397 = vpack.c.b16 %v3310, %v3309
    %v3398 = vpack.c.b16 %v3312, %v3311
    %v3399 = vpack.c.b16 %v3314, %v3313
    %v3400 = vpack.c.b16 %v3316, %v3315
    %v3401 = vpack.c.b16 %v3318, %v3317
    %v3402 = vpack.c.b16 %v3320, %v3319
    %v3403 = vpack.c.b16 %v3322, %v3321
    %v3404 = vpack.c.b16 %v3324, %v3323
    %v3405 = vpack.c.b16 %v3326, %v3325
    %v3406 = vpack.c.b16 %v3328, %v3327
    %v3407 = vpack.c.b16 %v3330, %v3329
    %v3408 = vpack.c.b16 %v3332, %v3331
    %v3409 = vpack.c.b16 %v3334, %v3333
    %v3410 = vpack.c.b16 %v3336, %v3335
    %v3411 = vpack.c.b16 %v3338, %v3337
    %v3412 = vpack.c.b16 %v3340, %v3339
    %3485 = vmatpush.bf16.msra.mxu0 %v3348
    %3486 = vmatpush.bf16.msra.mxu0 %v3347
    %3487 = vmatpush.bf16.msra.mxu0 %v3346
    %3488 = vmatpush.bf16.msra.mxu0 %v3345
    %3489 = vmatpush.bf16.msra.mxu0 %v3344
    %3490 = vmatpush.bf16.msra.mxu0 %v3343
    %3491 = vmatpush.bf16.msra.mxu0 %v3342
    %3492 = vmatpush.bf16.msra.mxu0 %v3341
    %3493 = vmatmul.bf16.gmra.mxu0 %v1309
    %v3494 = vpop.f32.mrf.mxu0
    %v3495 = vadd.f32 0.0, %v3494
    %v3496 = vpop.f32.mrf.mxu0
    %v3497 = vadd.f32 0.0, %v3496
    %3498 = vmatmul.bf16.gmra.mxu0 %v1310
    %v3499 = vpop.f32.mrf.mxu0
    %v3500 = vadd.f32 0.0, %v3499
    %v3501 = vpop.f32.mrf.mxu0
    %v3502 = vadd.f32 0.0, %v3501
    %3503 = vmatmul.bf16.gmra.mxu0 %v1311
    %v3504 = vpop.f32.mrf.mxu0
    %v3505 = vadd.f32 0.0, %v3504
    %v3506 = vpop.f32.mrf.mxu0
    %v3507 = vadd.f32 0.0, %v3506
    %3508 = vmatmul.bf16.gmra.mxu0 %v1312
    %v3509 = vpop.f32.mrf.mxu0
    %v3510 = vadd.f32 0.0, %v3509
    %v3511 = vpop.f32.mrf.mxu0
    %v3512 = vadd.f32 0.0, %v3511
    %3513 = vmatmul.bf16.gmra.mxu0 %v1313
    %v3514 = vpop.f32.mrf.mxu0
    %v3515 = vadd.f32 0.0, %v3514
    %v3516 = vpop.f32.mrf.mxu0
    %v3517 = vadd.f32 0.0, %v3516
    %3518 = vmatmul.bf16.gmra.mxu0 %v1314
    %v3519 = vpop.f32.mrf.mxu0
    %v3520 = vadd.f32 0.0, %v3519
    %v3521 = vpop.f32.mrf.mxu0
    %v3522 = vadd.f32 0.0, %v3521
    %3523 = vmatmul.bf16.gmra.mxu0 %v1315
    %v3524 = vpop.f32.mrf.mxu0
    %v3525 = vadd.f32 0.0, %v3524
    %v3526 = vpop.f32.mrf.mxu0
    %v3527 = vadd.f32 0.0, %v3526
    %3528 = vmatmul.bf16.gmra.mxu0 %v1316
    %v3529 = vpop.f32.mrf.mxu0
    %v3530 = vadd.f32 0.0, %v3529
    %v3531 = vpop.f32.mrf.mxu0
    %v3532 = vadd.f32 0.0, %v3531
    %3533 = vmatmul.bf16.gmra.mxu0 %v1317
    %v3534 = vpop.f32.mrf.mxu0
    %v3535 = vadd.f32 0.0, %v3534
    %v3536 = vpop.f32.mrf.mxu0
    %v3537 = vadd.f32 0.0, %v3536
    %3538 = vmatmul.bf16.gmra.mxu0 %v1318
    %v3539 = vpop.f32.mrf.mxu0
    %v3540 = vadd.f32 0.0, %v3539
    %v3541 = vpop.f32.mrf.mxu0
    %v3542 = vadd.f32 0.0, %v3541
    %3543 = vmatmul.bf16.gmra.mxu0 %v1319
    %v3544 = vpop.f32.mrf.mxu0
    %v3545 = vadd.f32 0.0, %v3544
    %v3546 = vpop.f32.mrf.mxu0
    %v3547 = vadd.f32 0.0, %v3546
    %3548 = vmatmul.bf16.gmra.mxu0 %v1320
    %v3549 = vpop.f32.mrf.mxu0
    %v3550 = vadd.f32 0.0, %v3549
    %v3551 = vpop.f32.mrf.mxu0
    %v3552 = vadd.f32 0.0, %v3551
    %3553 = vmatmul.bf16.gmra.mxu0 %v1321
    %v3554 = vpop.f32.mrf.mxu0
    %v3555 = vadd.f32 0.0, %v3554
    %v3556 = vpop.f32.mrf.mxu0
    %v3557 = vadd.f32 0.0, %v3556
    %3558 = vmatmul.bf16.gmra.mxu0 %v1322
    %v3559 = vpop.f32.mrf.mxu0
    %v3560 = vadd.f32 0.0, %v3559
    %v3561 = vpop.f32.mrf.mxu0
    %v3562 = vadd.f32 0.0, %v3561
    %3563 = vmatmul.bf16.gmra.mxu0 %v1323
    %v3564 = vpop.f32.mrf.mxu0
    %v3565 = vadd.f32 0.0, %v3564
    %v3566 = vpop.f32.mrf.mxu0
    %v3567 = vadd.f32 0.0, %v3566
    %3568 = vmatmul.bf16.gmra.mxu0 %v1324
    %v3569 = vpop.f32.mrf.mxu0
    %v3570 = vadd.f32 0.0, %v3569
    %v3571 = vpop.f32.mrf.mxu0
    %v3572 = vadd.f32 0.0, %v3571
    %3573 = vmatmul.bf16.gmra.mxu0 %v1325
    %v3574 = vpop.f32.mrf.mxu0
    %v3575 = vadd.f32 0.0, %v3574
    %v3576 = vpop.f32.mrf.mxu0
    %v3577 = vadd.f32 0.0, %v3576
    %3578 = vmatmul.bf16.gmra.mxu0 %v1326
    %v3579 = vpop.f32.mrf.mxu0
    %v3580 = vadd.f32 0.0, %v3579
    %v3581 = vpop.f32.mrf.mxu0
    %v3582 = vadd.f32 0.0, %v3581
    %3583 = vmatmul.bf16.gmra.mxu0 %v1327
    %v3584 = vpop.f32.mrf.mxu0
    %v3585 = vadd.f32 0.0, %v3584
    %v3586 = vpop.f32.mrf.mxu0
    %v3587 = vadd.f32 0.0, %v3586
    %3588 = vmatmul.bf16.gmra.mxu0 %v1328
    %v3589 = vpop.f32.mrf.mxu0
    %v3590 = vadd.f32 0.0, %v3589
    %v3591 = vpop.f32.mrf.mxu0
    %v3592 = vadd.f32 0.0, %v3591
    %3593 = vmatmul.bf16.gmra.mxu0 %v1329
    %v3594 = vpop.f32.mrf.mxu0
    %v3595 = vadd.f32 0.0, %v3594
    %v3596 = vpop.f32.mrf.mxu0
    %v3597 = vadd.f32 0.0, %v3596
    %3598 = vmatmul.bf16.gmra.mxu0 %v1330
    %v3599 = vpop.f32.mrf.mxu0
    %v3600 = vadd.f32 0.0, %v3599
    %v3601 = vpop.f32.mrf.mxu0
    %v3602 = vadd.f32 0.0, %v3601
    %3603 = vmatmul.bf16.gmra.mxu0 %v1331
    %v3604 = vpop.f32.mrf.mxu0
    %v3605 = vadd.f32 0.0, %v3604
    %v3606 = vpop.f32.mrf.mxu0
    %v3607 = vadd.f32 0.0, %v3606
    %3608 = vmatmul.bf16.gmra.mxu0 %v1332
    %v3609 = vpop.f32.mrf.mxu0
    %v3610 = vadd.f32 0.0, %v3609
    %v3611 = vpop.f32.mrf.mxu0
    %v3612 = vadd.f32 0.0, %v3611
    %3613 = vmatmul.bf16.gmra.mxu0 %v1333
    %v3614 = vpop.f32.mrf.mxu0
    %v3615 = vadd.f32 0.0, %v3614
    %v3616 = vpop.f32.mrf.mxu0
    %v3617 = vadd.f32 0.0, %v3616
    %3618 = vmatmul.bf16.gmra.mxu0 %v1334
    %v3619 = vpop.f32.mrf.mxu0
    %v3620 = vadd.f32 0.0, %v3619
    %v3621 = vpop.f32.mrf.mxu0
    %v3622 = vadd.f32 0.0, %v3621
    %3623 = vmatmul.bf16.gmra.mxu0 %v1335
    %v3624 = vpop.f32.mrf.mxu0
    %v3625 = vadd.f32 0.0, %v3624
    %v3626 = vpop.f32.mrf.mxu0
    %v3627 = vadd.f32 0.0, %v3626
    %3628 = vmatmul.bf16.gmra.mxu0 %v1336
    %v3629 = vpop.f32.mrf.mxu0
    %v3630 = vadd.f32 0.0, %v3629
    %v3631 = vpop.f32.mrf.mxu0
    %v3632 = vadd.f32 0.0, %v3631
    %3633 = vmatmul.bf16.gmra.mxu0 %v1337
    %v3634 = vpop.f32.mrf.mxu0
    %v3635 = vadd.f32 0.0, %v3634
    %v3636 = vpop.f32.mrf.mxu0
    %v3637 = vadd.f32 0.0, %v3636
    %3638 = vmatmul.bf16.gmra.mxu0 %v1338
    %v3639 = vpop.f32.mrf.mxu0
    %v3640 = vadd.f32 0.0, %v3639
    %v3641 = vpop.f32.mrf.mxu0
    %v3642 = vadd.f32 0.0, %v3641
    %3643 = vmatmul.bf16.gmra.mxu0 %v1339
    %v3644 = vpop.f32.mrf.mxu0
    %v3645 = vadd.f32 0.0, %v3644
    %v3646 = vpop.f32.mrf.mxu0
    %v3647 = vadd.f32 0.0, %v3646
    %3648 = vmatmul.bf16.gmra.mxu0 %v1340
    %v3649 = vpop.f32.mrf.mxu0
    %v3650 = vadd.f32 0.0, %v3649
    %v3651 = vpop.f32.mrf.mxu0
    %v3652 = vadd.f32 0.0, %v3651
    %3653 = vdwg.mxu0
    %3654 = vmatpush.bf16.msra.mxu0 %v3356
    %3655 = vmatpush.bf16.msra.mxu0 %v3355
    %3656 = vmatpush.bf16.msra.mxu0 %v3354
    %3657 = vmatpush.bf16.msra.mxu0 %v3353
    %3658 = vmatpush.bf16.msra.mxu0 %v3352
    %3659 = vmatpush.bf16.msra.mxu0 %v3351
    %3660 = vmatpush.bf16.msra.mxu0 %v3350
    %3661 = vmatpush.bf16.msra.mxu0 %v3349
    %3662 = vmatmul.bf16.gmra.mxu0 %v1501
    %v3663 = vpop.f32.mrf.mxu0
    %v3664 = vadd.f32 %v3495, %v3663
    %v3665 = vpop.f32.mrf.mxu0
    %v3666 = vadd.f32 %v3497, %v3665
    %3667 = vmatmul.bf16.gmra.mxu0 %v1502
    %v3668 = vpop.f32.mrf.mxu0
    %v3669 = vadd.f32 %v3500, %v3668
    %v3670 = vpop.f32.mrf.mxu0
    %v3671 = vadd.f32 %v3502, %v3670
    %3672 = vmatmul.bf16.gmra.mxu0 %v1503
    %v3673 = vpop.f32.mrf.mxu0
    %v3674 = vadd.f32 %v3505, %v3673
    %v3675 = vpop.f32.mrf.mxu0
    %v3676 = vadd.f32 %v3507, %v3675
    %3677 = vmatmul.bf16.gmra.mxu0 %v1504
    %v3678 = vpop.f32.mrf.mxu0
    %v3679 = vadd.f32 %v3510, %v3678
    %v3680 = vpop.f32.mrf.mxu0
    %v3681 = vadd.f32 %v3512, %v3680
    %3682 = vmatmul.bf16.gmra.mxu0 %v1505
    %v3683 = vpop.f32.mrf.mxu0
    %v3684 = vadd.f32 %v3515, %v3683
    %v3685 = vpop.f32.mrf.mxu0
    %v3686 = vadd.f32 %v3517, %v3685
    %3687 = vmatmul.bf16.gmra.mxu0 %v1506
    %v3688 = vpop.f32.mrf.mxu0
    %v3689 = vadd.f32 %v3520, %v3688
    %v3690 = vpop.f32.mrf.mxu0
    %v3691 = vadd.f32 %v3522, %v3690
    %3692 = vmatmul.bf16.gmra.mxu0 %v1507
    %v3693 = vpop.f32.mrf.mxu0
    %v3694 = vadd.f32 %v3525, %v3693
    %v3695 = vpop.f32.mrf.mxu0
    %v3696 = vadd.f32 %v3527, %v3695
    %3697 = vmatmul.bf16.gmra.mxu0 %v1508
    %v3698 = vpop.f32.mrf.mxu0
    %v3699 = vadd.f32 %v3530, %v3698
    %v3700 = vpop.f32.mrf.mxu0
    %v3701 = vadd.f32 %v3532, %v3700
    %3702 = vmatmul.bf16.gmra.mxu0 %v1509
    %v3703 = vpop.f32.mrf.mxu0
    %v3704 = vadd.f32 %v3535, %v3703
    %v3705 = vpop.f32.mrf.mxu0
    %v3706 = vadd.f32 %v3537, %v3705
    %3707 = vmatmul.bf16.gmra.mxu0 %v1510
    %v3708 = vpop.f32.mrf.mxu0
    %v3709 = vadd.f32 %v3540, %v3708
    %v3710 = vpop.f32.mrf.mxu0
    %v3711 = vadd.f32 %v3542, %v3710
    %3712 = vmatmul.bf16.gmra.mxu0 %v1511
    %v3713 = vpop.f32.mrf.mxu0
    %v3714 = vadd.f32 %v3545, %v3713
    %v3715 = vpop.f32.mrf.mxu0
    %v3716 = vadd.f32 %v3547, %v3715
    %3717 = vmatmul.bf16.gmra.mxu0 %v1512
    %v3718 = vpop.f32.mrf.mxu0
    %v3719 = vadd.f32 %v3550, %v3718
    %v3720 = vpop.f32.mrf.mxu0
    %v3721 = vadd.f32 %v3552, %v3720
    %3722 = vmatmul.bf16.gmra.mxu0 %v1513
    %v3723 = vpop.f32.mrf.mxu0
    %v3724 = vadd.f32 %v3555, %v3723
    %v3725 = vpop.f32.mrf.mxu0
    %v3726 = vadd.f32 %v3557, %v3725
    %3727 = vmatmul.bf16.gmra.mxu0 %v1514
    %v3728 = vpop.f32.mrf.mxu0
    %v3729 = vadd.f32 %v3560, %v3728
    %v3730 = vpop.f32.mrf.mxu0
    %v3731 = vadd.f32 %v3562, %v3730
    %3732 = vmatmul.bf16.gmra.mxu0 %v1515
    %v3733 = vpop.f32.mrf.mxu0
    %v3734 = vadd.f32 %v3565, %v3733
    %v3735 = vpop.f32.mrf.mxu0
    %v3736 = vadd.f32 %v3567, %v3735
    %3737 = vmatmul.bf16.gmra.mxu0 %v1516
    %v3738 = vpop.f32.mrf.mxu0
    %v3739 = vadd.f32 %v3570, %v3738
    %v3740 = vpop.f32.mrf.mxu0
    %v3741 = vadd.f32 %v3572, %v3740
    %3742 = vmatmul.bf16.gmra.mxu0 %v1517
    %v3743 = vpop.f32.mrf.mxu0
    %v3744 = vadd.f32 %v3575, %v3743
    %v3745 = vpop.f32.mrf.mxu0
    %v3746 = vadd.f32 %v3577, %v3745
    %3747 = vmatmul.bf16.gmra.mxu0 %v1518
    %v3748 = vpop.f32.mrf.mxu0
    %v3749 = vadd.f32 %v3580, %v3748
    %v3750 = vpop.f32.mrf.mxu0
    %v3751 = vadd.f32 %v3582, %v3750
    %3752 = vmatmul.bf16.gmra.mxu0 %v1519
    %v3753 = vpop.f32.mrf.mxu0
    %v3754 = vadd.f32 %v3585, %v3753
    %v3755 = vpop.f32.mrf.mxu0
    %v3756 = vadd.f32 %v3587, %v3755
    %3757 = vmatmul.bf16.gmra.mxu0 %v1520
    %v3758 = vpop.f32.mrf.mxu0
    %v3759 = vadd.f32 %v3590, %v3758
    %v3760 = vpop.f32.mrf.mxu0
    %v3761 = vadd.f32 %v3592, %v3760
    %3762 = vmatmul.bf16.gmra.mxu0 %v1521
    %v3763 = vpop.f32.mrf.mxu0
    %v3764 = vadd.f32 %v3595, %v3763
    %v3765 = vpop.f32.mrf.mxu0
    %v3766 = vadd.f32 %v3597, %v3765
    %3767 = vmatmul.bf16.gmra.mxu0 %v1522
    %v3768 = vpop.f32.mrf.mxu0
    %v3769 = vadd.f32 %v3600, %v3768
    %v3770 = vpop.f32.mrf.mxu0
    %v3771 = vadd.f32 %v3602, %v3770
    %3772 = vmatmul.bf16.gmra.mxu0 %v1523
    %v3773 = vpop.f32.mrf.mxu0
    %v3774 = vadd.f32 %v3605, %v3773
    %v3775 = vpop.f32.mrf.mxu0
    %v3776 = vadd.f32 %v3607, %v3775
    %3777 = vmatmul.bf16.gmra.mxu0 %v1524
    %v3778 = vpop.f32.mrf.mxu0
    %v3779 = vadd.f32 %v3610, %v3778
    %v3780 = vpop.f32.mrf.mxu0
    %v3781 = vadd.f32 %v3612, %v3780
    %3782 = vmatmul.bf16.gmra.mxu0 %v1525
    %v3783 = vpop.f32.mrf.mxu0
    %v3784 = vadd.f32 %v3615, %v3783
    %v3785 = vpop.f32.mrf.mxu0
    %v3786 = vadd.f32 %v3617, %v3785
    %3787 = vmatmul.bf16.gmra.mxu0 %v1526
    %v3788 = vpop.f32.mrf.mxu0
    %v3789 = vadd.f32 %v3620, %v3788
    %v3790 = vpop.f32.mrf.mxu0
    %v3791 = vadd.f32 %v3622, %v3790
    %3792 = vmatmul.bf16.gmra.mxu0 %v1527
    %v3793 = vpop.f32.mrf.mxu0
    %v3794 = vadd.f32 %v3625, %v3793
    %v3795 = vpop.f32.mrf.mxu0
    %v3796 = vadd.f32 %v3627, %v3795
    %3797 = vmatmul.bf16.gmra.mxu0 %v1528
    %v3798 = vpop.f32.mrf.mxu0
    %v3799 = vadd.f32 %v3630, %v3798
    %v3800 = vpop.f32.mrf.mxu0
    %v3801 = vadd.f32 %v3632, %v3800
    %3802 = vmatmul.bf16.gmra.mxu0 %v1529
    %v3803 = vpop.f32.mrf.mxu0
    %v3804 = vadd.f32 %v3635, %v3803
    %v3805 = vpop.f32.mrf.mxu0
    %v3806 = vadd.f32 %v3637, %v3805
    %3807 = vmatmul.bf16.gmra.mxu0 %v1530
    %v3808 = vpop.f32.mrf.mxu0
    %v3809 = vadd.f32 %v3640, %v3808
    %v3810 = vpop.f32.mrf.mxu0
    %v3811 = vadd.f32 %v3642, %v3810
    %3812 = vmatmul.bf16.gmra.mxu0 %v1531
    %v3813 = vpop.f32.mrf.mxu0
    %v3814 = vadd.f32 %v3645, %v3813
    %v3815 = vpop.f32.mrf.mxu0
    %v3816 = vadd.f32 %v3647, %v3815
    %3817 = vmatmul.bf16.gmra.mxu0 %v1532
    %v3818 = vpop.f32.mrf.mxu0
    %v3819 = vadd.f32 %v3650, %v3818
    %v3820 = vpop.f32.mrf.mxu0
    %v3821 = vadd.f32 %v3652, %v3820
    %3822 = vdwg.mxu0
    %3823 = vmatpush.bf16.msra.mxu0 %v3364
    %3824 = vmatpush.bf16.msra.mxu0 %v3363
    %3825 = vmatpush.bf16.msra.mxu0 %v3362
    %3826 = vmatpush.bf16.msra.mxu0 %v3361
    %3827 = vmatpush.bf16.msra.mxu0 %v3360
    %3828 = vmatpush.bf16.msra.mxu0 %v3359
    %3829 = vmatpush.bf16.msra.mxu0 %v3358
    %3830 = vmatpush.bf16.msra.mxu0 %v3357
    %3831 = vmatmul.bf16.gmra.mxu0 %v1693
    %v3832 = vpop.f32.mrf.mxu0
    %v3833 = vadd.f32 %v3664, %v3832
    %v3834 = vpop.f32.mrf.mxu0
    %v3835 = vadd.f32 %v3666, %v3834
    %3836 = vmatmul.bf16.gmra.mxu0 %v1694
    %v3837 = vpop.f32.mrf.mxu0
    %v3838 = vadd.f32 %v3669, %v3837
    %v3839 = vpop.f32.mrf.mxu0
    %v3840 = vadd.f32 %v3671, %v3839
    %3841 = vmatmul.bf16.gmra.mxu0 %v1695
    %v3842 = vpop.f32.mrf.mxu0
    %v3843 = vadd.f32 %v3674, %v3842
    %v3844 = vpop.f32.mrf.mxu0
    %v3845 = vadd.f32 %v3676, %v3844
    %3846 = vmatmul.bf16.gmra.mxu0 %v1696
    %v3847 = vpop.f32.mrf.mxu0
    %v3848 = vadd.f32 %v3679, %v3847
    %v3849 = vpop.f32.mrf.mxu0
    %v3850 = vadd.f32 %v3681, %v3849
    %3851 = vmatmul.bf16.gmra.mxu0 %v1697
    %v3852 = vpop.f32.mrf.mxu0
    %v3853 = vadd.f32 %v3684, %v3852
    %v3854 = vpop.f32.mrf.mxu0
    %v3855 = vadd.f32 %v3686, %v3854
    %3856 = vmatmul.bf16.gmra.mxu0 %v1698
    %v3857 = vpop.f32.mrf.mxu0
    %v3858 = vadd.f32 %v3689, %v3857
    %v3859 = vpop.f32.mrf.mxu0
    %v3860 = vadd.f32 %v3691, %v3859
    %3861 = vmatmul.bf16.gmra.mxu0 %v1699
    %v3862 = vpop.f32.mrf.mxu0
    %v3863 = vadd.f32 %v3694, %v3862
    %v3864 = vpop.f32.mrf.mxu0
    %v3865 = vadd.f32 %v3696, %v3864
    %3866 = vmatmul.bf16.gmra.mxu0 %v1700
    %v3867 = vpop.f32.mrf.mxu0
    %v3868 = vadd.f32 %v3699, %v3867
    %v3869 = vpop.f32.mrf.mxu0
    %v3870 = vadd.f32 %v3701, %v3869
    %3871 = vmatmul.bf16.gmra.mxu0 %v1701
    %v3872 = vpop.f32.mrf.mxu0
    %v3873 = vadd.f32 %v3704, %v3872
    %v3874 = vpop.f32.mrf.mxu0
    %v3875 = vadd.f32 %v3706, %v3874
    %3876 = vmatmul.bf16.gmra.mxu0 %v1702
    %v3877 = vpop.f32.mrf.mxu0
    %v3878 = vadd.f32 %v3709, %v3877
    %v3879 = vpop.f32.mrf.mxu0
    %v3880 = vadd.f32 %v3711, %v3879
    %3881 = vmatmul.bf16.gmra.mxu0 %v1703
    %v3882 = vpop.f32.mrf.mxu0
    %v3883 = vadd.f32 %v3714, %v3882
    %v3884 = vpop.f32.mrf.mxu0
    %v3885 = vadd.f32 %v3716, %v3884
    %3886 = vmatmul.bf16.gmra.mxu0 %v1704
    %v3887 = vpop.f32.mrf.mxu0
    %v3888 = vadd.f32 %v3719, %v3887
    %v3889 = vpop.f32.mrf.mxu0
    %v3890 = vadd.f32 %v3721, %v3889
    %3891 = vmatmul.bf16.gmra.mxu0 %v1705
    %v3892 = vpop.f32.mrf.mxu0
    %v3893 = vadd.f32 %v3724, %v3892
    %v3894 = vpop.f32.mrf.mxu0
    %v3895 = vadd.f32 %v3726, %v3894
    %3896 = vmatmul.bf16.gmra.mxu0 %v1706
    %v3897 = vpop.f32.mrf.mxu0
    %v3898 = vadd.f32 %v3729, %v3897
    %v3899 = vpop.f32.mrf.mxu0
    %v3900 = vadd.f32 %v3731, %v3899
    %3901 = vmatmul.bf16.gmra.mxu0 %v1707
    %v3902 = vpop.f32.mrf.mxu0
    %v3903 = vadd.f32 %v3734, %v3902
    %v3904 = vpop.f32.mrf.mxu0
    %v3905 = vadd.f32 %v3736, %v3904
    %3906 = vmatmul.bf16.gmra.mxu0 %v1708
    %v3907 = vpop.f32.mrf.mxu0
    %v3908 = vadd.f32 %v3739, %v3907
    %v3909 = vpop.f32.mrf.mxu0
    %v3910 = vadd.f32 %v3741, %v3909
    %3911 = vmatmul.bf16.gmra.mxu0 %v1709
    %v3912 = vpop.f32.mrf.mxu0
    %v3913 = vadd.f32 %v3744, %v3912
    %v3914 = vpop.f32.mrf.mxu0
    %v3915 = vadd.f32 %v3746, %v3914
    %3916 = vmatmul.bf16.gmra.mxu0 %v1710
    %v3917 = vpop.f32.mrf.mxu0
    %v3918 = vadd.f32 %v3749, %v3917
    %v3919 = vpop.f32.mrf.mxu0
    %v3920 = vadd.f32 %v3751, %v3919
    %3921 = vmatmul.bf16.gmra.mxu0 %v1711
    %v3922 = vpop.f32.mrf.mxu0
    %v3923 = vadd.f32 %v3754, %v3922
    %v3924 = vpop.f32.mrf.mxu0
    %v3925 = vadd.f32 %v3756, %v3924
    %3926 = vmatmul.bf16.gmra.mxu0 %v1712
    %v3927 = vpop.f32.mrf.mxu0
    %v3928 = vadd.f32 %v3759, %v3927
    %v3929 = vpop.f32.mrf.mxu0
    %v3930 = vadd.f32 %v3761, %v3929
    %3931 = vmatmul.bf16.gmra.mxu0 %v1713
    %v3932 = vpop.f32.mrf.mxu0
    %v3933 = vadd.f32 %v3764, %v3932
    %v3934 = vpop.f32.mrf.mxu0
    %v3935 = vadd.f32 %v3766, %v3934
    %3936 = vmatmul.bf16.gmra.mxu0 %v1714
    %v3937 = vpop.f32.mrf.mxu0
    %v3938 = vadd.f32 %v3769, %v3937
    %v3939 = vpop.f32.mrf.mxu0
    %v3940 = vadd.f32 %v3771, %v3939
    %3941 = vmatmul.bf16.gmra.mxu0 %v1715
    %v3942 = vpop.f32.mrf.mxu0
    %v3943 = vadd.f32 %v3774, %v3942
    %v3944 = vpop.f32.mrf.mxu0
    %v3945 = vadd.f32 %v3776, %v3944
    %3946 = vmatmul.bf16.gmra.mxu0 %v1716
    %v3947 = vpop.f32.mrf.mxu0
    %v3948 = vadd.f32 %v3779, %v3947
    %v3949 = vpop.f32.mrf.mxu0
    %v3950 = vadd.f32 %v3781, %v3949
    %3951 = vmatmul.bf16.gmra.mxu0 %v1717
    %v3952 = vpop.f32.mrf.mxu0
    %v3953 = vadd.f32 %v3784, %v3952
    %v3954 = vpop.f32.mrf.mxu0
    %v3955 = vadd.f32 %v3786, %v3954
    %3956 = vmatmul.bf16.gmra.mxu0 %v1718
    %v3957 = vpop.f32.mrf.mxu0
    %v3958 = vadd.f32 %v3789, %v3957
    %v3959 = vpop.f32.mrf.mxu0
    %v3960 = vadd.f32 %v3791, %v3959
    %3961 = vmatmul.bf16.gmra.mxu0 %v1719
    %v3962 = vpop.f32.mrf.mxu0
    %v3963 = vadd.f32 %v3794, %v3962
    %v3964 = vpop.f32.mrf.mxu0
    %v3965 = vadd.f32 %v3796, %v3964
    %3966 = vmatmul.bf16.gmra.mxu0 %v1720
    %v3967 = vpop.f32.mrf.mxu0
    %v3968 = vadd.f32 %v3799, %v3967
    %v3969 = vpop.f32.mrf.mxu0
    %v3970 = vadd.f32 %v3801, %v3969
    %3971 = vmatmul.bf16.gmra.mxu0 %v1721
    %v3972 = vpop.f32.mrf.mxu0
    %v3973 = vadd.f32 %v3804, %v3972
    %v3974 = vpop.f32.mrf.mxu0
    %v3975 = vadd.f32 %v3806, %v3974
    %3976 = vmatmul.bf16.gmra.mxu0 %v1722
    %v3977 = vpop.f32.mrf.mxu0
    %v3978 = vadd.f32 %v3809, %v3977
    %v3979 = vpop.f32.mrf.mxu0
    %v3980 = vadd.f32 %v3811, %v3979
    %3981 = vmatmul.bf16.gmra.mxu0 %v1723
    %v3982 = vpop.f32.mrf.mxu0
    %v3983 = vadd.f32 %v3814, %v3982
    %v3984 = vpop.f32.mrf.mxu0
    %v3985 = vadd.f32 %v3816, %v3984
    %3986 = vmatmul.bf16.gmra.mxu0 %v1724
    %v3987 = vpop.f32.mrf.mxu0
    %v3988 = vadd.f32 %v3819, %v3987
    %v3989 = vpop.f32.mrf.mxu0
    %v3990 = vadd.f32 %v3821, %v3989
    %3991 = vdwg.mxu0
    %3992 = vmatpush.bf16.msra.mxu0 %v3372
    %3993 = vmatpush.bf16.msra.mxu0 %v3371
    %3994 = vmatpush.bf16.msra.mxu0 %v3370
    %3995 = vmatpush.bf16.msra.mxu0 %v3369
    %3996 = vmatpush.bf16.msra.mxu0 %v3368
    %3997 = vmatpush.bf16.msra.mxu0 %v3367
    %3998 = vmatpush.bf16.msra.mxu0 %v3366
    %3999 = vmatpush.bf16.msra.mxu0 %v3365
    %4000 = vmatmul.bf16.gmra.mxu0 %v1885
    %v4001 = vpop.f32.mrf.mxu0
    %v4002 = vadd.f32 %v3833, %v4001
    %v4003 = vpop.f32.mrf.mxu0
    %v4004 = vadd.f32 %v3835, %v4003
    %4005 = vmatmul.bf16.gmra.mxu0 %v1886
    %v4006 = vpop.f32.mrf.mxu0
    %v4007 = vadd.f32 %v3838, %v4006
    %v4008 = vpop.f32.mrf.mxu0
    %v4009 = vadd.f32 %v3840, %v4008
    %4010 = vmatmul.bf16.gmra.mxu0 %v1887
    %v4011 = vpop.f32.mrf.mxu0
    %v4012 = vadd.f32 %v3843, %v4011
    %v4013 = vpop.f32.mrf.mxu0
    %v4014 = vadd.f32 %v3845, %v4013
    %4015 = vmatmul.bf16.gmra.mxu0 %v1888
    %v4016 = vpop.f32.mrf.mxu0
    %v4017 = vadd.f32 %v3848, %v4016
    %v4018 = vpop.f32.mrf.mxu0
    %v4019 = vadd.f32 %v3850, %v4018
    %4020 = vmatmul.bf16.gmra.mxu0 %v1889
    %v4021 = vpop.f32.mrf.mxu0
    %v4022 = vadd.f32 %v3853, %v4021
    %v4023 = vpop.f32.mrf.mxu0
    %v4024 = vadd.f32 %v3855, %v4023
    %4025 = vmatmul.bf16.gmra.mxu0 %v1890
    %v4026 = vpop.f32.mrf.mxu0
    %v4027 = vadd.f32 %v3858, %v4026
    %v4028 = vpop.f32.mrf.mxu0
    %v4029 = vadd.f32 %v3860, %v4028
    %4030 = vmatmul.bf16.gmra.mxu0 %v1891
    %v4031 = vpop.f32.mrf.mxu0
    %v4032 = vadd.f32 %v3863, %v4031
    %v4033 = vpop.f32.mrf.mxu0
    %v4034 = vadd.f32 %v3865, %v4033
    %4035 = vmatmul.bf16.gmra.mxu0 %v1892
    %v4036 = vpop.f32.mrf.mxu0
    %v4037 = vadd.f32 %v3868, %v4036
    %v4038 = vpop.f32.mrf.mxu0
    %v4039 = vadd.f32 %v3870, %v4038
    %4040 = vmatmul.bf16.gmra.mxu0 %v1893
    %v4041 = vpop.f32.mrf.mxu0
    %v4042 = vadd.f32 %v3873, %v4041
    %v4043 = vpop.f32.mrf.mxu0
    %v4044 = vadd.f32 %v3875, %v4043
    %4045 = vmatmul.bf16.gmra.mxu0 %v1894
    %v4046 = vpop.f32.mrf.mxu0
    %v4047 = vadd.f32 %v3878, %v4046
    %v4048 = vpop.f32.mrf.mxu0
    %v4049 = vadd.f32 %v3880, %v4048
    %4050 = vmatmul.bf16.gmra.mxu0 %v1895
    %v4051 = vpop.f32.mrf.mxu0
    %v4052 = vadd.f32 %v3883, %v4051
    %v4053 = vpop.f32.mrf.mxu0
    %v4054 = vadd.f32 %v3885, %v4053
    %4055 = vmatmul.bf16.gmra.mxu0 %v1896
    %v4056 = vpop.f32.mrf.mxu0
    %v4057 = vadd.f32 %v3888, %v4056
    %v4058 = vpop.f32.mrf.mxu0
    %v4059 = vadd.f32 %v3890, %v4058
    %4060 = vmatmul.bf16.gmra.mxu0 %v1897
    %v4061 = vpop.f32.mrf.mxu0
    %v4062 = vadd.f32 %v3893, %v4061
    %v4063 = vpop.f32.mrf.mxu0
    %v4064 = vadd.f32 %v3895, %v4063
    %4065 = vmatmul.bf16.gmra.mxu0 %v1898
    %v4066 = vpop.f32.mrf.mxu0
    %v4067 = vadd.f32 %v3898, %v4066
    %v4068 = vpop.f32.mrf.mxu0
    %v4069 = vadd.f32 %v3900, %v4068
    %4070 = vmatmul.bf16.gmra.mxu0 %v1899
    %v4071 = vpop.f32.mrf.mxu0
    %v4072 = vadd.f32 %v3903, %v4071
    %v4073 = vpop.f32.mrf.mxu0
    %v4074 = vadd.f32 %v3905, %v4073
    %4075 = vmatmul.bf16.gmra.mxu0 %v1900
    %v4076 = vpop.f32.mrf.mxu0
    %v4077 = vadd.f32 %v3908, %v4076
    %v4078 = vpop.f32.mrf.mxu0
    %v4079 = vadd.f32 %v3910, %v4078
    %4080 = vmatmul.bf16.gmra.mxu0 %v1901
    %v4081 = vpop.f32.mrf.mxu0
    %v4082 = vadd.f32 %v3913, %v4081
    %v4083 = vpop.f32.mrf.mxu0
    %v4084 = vadd.f32 %v3915, %v4083
    %4085 = vmatmul.bf16.gmra.mxu0 %v1902
    %v4086 = vpop.f32.mrf.mxu0
    %v4087 = vadd.f32 %v3918, %v4086
    %v4088 = vpop.f32.mrf.mxu0
    %v4089 = vadd.f32 %v3920, %v4088
    %4090 = vmatmul.bf16.gmra.mxu0 %v1903
    %v4091 = vpop.f32.mrf.mxu0
    %v4092 = vadd.f32 %v3923, %v4091
    %v4093 = vpop.f32.mrf.mxu0
    %v4094 = vadd.f32 %v3925, %v4093
    %4095 = vmatmul.bf16.gmra.mxu0 %v1904
    %v4096 = vpop.f32.mrf.mxu0
    %v4097 = vadd.f32 %v3928, %v4096
    %v4098 = vpop.f32.mrf.mxu0
    %v4099 = vadd.f32 %v3930, %v4098
    %4100 = vmatmul.bf16.gmra.mxu0 %v1905
    %v4101 = vpop.f32.mrf.mxu0
    %v4102 = vadd.f32 %v3933, %v4101
    %v4103 = vpop.f32.mrf.mxu0
    %v4104 = vadd.f32 %v3935, %v4103
    %4105 = vmatmul.bf16.gmra.mxu0 %v1906
    %v4106 = vpop.f32.mrf.mxu0
    %v4107 = vadd.f32 %v3938, %v4106
    %v4108 = vpop.f32.mrf.mxu0
    %v4109 = vadd.f32 %v3940, %v4108
    %4110 = vmatmul.bf16.gmra.mxu0 %v1907
    %v4111 = vpop.f32.mrf.mxu0
    %v4112 = vadd.f32 %v3943, %v4111
    %v4113 = vpop.f32.mrf.mxu0
    %v4114 = vadd.f32 %v3945, %v4113
    %4115 = vmatmul.bf16.gmra.mxu0 %v1908
    %v4116 = vpop.f32.mrf.mxu0
    %v4117 = vadd.f32 %v3948, %v4116
    %v4118 = vpop.f32.mrf.mxu0
    %v4119 = vadd.f32 %v3950, %v4118
    %4120 = vmatmul.bf16.gmra.mxu0 %v1909
    %v4121 = vpop.f32.mrf.mxu0
    %v4122 = vadd.f32 %v3953, %v4121
    %v4123 = vpop.f32.mrf.mxu0
    %v4124 = vadd.f32 %v3955, %v4123
    %4125 = vmatmul.bf16.gmra.mxu0 %v1910
    %v4126 = vpop.f32.mrf.mxu0
    %v4127 = vadd.f32 %v3958, %v4126
    %v4128 = vpop.f32.mrf.mxu0
    %v4129 = vadd.f32 %v3960, %v4128
    %4130 = vmatmul.bf16.gmra.mxu0 %v1911
    %v4131 = vpop.f32.mrf.mxu0
    %v4132 = vadd.f32 %v3963, %v4131
    %v4133 = vpop.f32.mrf.mxu0
    %v4134 = vadd.f32 %v3965, %v4133
    %4135 = vmatmul.bf16.gmra.mxu0 %v1912
    %v4136 = vpop.f32.mrf.mxu0
    %v4137 = vadd.f32 %v3968, %v4136
    %v4138 = vpop.f32.mrf.mxu0
    %v4139 = vadd.f32 %v3970, %v4138
    %4140 = vmatmul.bf16.gmra.mxu0 %v1913
    %v4141 = vpop.f32.mrf.mxu0
    %v4142 = vadd.f32 %v3973, %v4141
    %v4143 = vpop.f32.mrf.mxu0
    %v4144 = vadd.f32 %v3975, %v4143
    %4145 = vmatmul.bf16.gmra.mxu0 %v1914
    %v4146 = vpop.f32.mrf.mxu0
    %v4147 = vadd.f32 %v3978, %v4146
    %v4148 = vpop.f32.mrf.mxu0
    %v4149 = vadd.f32 %v3980, %v4148
    %4150 = vmatmul.bf16.gmra.mxu0 %v1915
    %v4151 = vpop.f32.mrf.mxu0
    %v4152 = vadd.f32 %v3983, %v4151
    %v4153 = vpop.f32.mrf.mxu0
    %v4154 = vadd.f32 %v3985, %v4153
    %4155 = vmatmul.bf16.gmra.mxu0 %v1916
    %v4156 = vpop.f32.mrf.mxu0
    %v4157 = vadd.f32 %v3988, %v4156
    %v4158 = vpop.f32.mrf.mxu0
    %v4159 = vadd.f32 %v3990, %v4158
    %4160 = vdwg.mxu0
    %4161 = vmatpush.bf16.msra.mxu0 %v3380
    %4162 = vmatpush.bf16.msra.mxu0 %v3379
    %4163 = vmatpush.bf16.msra.mxu0 %v3378
    %4164 = vmatpush.bf16.msra.mxu0 %v3377
    %4165 = vmatpush.bf16.msra.mxu0 %v3376
    %4166 = vmatpush.bf16.msra.mxu0 %v3375
    %4167 = vmatpush.bf16.msra.mxu0 %v3374
    %4168 = vmatpush.bf16.msra.mxu0 %v3373
    %4169 = vmatmul.bf16.gmra.mxu0 %v2077
    %v4170 = vpop.f32.mrf.mxu0
    %v4171 = vadd.f32 %v4002, %v4170
    %v4172 = vpop.f32.mrf.mxu0
    %v4173 = vadd.f32 %v4004, %v4172
    %4174 = vmatmul.bf16.gmra.mxu0 %v2078
    %v4175 = vpop.f32.mrf.mxu0
    %v4176 = vadd.f32 %v4007, %v4175
    %v4177 = vpop.f32.mrf.mxu0
    %v4178 = vadd.f32 %v4009, %v4177
    %4179 = vmatmul.bf16.gmra.mxu0 %v2079
    %v4180 = vpop.f32.mrf.mxu0
    %v4181 = vadd.f32 %v4012, %v4180
    %v4182 = vpop.f32.mrf.mxu0
    %v4183 = vadd.f32 %v4014, %v4182
    %4184 = vmatmul.bf16.gmra.mxu0 %v2080
    %v4185 = vpop.f32.mrf.mxu0
    %v4186 = vadd.f32 %v4017, %v4185
    %v4187 = vpop.f32.mrf.mxu0
    %v4188 = vadd.f32 %v4019, %v4187
    %4189 = vmatmul.bf16.gmra.mxu0 %v2081
    %v4190 = vpop.f32.mrf.mxu0
    %v4191 = vadd.f32 %v4022, %v4190
    %v4192 = vpop.f32.mrf.mxu0
    %v4193 = vadd.f32 %v4024, %v4192
    %4194 = vmatmul.bf16.gmra.mxu0 %v2082
    %v4195 = vpop.f32.mrf.mxu0
    %v4196 = vadd.f32 %v4027, %v4195
    %v4197 = vpop.f32.mrf.mxu0
    %v4198 = vadd.f32 %v4029, %v4197
    %4199 = vmatmul.bf16.gmra.mxu0 %v2083
    %v4200 = vpop.f32.mrf.mxu0
    %v4201 = vadd.f32 %v4032, %v4200
    %v4202 = vpop.f32.mrf.mxu0
    %v4203 = vadd.f32 %v4034, %v4202
    %4204 = vmatmul.bf16.gmra.mxu0 %v2084
    %v4205 = vpop.f32.mrf.mxu0
    %v4206 = vadd.f32 %v4037, %v4205
    %v4207 = vpop.f32.mrf.mxu0
    %v4208 = vadd.f32 %v4039, %v4207
    %4209 = vmatmul.bf16.gmra.mxu0 %v2085
    %v4210 = vpop.f32.mrf.mxu0
    %v4211 = vadd.f32 %v4042, %v4210
    %v4212 = vpop.f32.mrf.mxu0
    %v4213 = vadd.f32 %v4044, %v4212
    %4214 = vmatmul.bf16.gmra.mxu0 %v2086
    %v4215 = vpop.f32.mrf.mxu0
    %v4216 = vadd.f32 %v4047, %v4215
    %v4217 = vpop.f32.mrf.mxu0
    %v4218 = vadd.f32 %v4049, %v4217
    %4219 = vmatmul.bf16.gmra.mxu0 %v2087
    %v4220 = vpop.f32.mrf.mxu0
    %v4221 = vadd.f32 %v4052, %v4220
    %v4222 = vpop.f32.mrf.mxu0
    %v4223 = vadd.f32 %v4054, %v4222
    %4224 = vmatmul.bf16.gmra.mxu0 %v2088
    %v4225 = vpop.f32.mrf.mxu0
    %v4226 = vadd.f32 %v4057, %v4225
    %v4227 = vpop.f32.mrf.mxu0
    %v4228 = vadd.f32 %v4059, %v4227
    %4229 = vmatmul.bf16.gmra.mxu0 %v2089
    %v4230 = vpop.f32.mrf.mxu0
    %v4231 = vadd.f32 %v4062, %v4230
    %v4232 = vpop.f32.mrf.mxu0
    %v4233 = vadd.f32 %v4064, %v4232
    %4234 = vmatmul.bf16.gmra.mxu0 %v2090
    %v4235 = vpop.f32.mrf.mxu0
    %v4236 = vadd.f32 %v4067, %v4235
    %v4237 = vpop.f32.mrf.mxu0
    %v4238 = vadd.f32 %v4069, %v4237
    %4239 = vmatmul.bf16.gmra.mxu0 %v2091
    %v4240 = vpop.f32.mrf.mxu0
    %v4241 = vadd.f32 %v4072, %v4240
    %v4242 = vpop.f32.mrf.mxu0
    %v4243 = vadd.f32 %v4074, %v4242
    %4244 = vmatmul.bf16.gmra.mxu0 %v2092
    %v4245 = vpop.f32.mrf.mxu0
    %v4246 = vadd.f32 %v4077, %v4245
    %v4247 = vpop.f32.mrf.mxu0
    %v4248 = vadd.f32 %v4079, %v4247
    %4249 = vmatmul.bf16.gmra.mxu0 %v2093
    %v4250 = vpop.f32.mrf.mxu0
    %v4251 = vadd.f32 %v4082, %v4250
    %v4252 = vpop.f32.mrf.mxu0
    %v4253 = vadd.f32 %v4084, %v4252
    %4254 = vmatmul.bf16.gmra.mxu0 %v2094
    %v4255 = vpop.f32.mrf.mxu0
    %v4256 = vadd.f32 %v4087, %v4255
    %v4257 = vpop.f32.mrf.mxu0
    %v4258 = vadd.f32 %v4089, %v4257
    %4259 = vmatmul.bf16.gmra.mxu0 %v2095
    %v4260 = vpop.f32.mrf.mxu0
    %v4261 = vadd.f32 %v4092, %v4260
    %v4262 = vpop.f32.mrf.mxu0
    %v4263 = vadd.f32 %v4094, %v4262
    %4264 = vmatmul.bf16.gmra.mxu0 %v2096
    %v4265 = vpop.f32.mrf.mxu0
    %v4266 = vadd.f32 %v4097, %v4265
    %v4267 = vpop.f32.mrf.mxu0
    %v4268 = vadd.f32 %v4099, %v4267
    %4269 = vmatmul.bf16.gmra.mxu0 %v2097
    %v4270 = vpop.f32.mrf.mxu0
    %v4271 = vadd.f32 %v4102, %v4270
    %v4272 = vpop.f32.mrf.mxu0
    %v4273 = vadd.f32 %v4104, %v4272
    %4274 = vmatmul.bf16.gmra.mxu0 %v2098
    %v4275 = vpop.f32.mrf.mxu0
    %v4276 = vadd.f32 %v4107, %v4275
    %v4277 = vpop.f32.mrf.mxu0
    %v4278 = vadd.f32 %v4109, %v4277
    %4279 = vmatmul.bf16.gmra.mxu0 %v2099
    %v4280 = vpop.f32.mrf.mxu0
    %v4281 = vadd.f32 %v4112, %v4280
    %v4282 = vpop.f32.mrf.mxu0
    %v4283 = vadd.f32 %v4114, %v4282
    %4284 = vmatmul.bf16.gmra.mxu0 %v2100
    %v4285 = vpop.f32.mrf.mxu0
    %v4286 = vadd.f32 %v4117, %v4285
    %v4287 = vpop.f32.mrf.mxu0
    %v4288 = vadd.f32 %v4119, %v4287
    %4289 = vmatmul.bf16.gmra.mxu0 %v2101
    %v4290 = vpop.f32.mrf.mxu0
    %v4291 = vadd.f32 %v4122, %v4290
    %v4292 = vpop.f32.mrf.mxu0
    %v4293 = vadd.f32 %v4124, %v4292
    %4294 = vmatmul.bf16.gmra.mxu0 %v2102
    %v4295 = vpop.f32.mrf.mxu0
    %v4296 = vadd.f32 %v4127, %v4295
    %v4297 = vpop.f32.mrf.mxu0
    %v4298 = vadd.f32 %v4129, %v4297
    %4299 = vmatmul.bf16.gmra.mxu0 %v2103
    %v4300 = vpop.f32.mrf.mxu0
    %v4301 = vadd.f32 %v4132, %v4300
    %v4302 = vpop.f32.mrf.mxu0
    %v4303 = vadd.f32 %v4134, %v4302
    %4304 = vmatmul.bf16.gmra.mxu0 %v2104
    %v4305 = vpop.f32.mrf.mxu0
    %v4306 = vadd.f32 %v4137, %v4305
    %v4307 = vpop.f32.mrf.mxu0
    %v4308 = vadd.f32 %v4139, %v4307
    %4309 = vmatmul.bf16.gmra.mxu0 %v2105
    %v4310 = vpop.f32.mrf.mxu0
    %v4311 = vadd.f32 %v4142, %v4310
    %v4312 = vpop.f32.mrf.mxu0
    %v4313 = vadd.f32 %v4144, %v4312
    %4314 = vmatmul.bf16.gmra.mxu0 %v2106
    %v4315 = vpop.f32.mrf.mxu0
    %v4316 = vadd.f32 %v4147, %v4315
    %v4317 = vpop.f32.mrf.mxu0
    %v4318 = vadd.f32 %v4149, %v4317
    %4319 = vmatmul.bf16.gmra.mxu0 %v2107
    %v4320 = vpop.f32.mrf.mxu0
    %v4321 = vadd.f32 %v4152, %v4320
    %v4322 = vpop.f32.mrf.mxu0
    %v4323 = vadd.f32 %v4154, %v4322
    %4324 = vmatmul.bf16.gmra.mxu0 %v2108
    %v4325 = vpop.f32.mrf.mxu0
    %v4326 = vadd.f32 %v4157, %v4325
    %v4327 = vpop.f32.mrf.mxu0
    %v4328 = vadd.f32 %v4159, %v4327
    %4329 = vdwg.mxu0
    %4330 = vmatpush.bf16.msra.mxu0 %v3388
    %4331 = vmatpush.bf16.msra.mxu0 %v3387
    %4332 = vmatpush.bf16.msra.mxu0 %v3386
    %4333 = vmatpush.bf16.msra.mxu0 %v3385
    %4334 = vmatpush.bf16.msra.mxu0 %v3384
    %4335 = vmatpush.bf16.msra.mxu0 %v3383
    %4336 = vmatpush.bf16.msra.mxu0 %v3382
    %4337 = vmatpush.bf16.msra.mxu0 %v3381
    %4338 = vmatmul.bf16.gmra.mxu0 %v2269
    %v4339 = vpop.f32.mrf.mxu0
    %v4340 = vadd.f32 %v4171, %v4339
    %v4341 = vpop.f32.mrf.mxu0
    %v4342 = vadd.f32 %v4173, %v4341
    %4343 = vmatmul.bf16.gmra.mxu0 %v2270
    %v4344 = vpop.f32.mrf.mxu0
    %v4345 = vadd.f32 %v4176, %v4344
    %v4346 = vpop.f32.mrf.mxu0
    %v4347 = vadd.f32 %v4178, %v4346
    %4348 = vmatmul.bf16.gmra.mxu0 %v2271
    %v4349 = vpop.f32.mrf.mxu0
    %v4350 = vadd.f32 %v4181, %v4349
    %v4351 = vpop.f32.mrf.mxu0
    %v4352 = vadd.f32 %v4183, %v4351
    %4353 = vmatmul.bf16.gmra.mxu0 %v2272
    %v4354 = vpop.f32.mrf.mxu0
    %v4355 = vadd.f32 %v4186, %v4354
    %v4356 = vpop.f32.mrf.mxu0
    %v4357 = vadd.f32 %v4188, %v4356
    %4358 = vmatmul.bf16.gmra.mxu0 %v2273
    %v4359 = vpop.f32.mrf.mxu0
    %v4360 = vadd.f32 %v4191, %v4359
    %v4361 = vpop.f32.mrf.mxu0
    %v4362 = vadd.f32 %v4193, %v4361
    %4363 = vmatmul.bf16.gmra.mxu0 %v2274
    %v4364 = vpop.f32.mrf.mxu0
    %v4365 = vadd.f32 %v4196, %v4364
    %v4366 = vpop.f32.mrf.mxu0
    %v4367 = vadd.f32 %v4198, %v4366
    %4368 = vmatmul.bf16.gmra.mxu0 %v2275
    %v4369 = vpop.f32.mrf.mxu0
    %v4370 = vadd.f32 %v4201, %v4369
    %v4371 = vpop.f32.mrf.mxu0
    %v4372 = vadd.f32 %v4203, %v4371
    %4373 = vmatmul.bf16.gmra.mxu0 %v2276
    %v4374 = vpop.f32.mrf.mxu0
    %v4375 = vadd.f32 %v4206, %v4374
    %v4376 = vpop.f32.mrf.mxu0
    %v4377 = vadd.f32 %v4208, %v4376
    %4378 = vmatmul.bf16.gmra.mxu0 %v2277
    %v4379 = vpop.f32.mrf.mxu0
    %v4380 = vadd.f32 %v4211, %v4379
    %v4381 = vpop.f32.mrf.mxu0
    %v4382 = vadd.f32 %v4213, %v4381
    %4383 = vmatmul.bf16.gmra.mxu0 %v2278
    %v4384 = vpop.f32.mrf.mxu0
    %v4385 = vadd.f32 %v4216, %v4384
    %v4386 = vpop.f32.mrf.mxu0
    %v4387 = vadd.f32 %v4218, %v4386
    %4388 = vmatmul.bf16.gmra.mxu0 %v2279
    %v4389 = vpop.f32.mrf.mxu0
    %v4390 = vadd.f32 %v4221, %v4389
    %v4391 = vpop.f32.mrf.mxu0
    %v4392 = vadd.f32 %v4223, %v4391
    %4393 = vmatmul.bf16.gmra.mxu0 %v2280
    %v4394 = vpop.f32.mrf.mxu0
    %v4395 = vadd.f32 %v4226, %v4394
    %v4396 = vpop.f32.mrf.mxu0
    %v4397 = vadd.f32 %v4228, %v4396
    %4398 = vmatmul.bf16.gmra.mxu0 %v2281
    %v4399 = vpop.f32.mrf.mxu0
    %v4400 = vadd.f32 %v4231, %v4399
    %v4401 = vpop.f32.mrf.mxu0
    %v4402 = vadd.f32 %v4233, %v4401
    %4403 = vmatmul.bf16.gmra.mxu0 %v2282
    %v4404 = vpop.f32.mrf.mxu0
    %v4405 = vadd.f32 %v4236, %v4404
    %v4406 = vpop.f32.mrf.mxu0
    %v4407 = vadd.f32 %v4238, %v4406
    %4408 = vmatmul.bf16.gmra.mxu0 %v2283
    %v4409 = vpop.f32.mrf.mxu0
    %v4410 = vadd.f32 %v4241, %v4409
    %v4411 = vpop.f32.mrf.mxu0
    %v4412 = vadd.f32 %v4243, %v4411
    %4413 = vmatmul.bf16.gmra.mxu0 %v2284
    %v4414 = vpop.f32.mrf.mxu0
    %v4415 = vadd.f32 %v4246, %v4414
    %v4416 = vpop.f32.mrf.mxu0
    %v4417 = vadd.f32 %v4248, %v4416
    %4418 = vmatmul.bf16.gmra.mxu0 %v2285
    %v4419 = vpop.f32.mrf.mxu0
    %v4420 = vadd.f32 %v4251, %v4419
    %v4421 = vpop.f32.mrf.mxu0
    %v4422 = vadd.f32 %v4253, %v4421
    %4423 = vmatmul.bf16.gmra.mxu0 %v2286
    %v4424 = vpop.f32.mrf.mxu0
    %v4425 = vadd.f32 %v4256, %v4424
    %v4426 = vpop.f32.mrf.mxu0
    %v4427 = vadd.f32 %v4258, %v4426
    %4428 = vmatmul.bf16.gmra.mxu0 %v2287
    %v4429 = vpop.f32.mrf.mxu0
    %v4430 = vadd.f32 %v4261, %v4429
    %v4431 = vpop.f32.mrf.mxu0
    %v4432 = vadd.f32 %v4263, %v4431
    %4433 = vmatmul.bf16.gmra.mxu0 %v2288
    %v4434 = vpop.f32.mrf.mxu0
    %v4435 = vadd.f32 %v4266, %v4434
    %v4436 = vpop.f32.mrf.mxu0
    %v4437 = vadd.f32 %v4268, %v4436
    %4438 = vmatmul.bf16.gmra.mxu0 %v2289
    %v4439 = vpop.f32.mrf.mxu0
    %v4440 = vadd.f32 %v4271, %v4439
    %v4441 = vpop.f32.mrf.mxu0
    %v4442 = vadd.f32 %v4273, %v4441
    %4443 = vmatmul.bf16.gmra.mxu0 %v2290
    %v4444 = vpop.f32.mrf.mxu0
    %v4445 = vadd.f32 %v4276, %v4444
    %v4446 = vpop.f32.mrf.mxu0
    %v4447 = vadd.f32 %v4278, %v4446
    %4448 = vmatmul.bf16.gmra.mxu0 %v2291
    %v4449 = vpop.f32.mrf.mxu0
    %v4450 = vadd.f32 %v4281, %v4449
    %v4451 = vpop.f32.mrf.mxu0
    %v4452 = vadd.f32 %v4283, %v4451
    %4453 = vmatmul.bf16.gmra.mxu0 %v2292
    %v4454 = vpop.f32.mrf.mxu0
    %v4455 = vadd.f32 %v4286, %v4454
    %v4456 = vpop.f32.mrf.mxu0
    %v4457 = vadd.f32 %v4288, %v4456
    %4458 = vmatmul.bf16.gmra.mxu0 %v2293
    %v4459 = vpop.f32.mrf.mxu0
    %v4460 = vadd.f32 %v4291, %v4459
    %v4461 = vpop.f32.mrf.mxu0
    %v4462 = vadd.f32 %v4293, %v4461
    %4463 = vmatmul.bf16.gmra.mxu0 %v2294
    %v4464 = vpop.f32.mrf.mxu0
    %v4465 = vadd.f32 %v4296, %v4464
    %v4466 = vpop.f32.mrf.mxu0
    %v4467 = vadd.f32 %v4298, %v4466
    %4468 = vmatmul.bf16.gmra.mxu0 %v2295
    %v4469 = vpop.f32.mrf.mxu0
    %v4470 = vadd.f32 %v4301, %v4469
    %v4471 = vpop.f32.mrf.mxu0
    %v4472 = vadd.f32 %v4303, %v4471
    %4473 = vmatmul.bf16.gmra.mxu0 %v2296
    %v4474 = vpop.f32.mrf.mxu0
    %v4475 = vadd.f32 %v4306, %v4474
    %v4476 = vpop.f32.mrf.mxu0
    %v4477 = vadd.f32 %v4308, %v4476
    %4478 = vmatmul.bf16.gmra.mxu0 %v2297
    %v4479 = vpop.f32.mrf.mxu0
    %v4480 = vadd.f32 %v4311, %v4479
    %v4481 = vpop.f32.mrf.mxu0
    %v4482 = vadd.f32 %v4313, %v4481
    %4483 = vmatmul.bf16.gmra.mxu0 %v2298
    %v4484 = vpop.f32.mrf.mxu0
    %v4485 = vadd.f32 %v4316, %v4484
    %v4486 = vpop.f32.mrf.mxu0
    %v4487 = vadd.f32 %v4318, %v4486
    %4488 = vmatmul.bf16.gmra.mxu0 %v2299
    %v4489 = vpop.f32.mrf.mxu0
    %v4490 = vadd.f32 %v4321, %v4489
    %v4491 = vpop.f32.mrf.mxu0
    %v4492 = vadd.f32 %v4323, %v4491
    %4493 = vmatmul.bf16.gmra.mxu0 %v2300
    %v4494 = vpop.f32.mrf.mxu0
    %v4495 = vadd.f32 %v4326, %v4494
    %v4496 = vpop.f32.mrf.mxu0
    %v4497 = vadd.f32 %v4328, %v4496
    %4498 = vdwg.mxu0
    %4499 = vmatpush.bf16.msra.mxu0 %v3396
    %4500 = vmatpush.bf16.msra.mxu0 %v3395
    %4501 = vmatpush.bf16.msra.mxu0 %v3394
    %4502 = vmatpush.bf16.msra.mxu0 %v3393
    %4503 = vmatpush.bf16.msra.mxu0 %v3392
    %4504 = vmatpush.bf16.msra.mxu0 %v3391
    %4505 = vmatpush.bf16.msra.mxu0 %v3390
    %4506 = vmatpush.bf16.msra.mxu0 %v3389
    %4507 = vmatmul.bf16.gmra.mxu0 %v2461
    %v4508 = vpop.f32.mrf.mxu0
    %v4509 = vadd.f32 %v4340, %v4508
    %v4510 = vpop.f32.mrf.mxu0
    %v4511 = vadd.f32 %v4342, %v4510
    %4512 = vmatmul.bf16.gmra.mxu0 %v2462
    %v4513 = vpop.f32.mrf.mxu0
    %v4514 = vadd.f32 %v4345, %v4513
    %v4515 = vpop.f32.mrf.mxu0
    %v4516 = vadd.f32 %v4347, %v4515
    %4517 = vmatmul.bf16.gmra.mxu0 %v2463
    %v4518 = vpop.f32.mrf.mxu0
    %v4519 = vadd.f32 %v4350, %v4518
    %v4520 = vpop.f32.mrf.mxu0
    %v4521 = vadd.f32 %v4352, %v4520
    %4522 = vmatmul.bf16.gmra.mxu0 %v2464
    %v4523 = vpop.f32.mrf.mxu0
    %v4524 = vadd.f32 %v4355, %v4523
    %v4525 = vpop.f32.mrf.mxu0
    %v4526 = vadd.f32 %v4357, %v4525
    %4527 = vmatmul.bf16.gmra.mxu0 %v2465
    %v4528 = vpop.f32.mrf.mxu0
    %v4529 = vadd.f32 %v4360, %v4528
    %v4530 = vpop.f32.mrf.mxu0
    %v4531 = vadd.f32 %v4362, %v4530
    %4532 = vmatmul.bf16.gmra.mxu0 %v2466
    %v4533 = vpop.f32.mrf.mxu0
    %v4534 = vadd.f32 %v4365, %v4533
    %v4535 = vpop.f32.mrf.mxu0
    %v4536 = vadd.f32 %v4367, %v4535
    %4537 = vmatmul.bf16.gmra.mxu0 %v2467
    %v4538 = vpop.f32.mrf.mxu0
    %v4539 = vadd.f32 %v4370, %v4538
    %v4540 = vpop.f32.mrf.mxu0
    %v4541 = vadd.f32 %v4372, %v4540
    %4542 = vmatmul.bf16.gmra.mxu0 %v2468
    %v4543 = vpop.f32.mrf.mxu0
    %v4544 = vadd.f32 %v4375, %v4543
    %v4545 = vpop.f32.mrf.mxu0
    %v4546 = vadd.f32 %v4377, %v4545
    %4547 = vmatmul.bf16.gmra.mxu0 %v2469
    %v4548 = vpop.f32.mrf.mxu0
    %v4549 = vadd.f32 %v4380, %v4548
    %v4550 = vpop.f32.mrf.mxu0
    %v4551 = vadd.f32 %v4382, %v4550
    %4552 = vmatmul.bf16.gmra.mxu0 %v2470
    %v4553 = vpop.f32.mrf.mxu0
    %v4554 = vadd.f32 %v4385, %v4553
    %v4555 = vpop.f32.mrf.mxu0
    %v4556 = vadd.f32 %v4387, %v4555
    %4557 = vmatmul.bf16.gmra.mxu0 %v2471
    %v4558 = vpop.f32.mrf.mxu0
    %v4559 = vadd.f32 %v4390, %v4558
    %v4560 = vpop.f32.mrf.mxu0
    %v4561 = vadd.f32 %v4392, %v4560
    %4562 = vmatmul.bf16.gmra.mxu0 %v2472
    %v4563 = vpop.f32.mrf.mxu0
    %v4564 = vadd.f32 %v4395, %v4563
    %v4565 = vpop.f32.mrf.mxu0
    %v4566 = vadd.f32 %v4397, %v4565
    %4567 = vmatmul.bf16.gmra.mxu0 %v2473
    %v4568 = vpop.f32.mrf.mxu0
    %v4569 = vadd.f32 %v4400, %v4568
    %v4570 = vpop.f32.mrf.mxu0
    %v4571 = vadd.f32 %v4402, %v4570
    %4572 = vmatmul.bf16.gmra.mxu0 %v2474
    %v4573 = vpop.f32.mrf.mxu0
    %v4574 = vadd.f32 %v4405, %v4573
    %v4575 = vpop.f32.mrf.mxu0
    %v4576 = vadd.f32 %v4407, %v4575
    %4577 = vmatmul.bf16.gmra.mxu0 %v2475
    %v4578 = vpop.f32.mrf.mxu0
    %v4579 = vadd.f32 %v4410, %v4578
    %v4580 = vpop.f32.mrf.mxu0
    %v4581 = vadd.f32 %v4412, %v4580
    %4582 = vmatmul.bf16.gmra.mxu0 %v2476
    %v4583 = vpop.f32.mrf.mxu0
    %v4584 = vadd.f32 %v4415, %v4583
    %v4585 = vpop.f32.mrf.mxu0
    %v4586 = vadd.f32 %v4417, %v4585
    %4587 = vmatmul.bf16.gmra.mxu0 %v2477
    %v4588 = vpop.f32.mrf.mxu0
    %v4589 = vadd.f32 %v4420, %v4588
    %v4590 = vpop.f32.mrf.mxu0
    %v4591 = vadd.f32 %v4422, %v4590
    %4592 = vmatmul.bf16.gmra.mxu0 %v2478
    %v4593 = vpop.f32.mrf.mxu0
    %v4594 = vadd.f32 %v4425, %v4593
    %v4595 = vpop.f32.mrf.mxu0
    %v4596 = vadd.f32 %v4427, %v4595
    %4597 = vmatmul.bf16.gmra.mxu0 %v2479
    %v4598 = vpop.f32.mrf.mxu0
    %v4599 = vadd.f32 %v4430, %v4598
    %v4600 = vpop.f32.mrf.mxu0
    %v4601 = vadd.f32 %v4432, %v4600
    %4602 = vmatmul.bf16.gmra.mxu0 %v2480
    %v4603 = vpop.f32.mrf.mxu0
    %v4604 = vadd.f32 %v4435, %v4603
    %v4605 = vpop.f32.mrf.mxu0
    %v4606 = vadd.f32 %v4437, %v4605
    %4607 = vmatmul.bf16.gmra.mxu0 %v2481
    %v4608 = vpop.f32.mrf.mxu0
    %v4609 = vadd.f32 %v4440, %v4608
    %v4610 = vpop.f32.mrf.mxu0
    %v4611 = vadd.f32 %v4442, %v4610
    %4612 = vmatmul.bf16.gmra.mxu0 %v2482
    %v4613 = vpop.f32.mrf.mxu0
    %v4614 = vadd.f32 %v4445, %v4613
    %v4615 = vpop.f32.mrf.mxu0
    %v4616 = vadd.f32 %v4447, %v4615
    %4617 = vmatmul.bf16.gmra.mxu0 %v2483
    %v4618 = vpop.f32.mrf.mxu0
    %v4619 = vadd.f32 %v4450, %v4618
    %v4620 = vpop.f32.mrf.mxu0
    %v4621 = vadd.f32 %v4452, %v4620
    %4622 = vmatmul.bf16.gmra.mxu0 %v2484
    %v4623 = vpop.f32.mrf.mxu0
    %v4624 = vadd.f32 %v4455, %v4623
    %v4625 = vpop.f32.mrf.mxu0
    %v4626 = vadd.f32 %v4457, %v4625
    %4627 = vmatmul.bf16.gmra.mxu0 %v2485
    %v4628 = vpop.f32.mrf.mxu0
    %v4629 = vadd.f32 %v4460, %v4628
    %v4630 = vpop.f32.mrf.mxu0
    %v4631 = vadd.f32 %v4462, %v4630
    %4632 = vmatmul.bf16.gmra.mxu0 %v2486
    %v4633 = vpop.f32.mrf.mxu0
    %v4634 = vadd.f32 %v4465, %v4633
    %v4635 = vpop.f32.mrf.mxu0
    %v4636 = vadd.f32 %v4467, %v4635
    %4637 = vmatmul.bf16.gmra.mxu0 %v2487
    %v4638 = vpop.f32.mrf.mxu0
    %v4639 = vadd.f32 %v4470, %v4638
    %v4640 = vpop.f32.mrf.mxu0
    %v4641 = vadd.f32 %v4472, %v4640
    %4642 = vmatmul.bf16.gmra.mxu0 %v2488
    %v4643 = vpop.f32.mrf.mxu0
    %v4644 = vadd.f32 %v4475, %v4643
    %v4645 = vpop.f32.mrf.mxu0
    %v4646 = vadd.f32 %v4477, %v4645
    %4647 = vmatmul.bf16.gmra.mxu0 %v2489
    %v4648 = vpop.f32.mrf.mxu0
    %v4649 = vadd.f32 %v4480, %v4648
    %v4650 = vpop.f32.mrf.mxu0
    %v4651 = vadd.f32 %v4482, %v4650
    %4652 = vmatmul.bf16.gmra.mxu0 %v2490
    %v4653 = vpop.f32.mrf.mxu0
    %v4654 = vadd.f32 %v4485, %v4653
    %v4655 = vpop.f32.mrf.mxu0
    %v4656 = vadd.f32 %v4487, %v4655
    %4657 = vmatmul.bf16.gmra.mxu0 %v2491
    %v4658 = vpop.f32.mrf.mxu0
    %v4659 = vadd.f32 %v4490, %v4658
    %v4660 = vpop.f32.mrf.mxu0
    %v4661 = vadd.f32 %v4492, %v4660
    %4662 = vmatmul.bf16.gmra.mxu0 %v2492
    %v4663 = vpop.f32.mrf.mxu0
    %v4664 = vadd.f32 %v4495, %v4663
    %v4665 = vpop.f32.mrf.mxu0
    %v4666 = vadd.f32 %v4497, %v4665
    %4667 = vdwg.mxu0
    %4668 = vmatpush.bf16.msra.mxu0 %v3404
    %4669 = vmatpush.bf16.msra.mxu0 %v3403
    %4670 = vmatpush.bf16.msra.mxu0 %v3402
    %4671 = vmatpush.bf16.msra.mxu0 %v3401
    %4672 = vmatpush.bf16.msra.mxu0 %v3400
    %4673 = vmatpush.bf16.msra.mxu0 %v3399
    %4674 = vmatpush.bf16.msra.mxu0 %v3398
    %4675 = vmatpush.bf16.msra.mxu0 %v3397
    %4676 = vmatmul.bf16.gmra.mxu0 %v2653
    %v4677 = vpop.f32.mrf.mxu0
    %v4678 = vadd.f32 %v4509, %v4677
    %v4679 = vpop.f32.mrf.mxu0
    %v4680 = vadd.f32 %v4511, %v4679
    %4681 = vmatmul.bf16.gmra.mxu0 %v2654
    %v4682 = vpop.f32.mrf.mxu0
    %v4683 = vadd.f32 %v4514, %v4682
    %v4684 = vpop.f32.mrf.mxu0
    %v4685 = vadd.f32 %v4516, %v4684
    %4686 = vmatmul.bf16.gmra.mxu0 %v2655
    %v4687 = vpop.f32.mrf.mxu0
    %v4688 = vadd.f32 %v4519, %v4687
    %v4689 = vpop.f32.mrf.mxu0
    %v4690 = vadd.f32 %v4521, %v4689
    %4691 = vmatmul.bf16.gmra.mxu0 %v2656
    %v4692 = vpop.f32.mrf.mxu0
    %v4693 = vadd.f32 %v4524, %v4692
    %v4694 = vpop.f32.mrf.mxu0
    %v4695 = vadd.f32 %v4526, %v4694
    %4696 = vmatmul.bf16.gmra.mxu0 %v2657
    %v4697 = vpop.f32.mrf.mxu0
    %v4698 = vadd.f32 %v4529, %v4697
    %v4699 = vpop.f32.mrf.mxu0
    %v4700 = vadd.f32 %v4531, %v4699
    %4701 = vmatmul.bf16.gmra.mxu0 %v2658
    %v4702 = vpop.f32.mrf.mxu0
    %v4703 = vadd.f32 %v4534, %v4702
    %v4704 = vpop.f32.mrf.mxu0
    %v4705 = vadd.f32 %v4536, %v4704
    %4706 = vmatmul.bf16.gmra.mxu0 %v2659
    %v4707 = vpop.f32.mrf.mxu0
    %v4708 = vadd.f32 %v4539, %v4707
    %v4709 = vpop.f32.mrf.mxu0
    %v4710 = vadd.f32 %v4541, %v4709
    %4711 = vmatmul.bf16.gmra.mxu0 %v2660
    %v4712 = vpop.f32.mrf.mxu0
    %v4713 = vadd.f32 %v4544, %v4712
    %v4714 = vpop.f32.mrf.mxu0
    %v4715 = vadd.f32 %v4546, %v4714
    %4716 = vmatmul.bf16.gmra.mxu0 %v2661
    %v4717 = vpop.f32.mrf.mxu0
    %v4718 = vadd.f32 %v4549, %v4717
    %v4719 = vpop.f32.mrf.mxu0
    %v4720 = vadd.f32 %v4551, %v4719
    %4721 = vmatmul.bf16.gmra.mxu0 %v2662
    %v4722 = vpop.f32.mrf.mxu0
    %v4723 = vadd.f32 %v4554, %v4722
    %v4724 = vpop.f32.mrf.mxu0
    %v4725 = vadd.f32 %v4556, %v4724
    %4726 = vmatmul.bf16.gmra.mxu0 %v2663
    %v4727 = vpop.f32.mrf.mxu0
    %v4728 = vadd.f32 %v4559, %v4727
    %v4729 = vpop.f32.mrf.mxu0
    %v4730 = vadd.f32 %v4561, %v4729
    %4731 = vmatmul.bf16.gmra.mxu0 %v2664
    %v4732 = vpop.f32.mrf.mxu0
    %v4733 = vadd.f32 %v4564, %v4732
    %v4734 = vpop.f32.mrf.mxu0
    %v4735 = vadd.f32 %v4566, %v4734
    %4736 = vmatmul.bf16.gmra.mxu0 %v2665
    %v4737 = vpop.f32.mrf.mxu0
    %v4738 = vadd.f32 %v4569, %v4737
    %v4739 = vpop.f32.mrf.mxu0
    %v4740 = vadd.f32 %v4571, %v4739
    %4741 = vmatmul.bf16.gmra.mxu0 %v2666
    %v4742 = vpop.f32.mrf.mxu0
    %v4743 = vadd.f32 %v4574, %v4742
    %v4744 = vpop.f32.mrf.mxu0
    %v4745 = vadd.f32 %v4576, %v4744
    %4746 = vmatmul.bf16.gmra.mxu0 %v2667
    %v4747 = vpop.f32.mrf.mxu0
    %v4748 = vadd.f32 %v4579, %v4747
    %v4749 = vpop.f32.mrf.mxu0
    %v4750 = vadd.f32 %v4581, %v4749
    %4751 = vmatmul.bf16.gmra.mxu0 %v2668
    %v4752 = vpop.f32.mrf.mxu0
    %v4753 = vadd.f32 %v4584, %v4752
    %v4754 = vpop.f32.mrf.mxu0
    %v4755 = vadd.f32 %v4586, %v4754
    %4756 = vmatmul.bf16.gmra.mxu0 %v2669
    %v4757 = vpop.f32.mrf.mxu0
    %v4758 = vadd.f32 %v4589, %v4757
    %v4759 = vpop.f32.mrf.mxu0
    %v4760 = vadd.f32 %v4591, %v4759
    %4761 = vmatmul.bf16.gmra.mxu0 %v2670
    %v4762 = vpop.f32.mrf.mxu0
    %v4763 = vadd.f32 %v4594, %v4762
    %v4764 = vpop.f32.mrf.mxu0
    %v4765 = vadd.f32 %v4596, %v4764
    %4766 = vmatmul.bf16.gmra.mxu0 %v2671
    %v4767 = vpop.f32.mrf.mxu0
    %v4768 = vadd.f32 %v4599, %v4767
    %v4769 = vpop.f32.mrf.mxu0
    %v4770 = vadd.f32 %v4601, %v4769
    %4771 = vmatmul.bf16.gmra.mxu0 %v2672
    %v4772 = vpop.f32.mrf.mxu0
    %v4773 = vadd.f32 %v4604, %v4772
    %v4774 = vpop.f32.mrf.mxu0
    %v4775 = vadd.f32 %v4606, %v4774
    %4776 = vmatmul.bf16.gmra.mxu0 %v2673
    %v4777 = vpop.f32.mrf.mxu0
    %v4778 = vadd.f32 %v4609, %v4777
    %v4779 = vpop.f32.mrf.mxu0
    %v4780 = vadd.f32 %v4611, %v4779
    %4781 = vmatmul.bf16.gmra.mxu0 %v2674
    %v4782 = vpop.f32.mrf.mxu0
    %v4783 = vadd.f32 %v4614, %v4782
    %v4784 = vpop.f32.mrf.mxu0
    %v4785 = vadd.f32 %v4616, %v4784
    %4786 = vmatmul.bf16.gmra.mxu0 %v2675
    %v4787 = vpop.f32.mrf.mxu0
    %v4788 = vadd.f32 %v4619, %v4787
    %v4789 = vpop.f32.mrf.mxu0
    %v4790 = vadd.f32 %v4621, %v4789
    %4791 = vmatmul.bf16.gmra.mxu0 %v2676
    %v4792 = vpop.f32.mrf.mxu0
    %v4793 = vadd.f32 %v4624, %v4792
    %v4794 = vpop.f32.mrf.mxu0
    %v4795 = vadd.f32 %v4626, %v4794
    %4796 = vmatmul.bf16.gmra.mxu0 %v2677
    %v4797 = vpop.f32.mrf.mxu0
    %v4798 = vadd.f32 %v4629, %v4797
    %v4799 = vpop.f32.mrf.mxu0
    %v4800 = vadd.f32 %v4631, %v4799
    %4801 = vmatmul.bf16.gmra.mxu0 %v2678
    %v4802 = vpop.f32.mrf.mxu0
    %v4803 = vadd.f32 %v4634, %v4802
    %v4804 = vpop.f32.mrf.mxu0
    %v4805 = vadd.f32 %v4636, %v4804
    %4806 = vmatmul.bf16.gmra.mxu0 %v2679
    %v4807 = vpop.f32.mrf.mxu0
    %v4808 = vadd.f32 %v4639, %v4807
    %v4809 = vpop.f32.mrf.mxu0
    %v4810 = vadd.f32 %v4641, %v4809
    %4811 = vmatmul.bf16.gmra.mxu0 %v2680
    %v4812 = vpop.f32.mrf.mxu0
    %v4813 = vadd.f32 %v4644, %v4812
    %v4814 = vpop.f32.mrf.mxu0
    %v4815 = vadd.f32 %v4646, %v4814
    %4816 = vmatmul.bf16.gmra.mxu0 %v2681
    %v4817 = vpop.f32.mrf.mxu0
    %v4818 = vadd.f32 %v4649, %v4817
    %v4819 = vpop.f32.mrf.mxu0
    %v4820 = vadd.f32 %v4651, %v4819
    %4821 = vmatmul.bf16.gmra.mxu0 %v2682
    %v4822 = vpop.f32.mrf.mxu0
    %v4823 = vadd.f32 %v4654, %v4822
    %v4824 = vpop.f32.mrf.mxu0
    %v4825 = vadd.f32 %v4656, %v4824
    %4826 = vmatmul.bf16.gmra.mxu0 %v2683
    %v4827 = vpop.f32.mrf.mxu0
    %v4828 = vadd.f32 %v4659, %v4827
    %v4829 = vpop.f32.mrf.mxu0
    %v4830 = vadd.f32 %v4661, %v4829
    %4831 = vmatmul.bf16.gmra.mxu0 %v2684
    %v4832 = vpop.f32.mrf.mxu0
    %v4833 = vadd.f32 %v4664, %v4832
    %v4834 = vpop.f32.mrf.mxu0
    %v4835 = vadd.f32 %v4666, %v4834
    %4836 = vdwg.mxu0
    %4837 = vmatpush.bf16.msra.mxu0 %v3412
    %4838 = vmatpush.bf16.msra.mxu0 %v3411
    %4839 = vmatpush.bf16.msra.mxu0 %v3410
    %4840 = vmatpush.bf16.msra.mxu0 %v3409
    %4841 = vmatpush.bf16.msra.mxu0 %v3408
    %4842 = vmatpush.bf16.msra.mxu0 %v3407
    %4843 = vmatpush.bf16.msra.mxu0 %v3406
    %4844 = vmatpush.bf16.msra.mxu0 %v3405
    %4845 = vmatmul.bf16.gmra.mxu0 %v2845
    %v4846 = vpop.f32.mrf.mxu0
    %v4847 = vadd.f32 %v4678, %v4846
    %v4848 = vpop.f32.mrf.mxu0
    %v4849 = vadd.f32 %v4680, %v4848
    %4850 = vmatmul.bf16.gmra.mxu0 %v2846
    %v4851 = vpop.f32.mrf.mxu0
    %v4852 = vadd.f32 %v4683, %v4851
    %v4853 = vpop.f32.mrf.mxu0
    %v4854 = vadd.f32 %v4685, %v4853
    %4855 = vmatmul.bf16.gmra.mxu0 %v2847
    %v4856 = vpop.f32.mrf.mxu0
    %v4857 = vadd.f32 %v4688, %v4856
    %v4858 = vpop.f32.mrf.mxu0
    %v4859 = vadd.f32 %v4690, %v4858
    %4860 = vmatmul.bf16.gmra.mxu0 %v2848
    %v4861 = vpop.f32.mrf.mxu0
    %v4862 = vadd.f32 %v4693, %v4861
    %v4863 = vpop.f32.mrf.mxu0
    %v4864 = vadd.f32 %v4695, %v4863
    %4865 = vmatmul.bf16.gmra.mxu0 %v2849
    %v4866 = vpop.f32.mrf.mxu0
    %v4867 = vadd.f32 %v4698, %v4866
    %v4868 = vpop.f32.mrf.mxu0
    %v4869 = vadd.f32 %v4700, %v4868
    %4870 = vmatmul.bf16.gmra.mxu0 %v2850
    %v4871 = vpop.f32.mrf.mxu0
    %v4872 = vadd.f32 %v4703, %v4871
    %v4873 = vpop.f32.mrf.mxu0
    %v4874 = vadd.f32 %v4705, %v4873
    %4875 = vmatmul.bf16.gmra.mxu0 %v2851
    %v4876 = vpop.f32.mrf.mxu0
    %v4877 = vadd.f32 %v4708, %v4876
    %v4878 = vpop.f32.mrf.mxu0
    %v4879 = vadd.f32 %v4710, %v4878
    %4880 = vmatmul.bf16.gmra.mxu0 %v2852
    %v4881 = vpop.f32.mrf.mxu0
    %v4882 = vadd.f32 %v4713, %v4881
    %v4883 = vpop.f32.mrf.mxu0
    %v4884 = vadd.f32 %v4715, %v4883
    %4885 = vmatmul.bf16.gmra.mxu0 %v2853
    %v4886 = vpop.f32.mrf.mxu0
    %v4887 = vadd.f32 %v4718, %v4886
    %v4888 = vpop.f32.mrf.mxu0
    %v4889 = vadd.f32 %v4720, %v4888
    %4890 = vmatmul.bf16.gmra.mxu0 %v2854
    %v4891 = vpop.f32.mrf.mxu0
    %v4892 = vadd.f32 %v4723, %v4891
    %v4893 = vpop.f32.mrf.mxu0
    %v4894 = vadd.f32 %v4725, %v4893
    %4895 = vmatmul.bf16.gmra.mxu0 %v2855
    %v4896 = vpop.f32.mrf.mxu0
    %v4897 = vadd.f32 %v4728, %v4896
    %v4898 = vpop.f32.mrf.mxu0
    %v4899 = vadd.f32 %v4730, %v4898
    %4900 = vmatmul.bf16.gmra.mxu0 %v2856
    %v4901 = vpop.f32.mrf.mxu0
    %v4902 = vadd.f32 %v4733, %v4901
    %v4903 = vpop.f32.mrf.mxu0
    %v4904 = vadd.f32 %v4735, %v4903
    %4905 = vmatmul.bf16.gmra.mxu0 %v2857
    %v4906 = vpop.f32.mrf.mxu0
    %v4907 = vadd.f32 %v4738, %v4906
    %v4908 = vpop.f32.mrf.mxu0
    %v4909 = vadd.f32 %v4740, %v4908
    %4910 = vmatmul.bf16.gmra.mxu0 %v2858
    %v4911 = vpop.f32.mrf.mxu0
    %v4912 = vadd.f32 %v4743, %v4911
    %v4913 = vpop.f32.mrf.mxu0
    %v4914 = vadd.f32 %v4745, %v4913
    %4915 = vmatmul.bf16.gmra.mxu0 %v2859
    %v4916 = vpop.f32.mrf.mxu0
    %v4917 = vadd.f32 %v4748, %v4916
    %v4918 = vpop.f32.mrf.mxu0
    %v4919 = vadd.f32 %v4750, %v4918
    %4920 = vmatmul.bf16.gmra.mxu0 %v2860
    %v4921 = vpop.f32.mrf.mxu0
    %v4922 = vadd.f32 %v4753, %v4921
    %v4923 = vpop.f32.mrf.mxu0
    %v4924 = vadd.f32 %v4755, %v4923
    %4925 = vmatmul.bf16.gmra.mxu0 %v2861
    %v4926 = vpop.f32.mrf.mxu0
    %v4927 = vadd.f32 %v4758, %v4926
    %v4928 = vpop.f32.mrf.mxu0
    %v4929 = vadd.f32 %v4760, %v4928
    %4930 = vmatmul.bf16.gmra.mxu0 %v2862
    %v4931 = vpop.f32.mrf.mxu0
    %v4932 = vadd.f32 %v4763, %v4931
    %v4933 = vpop.f32.mrf.mxu0
    %v4934 = vadd.f32 %v4765, %v4933
    %4935 = vmatmul.bf16.gmra.mxu0 %v2863
    %v4936 = vpop.f32.mrf.mxu0
    %v4937 = vadd.f32 %v4768, %v4936
    %v4938 = vpop.f32.mrf.mxu0
    %v4939 = vadd.f32 %v4770, %v4938
    %4940 = vmatmul.bf16.gmra.mxu0 %v2864
    %v4941 = vpop.f32.mrf.mxu0
    %v4942 = vadd.f32 %v4773, %v4941
    %v4943 = vpop.f32.mrf.mxu0
    %v4944 = vadd.f32 %v4775, %v4943
    %4945 = vmatmul.bf16.gmra.mxu0 %v2865
    %v4946 = vpop.f32.mrf.mxu0
    %v4947 = vadd.f32 %v4778, %v4946
    %v4948 = vpop.f32.mrf.mxu0
    %v4949 = vadd.f32 %v4780, %v4948
    %4950 = vmatmul.bf16.gmra.mxu0 %v2866
    %v4951 = vpop.f32.mrf.mxu0
    %v4952 = vadd.f32 %v4783, %v4951
    %v4953 = vpop.f32.mrf.mxu0
    %v4954 = vadd.f32 %v4785, %v4953
    %4955 = vmatmul.bf16.gmra.mxu0 %v2867
    %v4956 = vpop.f32.mrf.mxu0
    %v4957 = vadd.f32 %v4788, %v4956
    %v4958 = vpop.f32.mrf.mxu0
    %v4959 = vadd.f32 %v4790, %v4958
    %4960 = vmatmul.bf16.gmra.mxu0 %v2868
    %v4961 = vpop.f32.mrf.mxu0
    %v4962 = vadd.f32 %v4793, %v4961
    %v4963 = vpop.f32.mrf.mxu0
    %v4964 = vadd.f32 %v4795, %v4963
    %4965 = vmatmul.bf16.gmra.mxu0 %v2869
    %v4966 = vpop.f32.mrf.mxu0
    %v4967 = vadd.f32 %v4798, %v4966
    %v4968 = vpop.f32.mrf.mxu0
    %v4969 = vadd.f32 %v4800, %v4968
    %4970 = vmatmul.bf16.gmra.mxu0 %v2870
    %v4971 = vpop.f32.mrf.mxu0
    %v4972 = vadd.f32 %v4803, %v4971
    %v4973 = vpop.f32.mrf.mxu0
    %v4974 = vadd.f32 %v4805, %v4973
    %4975 = vmatmul.bf16.gmra.mxu0 %v2871
    %v4976 = vpop.f32.mrf.mxu0
    %v4977 = vadd.f32 %v4808, %v4976
    %v4978 = vpop.f32.mrf.mxu0
    %v4979 = vadd.f32 %v4810, %v4978
    %4980 = vmatmul.bf16.gmra.mxu0 %v2872
    %v4981 = vpop.f32.mrf.mxu0
    %v4982 = vadd.f32 %v4813, %v4981
    %v4983 = vpop.f32.mrf.mxu0
    %v4984 = vadd.f32 %v4815, %v4983
    %4985 = vmatmul.bf16.gmra.mxu0 %v2873
    %v4986 = vpop.f32.mrf.mxu0
    %v4987 = vadd.f32 %v4818, %v4986
    %v4988 = vpop.f32.mrf.mxu0
    %v4989 = vadd.f32 %v4820, %v4988
    %4990 = vmatmul.bf16.gmra.mxu0 %v2874
    %v4991 = vpop.f32.mrf.mxu0
    %v4992 = vadd.f32 %v4823, %v4991
    %v4993 = vpop.f32.mrf.mxu0
    %v4994 = vadd.f32 %v4825, %v4993
    %4995 = vmatmul.bf16.gmra.mxu0 %v2875
    %v4996 = vpop.f32.mrf.mxu0
    %v4997 = vadd.f32 %v4828, %v4996
    %v4998 = vpop.f32.mrf.mxu0
    %v4999 = vadd.f32 %v4830, %v4998
    %5000 = vmatmul.bf16.gmra.mxu0 %v2876
    %v5001 = vpop.f32.mrf.mxu0
    %v5002 = vadd.f32 %v4833, %v5001
    %v5003 = vpop.f32.mrf.mxu0
    %v5004 = vadd.f32 %v4835, %v5003
    %5005 = vdwg.mxu0
    %v5006 = vld [vmem:[%s3] sm:$0x1]
    %v5007 = vld [vmem:[%s4] sm:$0x1]
    %v5008 = vadd.f32 %v4847, %v4849
    %v5009 = vadd.f32 %v5008, %v4852
    %v5010 = vadd.f32 %v5009, %v4854
    %v5011 = vadd.f32 %v5010, %v4857
    %v5012 = vadd.f32 %v5011, %v4859
    %v5013 = vadd.f32 %v5012, %v4862
    %v5014 = vadd.f32 %v5013, %v4864
    %v5015 = vadd.f32 %v5014, %v4867
    %v5016 = vadd.f32 %v5015, %v4869
    %v5017 = vadd.f32 %v5016, %v4872
    %v5018 = vadd.f32 %v5017, %v4874
    %v5019 = vadd.f32 %v5018, %v4877
    %v5020 = vadd.f32 %v5019, %v4879
    %v5021 = vadd.f32 %v5020, %v4882
    %v5022 = vadd.f32 %v5021, %v4884
    %v5023 = vadd.f32 %v5022, %v4887
    %v5024 = vadd.f32 %v5023, %v4889
    %v5025 = vadd.f32 %v5024, %v4892
    %v5026 = vadd.f32 %v5025, %v4894
    %v5027 = vadd.f32 %v5026, %v4897
    %v5028 = vadd.f32 %v5027, %v4899
    %v5029 = vadd.f32 %v5028, %v4902
    %v5030 = vadd.f32 %v5029, %v4904
    %v5031 = vadd.f32 %v5030, %v4907
    %v5032 = vadd.f32 %v5031, %v4909
    %v5033 = vadd.f32 %v5032, %v4912
    %v5034 = vadd.f32 %v5033, %v4914
    %v5035 = vadd.f32 %v5034, %v4917
    %v5036 = vadd.f32 %v5035, %v4919
    %v5037 = vadd.f32 %v5036, %v4922
    %v5038 = vadd.f32 %v5037, %v4924
    %v5039 = vadd.f32 %v5038, %v4927
    %v5040 = vadd.f32 %v5039, %v4929
    %v5041 = vadd.f32 %v5040, %v4932
    %v5042 = vadd.f32 %v5041, %v4934
    %v5043 = vadd.f32 %v5042, %v4937
    %v5044 = vadd.f32 %v5043, %v4939
    %v5045 = vadd.f32 %v5044, %v4942
    %v5046 = vadd.f32 %v5045, %v4944
    %v5047 = vadd.f32 %v5046, %v4947
    %v5048 = vadd.f32 %v5047, %v4949
    %v5049 = vadd.f32 %v5048, %v4952
    %v5050 = vadd.f32 %v5049, %v4954
    %v5051 = vadd.f32 %v5050, %v4957
    %v5052 = vadd.f32 %v5051, %v4959
    %v5053 = vadd.f32 %v5052, %v4962
    %v5054 = vadd.f32 %v5053, %v4964
    %v5055 = vadd.f32 %v5054, %v4967
    %v5056 = vadd.f32 %v5055, %v4969
    %v5057 = vadd.f32 %v5056, %v4972
    %v5058 = vadd.f32 %v5057, %v4974
    %v5059 = vadd.f32 %v5058, %v4977
    %v5060 = vadd.f32 %v5059, %v4979
    %v5061 = vadd.f32 %v5060, %v4982
    %v5062 = vadd.f32 %v5061, %v4984
    %v5063 = vadd.f32 %v5062, %v4987
    %v5064 = vadd.f32 %v5063, %v4989
    %v5065 = vadd.f32 %v5064, %v4992
    %v5066 = vadd.f32 %v5065, %v4994
    %v5067 = vadd.f32 %v5066, %v4997
    %v5068 = vadd.f32 %v5067, %v4999
    %v5069 = vadd.f32 %v5068, %v5002
    %v5070 = vadd.f32 %v5069, %v5004
    %v5071 = vrot.slane %v5070, 4
    %v5072 = vadd.f32 %v5070, %v5071
    %v5073 = vrot.slane %v5072, 2
    %v5074 = vadd.f32 %v5072, %v5073
    %v5075 = vrot.slane %v5074, 1
    %v5076 = vadd.f32 %v5074, %v5075
    %v5077 = vmul.f32 %v5076, 0.001953125
    %v5078 = vmul.f32 %v4847, %v4847
    %v5079 = vmul.f32 %v4849, %v4849
    %v5080 = vmul.f32 %v4852, %v4852
    %v5081 = vmul.f32 %v4854, %v4854
    %v5082 = vmul.f32 %v4857, %v4857
    %v5083 = vmul.f32 %v4859, %v4859
    %v5084 = vmul.f32 %v4862, %v4862
    %v5085 = vmul.f32 %v4864, %v4864
    %v5086 = vmul.f32 %v4867, %v4867
    %v5087 = vmul.f32 %v4869, %v4869
    %v5088 = vmul.f32 %v4872, %v4872
    %v5089 = vmul.f32 %v4874, %v4874
    %v5090 = vmul.f32 %v4877, %v4877
    %v5091 = vmul.f32 %v4879, %v4879
    %v5092 = vmul.f32 %v4882, %v4882
    %v5093 = vmul.f32 %v4884, %v4884
    %v5094 = vmul.f32 %v4887, %v4887
    %v5095 = vmul.f32 %v4889, %v4889
    %v5096 = vmul.f32 %v4892, %v4892
    %v5097 = vmul.f32 %v4894, %v4894
    %v5098 = vmul.f32 %v4897, %v4897
    %v5099 = vmul.f32 %v4899, %v4899
    %v5100 = vmul.f32 %v4902, %v4902
    %v5101 = vmul.f32 %v4904, %v4904
    %v5102 = vmul.f32 %v4907, %v4907
    %v5103 = vmul.f32 %v4909, %v4909
    %v5104 = vmul.f32 %v4912, %v4912
    %v5105 = vmul.f32 %v4914, %v4914
    %v5106 = vmul.f32 %v4917, %v4917
    %v5107 = vmul.f32 %v4919, %v4919
    %v5108 = vmul.f32 %v4922, %v4922
    %v5109 = vmul.f32 %v4924, %v4924
    %v5110 = vmul.f32 %v4927, %v4927
    %v5111 = vmul.f32 %v4929, %v4929
    %v5112 = vmul.f32 %v4932, %v4932
    %v5113 = vmul.f32 %v4934, %v4934
    %v5114 = vmul.f32 %v4937, %v4937
    %v5115 = vmul.f32 %v4939, %v4939
    %v5116 = vmul.f32 %v4942, %v4942
    %v5117 = vmul.f32 %v4944, %v4944
    %v5118 = vmul.f32 %v4947, %v4947
    %v5119 = vmul.f32 %v4949, %v4949
    %v5120 = vmul.f32 %v4952, %v4952
    %v5121 = vmul.f32 %v4954, %v4954
    %v5122 = vmul.f32 %v4957, %v4957
    %v5123 = vmul.f32 %v4959, %v4959
    %v5124 = vmul.f32 %v4962, %v4962
    %v5125 = vmul.f32 %v4964, %v4964
    %v5126 = vmul.f32 %v4967, %v4967
    %v5127 = vmul.f32 %v4969, %v4969
    %v5128 = vmul.f32 %v4972, %v4972
    %v5129 = vmul.f32 %v4974, %v4974
    %v5130 = vmul.f32 %v4977, %v4977
    %v5131 = vmul.f32 %v4979, %v4979
    %v5132 = vmul.f32 %v4982, %v4982
    %v5133 = vmul.f32 %v4984, %v4984
    %v5134 = vmul.f32 %v4987, %v4987
    %v5135 = vmul.f32 %v4989, %v4989
    %v5136 = vmul.f32 %v4992, %v4992
    %v5137 = vmul.f32 %v4994, %v4994
    %v5138 = vmul.f32 %v4997, %v4997
    %v5139 = vmul.f32 %v4999, %v4999
    %v5140 = vmul.f32 %v5002, %v5002
    %v5141 = vmul.f32 %v5004, %v5004
    %v5142 = vadd.f32 %v5078, %v5079
    %v5143 = vadd.f32 %v5142, %v5080
    %v5144 = vadd.f32 %v5143, %v5081
    %v5145 = vadd.f32 %v5144, %v5082
    %v5146 = vadd.f32 %v5145, %v5083
    %v5147 = vadd.f32 %v5146, %v5084
    %v5148 = vadd.f32 %v5147, %v5085
    %v5149 = vadd.f32 %v5148, %v5086
    %v5150 = vadd.f32 %v5149, %v5087
    %v5151 = vadd.f32 %v5150, %v5088
    %v5152 = vadd.f32 %v5151, %v5089
    %v5153 = vadd.f32 %v5152, %v5090
    %v5154 = vadd.f32 %v5153, %v5091
    %v5155 = vadd.f32 %v5154, %v5092
    %v5156 = vadd.f32 %v5155, %v5093
    %v5157 = vadd.f32 %v5156, %v5094
    %v5158 = vadd.f32 %v5157, %v5095
    %v5159 = vadd.f32 %v5158, %v5096
    %v5160 = vadd.f32 %v5159, %v5097
    %v5161 = vadd.f32 %v5160, %v5098
    %v5162 = vadd.f32 %v5161, %v5099
    %v5163 = vadd.f32 %v5162, %v5100
    %v5164 = vadd.f32 %v5163, %v5101
    %v5165 = vadd.f32 %v5164, %v5102
    %v5166 = vadd.f32 %v5165, %v5103
    %v5167 = vadd.f32 %v5166, %v5104
    %v5168 = vadd.f32 %v5167, %v5105
    %v5169 = vadd.f32 %v5168, %v5106
    %v5170 = vadd.f32 %v5169, %v5107
    %v5171 = vadd.f32 %v5170, %v5108
    %v5172 = vadd.f32 %v5171, %v5109
    %v5173 = vadd.f32 %v5172, %v5110
    %v5174 = vadd.f32 %v5173, %v5111
    %v5175 = vadd.f32 %v5174, %v5112
    %v5176 = vadd.f32 %v5175, %v5113
    %v5177 = vadd.f32 %v5176, %v5114
    %v5178 = vadd.f32 %v5177, %v5115
    %v5179 = vadd.f32 %v5178, %v5116
    %v5180 = vadd.f32 %v5179, %v5117
    %v5181 = vadd.f32 %v5180, %v5118
    %v5182 = vadd.f32 %v5181, %v5119
    %v5183 = vadd.f32 %v5182, %v5120
    %v5184 = vadd.f32 %v5183, %v5121
    %v5185 = vadd.f32 %v5184, %v5122
    %v5186 = vadd.f32 %v5185, %v5123
    %v5187 = vadd.f32 %v5186, %v5124
    %v5188 = vadd.f32 %v5187, %v5125
    %v5189 = vadd.f32 %v5188, %v5126
    %v5190 = vadd.f32 %v5189, %v5127
    %v5191 = vadd.f32 %v5190, %v5128
    %v5192 = vadd.f32 %v5191, %v5129
    %v5193 = vadd.f32 %v5192, %v5130
    %v5194 = vadd.f32 %v5193, %v5131
    %v5195 = vadd.f32 %v5194, %v5132
    %v5196 = vadd.f32 %v5195, %v5133
    %v5197 = vadd.f32 %v5196, %v5134
    %v5198 = vadd.f32 %v5197, %v5135
    %v5199 = vadd.f32 %v5198, %v5136
    %v5200 = vadd.f32 %v5199, %v5137
    %v5201 = vadd.f32 %v5200, %v5138
    %v5202 = vadd.f32 %v5201, %v5139
    %v5203 = vadd.f32 %v5202, %v5140
    %v5204 = vadd.f32 %v5203, %v5141
    %v5205 = vrot.slane %v5204, 4
    %v5206 = vadd.f32 %v5204, %v5205
    %v5207 = vrot.slane %v5206, 2
    %v5208 = vadd.f32 %v5206, %v5207
    %v5209 = vrot.slane %v5208, 1
    %v5210 = vadd.f32 %v5208, %v5209
    %v5211 = vmul.f32 %v5210, 0.001953125
    %v5212 = vmul.f32 %v5077, %v5077
    %v5213 = vsub.f32 %v5211, %v5212
    %v5214 = vmax.f32 %v5213, 0.0
    %v5215 = vsub.f32 %v4847, %v5077
    %v5216 = vsub.f32 %v4849, %v5077
    %v5217 = vsub.f32 %v4852, %v5077
    %v5218 = vsub.f32 %v4854, %v5077
    %v5219 = vsub.f32 %v4857, %v5077
    %v5220 = vsub.f32 %v4859, %v5077
    %v5221 = vsub.f32 %v4862, %v5077
    %v5222 = vsub.f32 %v4864, %v5077
    %v5223 = vsub.f32 %v4867, %v5077
    %v5224 = vsub.f32 %v4869, %v5077
    %v5225 = vsub.f32 %v4872, %v5077
    %v5226 = vsub.f32 %v4874, %v5077
    %v5227 = vsub.f32 %v4877, %v5077
    %v5228 = vsub.f32 %v4879, %v5077
    %v5229 = vsub.f32 %v4882, %v5077
    %v5230 = vsub.f32 %v4884, %v5077
    %v5231 = vsub.f32 %v4887, %v5077
    %v5232 = vsub.f32 %v4889, %v5077
    %v5233 = vsub.f32 %v4892, %v5077
    %v5234 = vsub.f32 %v4894, %v5077
    %v5235 = vsub.f32 %v4897, %v5077
    %v5236 = vsub.f32 %v4899, %v5077
    %v5237 = vsub.f32 %v4902, %v5077
    %v5238 = vsub.f32 %v4904, %v5077
    %v5239 = vsub.f32 %v4907, %v5077
    %v5240 = vsub.f32 %v4909, %v5077
    %v5241 = vsub.f32 %v4912, %v5077
    %v5242 = vsub.f32 %v4914, %v5077
    %v5243 = vsub.f32 %v4917, %v5077
    %v5244 = vsub.f32 %v4919, %v5077
    %v5245 = vsub.f32 %v4922, %v5077
    %v5246 = vsub.f32 %v4924, %v5077
    %v5247 = vsub.f32 %v4927, %v5077
    %v5248 = vsub.f32 %v4929, %v5077
    %v5249 = vsub.f32 %v4932, %v5077
    %v5250 = vsub.f32 %v4934, %v5077
    %v5251 = vsub.f32 %v4937, %v5077
    %v5252 = vsub.f32 %v4939, %v5077
    %v5253 = vsub.f32 %v4942, %v5077
    %v5254 = vsub.f32 %v4944, %v5077
    %v5255 = vsub.f32 %v4947, %v5077
    %v5256 = vsub.f32 %v4949, %v5077
    %v5257 = vsub.f32 %v4952, %v5077
    %v5258 = vsub.f32 %v4954, %v5077
    %v5259 = vsub.f32 %v4957, %v5077
    %v5260 = vsub.f32 %v4959, %v5077
    %v5261 = vsub.f32 %v4962, %v5077
    %v5262 = vsub.f32 %v4964, %v5077
    %v5263 = vsub.f32 %v4967, %v5077
    %v5264 = vsub.f32 %v4969, %v5077
    %v5265 = vsub.f32 %v4972, %v5077
    %v5266 = vsub.f32 %v4974, %v5077
    %v5267 = vsub.f32 %v4977, %v5077
    %v5268 = vsub.f32 %v4979, %v5077
    %v5269 = vsub.f32 %v4982, %v5077
    %v5270 = vsub.f32 %v4984, %v5077
    %v5271 = vsub.f32 %v4987, %v5077
    %v5272 = vsub.f32 %v4989, %v5077
    %v5273 = vsub.f32 %v4992, %v5077
    %v5274 = vsub.f32 %v4994, %v5077
    %v5275 = vsub.f32 %v4997, %v5077
    %v5276 = vsub.f32 %v4999, %v5077
    %v5277 = vsub.f32 %v5002, %v5077
    %v5278 = vsub.f32 %v5004, %v5077
    %v5279 = vadd.f32 %v5214, 1e-05
    %v5280 = vrsqrt.pop %v5279
    %v5281 = vmul.f32 %v5280, %v5279
    %v5282 = vmul.f32 %v5281, %v5280
    %v5283 = vmul.f32 0.5, %v5282
    %v5284 = vsub.f32 1.5, %v5283
    %v5285 = vmul.f32 %v5280, %v5284
    %vm5286 = vweird.f32 %v5279
    %vm5287 = vweird.f32 %v5280
    %vm5288 = vmor %vm5286, %vm5287
    %v5289 = vsel %vm5288, %v5280, %v5285
    %v5290 = vmul.f32 %v5215, %v5289
    %v5291 = vmul.f32 %v5216, %v5289
    %v5292 = vmul.f32 %v5217, %v5289
    %v5293 = vmul.f32 %v5218, %v5289
    %v5294 = vmul.f32 %v5219, %v5289
    %v5295 = vmul.f32 %v5220, %v5289
    %v5296 = vmul.f32 %v5221, %v5289
    %v5297 = vmul.f32 %v5222, %v5289
    %v5298 = vmul.f32 %v5223, %v5289
    %v5299 = vmul.f32 %v5224, %v5289
    %v5300 = vmul.f32 %v5225, %v5289
    %v5301 = vmul.f32 %v5226, %v5289
    %v5302 = vmul.f32 %v5227, %v5289
    %v5303 = vmul.f32 %v5228, %v5289
    %v5304 = vmul.f32 %v5229, %v5289
    %v5305 = vmul.f32 %v5230, %v5289
    %v5306 = vmul.f32 %v5231, %v5289
    %v5307 = vmul.f32 %v5232, %v5289
    %v5308 = vmul.f32 %v5233, %v5289
    %v5309 = vmul.f32 %v5234, %v5289
    %v5310 = vmul.f32 %v5235, %v5289
    %v5311 = vmul.f32 %v5236, %v5289
    %v5312 = vmul.f32 %v5237, %v5289
    %v5313 = vmul.f32 %v5238, %v5289
    %v5314 = vmul.f32 %v5239, %v5289
    %v5315 = vmul.f32 %v5240, %v5289
    %v5316 = vmul.f32 %v5241, %v5289
    %v5317 = vmul.f32 %v5242, %v5289
    %v5318 = vmul.f32 %v5243, %v5289
    %v5319 = vmul.f32 %v5244, %v5289
    %v5320 = vmul.f32 %v5245, %v5289
    %v5321 = vmul.f32 %v5246, %v5289
    %v5322 = vmul.f32 %v5247, %v5289
    %v5323 = vmul.f32 %v5248, %v5289
    %v5324 = vmul.f32 %v5249, %v5289
    %v5325 = vmul.f32 %v5250, %v5289
    %v5326 = vmul.f32 %v5251, %v5289
    %v5327 = vmul.f32 %v5252, %v5289
    %v5328 = vmul.f32 %v5253, %v5289
    %v5329 = vmul.f32 %v5254, %v5289
    %v5330 = vmul.f32 %v5255, %v5289
    %v5331 = vmul.f32 %v5256, %v5289
    %v5332 = vmul.f32 %v5257, %v5289
    %v5333 = vmul.f32 %v5258, %v5289
    %v5334 = vmul.f32 %v5259, %v5289
    %v5335 = vmul.f32 %v5260, %v5289
    %v5336 = vmul.f32 %v5261, %v5289
    %v5337 = vmul.f32 %v5262, %v5289
    %v5338 = vmul.f32 %v5263, %v5289
    %v5339 = vmul.f32 %v5264, %v5289
    %v5340 = vmul.f32 %v5265, %v5289
    %v5341 = vmul.f32 %v5266, %v5289
    %v5342 = vmul.f32 %v5267, %v5289
    %v5343 = vmul.f32 %v5268, %v5289
    %v5344 = vmul.f32 %v5269, %v5289
    %v5345 = vmul.f32 %v5270, %v5289
    %v5346 = vmul.f32 %v5271, %v5289
    %v5347 = vmul.f32 %v5272, %v5289
    %v5348 = vmul.f32 %v5273, %v5289
    %v5349 = vmul.f32 %v5274, %v5289
    %v5350 = vmul.f32 %v5275, %v5289
    %v5351 = vmul.f32 %v5276, %v5289
    %v5352 = vmul.f32 %v5277, %v5289
    %v5353 = vmul.f32 %v5278, %v5289
    %v5355 = vperm.slane %v5006, 0
    %v5357 = vmul.f32 %v5290, %v5355
    %v5358 = vmul.f32 %v5291, %v5355
    %v5359 = vmul.f32 %v5292, %v5355
    %v5360 = vmul.f32 %v5293, %v5355
    %v5361 = vmul.f32 %v5294, %v5355
    %v5362 = vmul.f32 %v5295, %v5355
    %v5363 = vmul.f32 %v5296, %v5355
    %v5364 = vmul.f32 %v5297, %v5355
    %v5365 = vmul.f32 %v5298, %v5355
    %v5366 = vmul.f32 %v5299, %v5355
    %v5367 = vmul.f32 %v5300, %v5355
    %v5368 = vmul.f32 %v5301, %v5355
    %v5369 = vmul.f32 %v5302, %v5355
    %v5370 = vmul.f32 %v5303, %v5355
    %v5371 = vmul.f32 %v5304, %v5355
    %v5372 = vmul.f32 %v5305, %v5355
    %v5373 = vmul.f32 %v5306, %v5355
    %v5374 = vmul.f32 %v5307, %v5355
    %v5375 = vmul.f32 %v5308, %v5355
    %v5376 = vmul.f32 %v5309, %v5355
    %v5377 = vmul.f32 %v5310, %v5355
    %v5378 = vmul.f32 %v5311, %v5355
    %v5379 = vmul.f32 %v5312, %v5355
    %v5380 = vmul.f32 %v5313, %v5355
    %v5381 = vmul.f32 %v5314, %v5355
    %v5382 = vmul.f32 %v5315, %v5355
    %v5383 = vmul.f32 %v5316, %v5355
    %v5384 = vmul.f32 %v5317, %v5355
    %v5385 = vmul.f32 %v5318, %v5355
    %v5386 = vmul.f32 %v5319, %v5355
    %v5387 = vmul.f32 %v5320, %v5355
    %v5388 = vmul.f32 %v5321, %v5355
    %v5389 = vmul.f32 %v5322, %v5355
    %v5390 = vmul.f32 %v5323, %v5355
    %v5391 = vmul.f32 %v5324, %v5355
    %v5392 = vmul.f32 %v5325, %v5355
    %v5393 = vmul.f32 %v5326, %v5355
    %v5394 = vmul.f32 %v5327, %v5355
    %v5395 = vmul.f32 %v5328, %v5355
    %v5396 = vmul.f32 %v5329, %v5355
    %v5397 = vmul.f32 %v5330, %v5355
    %v5398 = vmul.f32 %v5331, %v5355
    %v5399 = vmul.f32 %v5332, %v5355
    %v5400 = vmul.f32 %v5333, %v5355
    %v5401 = vmul.f32 %v5334, %v5355
    %v5402 = vmul.f32 %v5335, %v5355
    %v5403 = vmul.f32 %v5336, %v5355
    %v5404 = vmul.f32 %v5337, %v5355
    %v5405 = vmul.f32 %v5338, %v5355
    %v5406 = vmul.f32 %v5339, %v5355
    %v5407 = vmul.f32 %v5340, %v5355
    %v5408 = vmul.f32 %v5341, %v5355
    %v5409 = vmul.f32 %v5342, %v5355
    %v5410 = vmul.f32 %v5343, %v5355
    %v5411 = vmul.f32 %v5344, %v5355
    %v5412 = vmul.f32 %v5345, %v5355
    %v5413 = vmul.f32 %v5346, %v5355
    %v5414 = vmul.f32 %v5347, %v5355
    %v5415 = vmul.f32 %v5348, %v5355
    %v5416 = vmul.f32 %v5349, %v5355
    %v5417 = vmul.f32 %v5350, %v5355
    %v5418 = vmul.f32 %v5351, %v5355
    %v5419 = vmul.f32 %v5352, %v5355
    %v5420 = vmul.f32 %v5353, %v5355
    %v5422 = vperm.slane %v5007, 0
    %v5424 = vadd.f32 %v5357, %v5422
    %v5425 = vadd.f32 %v5358, %v5422
    %v5426 = vadd.f32 %v5359, %v5422
    %v5427 = vadd.f32 %v5360, %v5422
    %v5428 = vadd.f32 %v5361, %v5422
    %v5429 = vadd.f32 %v5362, %v5422
    %v5430 = vadd.f32 %v5363, %v5422
    %v5431 = vadd.f32 %v5364, %v5422
    %v5432 = vadd.f32 %v5365, %v5422
    %v5433 = vadd.f32 %v5366, %v5422
    %v5434 = vadd.f32 %v5367, %v5422
    %v5435 = vadd.f32 %v5368, %v5422
    %v5436 = vadd.f32 %v5369, %v5422
    %v5437 = vadd.f32 %v5370, %v5422
    %v5438 = vadd.f32 %v5371, %v5422
    %v5439 = vadd.f32 %v5372, %v5422
    %v5440 = vadd.f32 %v5373, %v5422
    %v5441 = vadd.f32 %v5374, %v5422
    %v5442 = vadd.f32 %v5375, %v5422
    %v5443 = vadd.f32 %v5376, %v5422
    %v5444 = vadd.f32 %v5377, %v5422
    %v5445 = vadd.f32 %v5378, %v5422
    %v5446 = vadd.f32 %v5379, %v5422
    %v5447 = vadd.f32 %v5380, %v5422
    %v5448 = vadd.f32 %v5381, %v5422
    %v5449 = vadd.f32 %v5382, %v5422
    %v5450 = vadd.f32 %v5383, %v5422
    %v5451 = vadd.f32 %v5384, %v5422
    %v5452 = vadd.f32 %v5385, %v5422
    %v5453 = vadd.f32 %v5386, %v5422
    %v5454 = vadd.f32 %v5387, %v5422
    %v5455 = vadd.f32 %v5388, %v5422
    %v5456 = vadd.f32 %v5389, %v5422
    %v5457 = vadd.f32 %v5390, %v5422
    %v5458 = vadd.f32 %v5391, %v5422
    %v5459 = vadd.f32 %v5392, %v5422
    %v5460 = vadd.f32 %v5393, %v5422
    %v5461 = vadd.f32 %v5394, %v5422
    %v5462 = vadd.f32 %v5395, %v5422
    %v5463 = vadd.f32 %v5396, %v5422
    %v5464 = vadd.f32 %v5397, %v5422
    %v5465 = vadd.f32 %v5398, %v5422
    %v5466 = vadd.f32 %v5399, %v5422
    %v5467 = vadd.f32 %v5400, %v5422
    %v5468 = vadd.f32 %v5401, %v5422
    %v5469 = vadd.f32 %v5402, %v5422
    %v5470 = vadd.f32 %v5403, %v5422
    %v5471 = vadd.f32 %v5404, %v5422
    %v5472 = vadd.f32 %v5405, %v5422
    %v5473 = vadd.f32 %v5406, %v5422
    %v5474 = vadd.f32 %v5407, %v5422
    %v5475 = vadd.f32 %v5408, %v5422
    %v5476 = vadd.f32 %v5409, %v5422
    %v5477 = vadd.f32 %v5410, %v5422
    %v5478 = vadd.f32 %v5411, %v5422
    %v5479 = vadd.f32 %v5412, %v5422
    %v5480 = vadd.f32 %v5413, %v5422
    %v5481 = vadd.f32 %v5414, %v5422
    %v5482 = vadd.f32 %v5415, %v5422
    %v5483 = vadd.f32 %v5416, %v5422
    %v5484 = vadd.f32 %v5417, %v5422
    %v5485 = vadd.f32 %v5418, %v5422
    %v5486 = vadd.f32 %v5419, %v5422
    %v5487 = vadd.f32 %v5420, %v5422
    %v5488 = vmax.f32 %v5424, 0.0
    %v5489 = vmax.f32 %v5425, 0.0
    %v5490 = vmax.f32 %v5426, 0.0
    %v5491 = vmax.f32 %v5427, 0.0
    %v5492 = vmax.f32 %v5428, 0.0
    %v5493 = vmax.f32 %v5429, 0.0
    %v5494 = vmax.f32 %v5430, 0.0
    %v5495 = vmax.f32 %v5431, 0.0
    %v5496 = vmax.f32 %v5432, 0.0
    %v5497 = vmax.f32 %v5433, 0.0
    %v5498 = vmax.f32 %v5434, 0.0
    %v5499 = vmax.f32 %v5435, 0.0
    %v5500 = vmax.f32 %v5436, 0.0
    %v5501 = vmax.f32 %v5437, 0.0
    %v5502 = vmax.f32 %v5438, 0.0
    %v5503 = vmax.f32 %v5439, 0.0
    %v5504 = vmax.f32 %v5440, 0.0
    %v5505 = vmax.f32 %v5441, 0.0
    %v5506 = vmax.f32 %v5442, 0.0
    %v5507 = vmax.f32 %v5443, 0.0
    %v5508 = vmax.f32 %v5444, 0.0
    %v5509 = vmax.f32 %v5445, 0.0
    %v5510 = vmax.f32 %v5446, 0.0
    %v5511 = vmax.f32 %v5447, 0.0
    %v5512 = vmax.f32 %v5448, 0.0
    %v5513 = vmax.f32 %v5449, 0.0
    %v5514 = vmax.f32 %v5450, 0.0
    %v5515 = vmax.f32 %v5451, 0.0
    %v5516 = vmax.f32 %v5452, 0.0
    %v5517 = vmax.f32 %v5453, 0.0
    %v5518 = vmax.f32 %v5454, 0.0
    %v5519 = vmax.f32 %v5455, 0.0
    %v5520 = vmax.f32 %v5456, 0.0
    %v5521 = vmax.f32 %v5457, 0.0
    %v5522 = vmax.f32 %v5458, 0.0
    %v5523 = vmax.f32 %v5459, 0.0
    %v5524 = vmax.f32 %v5460, 0.0
    %v5525 = vmax.f32 %v5461, 0.0
    %v5526 = vmax.f32 %v5462, 0.0
    %v5527 = vmax.f32 %v5463, 0.0
    %v5528 = vmax.f32 %v5464, 0.0
    %v5529 = vmax.f32 %v5465, 0.0
    %v5530 = vmax.f32 %v5466, 0.0
    %v5531 = vmax.f32 %v5467, 0.0
    %v5532 = vmax.f32 %v5468, 0.0
    %v5533 = vmax.f32 %v5469, 0.0
    %v5534 = vmax.f32 %v5470, 0.0
    %v5535 = vmax.f32 %v5471, 0.0
    %v5536 = vmax.f32 %v5472, 0.0
    %v5537 = vmax.f32 %v5473, 0.0
    %v5538 = vmax.f32 %v5474, 0.0
    %v5539 = vmax.f32 %v5475, 0.0
    %v5540 = vmax.f32 %v5476, 0.0
    %v5541 = vmax.f32 %v5477, 0.0
    %v5542 = vmax.f32 %v5478, 0.0
    %v5543 = vmax.f32 %v5479, 0.0
    %v5544 = vmax.f32 %v5480, 0.0
    %v5545 = vmax.f32 %v5481, 0.0
    %v5546 = vmax.f32 %v5482, 0.0
    %v5547 = vmax.f32 %v5483, 0.0
    %v5548 = vmax.f32 %v5484, 0.0
    %v5549 = vmax.f32 %v5485, 0.0
    %v5550 = vmax.f32 %v5486, 0.0
    %v5551 = vmax.f32 %v5487, 0.0
    %5552 = vst [vmem:[#allocation2] sm:$0xff] 0.0
    %5553 = vst [vmem:[#allocation2 + $0x8] sm:$0xff] 0.0
    %5554 = vst [vmem:[#allocation2 + $0x10] sm:$0x3] 0.0
    %5555 = vst [vmem:[#allocation2 + $0x1b0] sm:$0xff] 0.0
    %5556 = vst [vmem:[#allocation2 + $0x1b8] sm:$0xff] 0.0
    %5557 = vst [vmem:[#allocation2 + $0x1c0] sm:$0x3] 0.0
    %s5558 = scalar_lea.vmem [#allocation2], 408
    %5559 = vst [vmem:[%s5558] sm:$0xff] 0.0
    %5560 = vst [vmem:[%s5558 + $0x8] sm:$0xff] 0.0
    %5561 = vst [vmem:[%s5558 + $0x10] sm:$0x3] 0.0
    %5562 = vst [vmem:[%s5558 + $0x1b0] sm:$0xff] 0.0
    %5563 = vst [vmem:[%s5558 + $0x1b8] sm:$0xff] 0.0
    %5564 = vst [vmem:[%s5558 + $0x1c0] sm:$0x3] 0.0
    %5565 = vst [vmem:[#allocation2] sm:$0x1] 0.0
    %5566 = vst [vmem:[#allocation2 + $0x18] sm:$0x1] 0.0
    %5567 = vst [vmem:[#allocation2 + $0x30] sm:$0x1] 0.0
    %5568 = vst [vmem:[#allocation2 + $0x48] sm:$0x1] 0.0
    %5569 = vst [vmem:[#allocation2 + $0x60] sm:$0x1] 0.0
    %5570 = vst [vmem:[#allocation2 + $0x78] sm:$0x1] 0.0
    %5571 = vst [vmem:[#allocation2 + $0x90] sm:$0x1] 0.0
    %5572 = vst [vmem:[#allocation2 + $0xa8] sm:$0x1] 0.0
    %5573 = vst [vmem:[#allocation2 + $0xc0] sm:$0x1] 0.0
    %5574 = vst [vmem:[#allocation2 + $0xd8] sm:$0x1] 0.0
    %5575 = vst [vmem:[#allocation2 + $0xf0] sm:$0x1] 0.0
    %5576 = vst [vmem:[#allocation2 + $0x108] sm:$0x1] 0.0
    %5577 = vst [vmem:[#allocation2 + $0x120] sm:$0x1] 0.0
    %5578 = vst [vmem:[#allocation2 + $0x138] sm:$0x1] 0.0
    %5579 = vst [vmem:[#allocation2 + $0x150] sm:$0x1] 0.0
    %5580 = vst [vmem:[#allocation2 + $0x168] sm:$0x1] 0.0
    %5581 = vst [vmem:[#allocation2 + $0x180] sm:$0x1] 0.0
    %5582 = vst [vmem:[#allocation2 + $0x198] sm:$0x1] 0.0
    %5583 = vst [vmem:[#allocation2 + $0x1b0] sm:$0x1] 0.0
    %5584 = vst [vmem:[#allocation2 + $0x1c8] sm:$0x1] 0.0
    %5585 = vst [vmem:[#allocation2 + $0x1e0] sm:$0x1] 0.0
    %5586 = vst [vmem:[#allocation2 + $0x1f8] sm:$0x1] 0.0
    %5587 = vst [vmem:[#allocation2 + $0x210] sm:$0x1] 0.0
    %5588 = vst [vmem:[#allocation2 + $0x228] sm:$0x1] 0.0
    %5589 = vst [vmem:[#allocation2 + $0x240] sm:$0x1] 0.0
    %5590 = vst [vmem:[#allocation2 + $0x258] sm:$0x1] 0.0
    %5591 = vst [vmem:[#allocation2 + $0x270] sm:$0x1] 0.0
    %5592 = vst [vmem:[#allocation2 + $0x288] sm:$0x1] 0.0
    %5593 = vst [vmem:[#allocation2 + $0x2a0] sm:$0x1] 0.0
    %5594 = vst [vmem:[#allocation2 + $0x2b8] sm:$0x1] 0.0
    %5595 = vst [vmem:[#allocation2 + $0x2d0] sm:$0x1] 0.0
    %5596 = vst [vmem:[#allocation2 + $0x2e8] sm:$0x1] 0.0
    %5597 = vst [vmem:[#allocation2 + $0x300] sm:$0x1] 0.0
    %5598 = vst [vmem:[#allocation2 + $0x318] sm:$0x1] 0.0
    %5599 = vst [vmem:[#allocation2 + $0x330] sm:$0x1] 0.0
    %5600 = vst [vmem:[#allocation2 + $0x348] sm:$0x1] 0.0
    %5601 = vst [vmem:[#allocation2 + $0x11] sm:$0x1] 0.0
    %5602 = vst [vmem:[#allocation2 + $0x29] sm:$0x1] 0.0
    %5603 = vst [vmem:[#allocation2 + $0x41] sm:$0x1] 0.0
    %5604 = vst [vmem:[#allocation2 + $0x59] sm:$0x1] 0.0
    %5605 = vst [vmem:[#allocation2 + $0x71] sm:$0x1] 0.0
    %5606 = vst [vmem:[#allocation2 + $0x89] sm:$0x1] 0.0
    %5607 = vst [vmem:[#allocation2 + $0xa1] sm:$0x1] 0.0
    %5608 = vst [vmem:[#allocation2 + $0xb9] sm:$0x1] 0.0
    %5609 = vst [vmem:[#allocation2 + $0xd1] sm:$0x1] 0.0
    %5610 = vst [vmem:[#allocation2 + $0xe9] sm:$0x1] 0.0
    %5611 = vst [vmem:[#allocation2 + $0x101] sm:$0x1] 0.0
    %5612 = vst [vmem:[#allocation2 + $0x119] sm:$0x1] 0.0
    %5613 = vst [vmem:[#allocation2 + $0x131] sm:$0x1] 0.0
    %5614 = vst [vmem:[#allocation2 + $0x149] sm:$0x1] 0.0
    %5615 = vst [vmem:[#allocation2 + $0x161] sm:$0x1] 0.0
    %5616 = vst [vmem:[#allocation2 + $0x179] sm:$0x1] 0.0
    %5617 = vst [vmem:[#allocation2 + $0x191] sm:$0x1] 0.0
    %5618 = vst [vmem:[#allocation2 + $0x1a9] sm:$0x1] 0.0
    %5619 = vst [vmem:[#allocation2 + $0x1c1] sm:$0x1] 0.0
    %5620 = vst [vmem:[#allocation2 + $0x1d9] sm:$0x1] 0.0
    %5621 = vst [vmem:[#allocation2 + $0x1f1] sm:$0x1] 0.0
    %5622 = vst [vmem:[#allocation2 + $0x209] sm:$0x1] 0.0
    %5623 = vst [vmem:[#allocation2 + $0x221] sm:$0x1] 0.0
    %5624 = vst [vmem:[#allocation2 + $0x239] sm:$0x1] 0.0
    %5625 = vst [vmem:[#allocation2 + $0x251] sm:$0x1] 0.0
    %5626 = vst [vmem:[#allocation2 + $0x269] sm:$0x1] 0.0
    %5627 = vst [vmem:[#allocation2 + $0x281] sm:$0x1] 0.0
    %5628 = vst [vmem:[#allocation2 + $0x299] sm:$0x1] 0.0
    %5629 = vst [vmem:[#allocation2 + $0x2b1] sm:$0x1] 0.0
    %5630 = vst [vmem:[#allocation2 + $0x2c9] sm:$0x1] 0.0
    %5631 = vst [vmem:[#allocation2 + $0x2e1] sm:$0x1] 0.0
    %5632 = vst [vmem:[#allocation2 + $0x2f9] sm:$0x1] 0.0
    %5633 = vst [vmem:[#allocation2 + $0x311] sm:$0x1] 0.0
    %5634 = vst [vmem:[#allocation2 + $0x329] sm:$0x1] 0.0
    %5635 = vst [vmem:[#allocation2 + $0x341] sm:$0x1] 0.0
    %5636 = vst [vmem:[#allocation2 + $0x359] sm:$0x1] 0.0
    %s5637 = scalar_lea.vmem [#allocation2], 24
    %5638 = vst [vmem:[%s5637 + $0x1] sm:$0xff] %v5488
    %5639 = vst [vmem:[%s5637 + $0x9] sm:$0xff] %v5489
    %5640 = vst [vmem:[%s5637 + $0x19] sm:$0xff] %v5490
    %5641 = vst [vmem:[%s5637 + $0x21] sm:$0xff] %v5491
    %5642 = vst [vmem:[%s5637 + $0x31] sm:$0xff] %v5492
    %5643 = vst [vmem:[%s5637 + $0x39] sm:$0xff] %v5493
    %5644 = vst [vmem:[%s5637 + $0x49] sm:$0xff] %v5494
    %5645 = vst [vmem:[%s5637 + $0x51] sm:$0xff] %v5495
    %5646 = vst [vmem:[%s5637 + $0x61] sm:$0xff] %v5496
    %5647 = vst [vmem:[%s5637 + $0x69] sm:$0xff] %v5497
    %5648 = vst [vmem:[%s5637 + $0x79] sm:$0xff] %v5498
    %5649 = vst [vmem:[%s5637 + $0x81] sm:$0xff] %v5499
    %5650 = vst [vmem:[%s5637 + $0x91] sm:$0xff] %v5500
    %5651 = vst [vmem:[%s5637 + $0x99] sm:$0xff] %v5501
    %5652 = vst [vmem:[%s5637 + $0xa9] sm:$0xff] %v5502
    %5653 = vst [vmem:[%s5637 + $0xb1] sm:$0xff] %v5503
    %5654 = vst [vmem:[%s5637 + $0xc1] sm:$0xff] %v5504
    %5655 = vst [vmem:[%s5637 + $0xc9] sm:$0xff] %v5505
    %5656 = vst [vmem:[%s5637 + $0xd9] sm:$0xff] %v5506
    %5657 = vst [vmem:[%s5637 + $0xe1] sm:$0xff] %v5507
    %5658 = vst [vmem:[%s5637 + $0xf1] sm:$0xff] %v5508
    %5659 = vst [vmem:[%s5637 + $0xf9] sm:$0xff] %v5509
    %5660 = vst [vmem:[%s5637 + $0x109] sm:$0xff] %v5510
    %5661 = vst [vmem:[%s5637 + $0x111] sm:$0xff] %v5511
    %5662 = vst [vmem:[%s5637 + $0x121] sm:$0xff] %v5512
    %5663 = vst [vmem:[%s5637 + $0x129] sm:$0xff] %v5513
    %5664 = vst [vmem:[%s5637 + $0x139] sm:$0xff] %v5514
    %5665 = vst [vmem:[%s5637 + $0x141] sm:$0xff] %v5515
    %5666 = vst [vmem:[%s5637 + $0x151] sm:$0xff] %v5516
    %5667 = vst [vmem:[%s5637 + $0x159] sm:$0xff] %v5517
    %5668 = vst [vmem:[%s5637 + $0x169] sm:$0xff] %v5518
    %5669 = vst [vmem:[%s5637 + $0x171] sm:$0xff] %v5519
    %5670 = vst [vmem:[%s5637 + $0x1b1] sm:$0xff] %v5520
    %5671 = vst [vmem:[%s5637 + $0x1b9] sm:$0xff] %v5521
    %5672 = vst [vmem:[%s5637 + $0x1c9] sm:$0xff] %v5522
    %5673 = vst [vmem:[%s5637 + $0x1d1] sm:$0xff] %v5523
    %5674 = vst [vmem:[%s5637 + $0x1e1] sm:$0xff] %v5524
    %5675 = vst [vmem:[%s5637 + $0x1e9] sm:$0xff] %v5525
    %5676 = vst [vmem:[%s5637 + $0x1f9] sm:$0xff] %v5526
    %5677 = vst [vmem:[%s5637 + $0x201] sm:$0xff] %v5527
    %5678 = vst [vmem:[%s5637 + $0x211] sm:$0xff] %v5528
    %5679 = vst [vmem:[%s5637 + $0x219] sm:$0xff] %v5529
    %5680 = vst [vmem:[%s5637 + $0x229] sm:$0xff] %v5530
    %5681 = vst [vmem:[%s5637 + $0x231] sm:$0xff] %v5531
    %5682 = vst [vmem:[%s5637 + $0x241] sm:$0xff] %v5532
    %5683 = vst [vmem:[%s5637 + $0x249] sm:$0xff] %v5533
    %5684 = vst [vmem:[%s5637 + $0x259] sm:$0xff] %v5534
    %5685 = vst [vmem:[%s5637 + $0x261] sm:$0xff] %v5535
    %5686 = vst [vmem:[%s5637 + $0x271] sm:$0xff] %v5536
    %5687 = vst [vmem:[%s5637 + $0x279] sm:$0xff] %v5537
    %5688 = vst [vmem:[%s5637 + $0x289] sm:$0xff] %v5538
    %5689 = vst [vmem:[%s5637 + $0x291] sm:$0xff] %v5539
    %5690 = vst [vmem:[%s5637 + $0x2a1] sm:$0xff] %v5540
    %5691 = vst [vmem:[%s5637 + $0x2a9] sm:$0xff] %v5541
    %5692 = vst [vmem:[%s5637 + $0x2b9] sm:$0xff] %v5542
    %5693 = vst [vmem:[%s5637 + $0x2c1] sm:$0xff] %v5543
    %5694 = vst [vmem:[%s5637 + $0x2d1] sm:$0xff] %v5544
    %5695 = vst [vmem:[%s5637 + $0x2d9] sm:$0xff] %v5545
    %5696 = vst [vmem:[%s5637 + $0x2e9] sm:$0xff] %v5546
    %5697 = vst [vmem:[%s5637 + $0x2f1] sm:$0xff] %v5547
    %5698 = vst [vmem:[%s5637 + $0x301] sm:$0xff] %v5548
    %5699 = vst [vmem:[%s5637 + $0x309] sm:$0xff] %v5549
    %5700 = vst [vmem:[%s5637 + $0x319] sm:$0xff] %v5550
    %5701 = vst [vmem:[%s5637 + $0x321] sm:$0xff] %v5551
    %v5702 = vld [vmem:[#allocation2] sm:$0xff]
    %v5703 = vld [vmem:[#allocation2 + $0x8] sm:$0xff]
    %v5704 = vld [vmem:[#allocation2 + $0x18] sm:$0xff]
    %v5705 = vld [vmem:[#allocation2 + $0x20] sm:$0xff]
    %v5706 = vld [vmem:[#allocation2 + $0x30] sm:$0xff]
    %v5707 = vld [vmem:[#allocation2 + $0x38] sm:$0xff]
    %v5708 = vld [vmem:[#allocation2 + $0x48] sm:$0xff]
    %v5709 = vld [vmem:[#allocation2 + $0x50] sm:$0xff]
    %v5710 = vld [vmem:[#allocation2 + $0x60] sm:$0xff]
    %v5711 = vld [vmem:[#allocation2 + $0x68] sm:$0xff]
    %v5712 = vld [vmem:[#allocation2 + $0x78] sm:$0xff]
    %v5713 = vld [vmem:[#allocation2 + $0x80] sm:$0xff]
    %v5714 = vld [vmem:[#allocation2 + $0x90] sm:$0xff]
    %v5715 = vld [vmem:[#allocation2 + $0x98] sm:$0xff]
    %v5716 = vld [vmem:[#allocation2 + $0xa8] sm:$0xff]
    %v5717 = vld [vmem:[#allocation2 + $0xb0] sm:$0xff]
    %v5718 = vld [vmem:[#allocation2 + $0xc0] sm:$0xff]
    %v5719 = vld [vmem:[#allocation2 + $0xc8] sm:$0xff]
    %v5720 = vld [vmem:[#allocation2 + $0xd8] sm:$0xff]
    %v5721 = vld [vmem:[#allocation2 + $0xe0] sm:$0xff]
    %v5722 = vld [vmem:[#allocation2 + $0xf0] sm:$0xff]
    %v5723 = vld [vmem:[#allocation2 + $0xf8] sm:$0xff]
    %v5724 = vld [vmem:[#allocation2 + $0x108] sm:$0xff]
    %v5725 = vld [vmem:[#allocation2 + $0x110] sm:$0xff]
    %v5726 = vld [vmem:[#allocation2 + $0x120] sm:$0xff]
    %v5727 = vld [vmem:[#allocation2 + $0x128] sm:$0xff]
    %v5728 = vld [vmem:[#allocation2 + $0x138] sm:$0xff]
    %v5729 = vld [vmem:[#allocation2 + $0x140] sm:$0xff]
    %v5730 = vld [vmem:[#allocation2 + $0x150] sm:$0xff]
    %v5731 = vld [vmem:[#allocation2 + $0x158] sm:$0xff]
    %v5732 = vld [vmem:[#allocation2 + $0x168] sm:$0xff]
    %v5733 = vld [vmem:[#allocation2 + $0x170] sm:$0xff]
    %v5734 = vld [vmem:[#allocation2 + $0x1b0] sm:$0xff]
    %v5735 = vld [vmem:[#allocation2 + $0x1b8] sm:$0xff]
    %v5736 = vld [vmem:[#allocation2 + $0x1c8] sm:$0xff]
    %v5737 = vld [vmem:[#allocation2 + $0x1d0] sm:$0xff]
    %v5738 = vld [vmem:[#allocation2 + $0x1e0] sm:$0xff]
    %v5739 = vld [vmem:[#allocation2 + $0x1e8] sm:$0xff]
    %v5740 = vld [vmem:[#allocation2 + $0x1f8] sm:$0xff]
    %v5741 = vld [vmem:[#allocation2 + $0x200] sm:$0xff]
    %v5742 = vld [vmem:[#allocation2 + $0x210] sm:$0xff]
    %v5743 = vld [vmem:[#allocation2 + $0x218] sm:$0xff]
    %v5744 = vld [vmem:[#allocation2 + $0x228] sm:$0xff]
    %v5745 = vld [vmem:[#allocation2 + $0x230] sm:$0xff]
    %v5746 = vld [vmem:[#allocation2 + $0x240] sm:$0xff]
    %v5747 = vld [vmem:[#allocation2 + $0x248] sm:$0xff]
    %v5748 = vld [vmem:[#allocation2 + $0x258] sm:$0xff]
    %v5749 = vld [vmem:[#allocation2 + $0x260] sm:$0xff]
    %v5750 = vld [vmem:[#allocation2 + $0x270] sm:$0xff]
    %v5751 = vld [vmem:[#allocation2 + $0x278] sm:$0xff]
    %v5752 = vld [vmem:[#allocation2 + $0x288] sm:$0xff]
    %v5753 = vld [vmem:[#allocation2 + $0x290] sm:$0xff]
    %v5754 = vld [vmem:[#allocation2 + $0x2a0] sm:$0xff]
    %v5755 = vld [vmem:[#allocation2 + $0x2a8] sm:$0xff]
    %v5756 = vld [vmem:[#allocation2 + $0x2b8] sm:$0xff]
    %v5757 = vld [vmem:[#allocation2 + $0x2c0] sm:$0xff]
    %v5758 = vld [vmem:[#allocation2 + $0x2d0] sm:$0xff]
    %v5759 = vld [vmem:[#allocation2 + $0x2d8] sm:$0xff]
    %v5760 = vld [vmem:[#allocation2 + $0x2e8] sm:$0xff]
    %v5761 = vld [vmem:[#allocation2 + $0x2f0] sm:$0xff]
    %v5762 = vld [vmem:[#allocation2 + $0x300] sm:$0xff]
    %v5763 = vld [vmem:[#allocation2 + $0x308] sm:$0xff]
    %v5764 = vld [vmem:[#allocation2 + $0x318] sm:$0xff]
    %v5765 = vld [vmem:[#allocation2 + $0x320] sm:$0xff]
    %v5766 = vpack.c.bf16 %v5702, %v5702
    %v5767 = vpack.c.bf16 %v5703, %v5703
    %v5768 = vpack.c.bf16 %v5704, %v5704
    %v5769 = vpack.c.bf16 %v5705, %v5705
    %v5770 = vpack.c.bf16 %v5706, %v5706
    %v5771 = vpack.c.bf16 %v5707, %v5707
    %v5772 = vpack.c.bf16 %v5708, %v5708
    %v5773 = vpack.c.bf16 %v5709, %v5709
    %v5774 = vpack.c.bf16 %v5710, %v5710
    %v5775 = vpack.c.bf16 %v5711, %v5711
    %v5776 = vpack.c.bf16 %v5712, %v5712
    %v5777 = vpack.c.bf16 %v5713, %v5713
    %v5778 = vpack.c.bf16 %v5714, %v5714
    %v5779 = vpack.c.bf16 %v5715, %v5715
    %v5780 = vpack.c.bf16 %v5716, %v5716
    %v5781 = vpack.c.bf16 %v5717, %v5717
    %v5782 = vpack.c.bf16 %v5718, %v5718
    %v5783 = vpack.c.bf16 %v5719, %v5719
    %v5784 = vpack.c.bf16 %v5720, %v5720
    %v5785 = vpack.c.bf16 %v5721, %v5721
    %v5786 = vpack.c.bf16 %v5722, %v5722
    %v5787 = vpack.c.bf16 %v5723, %v5723
    %v5788 = vpack.c.bf16 %v5724, %v5724
    %v5789 = vpack.c.bf16 %v5725, %v5725
    %v5790 = vpack.c.bf16 %v5726, %v5726
    %v5791 = vpack.c.bf16 %v5727, %v5727
    %v5792 = vpack.c.bf16 %v5728, %v5728
    %v5793 = vpack.c.bf16 %v5729, %v5729
    %v5794 = vpack.c.bf16 %v5730, %v5730
    %v5795 = vpack.c.bf16 %v5731, %v5731
    %v5796 = vpack.c.bf16 %v5732, %v5732
    %v5797 = vpack.c.bf16 %v5733, %v5733
    %v5798 = vpack.c.bf16 %v5734, %v5734
    %v5799 = vpack.c.bf16 %v5735, %v5735
    %v5800 = vpack.c.bf16 %v5736, %v5736
    %v5801 = vpack.c.bf16 %v5737, %v5737
    %v5802 = vpack.c.bf16 %v5738, %v5738
    %v5803 = vpack.c.bf16 %v5739, %v5739
    %v5804 = vpack.c.bf16 %v5740, %v5740
    %v5805 = vpack.c.bf16 %v5741, %v5741
    %v5806 = vpack.c.bf16 %v5742, %v5742
    %v5807 = vpack.c.bf16 %v5743, %v5743
    %v5808 = vpack.c.bf16 %v5744, %v5744
    %v5809 = vpack.c.bf16 %v5745, %v5745
    %v5810 = vpack.c.bf16 %v5746, %v5746
    %v5811 = vpack.c.bf16 %v5747, %v5747
    %v5812 = vpack.c.bf16 %v5748, %v5748
    %v5813 = vpack.c.bf16 %v5749, %v5749
    %v5814 = vpack.c.bf16 %v5750, %v5750
    %v5815 = vpack.c.bf16 %v5751, %v5751
    %v5816 = vpack.c.bf16 %v5752, %v5752
    %v5817 = vpack.c.bf16 %v5753, %v5753
    %v5818 = vpack.c.bf16 %v5754, %v5754
    %v5819 = vpack.c.bf16 %v5755, %v5755
    %v5820 = vpack.c.bf16 %v5756, %v5756
    %v5821 = vpack.c.bf16 %v5757, %v5757
    %v5822 = vpack.c.bf16 %v5758, %v5758
    %v5823 = vpack.c.bf16 %v5759, %v5759
    %v5824 = vpack.c.bf16 %v5760, %v5760
    %v5825 = vpack.c.bf16 %v5761, %v5761
    %v5826 = vpack.c.bf16 %v5762, %v5762
    %v5827 = vpack.c.bf16 %v5763, %v5763
    %v5828 = vpack.c.bf16 %v5764, %v5764
    %v5829 = vpack.c.bf16 %v5765, %v5765
    %v5830 = vld [vmem:[#allocation2 + $0x1] sm:$0xff]
    %v5831 = vld [vmem:[#allocation2 + $0x9] sm:$0xff]
    %v5832 = vld [vmem:[#allocation2 + $0x19] sm:$0xff]
    %v5833 = vld [vmem:[#allocation2 + $0x21] sm:$0xff]
    %v5834 = vld [vmem:[#allocation2 + $0x31] sm:$0xff]
    %v5835 = vld [vmem:[#allocation2 + $0x39] sm:$0xff]
    %v5836 = vld [vmem:[#allocation2 + $0x49] sm:$0xff]
    %v5837 = vld [vmem:[#allocation2 + $0x51] sm:$0xff]
    %v5838 = vld [vmem:[#allocation2 + $0x61] sm:$0xff]
    %v5839 = vld [vmem:[#allocation2 + $0x69] sm:$0xff]
    %v5840 = vld [vmem:[#allocation2 + $0x79] sm:$0xff]
    %v5841 = vld [vmem:[#allocation2 + $0x81] sm:$0xff]
    %v5842 = vld [vmem:[#allocation2 + $0x91] sm:$0xff]
    %v5843 = vld [vmem:[#allocation2 + $0x99] sm:$0xff]
    %v5844 = vld [vmem:[#allocation2 + $0xa9] sm:$0xff]
    %v5845 = vld [vmem:[#allocation2 + $0xb1] sm:$0xff]
    %v5846 = vld [vmem:[#allocation2 + $0xc1] sm:$0xff]
    %v5847 = vld [vmem:[#allocation2 + $0xc9] sm:$0xff]
    %v5848 = vld [vmem:[#allocation2 + $0xd9] sm:$0xff]
    %v5849 = vld [vmem:[#allocation2 + $0xe1] sm:$0xff]
    %v5850 = vld [vmem:[#allocation2 + $0xf1] sm:$0xff]
    %v5851 = vld [vmem:[#allocation2 + $0xf9] sm:$0xff]
    %v5852 = vld [vmem:[#allocation2 + $0x109] sm:$0xff]
    %v5853 = vld [vmem:[#allocation2 + $0x111] sm:$0xff]
    %v5854 = vld [vmem:[#allocation2 + $0x121] sm:$0xff]
    %v5855 = vld [vmem:[#allocation2 + $0x129] sm:$0xff]
    %v5856 = vld [vmem:[#allocation2 + $0x139] sm:$0xff]
    %v5857 = vld [vmem:[#allocation2 + $0x141] sm:$0xff]
    %v5858 = vld [vmem:[#allocation2 + $0x151] sm:$0xff]
    %v5859 = vld [vmem:[#allocation2 + $0x159] sm:$0xff]
    %v5860 = vld [vmem:[#allocation2 + $0x169] sm:$0xff]
    %v5861 = vld [vmem:[#allocation2 + $0x171] sm:$0xff]
    %v5862 = vld [vmem:[#allocation2 + $0x1b1] sm:$0xff]
    %v5863 = vld [vmem:[#allocation2 + $0x1b9] sm:$0xff]
    %v5864 = vld [vmem:[#allocation2 + $0x1c9] sm:$0xff]
    %v5865 = vld [vmem:[#allocation2 + $0x1d1] sm:$0xff]
    %v5866 = vld [vmem:[#allocation2 + $0x1e1] sm:$0xff]
    %v5867 = vld [vmem:[#allocation2 + $0x1e9] sm:$0xff]
    %v5868 = vld [vmem:[#allocation2 + $0x1f9] sm:$0xff]
    %v5869 = vld [vmem:[#allocation2 + $0x201] sm:$0xff]
    %v5870 = vld [vmem:[#allocation2 + $0x211] sm:$0xff]
    %v5871 = vld [vmem:[#allocation2 + $0x219] sm:$0xff]
    %v5872 = vld [vmem:[#allocation2 + $0x229] sm:$0xff]
    %v5873 = vld [vmem:[#allocation2 + $0x231] sm:$0xff]
    %v5874 = vld [vmem:[#allocation2 + $0x241] sm:$0xff]
    %v5875 = vld [vmem:[#allocation2 + $0x249] sm:$0xff]
    %v5876 = vld [vmem:[#allocation2 + $0x259] sm:$0xff]
    %v5877 = vld [vmem:[#allocation2 + $0x261] sm:$0xff]
    %v5878 = vld [vmem:[#allocation2 + $0x271] sm:$0xff]
    %v5879 = vld [vmem:[#allocation2 + $0x279] sm:$0xff]
    %v5880 = vld [vmem:[#allocation2 + $0x289] sm:$0xff]
    %v5881 = vld [vmem:[#allocation2 + $0x291] sm:$0xff]
    %v5882 = vld [vmem:[#allocation2 + $0x2a1] sm:$0xff]
    %v5883 = vld [vmem:[#allocation2 + $0x2a9] sm:$0xff]
    %v5884 = vld [vmem:[#allocation2 + $0x2b9] sm:$0xff]
    %v5885 = vld [vmem:[#allocation2 + $0x2c1] sm:$0xff]
    %v5886 = vld [vmem:[#allocation2 + $0x2d1] sm:$0xff]
    %v5887 = vld [vmem:[#allocation2 + $0x2d9] sm:$0xff]
    %v5888 = vld [vmem:[#allocation2 + $0x2e9] sm:$0xff]
    %v5889 = vld [vmem:[#allocation2 + $0x2f1] sm:$0xff]
    %v5890 = vld [vmem:[#allocation2 + $0x301] sm:$0xff]
    %v5891 = vld [vmem:[#allocation2 + $0x309] sm:$0xff]
    %v5892 = vld [vmem:[#allocation2 + $0x319] sm:$0xff]
    %v5893 = vld [vmem:[#allocation2 + $0x321] sm:$0xff]
    %v5894 = vpack.c.bf16 %v5830, %v5830
    %v5895 = vpack.c.bf16 %v5831, %v5831
    %v5896 = vpack.c.bf16 %v5832, %v5832
    %v5897 = vpack.c.bf16 %v5833, %v5833
    %v5898 = vpack.c.bf16 %v5834, %v5834
    %v5899 = vpack.c.bf16 %v5835, %v5835
    %v5900 = vpack.c.bf16 %v5836, %v5836
    %v5901 = vpack.c.bf16 %v5837, %v5837
    %v5902 = vpack.c.bf16 %v5838, %v5838
    %v5903 = vpack.c.bf16 %v5839, %v5839
    %v5904 = vpack.c.bf16 %v5840, %v5840
    %v5905 = vpack.c.bf16 %v5841, %v5841
    %v5906 = vpack.c.bf16 %v5842, %v5842
    %v5907 = vpack.c.bf16 %v5843, %v5843
    %v5908 = vpack.c.bf16 %v5844, %v5844
    %v5909 = vpack.c.bf16 %v5845, %v5845
    %v5910 = vpack.c.bf16 %v5846, %v5846
    %v5911 = vpack.c.bf16 %v5847, %v5847
    %v5912 = vpack.c.bf16 %v5848, %v5848
    %v5913 = vpack.c.bf16 %v5849, %v5849
    %v5914 = vpack.c.bf16 %v5850, %v5850
    %v5915 = vpack.c.bf16 %v5851, %v5851
    %v5916 = vpack.c.bf16 %v5852, %v5852
    %v5917 = vpack.c.bf16 %v5853, %v5853
    %v5918 = vpack.c.bf16 %v5854, %v5854
    %v5919 = vpack.c.bf16 %v5855, %v5855
    %v5920 = vpack.c.bf16 %v5856, %v5856
    %v5921 = vpack.c.bf16 %v5857, %v5857
    %v5922 = vpack.c.bf16 %v5858, %v5858
    %v5923 = vpack.c.bf16 %v5859, %v5859
    %v5924 = vpack.c.bf16 %v5860, %v5860
    %v5925 = vpack.c.bf16 %v5861, %v5861
    %v5926 = vpack.c.bf16 %v5862, %v5862
    %v5927 = vpack.c.bf16 %v5863, %v5863
    %v5928 = vpack.c.bf16 %v5864, %v5864
    %v5929 = vpack.c.bf16 %v5865, %v5865
    %v5930 = vpack.c.bf16 %v5866, %v5866
    %v5931 = vpack.c.bf16 %v5867, %v5867
    %v5932 = vpack.c.bf16 %v5868, %v5868
    %v5933 = vpack.c.bf16 %v5869, %v5869
    %v5934 = vpack.c.bf16 %v5870, %v5870
    %v5935 = vpack.c.bf16 %v5871, %v5871
    %v5936 = vpack.c.bf16 %v5872, %v5872
    %v5937 = vpack.c.bf16 %v5873, %v5873
    %v5938 = vpack.c.bf16 %v5874, %v5874
    %v5939 = vpack.c.bf16 %v5875, %v5875
    %v5940 = vpack.c.bf16 %v5876, %v5876
    %v5941 = vpack.c.bf16 %v5877, %v5877
    %v5942 = vpack.c.bf16 %v5878, %v5878
    %v5943 = vpack.c.bf16 %v5879, %v5879
    %v5944 = vpack.c.bf16 %v5880, %v5880
    %v5945 = vpack.c.bf16 %v5881, %v5881
    %v5946 = vpack.c.bf16 %v5882, %v5882
    %v5947 = vpack.c.bf16 %v5883, %v5883
    %v5948 = vpack.c.bf16 %v5884, %v5884
    %v5949 = vpack.c.bf16 %v5885, %v5885
    %v5950 = vpack.c.bf16 %v5886, %v5886
    %v5951 = vpack.c.bf16 %v5887, %v5887
    %v5952 = vpack.c.bf16 %v5888, %v5888
    %v5953 = vpack.c.bf16 %v5889, %v5889
    %v5954 = vpack.c.bf16 %v5890, %v5890
    %v5955 = vpack.c.bf16 %v5891, %v5891
    %v5956 = vpack.c.bf16 %v5892, %v5892
    %v5957 = vpack.c.bf16 %v5893, %v5893
    %v5958 = vld [vmem:[#allocation2 + $0x2] sm:$0xff]
    %v5959 = vld [vmem:[#allocation2 + $0xa] sm:$0xff]
    %v5960 = vld [vmem:[#allocation2 + $0x1a] sm:$0xff]
    %v5961 = vld [vmem:[#allocation2 + $0x22] sm:$0xff]
    %v5962 = vld [vmem:[#allocation2 + $0x32] sm:$0xff]
    %v5963 = vld [vmem:[#allocation2 + $0x3a] sm:$0xff]
    %v5964 = vld [vmem:[#allocation2 + $0x4a] sm:$0xff]
    %v5965 = vld [vmem:[#allocation2 + $0x52] sm:$0xff]
    %v5966 = vld [vmem:[#allocation2 + $0x62] sm:$0xff]
    %v5967 = vld [vmem:[#allocation2 + $0x6a] sm:$0xff]
    %v5968 = vld [vmem:[#allocation2 + $0x7a] sm:$0xff]
    %v5969 = vld [vmem:[#allocation2 + $0x82] sm:$0xff]
    %v5970 = vld [vmem:[#allocation2 + $0x92] sm:$0xff]
    %v5971 = vld [vmem:[#allocation2 + $0x9a] sm:$0xff]
    %v5972 = vld [vmem:[#allocation2 + $0xaa] sm:$0xff]
    %v5973 = vld [vmem:[#allocation2 + $0xb2] sm:$0xff]
    %v5974 = vld [vmem:[#allocation2 + $0xc2] sm:$0xff]
    %v5975 = vld [vmem:[#allocation2 + $0xca] sm:$0xff]
    %v5976 = vld [vmem:[#allocation2 + $0xda] sm:$0xff]
    %v5977 = vld [vmem:[#allocation2 + $0xe2] sm:$0xff]
    %v5978 = vld [vmem:[#allocation2 + $0xf2] sm:$0xff]
    %v5979 = vld [vmem:[#allocation2 + $0xfa] sm:$0xff]
    %v5980 = vld [vmem:[#allocation2 + $0x10a] sm:$0xff]
    %v5981 = vld [vmem:[#allocation2 + $0x112] sm:$0xff]
    %v5982 = vld [vmem:[#allocation2 + $0x122] sm:$0xff]
    %v5983 = vld [vmem:[#allocation2 + $0x12a] sm:$0xff]
    %v5984 = vld [vmem:[#allocation2 + $0x13a] sm:$0xff]
    %v5985 = vld [vmem:[#allocation2 + $0x142] sm:$0xff]
    %v5986 = vld [vmem:[#allocation2 + $0x152] sm:$0xff]
    %v5987 = vld [vmem:[#allocation2 + $0x15a] sm:$0xff]
    %v5988 = vld [vmem:[#allocation2 + $0x16a] sm:$0xff]
    %v5989 = vld [vmem:[#allocation2 + $0x172] sm:$0xff]
    %v5990 = vld [vmem:[#allocation2 + $0x1b2] sm:$0xff]
    %v5991 = vld [vmem:[#allocation2 + $0x1ba] sm:$0xff]
    %v5992 = vld [vmem:[#allocation2 + $0x1ca] sm:$0xff]
    %v5993 = vld [vmem:[#allocation2 + $0x1d2] sm:$0xff]
    %v5994 = vld [vmem:[#allocation2 + $0x1e2] sm:$0xff]
    %v5995 = vld [vmem:[#allocation2 + $0x1ea] sm:$0xff]
    %v5996 = vld [vmem:[#allocation2 + $0x1fa] sm:$0xff]
    %v5997 = vld [vmem:[#allocation2 + $0x202] sm:$0xff]
    %v5998 = vld [vmem:[#allocation2 + $0x212] sm:$0xff]
    %v5999 = vld [vmem:[#allocation2 + $0x21a] sm:$0xff]
    %v6000 = vld [vmem:[#allocation2 + $0x22a] sm:$0xff]
    %v6001 = vld [vmem:[#allocation2 + $0x232] sm:$0xff]
    %v6002 = vld [vmem:[#allocation2 + $0x242] sm:$0xff]
    %v6003 = vld [vmem:[#allocation2 + $0x24a] sm:$0xff]
    %v6004 = vld [vmem:[#allocation2 + $0x25a] sm:$0xff]
    %v6005 = vld [vmem:[#allocation2 + $0x262] sm:$0xff]
    %v6006 = vld [vmem:[#allocation2 + $0x272] sm:$0xff]
    %v6007 = vld [vmem:[#allocation2 + $0x27a] sm:$0xff]
    %v6008 = vld [vmem:[#allocation2 + $0x28a] sm:$0xff]
    %v6009 = vld [vmem:[#allocation2 + $0x292] sm:$0xff]
    %v6010 = vld [vmem:[#allocation2 + $0x2a2] sm:$0xff]
    %v6011 = vld [vmem:[#allocation2 + $0x2aa] sm:$0xff]
    %v6012 = vld [vmem:[#allocation2 + $0x2ba] sm:$0xff]
    %v6013 = vld [vmem:[#allocation2 + $0x2c2] sm:$0xff]
    %v6014 = vld [vmem:[#allocation2 + $0x2d2] sm:$0xff]
    %v6015 = vld [vmem:[#allocation2 + $0x2da] sm:$0xff]
    %v6016 = vld [vmem:[#allocation2 + $0x2ea] sm:$0xff]
    %v6017 = vld [vmem:[#allocation2 + $0x2f2] sm:$0xff]
    %v6018 = vld [vmem:[#allocation2 + $0x302] sm:$0xff]
    %v6019 = vld [vmem:[#allocation2 + $0x30a] sm:$0xff]
    %v6020 = vld [vmem:[#allocation2 + $0x31a] sm:$0xff]
    %v6021 = vld [vmem:[#allocation2 + $0x322] sm:$0xff]
    %v6022 = vpack.c.bf16 %v5958, %v5958
    %v6023 = vpack.c.bf16 %v5959, %v5959
    %v6024 = vpack.c.bf16 %v5960, %v5960
    %v6025 = vpack.c.bf16 %v5961, %v5961
    %v6026 = vpack.c.bf16 %v5962, %v5962
    %v6027 = vpack.c.bf16 %v5963, %v5963
    %v6028 = vpack.c.bf16 %v5964, %v5964
    %v6029 = vpack.c.bf16 %v5965, %v5965
    %v6030 = vpack.c.bf16 %v5966, %v5966
    %v6031 = vpack.c.bf16 %v5967, %v5967
    %v6032 = vpack.c.bf16 %v5968, %v5968
    %v6033 = vpack.c.bf16 %v5969, %v5969
    %v6034 = vpack.c.bf16 %v5970, %v5970
    %v6035 = vpack.c.bf16 %v5971, %v5971
    %v6036 = vpack.c.bf16 %v5972, %v5972
    %v6037 = vpack.c.bf16 %v5973, %v5973
    %v6038 = vpack.c.bf16 %v5974, %v5974
    %v6039 = vpack.c.bf16 %v5975, %v5975
    %v6040 = vpack.c.bf16 %v5976, %v5976
    %v6041 = vpack.c.bf16 %v5977, %v5977
    %v6042 = vpack.c.bf16 %v5978, %v5978
    %v6043 = vpack.c.bf16 %v5979, %v5979
    %v6044 = vpack.c.bf16 %v5980, %v5980
    %v6045 = vpack.c.bf16 %v5981, %v5981
    %v6046 = vpack.c.bf16 %v5982, %v5982
    %v6047 = vpack.c.bf16 %v5983, %v5983
    %v6048 = vpack.c.bf16 %v5984, %v5984
    %v6049 = vpack.c.bf16 %v5985, %v5985
    %v6050 = vpack.c.bf16 %v5986, %v5986
    %v6051 = vpack.c.bf16 %v5987, %v5987
    %v6052 = vpack.c.bf16 %v5988, %v5988
    %v6053 = vpack.c.bf16 %v5989, %v5989
    %v6054 = vpack.c.bf16 %v5990, %v5990
    %v6055 = vpack.c.bf16 %v5991, %v5991
    %v6056 = vpack.c.bf16 %v5992, %v5992
    %v6057 = vpack.c.bf16 %v5993, %v5993
    %v6058 = vpack.c.bf16 %v5994, %v5994
    %v6059 = vpack.c.bf16 %v5995, %v5995
    %v6060 = vpack.c.bf16 %v5996, %v5996
    %v6061 = vpack.c.bf16 %v5997, %v5997
    %v6062 = vpack.c.bf16 %v5998, %v5998
    %v6063 = vpack.c.bf16 %v5999, %v5999
    %v6064 = vpack.c.bf16 %v6000, %v6000
    %v6065 = vpack.c.bf16 %v6001, %v6001
    %v6066 = vpack.c.bf16 %v6002, %v6002
    %v6067 = vpack.c.bf16 %v6003, %v6003
    %v6068 = vpack.c.bf16 %v6004, %v6004
    %v6069 = vpack.c.bf16 %v6005, %v6005
    %v6070 = vpack.c.bf16 %v6006, %v6006
    %v6071 = vpack.c.bf16 %v6007, %v6007
    %v6072 = vpack.c.bf16 %v6008, %v6008
    %v6073 = vpack.c.bf16 %v6009, %v6009
    %v6074 = vpack.c.bf16 %v6010, %v6010
    %v6075 = vpack.c.bf16 %v6011, %v6011
    %v6076 = vpack.c.bf16 %v6012, %v6012
    %v6077 = vpack.c.bf16 %v6013, %v6013
    %v6078 = vpack.c.bf16 %v6014, %v6014
    %v6079 = vpack.c.bf16 %v6015, %v6015
    %v6080 = vpack.c.bf16 %v6016, %v6016
    %v6081 = vpack.c.bf16 %v6017, %v6017
    %v6082 = vpack.c.bf16 %v6018, %v6018
    %v6083 = vpack.c.bf16 %v6019, %v6019
    %v6084 = vpack.c.bf16 %v6020, %v6020
    %v6085 = vpack.c.bf16 %v6021, %v6021
    %v6086 = vld [vmem:[%s5637] sm:$0xff]
    %v6087 = vld [vmem:[%s5637 + $0x8] sm:$0xff]
    %v6088 = vld [vmem:[%s5637 + $0x18] sm:$0xff]
    %v6089 = vld [vmem:[%s5637 + $0x20] sm:$0xff]
    %v6090 = vld [vmem:[%s5637 + $0x30] sm:$0xff]
    %v6091 = vld [vmem:[%s5637 + $0x38] sm:$0xff]
    %v6092 = vld [vmem:[%s5637 + $0x48] sm:$0xff]
    %v6093 = vld [vmem:[%s5637 + $0x50] sm:$0xff]
    %v6094 = vld [vmem:[%s5637 + $0x60] sm:$0xff]
    %v6095 = vld [vmem:[%s5637 + $0x68] sm:$0xff]
    %v6096 = vld [vmem:[%s5637 + $0x78] sm:$0xff]
    %v6097 = vld [vmem:[%s5637 + $0x80] sm:$0xff]
    %v6098 = vld [vmem:[%s5637 + $0x90] sm:$0xff]
    %v6099 = vld [vmem:[%s5637 + $0x98] sm:$0xff]
    %v6100 = vld [vmem:[%s5637 + $0xa8] sm:$0xff]
    %v6101 = vld [vmem:[%s5637 + $0xb0] sm:$0xff]
    %v6102 = vld [vmem:[%s5637 + $0xc0] sm:$0xff]
    %v6103 = vld [vmem:[%s5637 + $0xc8] sm:$0xff]
    %v6104 = vld [vmem:[%s5637 + $0xd8] sm:$0xff]
    %v6105 = vld [vmem:[%s5637 + $0xe0] sm:$0xff]
    %v6106 = vld [vmem:[%s5637 + $0xf0] sm:$0xff]
    %v6107 = vld [vmem:[%s5637 + $0xf8] sm:$0xff]
    %v6108 = vld [vmem:[%s5637 + $0x108] sm:$0xff]
    %v6109 = vld [vmem:[%s5637 + $0x110] sm:$0xff]
    %v6110 = vld [vmem:[%s5637 + $0x120] sm:$0xff]
    %v6111 = vld [vmem:[%s5637 + $0x128] sm:$0xff]
    %v6112 = vld [vmem:[%s5637 + $0x138] sm:$0xff]
    %v6113 = vld [vmem:[%s5637 + $0x140] sm:$0xff]
    %v6114 = vld [vmem:[%s5637 + $0x150] sm:$0xff]
    %v6115 = vld [vmem:[%s5637 + $0x158] sm:$0xff]
    %v6116 = vld [vmem:[%s5637 + $0x168] sm:$0xff]
    %v6117 = vld [vmem:[%s5637 + $0x170] sm:$0xff]
    %v6118 = vld [vmem:[%s5637 + $0x1b0] sm:$0xff]
    %v6119 = vld [vmem:[%s5637 + $0x1b8] sm:$0xff]
    %v6120 = vld [vmem:[%s5637 + $0x1c8] sm:$0xff]
    %v6121 = vld [vmem:[%s5637 + $0x1d0] sm:$0xff]
    %v6122 = vld [vmem:[%s5637 + $0x1e0] sm:$0xff]
    %v6123 = vld [vmem:[%s5637 + $0x1e8] sm:$0xff]
    %v6124 = vld [vmem:[%s5637 + $0x1f8] sm:$0xff]
    %v6125 = vld [vmem:[%s5637 + $0x200] sm:$0xff]
    %v6126 = vld [vmem:[%s5637 + $0x210] sm:$0xff]
    %v6127 = vld [vmem:[%s5637 + $0x218] sm:$0xff]
    %v6128 = vld [vmem:[%s5637 + $0x228] sm:$0xff]
    %v6129 = vld [vmem:[%s5637 + $0x230] sm:$0xff]
    %v6130 = vld [vmem:[%s5637 + $0x240] sm:$0xff]
    %v6131 = vld [vmem:[%s5637 + $0x248] sm:$0xff]
    %v6132 = vld [vmem:[%s5637 + $0x258] sm:$0xff]
    %v6133 = vld [vmem:[%s5637 + $0x260] sm:$0xff]
    %v6134 = vld [vmem:[%s5637 + $0x270] sm:$0xff]
    %v6135 = vld [vmem:[%s5637 + $0x278] sm:$0xff]
    %v6136 = vld [vmem:[%s5637 + $0x288] sm:$0xff]
    %v6137 = vld [vmem:[%s5637 + $0x290] sm:$0xff]
    %v6138 = vld [vmem:[%s5637 + $0x2a0] sm:$0xff]
    %v6139 = vld [vmem:[%s5637 + $0x2a8] sm:$0xff]
    %v6140 = vld [vmem:[%s5637 + $0x2b8] sm:$0xff]
    %v6141 = vld [vmem:[%s5637 + $0x2c0] sm:$0xff]
    %v6142 = vld [vmem:[%s5637 + $0x2d0] sm:$0xff]
    %v6143 = vld [vmem:[%s5637 + $0x2d8] sm:$0xff]
    %v6144 = vld [vmem:[%s5637 + $0x2e8] sm:$0xff]
    %v6145 = vld [vmem:[%s5637 + $0x2f0] sm:$0xff]
    %v6146 = vld [vmem:[%s5637 + $0x300] sm:$0xff]
    %v6147 = vld [vmem:[%s5637 + $0x308] sm:$0xff]
    %v6148 = vld [vmem:[%s5637 + $0x318] sm:$0xff]
    %v6149 = vld [vmem:[%s5637 + $0x320] sm:$0xff]
    %v6150 = vpack.c.bf16 %v6086, %v6086
    %v6151 = vpack.c.bf16 %v6087, %v6087
    %v6152 = vpack.c.bf16 %v6088, %v6088
    %v6153 = vpack.c.bf16 %v6089, %v6089
    %v6154 = vpack.c.bf16 %v6090, %v6090
    %v6155 = vpack.c.bf16 %v6091, %v6091
    %v6156 = vpack.c.bf16 %v6092, %v6092
    %v6157 = vpack.c.bf16 %v6093, %v6093
    %v6158 = vpack.c.bf16 %v6094, %v6094
    %v6159 = vpack.c.bf16 %v6095, %v6095
    %v6160 = vpack.c.bf16 %v6096, %v6096
    %v6161 = vpack.c.bf16 %v6097, %v6097
    %v6162 = vpack.c.bf16 %v6098, %v6098
    %v6163 = vpack.c.bf16 %v6099, %v6099
    %v6164 = vpack.c.bf16 %v6100, %v6100
    %v6165 = vpack.c.bf16 %v6101, %v6101
    %v6166 = vpack.c.bf16 %v6102, %v6102
    %v6167 = vpack.c.bf16 %v6103, %v6103
    %v6168 = vpack.c.bf16 %v6104, %v6104
    %v6169 = vpack.c.bf16 %v6105, %v6105
    %v6170 = vpack.c.bf16 %v6106, %v6106
    %v6171 = vpack.c.bf16 %v6107, %v6107
    %v6172 = vpack.c.bf16 %v6108, %v6108
    %v6173 = vpack.c.bf16 %v6109, %v6109
    %v6174 = vpack.c.bf16 %v6110, %v6110
    %v6175 = vpack.c.bf16 %v6111, %v6111
    %v6176 = vpack.c.bf16 %v6112, %v6112
    %v6177 = vpack.c.bf16 %v6113, %v6113
    %v6178 = vpack.c.bf16 %v6114, %v6114
    %v6179 = vpack.c.bf16 %v6115, %v6115
    %v6180 = vpack.c.bf16 %v6116, %v6116
    %v6181 = vpack.c.bf16 %v6117, %v6117
    %v6182 = vpack.c.bf16 %v6118, %v6118
    %v6183 = vpack.c.bf16 %v6119, %v6119
    %v6184 = vpack.c.bf16 %v6120, %v6120
    %v6185 = vpack.c.bf16 %v6121, %v6121
    %v6186 = vpack.c.bf16 %v6122, %v6122
    %v6187 = vpack.c.bf16 %v6123, %v6123
    %v6188 = vpack.c.bf16 %v6124, %v6124
    %v6189 = vpack.c.bf16 %v6125, %v6125
    %v6190 = vpack.c.bf16 %v6126, %v6126
    %v6191 = vpack.c.bf16 %v6127, %v6127
    %v6192 = vpack.c.bf16 %v6128, %v6128
    %v6193 = vpack.c.bf16 %v6129, %v6129
    %v6194 = vpack.c.bf16 %v6130, %v6130
    %v6195 = vpack.c.bf16 %v6131, %v6131
    %v6196 = vpack.c.bf16 %v6132, %v6132
    %v6197 = vpack.c.bf16 %v6133, %v6133
    %v6198 = vpack.c.bf16 %v6134, %v6134
    %v6199 = vpack.c.bf16 %v6135, %v6135
    %v6200 = vpack.c.bf16 %v6136, %v6136
    %v6201 = vpack.c.bf16 %v6137, %v6137
    %v6202 = vpack.c.bf16 %v6138, %v6138
    %v6203 = vpack.c.bf16 %v6139, %v6139
    %v6204 = vpack.c.bf16 %v6140, %v6140
    %v6205 = vpack.c.bf16 %v6141, %v6141
    %v6206 = vpack.c.bf16 %v6142, %v6142
    %v6207 = vpack.c.bf16 %v6143, %v6143
    %v6208 = vpack.c.bf16 %v6144, %v6144
    %v6209 = vpack.c.bf16 %v6145, %v6145
    %v6210 = vpack.c.bf16 %v6146, %v6146
    %v6211 = vpack.c.bf16 %v6147, %v6147
    %v6212 = vpack.c.bf16 %v6148, %v6148
    %v6213 = vpack.c.bf16 %v6149, %v6149
    %v6214 = vld [vmem:[%s5637 + $0x1] sm:$0xff]
    %v6215 = vld [vmem:[%s5637 + $0x9] sm:$0xff]
    %v6216 = vld [vmem:[%s5637 + $0x19] sm:$0xff]
    %v6217 = vld [vmem:[%s5637 + $0x21] sm:$0xff]
    %v6218 = vld [vmem:[%s5637 + $0x31] sm:$0xff]
    %v6219 = vld [vmem:[%s5637 + $0x39] sm:$0xff]
    %v6220 = vld [vmem:[%s5637 + $0x49] sm:$0xff]
    %v6221 = vld [vmem:[%s5637 + $0x51] sm:$0xff]
    %v6222 = vld [vmem:[%s5637 + $0x61] sm:$0xff]
    %v6223 = vld [vmem:[%s5637 + $0x69] sm:$0xff]
    %v6224 = vld [vmem:[%s5637 + $0x79] sm:$0xff]
    %v6225 = vld [vmem:[%s5637 + $0x81] sm:$0xff]
    %v6226 = vld [vmem:[%s5637 + $0x91] sm:$0xff]
    %v6227 = vld [vmem:[%s5637 + $0x99] sm:$0xff]
    %v6228 = vld [vmem:[%s5637 + $0xa9] sm:$0xff]
    %v6229 = vld [vmem:[%s5637 + $0xb1] sm:$0xff]
    %v6230 = vld [vmem:[%s5637 + $0xc1] sm:$0xff]
    %v6231 = vld [vmem:[%s5637 + $0xc9] sm:$0xff]
    %v6232 = vld [vmem:[%s5637 + $0xd9] sm:$0xff]
    %v6233 = vld [vmem:[%s5637 + $0xe1] sm:$0xff]
    %v6234 = vld [vmem:[%s5637 + $0xf1] sm:$0xff]
    %v6235 = vld [vmem:[%s5637 + $0xf9] sm:$0xff]
    %v6236 = vld [vmem:[%s5637 + $0x109] sm:$0xff]
    %v6237 = vld [vmem:[%s5637 + $0x111] sm:$0xff]
    %v6238 = vld [vmem:[%s5637 + $0x121] sm:$0xff]
    %v6239 = vld [vmem:[%s5637 + $0x129] sm:$0xff]
    %v6240 = vld [vmem:[%s5637 + $0x139] sm:$0xff]
    %v6241 = vld [vmem:[%s5637 + $0x141] sm:$0xff]
    %v6242 = vld [vmem:[%s5637 + $0x151] sm:$0xff]
    %v6243 = vld [vmem:[%s5637 + $0x159] sm:$0xff]
    %v6244 = vld [vmem:[%s5637 + $0x169] sm:$0xff]
    %v6245 = vld [vmem:[%s5637 + $0x171] sm:$0xff]
    %v6246 = vld [vmem:[%s5637 + $0x1b1] sm:$0xff]
    %v6247 = vld [vmem:[%s5637 + $0x1b9] sm:$0xff]
    %v6248 = vld [vmem:[%s5637 + $0x1c9] sm:$0xff]
    %v6249 = vld [vmem:[%s5637 + $0x1d1] sm:$0xff]
    %v6250 = vld [vmem:[%s5637 + $0x1e1] sm:$0xff]
    %v6251 = vld [vmem:[%s5637 + $0x1e9] sm:$0xff]
    %v6252 = vld [vmem:[%s5637 + $0x1f9] sm:$0xff]
    %v6253 = vld [vmem:[%s5637 + $0x201] sm:$0xff]
    %v6254 = vld [vmem:[%s5637 + $0x211] sm:$0xff]
    %v6255 = vld [vmem:[%s5637 + $0x219] sm:$0xff]
    %v6256 = vld [vmem:[%s5637 + $0x229] sm:$0xff]
    %v6257 = vld [vmem:[%s5637 + $0x231] sm:$0xff]
    %v6258 = vld [vmem:[%s5637 + $0x241] sm:$0xff]
    %v6259 = vld [vmem:[%s5637 + $0x249] sm:$0xff]
    %v6260 = vld [vmem:[%s5637 + $0x259] sm:$0xff]
    %v6261 = vld [vmem:[%s5637 + $0x261] sm:$0xff]
    %v6262 = vld [vmem:[%s5637 + $0x271] sm:$0xff]
    %v6263 = vld [vmem:[%s5637 + $0x279] sm:$0xff]
    %v6264 = vld [vmem:[%s5637 + $0x289] sm:$0xff]
    %v6265 = vld [vmem:[%s5637 + $0x291] sm:$0xff]
    %v6266 = vld [vmem:[%s5637 + $0x2a1] sm:$0xff]
    %v6267 = vld [vmem:[%s5637 + $0x2a9] sm:$0xff]
    %v6268 = vld [vmem:[%s5637 + $0x2b9] sm:$0xff]
    %v6269 = vld [vmem:[%s5637 + $0x2c1] sm:$0xff]
    %v6270 = vld [vmem:[%s5637 + $0x2d1] sm:$0xff]
    %v6271 = vld [vmem:[%s5637 + $0x2d9] sm:$0xff]
    %v6272 = vld [vmem:[%s5637 + $0x2e9] sm:$0xff]
    %v6273 = vld [vmem:[%s5637 + $0x2f1] sm:$0xff]
    %v6274 = vld [vmem:[%s5637 + $0x301] sm:$0xff]
    %v6275 = vld [vmem:[%s5637 + $0x309] sm:$0xff]
    %v6276 = vld [vmem:[%s5637 + $0x319] sm:$0xff]
    %v6277 = vld [vmem:[%s5637 + $0x321] sm:$0xff]
    %v6278 = vpack.c.bf16 %v6214, %v6214
    %v6279 = vpack.c.bf16 %v6215, %v6215
    %v6280 = vpack.c.bf16 %v6216, %v6216
    %v6281 = vpack.c.bf16 %v6217, %v6217
    %v6282 = vpack.c.bf16 %v6218, %v6218
    %v6283 = vpack.c.bf16 %v6219, %v6219
    %v6284 = vpack.c.bf16 %v6220, %v6220
    %v6285 = vpack.c.bf16 %v6221, %v6221
    %v6286 = vpack.c.bf16 %v6222, %v6222
    %v6287 = vpack.c.bf16 %v6223, %v6223
    %v6288 = vpack.c.bf16 %v6224, %v6224
    %v6289 = vpack.c.bf16 %v6225, %v6225
    %v6290 = vpack.c.bf16 %v6226, %v6226
    %v6291 = vpack.c.bf16 %v6227, %v6227
    %v6292 = vpack.c.bf16 %v6228, %v6228
    %v6293 = vpack.c.bf16 %v6229, %v6229
    %v6294 = vpack.c.bf16 %v6230, %v6230
    %v6295 = vpack.c.bf16 %v6231, %v6231
    %v6296 = vpack.c.bf16 %v6232, %v6232
    %v6297 = vpack.c.bf16 %v6233, %v6233
    %v6298 = vpack.c.bf16 %v6234, %v6234
    %v6299 = vpack.c.bf16 %v6235, %v6235
    %v6300 = vpack.c.bf16 %v6236, %v6236
    %v6301 = vpack.c.bf16 %v6237, %v6237
    %v6302 = vpack.c.bf16 %v6238, %v6238
    %v6303 = vpack.c.bf16 %v6239, %v6239
    %v6304 = vpack.c.bf16 %v6240, %v6240
    %v6305 = vpack.c.bf16 %v6241, %v6241
    %v6306 = vpack.c.bf16 %v6242, %v6242
    %v6307 = vpack.c.bf16 %v6243, %v6243
    %v6308 = vpack.c.bf16 %v6244, %v6244
    %v6309 = vpack.c.bf16 %v6245, %v6245
    %v6310 = vpack.c.bf16 %v6246, %v6246
    %v6311 = vpack.c.bf16 %v6247, %v6247
    %v6312 = vpack.c.bf16 %v6248, %v6248
    %v6313 = vpack.c.bf16 %v6249, %v6249
    %v6314 = vpack.c.bf16 %v6250, %v6250
    %v6315 = vpack.c.bf16 %v6251, %v6251
    %v6316 = vpack.c.bf16 %v6252, %v6252
    %v6317 = vpack.c.bf16 %v6253, %v6253
    %v6318 = vpack.c.bf16 %v6254, %v6254
    %v6319 = vpack.c.bf16 %v6255, %v6255
    %v6320 = vpack.c.bf16 %v6256, %v6256
    %v6321 = vpack.c.bf16 %v6257, %v6257
    %v6322 = vpack.c.bf16 %v6258, %v6258
    %v6323 = vpack.c.bf16 %v6259, %v6259
    %v6324 = vpack.c.bf16 %v6260, %v6260
    %v6325 = vpack.c.bf16 %v6261, %v6261
    %v6326 = vpack.c.bf16 %v6262, %v6262
    %v6327 = vpack.c.bf16 %v6263, %v6263
    %v6328 = vpack.c.bf16 %v6264, %v6264
    %v6329 = vpack.c.bf16 %v6265, %v6265
    %v6330 = vpack.c.bf16 %v6266, %v6266
    %v6331 = vpack.c.bf16 %v6267, %v6267
    %v6332 = vpack.c.bf16 %v6268, %v6268
    %v6333 = vpack.c.bf16 %v6269, %v6269
    %v6334 = vpack.c.bf16 %v6270, %v6270
    %v6335 = vpack.c.bf16 %v6271, %v6271
    %v6336 = vpack.c.bf16 %v6272, %v6272
    %v6337 = vpack.c.bf16 %v6273, %v6273
    %v6338 = vpack.c.bf16 %v6274, %v6274
    %v6339 = vpack.c.bf16 %v6275, %v6275
    %v6340 = vpack.c.bf16 %v6276, %v6276
    %v6341 = vpack.c.bf16 %v6277, %v6277
    %v6342 = vld [vmem:[%s5637 + $0x2] sm:$0xff]
    %v6343 = vld [vmem:[%s5637 + $0xa] sm:$0xff]
    %v6344 = vld [vmem:[%s5637 + $0x1a] sm:$0xff]
    %v6345 = vld [vmem:[%s5637 + $0x22] sm:$0xff]
    %v6346 = vld [vmem:[%s5637 + $0x32] sm:$0xff]
    %v6347 = vld [vmem:[%s5637 + $0x3a] sm:$0xff]
    %v6348 = vld [vmem:[%s5637 + $0x4a] sm:$0xff]
    %v6349 = vld [vmem:[%s5637 + $0x52] sm:$0xff]
    %v6350 = vld [vmem:[%s5637 + $0x62] sm:$0xff]
    %v6351 = vld [vmem:[%s5637 + $0x6a] sm:$0xff]
    %v6352 = vld [vmem:[%s5637 + $0x7a] sm:$0xff]
    %v6353 = vld [vmem:[%s5637 + $0x82] sm:$0xff]
    %v6354 = vld [vmem:[%s5637 + $0x92] sm:$0xff]
    %v6355 = vld [vmem:[%s5637 + $0x9a] sm:$0xff]
    %v6356 = vld [vmem:[%s5637 + $0xaa] sm:$0xff]
    %v6357 = vld [vmem:[%s5637 + $0xb2] sm:$0xff]
    %v6358 = vld [vmem:[%s5637 + $0xc2] sm:$0xff]
    %v6359 = vld [vmem:[%s5637 + $0xca] sm:$0xff]
    %v6360 = vld [vmem:[%s5637 + $0xda] sm:$0xff]
    %v6361 = vld [vmem:[%s5637 + $0xe2] sm:$0xff]
    %v6362 = vld [vmem:[%s5637 + $0xf2] sm:$0xff]
    %v6363 = vld [vmem:[%s5637 + $0xfa] sm:$0xff]
    %v6364 = vld [vmem:[%s5637 + $0x10a] sm:$0xff]
    %v6365 = vld [vmem:[%s5637 + $0x112] sm:$0xff]
    %v6366 = vld [vmem:[%s5637 + $0x122] sm:$0xff]
    %v6367 = vld [vmem:[%s5637 + $0x12a] sm:$0xff]
    %v6368 = vld [vmem:[%s5637 + $0x13a] sm:$0xff]
    %v6369 = vld [vmem:[%s5637 + $0x142] sm:$0xff]
    %v6370 = vld [vmem:[%s5637 + $0x152] sm:$0xff]
    %v6371 = vld [vmem:[%s5637 + $0x15a] sm:$0xff]
    %v6372 = vld [vmem:[%s5637 + $0x16a] sm:$0xff]
    %v6373 = vld [vmem:[%s5637 + $0x172] sm:$0xff]
    %v6374 = vld [vmem:[%s5637 + $0x1b2] sm:$0xff]
    %v6375 = vld [vmem:[%s5637 + $0x1ba] sm:$0xff]
    %v6376 = vld [vmem:[%s5637 + $0x1ca] sm:$0xff]
    %v6377 = vld [vmem:[%s5637 + $0x1d2] sm:$0xff]
    %v6378 = vld [vmem:[%s5637 + $0x1e2] sm:$0xff]
    %v6379 = vld [vmem:[%s5637 + $0x1ea] sm:$0xff]
    %v6380 = vld [vmem:[%s5637 + $0x1fa] sm:$0xff]
    %v6381 = vld [vmem:[%s5637 + $0x202] sm:$0xff]
    %v6382 = vld [vmem:[%s5637 + $0x212] sm:$0xff]
    %v6383 = vld [vmem:[%s5637 + $0x21a] sm:$0xff]
    %v6384 = vld [vmem:[%s5637 + $0x22a] sm:$0xff]
    %v6385 = vld [vmem:[%s5637 + $0x232] sm:$0xff]
    %v6386 = vld [vmem:[%s5637 + $0x242] sm:$0xff]
    %v6387 = vld [vmem:[%s5637 + $0x24a] sm:$0xff]
    %v6388 = vld [vmem:[%s5637 + $0x25a] sm:$0xff]
    %v6389 = vld [vmem:[%s5637 + $0x262] sm:$0xff]
    %v6390 = vld [vmem:[%s5637 + $0x272] sm:$0xff]
    %v6391 = vld [vmem:[%s5637 + $0x27a] sm:$0xff]
    %v6392 = vld [vmem:[%s5637 + $0x28a] sm:$0xff]
    %v6393 = vld [vmem:[%s5637 + $0x292] sm:$0xff]
    %v6394 = vld [vmem:[%s5637 + $0x2a2] sm:$0xff]
    %v6395 = vld [vmem:[%s5637 + $0x2aa] sm:$0xff]
    %v6396 = vld [vmem:[%s5637 + $0x2ba] sm:$0xff]
    %v6397 = vld [vmem:[%s5637 + $0x2c2] sm:$0xff]
    %v6398 = vld [vmem:[%s5637 + $0x2d2] sm:$0xff]
    %v6399 = vld [vmem:[%s5637 + $0x2da] sm:$0xff]
    %v6400 = vld [vmem:[%s5637 + $0x2ea] sm:$0xff]
    %v6401 = vld [vmem:[%s5637 + $0x2f2] sm:$0xff]
    %v6402 = vld [vmem:[%s5637 + $0x302] sm:$0xff]
    %v6403 = vld [vmem:[%s5637 + $0x30a] sm:$0xff]
    %v6404 = vld [vmem:[%s5637 + $0x31a] sm:$0xff]
    %v6405 = vld [vmem:[%s5637 + $0x322] sm:$0xff]
    %v6406 = vpack.c.bf16 %v6342, %v6342
    %v6407 = vpack.c.bf16 %v6343, %v6343
    %v6408 = vpack.c.bf16 %v6344, %v6344
    %v6409 = vpack.c.bf16 %v6345, %v6345
    %v6410 = vpack.c.bf16 %v6346, %v6346
    %v6411 = vpack.c.bf16 %v6347, %v6347
    %v6412 = vpack.c.bf16 %v6348, %v6348
    %v6413 = vpack.c.bf16 %v6349, %v6349
    %v6414 = vpack.c.bf16 %v6350, %v6350
    %v6415 = vpack.c.bf16 %v6351, %v6351
    %v6416 = vpack.c.bf16 %v6352, %v6352
    %v6417 = vpack.c.bf16 %v6353, %v6353
    %v6418 = vpack.c.bf16 %v6354, %v6354
    %v6419 = vpack.c.bf16 %v6355, %v6355
    %v6420 = vpack.c.bf16 %v6356, %v6356
    %v6421 = vpack.c.bf16 %v6357, %v6357
    %v6422 = vpack.c.bf16 %v6358, %v6358
    %v6423 = vpack.c.bf16 %v6359, %v6359
    %v6424 = vpack.c.bf16 %v6360, %v6360
    %v6425 = vpack.c.bf16 %v6361, %v6361
    %v6426 = vpack.c.bf16 %v6362, %v6362
    %v6427 = vpack.c.bf16 %v6363, %v6363
    %v6428 = vpack.c.bf16 %v6364, %v6364
    %v6429 = vpack.c.bf16 %v6365, %v6365
    %v6430 = vpack.c.bf16 %v6366, %v6366
    %v6431 = vpack.c.bf16 %v6367, %v6367
    %v6432 = vpack.c.bf16 %v6368, %v6368
    %v6433 = vpack.c.bf16 %v6369, %v6369
    %v6434 = vpack.c.bf16 %v6370, %v6370
    %v6435 = vpack.c.bf16 %v6371, %v6371
    %v6436 = vpack.c.bf16 %v6372, %v6372
    %v6437 = vpack.c.bf16 %v6373, %v6373
    %v6438 = vpack.c.bf16 %v6374, %v6374
    %v6439 = vpack.c.bf16 %v6375, %v6375
    %v6440 = vpack.c.bf16 %v6376, %v6376
    %v6441 = vpack.c.bf16 %v6377, %v6377
    %v6442 = vpack.c.bf16 %v6378, %v6378
    %v6443 = vpack.c.bf16 %v6379, %v6379
    %v6444 = vpack.c.bf16 %v6380, %v6380
    %v6445 = vpack.c.bf16 %v6381, %v6381
    %v6446 = vpack.c.bf16 %v6382, %v6382
    %v6447 = vpack.c.bf16 %v6383, %v6383
    %v6448 = vpack.c.bf16 %v6384, %v6384
    %v6449 = vpack.c.bf16 %v6385, %v6385
    %v6450 = vpack.c.bf16 %v6386, %v6386
    %v6451 = vpack.c.bf16 %v6387, %v6387
    %v6452 = vpack.c.bf16 %v6388, %v6388
    %v6453 = vpack.c.bf16 %v6389, %v6389
    %v6454 = vpack.c.bf16 %v6390, %v6390
    %v6455 = vpack.c.bf16 %v6391, %v6391
    %v6456 = vpack.c.bf16 %v6392, %v6392
    %v6457 = vpack.c.bf16 %v6393, %v6393
    %v6458 = vpack.c.bf16 %v6394, %v6394
    %v6459 = vpack.c.bf16 %v6395, %v6395
    %v6460 = vpack.c.bf16 %v6396, %v6396
    %v6461 = vpack.c.bf16 %v6397, %v6397
    %v6462 = vpack.c.bf16 %v6398, %v6398
    %v6463 = vpack.c.bf16 %v6399, %v6399
    %v6464 = vpack.c.bf16 %v6400, %v6400
    %v6465 = vpack.c.bf16 %v6401, %v6401
    %v6466 = vpack.c.bf16 %v6402, %v6402
    %v6467 = vpack.c.bf16 %v6403, %v6403
    %v6468 = vpack.c.bf16 %v6404, %v6404
    %v6469 = vpack.c.bf16 %v6405, %v6405
    %s6470 = scalar_lea.vmem [#allocation2], 48
    %v6471 = vld [vmem:[%s6470] sm:$0xff]
    %v6472 = vld [vmem:[%s6470 + $0x8] sm:$0xff]
    %v6473 = vld [vmem:[%s6470 + $0x18] sm:$0xff]
    %v6474 = vld [vmem:[%s6470 + $0x20] sm:$0xff]
    %v6475 = vld [vmem:[%s6470 + $0x30] sm:$0xff]
    %v6476 = vld [vmem:[%s6470 + $0x38] sm:$0xff]
    %v6477 = vld [vmem:[%s6470 + $0x48] sm:$0xff]
    %v6478 = vld [vmem:[%s6470 + $0x50] sm:$0xff]
    %v6479 = vld [vmem:[%s6470 + $0x60] sm:$0xff]
    %v6480 = vld [vmem:[%s6470 + $0x68] sm:$0xff]
    %v6481 = vld [vmem:[%s6470 + $0x78] sm:$0xff]
    %v6482 = vld [vmem:[%s6470 + $0x80] sm:$0xff]
    %v6483 = vld [vmem:[%s6470 + $0x90] sm:$0xff]
    %v6484 = vld [vmem:[%s6470 + $0x98] sm:$0xff]
    %v6485 = vld [vmem:[%s6470 + $0xa8] sm:$0xff]
    %v6486 = vld [vmem:[%s6470 + $0xb0] sm:$0xff]
    %v6487 = vld [vmem:[%s6470 + $0xc0] sm:$0xff]
    %v6488 = vld [vmem:[%s6470 + $0xc8] sm:$0xff]
    %v6489 = vld [vmem:[%s6470 + $0xd8] sm:$0xff]
    %v6490 = vld [vmem:[%s6470 + $0xe0] sm:$0xff]
    %v6491 = vld [vmem:[%s6470 + $0xf0] sm:$0xff]
    %v6492 = vld [vmem:[%s6470 + $0xf8] sm:$0xff]
    %v6493 = vld [vmem:[%s6470 + $0x108] sm:$0xff]
    %v6494 = vld [vmem:[%s6470 + $0x110] sm:$0xff]
    %v6495 = vld [vmem:[%s6470 + $0x120] sm:$0xff]
    %v6496 = vld [vmem:[%s6470 + $0x128] sm:$0xff]
    %v6497 = vld [vmem:[%s6470 + $0x138] sm:$0xff]
    %v6498 = vld [vmem:[%s6470 + $0x140] sm:$0xff]
    %v6499 = vld [vmem:[%s6470 + $0x150] sm:$0xff]
    %v6500 = vld [vmem:[%s6470 + $0x158] sm:$0xff]
    %v6501 = vld [vmem:[%s6470 + $0x168] sm:$0xff]
    %v6502 = vld [vmem:[%s6470 + $0x170] sm:$0xff]
    %v6503 = vld [vmem:[%s6470 + $0x1b0] sm:$0xff]
    %v6504 = vld [vmem:[%s6470 + $0x1b8] sm:$0xff]
    %v6505 = vld [vmem:[%s6470 + $0x1c8] sm:$0xff]
    %v6506 = vld [vmem:[%s6470 + $0x1d0] sm:$0xff]
    %v6507 = vld [vmem:[%s6470 + $0x1e0] sm:$0xff]
    %v6508 = vld [vmem:[%s6470 + $0x1e8] sm:$0xff]
    %v6509 = vld [vmem:[%s6470 + $0x1f8] sm:$0xff]
    %v6510 = vld [vmem:[%s6470 + $0x200] sm:$0xff]
    %v6511 = vld [vmem:[%s6470 + $0x210] sm:$0xff]
    %v6512 = vld [vmem:[%s6470 + $0x218] sm:$0xff]
    %v6513 = vld [vmem:[%s6470 + $0x228] sm:$0xff]
    %v6514 = vld [vmem:[%s6470 + $0x230] sm:$0xff]
    %v6515 = vld [vmem:[%s6470 + $0x240] sm:$0xff]
    %v6516 = vld [vmem:[%s6470 + $0x248] sm:$0xff]
    %v6517 = vld [vmem:[%s6470 + $0x258] sm:$0xff]
    %v6518 = vld [vmem:[%s6470 + $0x260] sm:$0xff]
    %v6519 = vld [vmem:[%s6470 + $0x270] sm:$0xff]
    %v6520 = vld [vmem:[%s6470 + $0x278] sm:$0xff]
    %v6521 = vld [vmem:[%s6470 + $0x288] sm:$0xff]
    %v6522 = vld [vmem:[%s6470 + $0x290] sm:$0xff]
    %v6523 = vld [vmem:[%s6470 + $0x2a0] sm:$0xff]
    %v6524 = vld [vmem:[%s6470 + $0x2a8] sm:$0xff]
    %v6525 = vld [vmem:[%s6470 + $0x2b8] sm:$0xff]
    %v6526 = vld [vmem:[%s6470 + $0x2c0] sm:$0xff]
    %v6527 = vld [vmem:[%s6470 + $0x2d0] sm:$0xff]
    %v6528 = vld [vmem:[%s6470 + $0x2d8] sm:$0xff]
    %v6529 = vld [vmem:[%s6470 + $0x2e8] sm:$0xff]
    %v6530 = vld [vmem:[%s6470 + $0x2f0] sm:$0xff]
    %v6531 = vld [vmem:[%s6470 + $0x300] sm:$0xff]
    %v6532 = vld [vmem:[%s6470 + $0x308] sm:$0xff]
    %v6533 = vld [vmem:[%s6470 + $0x318] sm:$0xff]
    %v6534 = vld [vmem:[%s6470 + $0x320] sm:$0xff]
    %v6535 = vpack.c.bf16 %v6471, %v6471
    %v6536 = vpack.c.bf16 %v6472, %v6472
    %v6537 = vpack.c.bf16 %v6473, %v6473
    %v6538 = vpack.c.bf16 %v6474, %v6474
    %v6539 = vpack.c.bf16 %v6475, %v6475
    %v6540 = vpack.c.bf16 %v6476, %v6476
    %v6541 = vpack.c.bf16 %v6477, %v6477
    %v6542 = vpack.c.bf16 %v6478, %v6478
    %v6543 = vpack.c.bf16 %v6479, %v6479
    %v6544 = vpack.c.bf16 %v6480, %v6480
    %v6545 = vpack.c.bf16 %v6481, %v6481
    %v6546 = vpack.c.bf16 %v6482, %v6482
    %v6547 = vpack.c.bf16 %v6483, %v6483
    %v6548 = vpack.c.bf16 %v6484, %v6484
    %v6549 = vpack.c.bf16 %v6485, %v6485
    %v6550 = vpack.c.bf16 %v6486, %v6486
    %v6551 = vpack.c.bf16 %v6487, %v6487
    %v6552 = vpack.c.bf16 %v6488, %v6488
    %v6553 = vpack.c.bf16 %v6489, %v6489
    %v6554 = vpack.c.bf16 %v6490, %v6490
    %v6555 = vpack.c.bf16 %v6491, %v6491
    %v6556 = vpack.c.bf16 %v6492, %v6492
    %v6557 = vpack.c.bf16 %v6493, %v6493
    %v6558 = vpack.c.bf16 %v6494, %v6494
    %v6559 = vpack.c.bf16 %v6495, %v6495
    %v6560 = vpack.c.bf16 %v6496, %v6496
    %v6561 = vpack.c.bf16 %v6497, %v6497
    %v6562 = vpack.c.bf16 %v6498, %v6498
    %v6563 = vpack.c.bf16 %v6499, %v6499
    %v6564 = vpack.c.bf16 %v6500, %v6500
    %v6565 = vpack.c.bf16 %v6501, %v6501
    %v6566 = vpack.c.bf16 %v6502, %v6502
    %v6567 = vpack.c.bf16 %v6503, %v6503
    %v6568 = vpack.c.bf16 %v6504, %v6504
    %v6569 = vpack.c.bf16 %v6505, %v6505
    %v6570 = vpack.c.bf16 %v6506, %v6506
    %v6571 = vpack.c.bf16 %v6507, %v6507
    %v6572 = vpack.c.bf16 %v6508, %v6508
    %v6573 = vpack.c.bf16 %v6509, %v6509
    %v6574 = vpack.c.bf16 %v6510, %v6510
    %v6575 = vpack.c.bf16 %v6511, %v6511
    %v6576 = vpack.c.bf16 %v6512, %v6512
    %v6577 = vpack.c.bf16 %v6513, %v6513
    %v6578 = vpack.c.bf16 %v6514, %v6514
    %v6579 = vpack.c.bf16 %v6515, %v6515
    %v6580 = vpack.c.bf16 %v6516, %v6516
    %v6581 = vpack.c.bf16 %v6517, %v6517
    %v6582 = vpack.c.bf16 %v6518, %v6518
    %v6583 = vpack.c.bf16 %v6519, %v6519
    %v6584 = vpack.c.bf16 %v6520, %v6520
    %v6585 = vpack.c.bf16 %v6521, %v6521
    %v6586 = vpack.c.bf16 %v6522, %v6522
    %v6587 = vpack.c.bf16 %v6523, %v6523
    %v6588 = vpack.c.bf16 %v6524, %v6524
    %v6589 = vpack.c.bf16 %v6525, %v6525
    %v6590 = vpack.c.bf16 %v6526, %v6526
    %v6591 = vpack.c.bf16 %v6527, %v6527
    %v6592 = vpack.c.bf16 %v6528, %v6528
    %v6593 = vpack.c.bf16 %v6529, %v6529
    %v6594 = vpack.c.bf16 %v6530, %v6530
    %v6595 = vpack.c.bf16 %v6531, %v6531
    %v6596 = vpack.c.bf16 %v6532, %v6532
    %v6597 = vpack.c.bf16 %v6533, %v6533
    %v6598 = vpack.c.bf16 %v6534, %v6534
    %v6599 = vld [vmem:[%s6470 + $0x1] sm:$0xff]
    %v6600 = vld [vmem:[%s6470 + $0x9] sm:$0xff]
    %v6601 = vld [vmem:[%s6470 + $0x19] sm:$0xff]
    %v6602 = vld [vmem:[%s6470 + $0x21] sm:$0xff]
    %v6603 = vld [vmem:[%s6470 + $0x31] sm:$0xff]
    %v6604 = vld [vmem:[%s6470 + $0x39] sm:$0xff]
    %v6605 = vld [vmem:[%s6470 + $0x49] sm:$0xff]
    %v6606 = vld [vmem:[%s6470 + $0x51] sm:$0xff]
    %v6607 = vld [vmem:[%s6470 + $0x61] sm:$0xff]
    %v6608 = vld [vmem:[%s6470 + $0x69] sm:$0xff]
    %v6609 = vld [vmem:[%s6470 + $0x79] sm:$0xff]
    %v6610 = vld [vmem:[%s6470 + $0x81] sm:$0xff]
    %v6611 = vld [vmem:[%s6470 + $0x91] sm:$0xff]
    %v6612 = vld [vmem:[%s6470 + $0x99] sm:$0xff]
    %v6613 = vld [vmem:[%s6470 + $0xa9] sm:$0xff]
    %v6614 = vld [vmem:[%s6470 + $0xb1] sm:$0xff]
    %v6615 = vld [vmem:[%s6470 + $0xc1] sm:$0xff]
    %v6616 = vld [vmem:[%s6470 + $0xc9] sm:$0xff]
    %v6617 = vld [vmem:[%s6470 + $0xd9] sm:$0xff]
    %v6618 = vld [vmem:[%s6470 + $0xe1] sm:$0xff]
    %v6619 = vld [vmem:[%s6470 + $0xf1] sm:$0xff]
    %v6620 = vld [vmem:[%s6470 + $0xf9] sm:$0xff]
    %v6621 = vld [vmem:[%s6470 + $0x109] sm:$0xff]
    %v6622 = vld [vmem:[%s6470 + $0x111] sm:$0xff]
    %v6623 = vld [vmem:[%s6470 + $0x121] sm:$0xff]
    %v6624 = vld [vmem:[%s6470 + $0x129] sm:$0xff]
    %v6625 = vld [vmem:[%s6470 + $0x139] sm:$0xff]
    %v6626 = vld [vmem:[%s6470 + $0x141] sm:$0xff]
    %v6627 = vld [vmem:[%s6470 + $0x151] sm:$0xff]
    %v6628 = vld [vmem:[%s6470 + $0x159] sm:$0xff]
    %v6629 = vld [vmem:[%s6470 + $0x169] sm:$0xff]
    %v6630 = vld [vmem:[%s6470 + $0x171] sm:$0xff]
    %v6631 = vld [vmem:[%s6470 + $0x1b1] sm:$0xff]
    %v6632 = vld [vmem:[%s6470 + $0x1b9] sm:$0xff]
    %v6633 = vld [vmem:[%s6470 + $0x1c9] sm:$0xff]
    %v6634 = vld [vmem:[%s6470 + $0x1d1] sm:$0xff]
    %v6635 = vld [vmem:[%s6470 + $0x1e1] sm:$0xff]
    %v6636 = vld [vmem:[%s6470 + $0x1e9] sm:$0xff]
    %v6637 = vld [vmem:[%s6470 + $0x1f9] sm:$0xff]
    %v6638 = vld [vmem:[%s6470 + $0x201] sm:$0xff]
    %v6639 = vld [vmem:[%s6470 + $0x211] sm:$0xff]
    %v6640 = vld [vmem:[%s6470 + $0x219] sm:$0xff]
    %v6641 = vld [vmem:[%s6470 + $0x229] sm:$0xff]
    %v6642 = vld [vmem:[%s6470 + $0x231] sm:$0xff]
    %v6643 = vld [vmem:[%s6470 + $0x241] sm:$0xff]
    %v6644 = vld [vmem:[%s6470 + $0x249] sm:$0xff]
    %v6645 = vld [vmem:[%s6470 + $0x259] sm:$0xff]
    %v6646 = vld [vmem:[%s6470 + $0x261] sm:$0xff]
    %v6647 = vld [vmem:[%s6470 + $0x271] sm:$0xff]
    %v6648 = vld [vmem:[%s6470 + $0x279] sm:$0xff]
    %v6649 = vld [vmem:[%s6470 + $0x289] sm:$0xff]
    %v6650 = vld [vmem:[%s6470 + $0x291] sm:$0xff]
    %v6651 = vld [vmem:[%s6470 + $0x2a1] sm:$0xff]
    %v6652 = vld [vmem:[%s6470 + $0x2a9] sm:$0xff]
    %v6653 = vld [vmem:[%s6470 + $0x2b9] sm:$0xff]
    %v6654 = vld [vmem:[%s6470 + $0x2c1] sm:$0xff]
    %v6655 = vld [vmem:[%s6470 + $0x2d1] sm:$0xff]
    %v6656 = vld [vmem:[%s6470 + $0x2d9] sm:$0xff]
    %v6657 = vld [vmem:[%s6470 + $0x2e9] sm:$0xff]
    %v6658 = vld [vmem:[%s6470 + $0x2f1] sm:$0xff]
    %v6659 = vld [vmem:[%s6470 + $0x301] sm:$0xff]
    %v6660 = vld [vmem:[%s6470 + $0x309] sm:$0xff]
    %v6661 = vld [vmem:[%s6470 + $0x319] sm:$0xff]
    %v6662 = vld [vmem:[%s6470 + $0x321] sm:$0xff]
    %v6663 = vpack.c.bf16 %v6599, %v6599
    %v6664 = vpack.c.bf16 %v6600, %v6600
    %v6665 = vpack.c.bf16 %v6601, %v6601
    %v6666 = vpack.c.bf16 %v6602, %v6602
    %v6667 = vpack.c.bf16 %v6603, %v6603
    %v6668 = vpack.c.bf16 %v6604, %v6604
    %v6669 = vpack.c.bf16 %v6605, %v6605
    %v6670 = vpack.c.bf16 %v6606, %v6606
    %v6671 = vpack.c.bf16 %v6607, %v6607
    %v6672 = vpack.c.bf16 %v6608, %v6608
    %v6673 = vpack.c.bf16 %v6609, %v6609
    %v6674 = vpack.c.bf16 %v6610, %v6610
    %v6675 = vpack.c.bf16 %v6611, %v6611
    %v6676 = vpack.c.bf16 %v6612, %v6612
    %v6677 = vpack.c.bf16 %v6613, %v6613
    %v6678 = vpack.c.bf16 %v6614, %v6614
    %v6679 = vpack.c.bf16 %v6615, %v6615
    %v6680 = vpack.c.bf16 %v6616, %v6616
    %v6681 = vpack.c.bf16 %v6617, %v6617
    %v6682 = vpack.c.bf16 %v6618, %v6618
    %v6683 = vpack.c.bf16 %v6619, %v6619
    %v6684 = vpack.c.bf16 %v6620, %v6620
    %v6685 = vpack.c.bf16 %v6621, %v6621
    %v6686 = vpack.c.bf16 %v6622, %v6622
    %v6687 = vpack.c.bf16 %v6623, %v6623
    %v6688 = vpack.c.bf16 %v6624, %v6624
    %v6689 = vpack.c.bf16 %v6625, %v6625
    %v6690 = vpack.c.bf16 %v6626, %v6626
    %v6691 = vpack.c.bf16 %v6627, %v6627
    %v6692 = vpack.c.bf16 %v6628, %v6628
    %v6693 = vpack.c.bf16 %v6629, %v6629
    %v6694 = vpack.c.bf16 %v6630, %v6630
    %v6695 = vpack.c.bf16 %v6631, %v6631
    %v6696 = vpack.c.bf16 %v6632, %v6632
    %v6697 = vpack.c.bf16 %v6633, %v6633
    %v6698 = vpack.c.bf16 %v6634, %v6634
    %v6699 = vpack.c.bf16 %v6635, %v6635
    %v6700 = vpack.c.bf16 %v6636, %v6636
    %v6701 = vpack.c.bf16 %v6637, %v6637
    %v6702 = vpack.c.bf16 %v6638, %v6638
    %v6703 = vpack.c.bf16 %v6639, %v6639
    %v6704 = vpack.c.bf16 %v6640, %v6640
    %v6705 = vpack.c.bf16 %v6641, %v6641
    %v6706 = vpack.c.bf16 %v6642, %v6642
    %v6707 = vpack.c.bf16 %v6643, %v6643
    %v6708 = vpack.c.bf16 %v6644, %v6644
    %v6709 = vpack.c.bf16 %v6645, %v6645
    %v6710 = vpack.c.bf16 %v6646, %v6646
    %v6711 = vpack.c.bf16 %v6647, %v6647
    %v6712 = vpack.c.bf16 %v6648, %v6648
    %v6713 = vpack.c.bf16 %v6649, %v6649
    %v6714 = vpack.c.bf16 %v6650, %v6650
    %v6715 = vpack.c.bf16 %v6651, %v6651
    %v6716 = vpack.c.bf16 %v6652, %v6652
    %v6717 = vpack.c.bf16 %v6653, %v6653
    %v6718 = vpack.c.bf16 %v6654, %v6654
    %v6719 = vpack.c.bf16 %v6655, %v6655
    %v6720 = vpack.c.bf16 %v6656, %v6656
    %v6721 = vpack.c.bf16 %v6657, %v6657
    %v6722 = vpack.c.bf16 %v6658, %v6658
    %v6723 = vpack.c.bf16 %v6659, %v6659
    %v6724 = vpack.c.bf16 %v6660, %v6660
    %v6725 = vpack.c.bf16 %v6661, %v6661
    %v6726 = vpack.c.bf16 %v6662, %v6662
    %v6727 = vld [vmem:[%s6470 + $0x2] sm:$0xff]
    %v6728 = vld [vmem:[%s6470 + $0xa] sm:$0xff]
    %v6729 = vld [vmem:[%s6470 + $0x1a] sm:$0xff]
    %v6730 = vld [vmem:[%s6470 + $0x22] sm:$0xff]
    %v6731 = vld [vmem:[%s6470 + $0x32] sm:$0xff]
    %v6732 = vld [vmem:[%s6470 + $0x3a] sm:$0xff]
    %v6733 = vld [vmem:[%s6470 + $0x4a] sm:$0xff]
    %v6734 = vld [vmem:[%s6470 + $0x52] sm:$0xff]
    %v6735 = vld [vmem:[%s6470 + $0x62] sm:$0xff]
    %v6736 = vld [vmem:[%s6470 + $0x6a] sm:$0xff]
    %v6737 = vld [vmem:[%s6470 + $0x7a] sm:$0xff]
    %v6738 = vld [vmem:[%s6470 + $0x82] sm:$0xff]
    %v6739 = vld [vmem:[%s6470 + $0x92] sm:$0xff]
    %v6740 = vld [vmem:[%s6470 + $0x9a] sm:$0xff]
    %v6741 = vld [vmem:[%s6470 + $0xaa] sm:$0xff]
    %v6742 = vld [vmem:[%s6470 + $0xb2] sm:$0xff]
    %v6743 = vld [vmem:[%s6470 + $0xc2] sm:$0xff]
    %v6744 = vld [vmem:[%s6470 + $0xca] sm:$0xff]
    %v6745 = vld [vmem:[%s6470 + $0xda] sm:$0xff]
    %v6746 = vld [vmem:[%s6470 + $0xe2] sm:$0xff]
    %v6747 = vld [vmem:[%s6470 + $0xf2] sm:$0xff]
    %v6748 = vld [vmem:[%s6470 + $0xfa] sm:$0xff]
    %v6749 = vld [vmem:[%s6470 + $0x10a] sm:$0xff]
    %v6750 = vld [vmem:[%s6470 + $0x112] sm:$0xff]
    %v6751 = vld [vmem:[%s6470 + $0x122] sm:$0xff]
    %v6752 = vld [vmem:[%s6470 + $0x12a] sm:$0xff]
    %v6753 = vld [vmem:[%s6470 + $0x13a] sm:$0xff]
    %v6754 = vld [vmem:[%s6470 + $0x142] sm:$0xff]
    %v6755 = vld [vmem:[%s6470 + $0x152] sm:$0xff]
    %v6756 = vld [vmem:[%s6470 + $0x15a] sm:$0xff]
    %v6757 = vld [vmem:[%s6470 + $0x16a] sm:$0xff]
    %v6758 = vld [vmem:[%s6470 + $0x172] sm:$0xff]
    %v6759 = vld [vmem:[%s6470 + $0x1b2] sm:$0xff]
    %v6760 = vld [vmem:[%s6470 + $0x1ba] sm:$0xff]
    %v6761 = vld [vmem:[%s6470 + $0x1ca] sm:$0xff]
    %v6762 = vld [vmem:[%s6470 + $0x1d2] sm:$0xff]
    %v6763 = vld [vmem:[%s6470 + $0x1e2] sm:$0xff]
    %v6764 = vld [vmem:[%s6470 + $0x1ea] sm:$0xff]
    %v6765 = vld [vmem:[%s6470 + $0x1fa] sm:$0xff]
    %v6766 = vld [vmem:[%s6470 + $0x202] sm:$0xff]
    %v6767 = vld [vmem:[%s6470 + $0x212] sm:$0xff]
    %v6768 = vld [vmem:[%s6470 + $0x21a] sm:$0xff]
    %v6769 = vld [vmem:[%s6470 + $0x22a] sm:$0xff]
    %v6770 = vld [vmem:[%s6470 + $0x232] sm:$0xff]
    %v6771 = vld [vmem:[%s6470 + $0x242] sm:$0xff]
    %v6772 = vld [vmem:[%s6470 + $0x24a] sm:$0xff]
    %v6773 = vld [vmem:[%s6470 + $0x25a] sm:$0xff]
    %v6774 = vld [vmem:[%s6470 + $0x262] sm:$0xff]
    %v6775 = vld [vmem:[%s6470 + $0x272] sm:$0xff]
    %v6776 = vld [vmem:[%s6470 + $0x27a] sm:$0xff]
    %v6777 = vld [vmem:[%s6470 + $0x28a] sm:$0xff]
    %v6778 = vld [vmem:[%s6470 + $0x292] sm:$0xff]
    %v6779 = vld [vmem:[%s6470 + $0x2a2] sm:$0xff]
    %v6780 = vld [vmem:[%s6470 + $0x2aa] sm:$0xff]
    %v6781 = vld [vmem:[%s6470 + $0x2ba] sm:$0xff]
    %v6782 = vld [vmem:[%s6470 + $0x2c2] sm:$0xff]
    %v6783 = vld [vmem:[%s6470 + $0x2d2] sm:$0xff]
    %v6784 = vld [vmem:[%s6470 + $0x2da] sm:$0xff]
    %v6785 = vld [vmem:[%s6470 + $0x2ea] sm:$0xff]
    %v6786 = vld [vmem:[%s6470 + $0x2f2] sm:$0xff]
    %v6787 = vld [vmem:[%s6470 + $0x302] sm:$0xff]
    %v6788 = vld [vmem:[%s6470 + $0x30a] sm:$0xff]
    %v6789 = vld [vmem:[%s6470 + $0x31a] sm:$0xff]
    %v6790 = vld [vmem:[%s6470 + $0x322] sm:$0xff]
    %v6791 = vpack.c.bf16 %v6727, %v6727
    %v6792 = vpack.c.bf16 %v6728, %v6728
    %v6793 = vpack.c.bf16 %v6729, %v6729
    %v6794 = vpack.c.bf16 %v6730, %v6730
    %v6795 = vpack.c.bf16 %v6731, %v6731
    %v6796 = vpack.c.bf16 %v6732, %v6732
    %v6797 = vpack.c.bf16 %v6733, %v6733
    %v6798 = vpack.c.bf16 %v6734, %v6734
    %v6799 = vpack.c.bf16 %v6735, %v6735
    %v6800 = vpack.c.bf16 %v6736, %v6736
    %v6801 = vpack.c.bf16 %v6737, %v6737
    %v6802 = vpack.c.bf16 %v6738, %v6738
    %v6803 = vpack.c.bf16 %v6739, %v6739
    %v6804 = vpack.c.bf16 %v6740, %v6740
    %v6805 = vpack.c.bf16 %v6741, %v6741
    %v6806 = vpack.c.bf16 %v6742, %v6742
    %v6807 = vpack.c.bf16 %v6743, %v6743
    %v6808 = vpack.c.bf16 %v6744, %v6744
    %v6809 = vpack.c.bf16 %v6745, %v6745
    %v6810 = vpack.c.bf16 %v6746, %v6746
    %v6811 = vpack.c.bf16 %v6747, %v6747
    %v6812 = vpack.c.bf16 %v6748, %v6748
    %v6813 = vpack.c.bf16 %v6749, %v6749
    %v6814 = vpack.c.bf16 %v6750, %v6750
    %v6815 = vpack.c.bf16 %v6751, %v6751
    %v6816 = vpack.c.bf16 %v6752, %v6752
    %v6817 = vpack.c.bf16 %v6753, %v6753
    %v6818 = vpack.c.bf16 %v6754, %v6754
    %v6819 = vpack.c.bf16 %v6755, %v6755
    %v6820 = vpack.c.bf16 %v6756, %v6756
    %v6821 = vpack.c.bf16 %v6757, %v6757
    %v6822 = vpack.c.bf16 %v6758, %v6758
    %v6823 = vpack.c.bf16 %v6759, %v6759
    %v6824 = vpack.c.bf16 %v6760, %v6760
    %v6825 = vpack.c.bf16 %v6761, %v6761
    %v6826 = vpack.c.bf16 %v6762, %v6762
    %v6827 = vpack.c.bf16 %v6763, %v6763
    %v6828 = vpack.c.bf16 %v6764, %v6764
    %v6829 = vpack.c.bf16 %v6765, %v6765
    %v6830 = vpack.c.bf16 %v6766, %v6766
    %v6831 = vpack.c.bf16 %v6767, %v6767
    %v6832 = vpack.c.bf16 %v6768, %v6768
    %v6833 = vpack.c.bf16 %v6769, %v6769
    %v6834 = vpack.c.bf16 %v6770, %v6770
    %v6835 = vpack.c.bf16 %v6771, %v6771
    %v6836 = vpack.c.bf16 %v6772, %v6772
    %v6837 = vpack.c.bf16 %v6773, %v6773
    %v6838 = vpack.c.bf16 %v6774, %v6774
    %v6839 = vpack.c.bf16 %v6775, %v6775
    %v6840 = vpack.c.bf16 %v6776, %v6776
    %v6841 = vpack.c.bf16 %v6777, %v6777
    %v6842 = vpack.c.bf16 %v6778, %v6778
    %v6843 = vpack.c.bf16 %v6779, %v6779
    %v6844 = vpack.c.bf16 %v6780, %v6780
    %v6845 = vpack.c.bf16 %v6781, %v6781
    %v6846 = vpack.c.bf16 %v6782, %v6782
    %v6847 = vpack.c.bf16 %v6783, %v6783
    %v6848 = vpack.c.bf16 %v6784, %v6784
    %v6849 = vpack.c.bf16 %v6785, %v6785
    %v6850 = vpack.c.bf16 %v6786, %v6786
    %v6851 = vpack.c.bf16 %v6787, %v6787
    %v6852 = vpack.c.bf16 %v6788, %v6788
    %v6853 = vpack.c.bf16 %v6789, %v6789
    %v6854 = vpack.c.bf16 %v6790, %v6790
    %v6919 = vunpack.c.l.b16 %v5766
    %v6920 = vunpack.c.l.b16 %v5767
    %v6921 = vunpack.c.l.b16 %v5768
    %v6922 = vunpack.c.l.b16 %v5769
    %v6923 = vunpack.c.l.b16 %v5770
    %v6924 = vunpack.c.l.b16 %v5771
    %v6925 = vunpack.c.l.b16 %v5772
    %v6926 = vunpack.c.l.b16 %v5773
    %v6927 = vunpack.c.l.b16 %v5774
    %v6928 = vunpack.c.l.b16 %v5775
    %v6929 = vunpack.c.l.b16 %v5776
    %v6930 = vunpack.c.l.b16 %v5777
    %v6931 = vunpack.c.l.b16 %v5778
    %v6932 = vunpack.c.l.b16 %v5779
    %v6933 = vunpack.c.l.b16 %v5780
    %v6934 = vunpack.c.l.b16 %v5781
    %v6935 = vunpack.c.l.b16 %v5782
    %v6936 = vunpack.c.l.b16 %v5783
    %v6937 = vunpack.c.l.b16 %v5784
    %v6938 = vunpack.c.l.b16 %v5785
    %v6939 = vunpack.c.l.b16 %v5786
    %v6940 = vunpack.c.l.b16 %v5787
    %v6941 = vunpack.c.l.b16 %v5788
    %v6942 = vunpack.c.l.b16 %v5789
    %v6943 = vunpack.c.l.b16 %v5790
    %v6944 = vunpack.c.l.b16 %v5791
    %v6945 = vunpack.c.l.b16 %v5792
    %v6946 = vunpack.c.l.b16 %v5793
    %v6947 = vunpack.c.l.b16 %v5794
    %v6948 = vunpack.c.l.b16 %v5795
    %v6949 = vunpack.c.l.b16 %v5796
    %v6950 = vunpack.c.l.b16 %v5797
    %v6951 = vunpack.c.l.b16 %v5798
    %v6952 = vunpack.c.l.b16 %v5799
    %v6953 = vunpack.c.l.b16 %v5800
    %v6954 = vunpack.c.l.b16 %v5801
    %v6955 = vunpack.c.l.b16 %v5802
    %v6956 = vunpack.c.l.b16 %v5803
    %v6957 = vunpack.c.l.b16 %v5804
    %v6958 = vunpack.c.l.b16 %v5805
    %v6959 = vunpack.c.l.b16 %v5806
    %v6960 = vunpack.c.l.b16 %v5807
    %v6961 = vunpack.c.l.b16 %v5808
    %v6962 = vunpack.c.l.b16 %v5809
    %v6963 = vunpack.c.l.b16 %v5810
    %v6964 = vunpack.c.l.b16 %v5811
    %v6965 = vunpack.c.l.b16 %v5812
    %v6966 = vunpack.c.l.b16 %v5813
    %v6967 = vunpack.c.l.b16 %v5814
    %v6968 = vunpack.c.l.b16 %v5815
    %v6969 = vunpack.c.l.b16 %v5816
    %v6970 = vunpack.c.l.b16 %v5817
    %v6971 = vunpack.c.l.b16 %v5818
    %v6972 = vunpack.c.l.b16 %v5819
    %v6973 = vunpack.c.l.b16 %v5820
    %v6974 = vunpack.c.l.b16 %v5821
    %v6975 = vunpack.c.l.b16 %v5822
    %v6976 = vunpack.c.l.b16 %v5823
    %v6977 = vunpack.c.l.b16 %v5824
    %v6978 = vunpack.c.l.b16 %v5825
    %v6979 = vunpack.c.l.b16 %v5826
    %v6980 = vunpack.c.l.b16 %v5827
    %v6981 = vunpack.c.l.b16 %v5828
    %v6982 = vunpack.c.l.b16 %v5829
    %v6983 = vpack.c.b16 %v6920, %v6919
    %v6984 = vpack.c.b16 %v6922, %v6921
    %v6985 = vpack.c.b16 %v6924, %v6923
    %v6986 = vpack.c.b16 %v6926, %v6925
    %v6987 = vpack.c.b16 %v6928, %v6927
    %v6988 = vpack.c.b16 %v6930, %v6929
    %v6989 = vpack.c.b16 %v6932, %v6931
    %v6990 = vpack.c.b16 %v6934, %v6933
    %v6991 = vpack.c.b16 %v6936, %v6935
    %v6992 = vpack.c.b16 %v6938, %v6937
    %v6993 = vpack.c.b16 %v6940, %v6939
    %v6994 = vpack.c.b16 %v6942, %v6941
    %v6995 = vpack.c.b16 %v6944, %v6943
    %v6996 = vpack.c.b16 %v6946, %v6945
    %v6997 = vpack.c.b16 %v6948, %v6947
    %v6998 = vpack.c.b16 %v6950, %v6949
    %v6999 = vpack.c.b16 %v6952, %v6951
    %v7000 = vpack.c.b16 %v6954, %v6953
    %v7001 = vpack.c.b16 %v6956, %v6955
    %v7002 = vpack.c.b16 %v6958, %v6957
    %v7003 = vpack.c.b16 %v6960, %v6959
    %v7004 = vpack.c.b16 %v6962, %v6961
    %v7005 = vpack.c.b16 %v6964, %v6963
    %v7006 = vpack.c.b16 %v6966, %v6965
    %v7007 = vpack.c.b16 %v6968, %v6967
    %v7008 = vpack.c.b16 %v6970, %v6969
    %v7009 = vpack.c.b16 %v6972, %v6971
    %v7010 = vpack.c.b16 %v6974, %v6973
    %v7011 = vpack.c.b16 %v6976, %v6975
    %v7012 = vpack.c.b16 %v6978, %v6977
    %v7013 = vpack.c.b16 %v6980, %v6979
    %v7014 = vpack.c.b16 %v6982, %v6981
    %v7111 = vunpack.c.l.b16 %v5894
    %v7112 = vunpack.c.l.b16 %v5895
    %v7113 = vunpack.c.l.b16 %v5896
    %v7114 = vunpack.c.l.b16 %v5897
    %v7115 = vunpack.c.l.b16 %v5898
    %v7116 = vunpack.c.l.b16 %v5899
    %v7117 = vunpack.c.l.b16 %v5900
    %v7118 = vunpack.c.l.b16 %v5901
    %v7119 = vunpack.c.l.b16 %v5902
    %v7120 = vunpack.c.l.b16 %v5903
    %v7121 = vunpack.c.l.b16 %v5904
    %v7122 = vunpack.c.l.b16 %v5905
    %v7123 = vunpack.c.l.b16 %v5906
    %v7124 = vunpack.c.l.b16 %v5907
    %v7125 = vunpack.c.l.b16 %v5908
    %v7126 = vunpack.c.l.b16 %v5909
    %v7127 = vunpack.c.l.b16 %v5910
    %v7128 = vunpack.c.l.b16 %v5911
    %v7129 = vunpack.c.l.b16 %v5912
    %v7130 = vunpack.c.l.b16 %v5913
    %v7131 = vunpack.c.l.b16 %v5914
    %v7132 = vunpack.c.l.b16 %v5915
    %v7133 = vunpack.c.l.b16 %v5916
    %v7134 = vunpack.c.l.b16 %v5917
    %v7135 = vunpack.c.l.b16 %v5918
    %v7136 = vunpack.c.l.b16 %v5919
    %v7137 = vunpack.c.l.b16 %v5920
    %v7138 = vunpack.c.l.b16 %v5921
    %v7139 = vunpack.c.l.b16 %v5922
    %v7140 = vunpack.c.l.b16 %v5923
    %v7141 = vunpack.c.l.b16 %v5924
    %v7142 = vunpack.c.l.b16 %v5925
    %v7143 = vunpack.c.l.b16 %v5926
    %v7144 = vunpack.c.l.b16 %v5927
    %v7145 = vunpack.c.l.b16 %v5928
    %v7146 = vunpack.c.l.b16 %v5929
    %v7147 = vunpack.c.l.b16 %v5930
    %v7148 = vunpack.c.l.b16 %v5931
    %v7149 = vunpack.c.l.b16 %v5932
    %v7150 = vunpack.c.l.b16 %v5933
    %v7151 = vunpack.c.l.b16 %v5934
    %v7152 = vunpack.c.l.b16 %v5935
    %v7153 = vunpack.c.l.b16 %v5936
    %v7154 = vunpack.c.l.b16 %v5937
    %v7155 = vunpack.c.l.b16 %v5938
    %v7156 = vunpack.c.l.b16 %v5939
    %v7157 = vunpack.c.l.b16 %v5940
    %v7158 = vunpack.c.l.b16 %v5941
    %v7159 = vunpack.c.l.b16 %v5942
    %v7160 = vunpack.c.l.b16 %v5943
    %v7161 = vunpack.c.l.b16 %v5944
    %v7162 = vunpack.c.l.b16 %v5945
    %v7163 = vunpack.c.l.b16 %v5946
    %v7164 = vunpack.c.l.b16 %v5947
    %v7165 = vunpack.c.l.b16 %v5948
    %v7166 = vunpack.c.l.b16 %v5949
    %v7167 = vunpack.c.l.b16 %v5950
    %v7168 = vunpack.c.l.b16 %v5951
    %v7169 = vunpack.c.l.b16 %v5952
    %v7170 = vunpack.c.l.b16 %v5953
    %v7171 = vunpack.c.l.b16 %v5954
    %v7172 = vunpack.c.l.b16 %v5955
    %v7173 = vunpack.c.l.b16 %v5956
    %v7174 = vunpack.c.l.b16 %v5957
    %v7175 = vpack.c.b16 %v7112, %v7111
    %v7176 = vpack.c.b16 %v7114, %v7113
    %v7177 = vpack.c.b16 %v7116, %v7115
    %v7178 = vpack.c.b16 %v7118, %v7117
    %v7179 = vpack.c.b16 %v7120, %v7119
    %v7180 = vpack.c.b16 %v7122, %v7121
    %v7181 = vpack.c.b16 %v7124, %v7123
    %v7182 = vpack.c.b16 %v7126, %v7125
    %v7183 = vpack.c.b16 %v7128, %v7127
    %v7184 = vpack.c.b16 %v7130, %v7129
    %v7185 = vpack.c.b16 %v7132, %v7131
    %v7186 = vpack.c.b16 %v7134, %v7133
    %v7187 = vpack.c.b16 %v7136, %v7135
    %v7188 = vpack.c.b16 %v7138, %v7137
    %v7189 = vpack.c.b16 %v7140, %v7139
    %v7190 = vpack.c.b16 %v7142, %v7141
    %v7191 = vpack.c.b16 %v7144, %v7143
    %v7192 = vpack.c.b16 %v7146, %v7145
    %v7193 = vpack.c.b16 %v7148, %v7147
    %v7194 = vpack.c.b16 %v7150, %v7149
    %v7195 = vpack.c.b16 %v7152, %v7151
    %v7196 = vpack.c.b16 %v7154, %v7153
    %v7197 = vpack.c.b16 %v7156, %v7155
    %v7198 = vpack.c.b16 %v7158, %v7157
    %v7199 = vpack.c.b16 %v7160, %v7159
    %v7200 = vpack.c.b16 %v7162, %v7161
    %v7201 = vpack.c.b16 %v7164, %v7163
    %v7202 = vpack.c.b16 %v7166, %v7165
    %v7203 = vpack.c.b16 %v7168, %v7167
    %v7204 = vpack.c.b16 %v7170, %v7169
    %v7205 = vpack.c.b16 %v7172, %v7171
    %v7206 = vpack.c.b16 %v7174, %v7173
    %v7303 = vunpack.c.l.b16 %v6022
    %v7304 = vunpack.c.l.b16 %v6023
    %v7305 = vunpack.c.l.b16 %v6024
    %v7306 = vunpack.c.l.b16 %v6025
    %v7307 = vunpack.c.l.b16 %v6026
    %v7308 = vunpack.c.l.b16 %v6027
    %v7309 = vunpack.c.l.b16 %v6028
    %v7310 = vunpack.c.l.b16 %v6029
    %v7311 = vunpack.c.l.b16 %v6030
    %v7312 = vunpack.c.l.b16 %v6031
    %v7313 = vunpack.c.l.b16 %v6032
    %v7314 = vunpack.c.l.b16 %v6033
    %v7315 = vunpack.c.l.b16 %v6034
    %v7316 = vunpack.c.l.b16 %v6035
    %v7317 = vunpack.c.l.b16 %v6036
    %v7318 = vunpack.c.l.b16 %v6037
    %v7319 = vunpack.c.l.b16 %v6038
    %v7320 = vunpack.c.l.b16 %v6039
    %v7321 = vunpack.c.l.b16 %v6040
    %v7322 = vunpack.c.l.b16 %v6041
    %v7323 = vunpack.c.l.b16 %v6042
    %v7324 = vunpack.c.l.b16 %v6043
    %v7325 = vunpack.c.l.b16 %v6044
    %v7326 = vunpack.c.l.b16 %v6045
    %v7327 = vunpack.c.l.b16 %v6046
    %v7328 = vunpack.c.l.b16 %v6047
    %v7329 = vunpack.c.l.b16 %v6048
    %v7330 = vunpack.c.l.b16 %v6049
    %v7331 = vunpack.c.l.b16 %v6050
    %v7332 = vunpack.c.l.b16 %v6051
    %v7333 = vunpack.c.l.b16 %v6052
    %v7334 = vunpack.c.l.b16 %v6053
    %v7335 = vunpack.c.l.b16 %v6054
    %v7336 = vunpack.c.l.b16 %v6055
    %v7337 = vunpack.c.l.b16 %v6056
    %v7338 = vunpack.c.l.b16 %v6057
    %v7339 = vunpack.c.l.b16 %v6058
    %v7340 = vunpack.c.l.b16 %v6059
    %v7341 = vunpack.c.l.b16 %v6060
    %v7342 = vunpack.c.l.b16 %v6061
    %v7343 = vunpack.c.l.b16 %v6062
    %v7344 = vunpack.c.l.b16 %v6063
    %v7345 = vunpack.c.l.b16 %v6064
    %v7346 = vunpack.c.l.b16 %v6065
    %v7347 = vunpack.c.l.b16 %v6066
    %v7348 = vunpack.c.l.b16 %v6067
    %v7349 = vunpack.c.l.b16 %v6068
    %v7350 = vunpack.c.l.b16 %v6069
    %v7351 = vunpack.c.l.b16 %v6070
    %v7352 = vunpack.c.l.b16 %v6071
    %v7353 = vunpack.c.l.b16 %v6072
    %v7354 = vunpack.c.l.b16 %v6073
    %v7355 = vunpack.c.l.b16 %v6074
    %v7356 = vunpack.c.l.b16 %v6075
    %v7357 = vunpack.c.l.b16 %v6076
    %v7358 = vunpack.c.l.b16 %v6077
    %v7359 = vunpack.c.l.b16 %v6078
    %v7360 = vunpack.c.l.b16 %v6079
    %v7361 = vunpack.c.l.b16 %v6080
    %v7362 = vunpack.c.l.b16 %v6081
    %v7363 = vunpack.c.l.b16 %v6082
    %v7364 = vunpack.c.l.b16 %v6083
    %v7365 = vunpack.c.l.b16 %v6084
    %v7366 = vunpack.c.l.b16 %v6085
    %v7367 = vpack.c.b16 %v7304, %v7303
    %v7368 = vpack.c.b16 %v7306, %v7305
    %v7369 = vpack.c.b16 %v7308, %v7307
    %v7370 = vpack.c.b16 %v7310, %v7309
    %v7371 = vpack.c.b16 %v7312, %v7311
    %v7372 = vpack.c.b16 %v7314, %v7313
    %v7373 = vpack.c.b16 %v7316, %v7315
    %v7374 = vpack.c.b16 %v7318, %v7317
    %v7375 = vpack.c.b16 %v7320, %v7319
    %v7376 = vpack.c.b16 %v7322, %v7321
    %v7377 = vpack.c.b16 %v7324, %v7323
    %v7378 = vpack.c.b16 %v7326, %v7325
    %v7379 = vpack.c.b16 %v7328, %v7327
    %v7380 = vpack.c.b16 %v7330, %v7329
    %v7381 = vpack.c.b16 %v7332, %v7331
    %v7382 = vpack.c.b16 %v7334, %v7333
    %v7383 = vpack.c.b16 %v7336, %v7335
    %v7384 = vpack.c.b16 %v7338, %v7337
    %v7385 = vpack.c.b16 %v7340, %v7339
    %v7386 = vpack.c.b16 %v7342, %v7341
    %v7387 = vpack.c.b16 %v7344, %v7343
    %v7388 = vpack.c.b16 %v7346, %v7345
    %v7389 = vpack.c.b16 %v7348, %v7347
    %v7390 = vpack.c.b16 %v7350, %v7349
    %v7391 = vpack.c.b16 %v7352, %v7351
    %v7392 = vpack.c.b16 %v7354, %v7353
    %v7393 = vpack.c.b16 %v7356, %v7355
    %v7394 = vpack.c.b16 %v7358, %v7357
    %v7395 = vpack.c.b16 %v7360, %v7359
    %v7396 = vpack.c.b16 %v7362, %v7361
    %v7397 = vpack.c.b16 %v7364, %v7363
    %v7398 = vpack.c.b16 %v7366, %v7365
    %v7495 = vunpack.c.l.b16 %v6150
    %v7496 = vunpack.c.l.b16 %v6151
    %v7497 = vunpack.c.l.b16 %v6152
    %v7498 = vunpack.c.l.b16 %v6153
    %v7499 = vunpack.c.l.b16 %v6154
    %v7500 = vunpack.c.l.b16 %v6155
    %v7501 = vunpack.c.l.b16 %v6156
    %v7502 = vunpack.c.l.b16 %v6157
    %v7503 = vunpack.c.l.b16 %v6158
    %v7504 = vunpack.c.l.b16 %v6159
    %v7505 = vunpack.c.l.b16 %v6160
    %v7506 = vunpack.c.l.b16 %v6161
    %v7507 = vunpack.c.l.b16 %v6162
    %v7508 = vunpack.c.l.b16 %v6163
    %v7509 = vunpack.c.l.b16 %v6164
    %v7510 = vunpack.c.l.b16 %v6165
    %v7511 = vunpack.c.l.b16 %v6166
    %v7512 = vunpack.c.l.b16 %v6167
    %v7513 = vunpack.c.l.b16 %v6168
    %v7514 = vunpack.c.l.b16 %v6169
    %v7515 = vunpack.c.l.b16 %v6170
    %v7516 = vunpack.c.l.b16 %v6171
    %v7517 = vunpack.c.l.b16 %v6172
    %v7518 = vunpack.c.l.b16 %v6173
    %v7519 = vunpack.c.l.b16 %v6174
    %v7520 = vunpack.c.l.b16 %v6175
    %v7521 = vunpack.c.l.b16 %v6176
    %v7522 = vunpack.c.l.b16 %v6177
    %v7523 = vunpack.c.l.b16 %v6178
    %v7524 = vunpack.c.l.b16 %v6179
    %v7525 = vunpack.c.l.b16 %v6180
    %v7526 = vunpack.c.l.b16 %v6181
    %v7527 = vunpack.c.l.b16 %v6182
    %v7528 = vunpack.c.l.b16 %v6183
    %v7529 = vunpack.c.l.b16 %v6184
    %v7530 = vunpack.c.l.b16 %v6185
    %v7531 = vunpack.c.l.b16 %v6186
    %v7532 = vunpack.c.l.b16 %v6187
    %v7533 = vunpack.c.l.b16 %v6188
    %v7534 = vunpack.c.l.b16 %v6189
    %v7535 = vunpack.c.l.b16 %v6190
    %v7536 = vunpack.c.l.b16 %v6191
    %v7537 = vunpack.c.l.b16 %v6192
    %v7538 = vunpack.c.l.b16 %v6193
    %v7539 = vunpack.c.l.b16 %v6194
    %v7540 = vunpack.c.l.b16 %v6195
    %v7541 = vunpack.c.l.b16 %v6196
    %v7542 = vunpack.c.l.b16 %v6197
    %v7543 = vunpack.c.l.b16 %v6198
    %v7544 = vunpack.c.l.b16 %v6199
    %v7545 = vunpack.c.l.b16 %v6200
    %v7546 = vunpack.c.l.b16 %v6201
    %v7547 = vunpack.c.l.b16 %v6202
    %v7548 = vunpack.c.l.b16 %v6203
    %v7549 = vunpack.c.l.b16 %v6204
    %v7550 = vunpack.c.l.b16 %v6205
    %v7551 = vunpack.c.l.b16 %v6206
    %v7552 = vunpack.c.l.b16 %v6207
    %v7553 = vunpack.c.l.b16 %v6208
    %v7554 = vunpack.c.l.b16 %v6209
    %v7555 = vunpack.c.l.b16 %v6210
    %v7556 = vunpack.c.l.b16 %v6211
    %v7557 = vunpack.c.l.b16 %v6212
    %v7558 = vunpack.c.l.b16 %v6213
    %v7559 = vpack.c.b16 %v7496, %v7495
    %v7560 = vpack.c.b16 %v7498, %v7497
    %v7561 = vpack.c.b16 %v7500, %v7499
    %v7562 = vpack.c.b16 %v7502, %v7501
    %v7563 = vpack.c.b16 %v7504, %v7503
    %v7564 = vpack.c.b16 %v7506, %v7505
    %v7565 = vpack.c.b16 %v7508, %v7507
    %v7566 = vpack.c.b16 %v7510, %v7509
    %v7567 = vpack.c.b16 %v7512, %v7511
    %v7568 = vpack.c.b16 %v7514, %v7513
    %v7569 = vpack.c.b16 %v7516, %v7515
    %v7570 = vpack.c.b16 %v7518, %v7517
    %v7571 = vpack.c.b16 %v7520, %v7519
    %v7572 = vpack.c.b16 %v7522, %v7521
    %v7573 = vpack.c.b16 %v7524, %v7523
    %v7574 = vpack.c.b16 %v7526, %v7525
    %v7575 = vpack.c.b16 %v7528, %v7527
    %v7576 = vpack.c.b16 %v7530, %v7529
    %v7577 = vpack.c.b16 %v7532, %v7531
    %v7578 = vpack.c.b16 %v7534, %v7533
    %v7579 = vpack.c.b16 %v7536, %v7535
    %v7580 = vpack.c.b16 %v7538, %v7537
    %v7581 = vpack.c.b16 %v7540, %v7539
    %v7582 = vpack.c.b16 %v7542, %v7541
    %v7583 = vpack.c.b16 %v7544, %v7543
    %v7584 = vpack.c.b16 %v7546, %v7545
    %v7585 = vpack.c.b16 %v7548, %v7547
    %v7586 = vpack.c.b16 %v7550, %v7549
    %v7587 = vpack.c.b16 %v7552, %v7551
    %v7588 = vpack.c.b16 %v7554, %v7553
    %v7589 = vpack.c.b16 %v7556, %v7555
    %v7590 = vpack.c.b16 %v7558, %v7557
    %v7687 = vunpack.c.l.b16 %v6278
    %v7688 = vunpack.c.l.b16 %v6279
    %v7689 = vunpack.c.l.b16 %v6280
    %v7690 = vunpack.c.l.b16 %v6281
    %v7691 = vunpack.c.l.b16 %v6282
    %v7692 = vunpack.c.l.b16 %v6283
    %v7693 = vunpack.c.l.b16 %v6284
    %v7694 = vunpack.c.l.b16 %v6285
    %v7695 = vunpack.c.l.b16 %v6286
    %v7696 = vunpack.c.l.b16 %v6287
    %v7697 = vunpack.c.l.b16 %v6288
    %v7698 = vunpack.c.l.b16 %v6289
    %v7699 = vunpack.c.l.b16 %v6290
    %v7700 = vunpack.c.l.b16 %v6291
    %v7701 = vunpack.c.l.b16 %v6292
    %v7702 = vunpack.c.l.b16 %v6293
    %v7703 = vunpack.c.l.b16 %v6294
    %v7704 = vunpack.c.l.b16 %v6295
    %v7705 = vunpack.c.l.b16 %v6296
    %v7706 = vunpack.c.l.b16 %v6297
    %v7707 = vunpack.c.l.b16 %v6298
    %v7708 = vunpack.c.l.b16 %v6299
    %v7709 = vunpack.c.l.b16 %v6300
    %v7710 = vunpack.c.l.b16 %v6301
    %v7711 = vunpack.c.l.b16 %v6302
    %v7712 = vunpack.c.l.b16 %v6303
    %v7713 = vunpack.c.l.b16 %v6304
    %v7714 = vunpack.c.l.b16 %v6305
    %v7715 = vunpack.c.l.b16 %v6306
    %v7716 = vunpack.c.l.b16 %v6307
    %v7717 = vunpack.c.l.b16 %v6308
    %v7718 = vunpack.c.l.b16 %v6309
    %v7719 = vunpack.c.l.b16 %v6310
    %v7720 = vunpack.c.l.b16 %v6311
    %v7721 = vunpack.c.l.b16 %v6312
    %v7722 = vunpack.c.l.b16 %v6313
    %v7723 = vunpack.c.l.b16 %v6314
    %v7724 = vunpack.c.l.b16 %v6315
    %v7725 = vunpack.c.l.b16 %v6316
    %v7726 = vunpack.c.l.b16 %v6317
    %v7727 = vunpack.c.l.b16 %v6318
    %v7728 = vunpack.c.l.b16 %v6319
    %v7729 = vunpack.c.l.b16 %v6320
    %v7730 = vunpack.c.l.b16 %v6321
    %v7731 = vunpack.c.l.b16 %v6322
    %v7732 = vunpack.c.l.b16 %v6323
    %v7733 = vunpack.c.l.b16 %v6324
    %v7734 = vunpack.c.l.b16 %v6325
    %v7735 = vunpack.c.l.b16 %v6326
    %v7736 = vunpack.c.l.b16 %v6327
    %v7737 = vunpack.c.l.b16 %v6328
    %v7738 = vunpack.c.l.b16 %v6329
    %v7739 = vunpack.c.l.b16 %v6330
    %v7740 = vunpack.c.l.b16 %v6331
    %v7741 = vunpack.c.l.b16 %v6332
    %v7742 = vunpack.c.l.b16 %v6333
    %v7743 = vunpack.c.l.b16 %v6334
    %v7744 = vunpack.c.l.b16 %v6335
    %v7745 = vunpack.c.l.b16 %v6336
    %v7746 = vunpack.c.l.b16 %v6337
    %v7747 = vunpack.c.l.b16 %v6338
    %v7748 = vunpack.c.l.b16 %v6339
    %v7749 = vunpack.c.l.b16 %v6340
    %v7750 = vunpack.c.l.b16 %v6341
    %v7751 = vpack.c.b16 %v7688, %v7687
    %v7752 = vpack.c.b16 %v7690, %v7689
    %v7753 = vpack.c.b16 %v7692, %v7691
    %v7754 = vpack.c.b16 %v7694, %v7693
    %v7755 = vpack.c.b16 %v7696, %v7695
    %v7756 = vpack.c.b16 %v7698, %v7697
    %v7757 = vpack.c.b16 %v7700, %v7699
    %v7758 = vpack.c.b16 %v7702, %v7701
    %v7759 = vpack.c.b16 %v7704, %v7703
    %v7760 = vpack.c.b16 %v7706, %v7705
    %v7761 = vpack.c.b16 %v7708, %v7707
    %v7762 = vpack.c.b16 %v7710, %v7709
    %v7763 = vpack.c.b16 %v7712, %v7711
    %v7764 = vpack.c.b16 %v7714, %v7713
    %v7765 = vpack.c.b16 %v7716, %v7715
    %v7766 = vpack.c.b16 %v7718, %v7717
    %v7767 = vpack.c.b16 %v7720, %v7719
    %v7768 = vpack.c.b16 %v7722, %v7721
    %v7769 = vpack.c.b16 %v7724, %v7723
    %v7770 = vpack.c.b16 %v7726, %v7725
    %v7771 = vpack.c.b16 %v7728, %v7727
    %v7772 = vpack.c.b16 %v7730, %v7729
    %v7773 = vpack.c.b16 %v7732, %v7731
    %v7774 = vpack.c.b16 %v7734, %v7733
    %v7775 = vpack.c.b16 %v7736, %v7735
    %v7776 = vpack.c.b16 %v7738, %v7737
    %v7777 = vpack.c.b16 %v7740, %v7739
    %v7778 = vpack.c.b16 %v7742, %v7741
    %v7779 = vpack.c.b16 %v7744, %v7743
    %v7780 = vpack.c.b16 %v7746, %v7745
    %v7781 = vpack.c.b16 %v7748, %v7747
    %v7782 = vpack.c.b16 %v7750, %v7749
    %v7879 = vunpack.c.l.b16 %v6406
    %v7880 = vunpack.c.l.b16 %v6407
    %v7881 = vunpack.c.l.b16 %v6408
    %v7882 = vunpack.c.l.b16 %v6409
    %v7883 = vunpack.c.l.b16 %v6410
    %v7884 = vunpack.c.l.b16 %v6411
    %v7885 = vunpack.c.l.b16 %v6412
    %v7886 = vunpack.c.l.b16 %v6413
    %v7887 = vunpack.c.l.b16 %v6414
    %v7888 = vunpack.c.l.b16 %v6415
    %v7889 = vunpack.c.l.b16 %v6416
    %v7890 = vunpack.c.l.b16 %v6417
    %v7891 = vunpack.c.l.b16 %v6418
    %v7892 = vunpack.c.l.b16 %v6419
    %v7893 = vunpack.c.l.b16 %v6420
    %v7894 = vunpack.c.l.b16 %v6421
    %v7895 = vunpack.c.l.b16 %v6422
    %v7896 = vunpack.c.l.b16 %v6423
    %v7897 = vunpack.c.l.b16 %v6424
    %v7898 = vunpack.c.l.b16 %v6425
    %v7899 = vunpack.c.l.b16 %v6426
    %v7900 = vunpack.c.l.b16 %v6427
    %v7901 = vunpack.c.l.b16 %v6428
    %v7902 = vunpack.c.l.b16 %v6429
    %v7903 = vunpack.c.l.b16 %v6430
    %v7904 = vunpack.c.l.b16 %v6431
    %v7905 = vunpack.c.l.b16 %v6432
    %v7906 = vunpack.c.l.b16 %v6433
    %v7907 = vunpack.c.l.b16 %v6434
    %v7908 = vunpack.c.l.b16 %v6435
    %v7909 = vunpack.c.l.b16 %v6436
    %v7910 = vunpack.c.l.b16 %v6437
    %v7911 = vunpack.c.l.b16 %v6438
    %v7912 = vunpack.c.l.b16 %v6439
    %v7913 = vunpack.c.l.b16 %v6440
    %v7914 = vunpack.c.l.b16 %v6441
    %v7915 = vunpack.c.l.b16 %v6442
    %v7916 = vunpack.c.l.b16 %v6443
    %v7917 = vunpack.c.l.b16 %v6444
    %v7918 = vunpack.c.l.b16 %v6445
    %v7919 = vunpack.c.l.b16 %v6446
    %v7920 = vunpack.c.l.b16 %v6447
    %v7921 = vunpack.c.l.b16 %v6448
    %v7922 = vunpack.c.l.b16 %v6449
    %v7923 = vunpack.c.l.b16 %v6450
    %v7924 = vunpack.c.l.b16 %v6451
    %v7925 = vunpack.c.l.b16 %v6452
    %v7926 = vunpack.c.l.b16 %v6453
    %v7927 = vunpack.c.l.b16 %v6454
    %v7928 = vunpack.c.l.b16 %v6455
    %v7929 = vunpack.c.l.b16 %v6456
    %v7930 = vunpack.c.l.b16 %v6457
    %v7931 = vunpack.c.l.b16 %v6458
    %v7932 = vunpack.c.l.b16 %v6459
    %v7933 = vunpack.c.l.b16 %v6460
    %v7934 = vunpack.c.l.b16 %v6461
    %v7935 = vunpack.c.l.b16 %v6462
    %v7936 = vunpack.c.l.b16 %v6463
    %v7937 = vunpack.c.l.b16 %v6464
    %v7938 = vunpack.c.l.b16 %v6465
    %v7939 = vunpack.c.l.b16 %v6466
    %v7940 = vunpack.c.l.b16 %v6467
    %v7941 = vunpack.c.l.b16 %v6468
    %v7942 = vunpack.c.l.b16 %v6469
    %v7943 = vpack.c.b16 %v7880, %v7879
    %v7944 = vpack.c.b16 %v7882, %v7881
    %v7945 = vpack.c.b16 %v7884, %v7883
    %v7946 = vpack.c.b16 %v7886, %v7885
    %v7947 = vpack.c.b16 %v7888, %v7887
    %v7948 = vpack.c.b16 %v7890, %v7889
    %v7949 = vpack.c.b16 %v7892, %v7891
    %v7950 = vpack.c.b16 %v7894, %v7893
    %v7951 = vpack.c.b16 %v7896, %v7895
    %v7952 = vpack.c.b16 %v7898, %v7897
    %v7953 = vpack.c.b16 %v7900, %v7899
    %v7954 = vpack.c.b16 %v7902, %v7901
    %v7955 = vpack.c.b16 %v7904, %v7903
    %v7956 = vpack.c.b16 %v7906, %v7905
    %v7957 = vpack.c.b16 %v7908, %v7907
    %v7958 = vpack.c.b16 %v7910, %v7909
    %v7959 = vpack.c.b16 %v7912, %v7911
    %v7960 = vpack.c.b16 %v7914, %v7913
    %v7961 = vpack.c.b16 %v7916, %v7915
    %v7962 = vpack.c.b16 %v7918, %v7917
    %v7963 = vpack.c.b16 %v7920, %v7919
    %v7964 = vpack.c.b16 %v7922, %v7921
    %v7965 = vpack.c.b16 %v7924, %v7923
    %v7966 = vpack.c.b16 %v7926, %v7925
    %v7967 = vpack.c.b16 %v7928, %v7927
    %v7968 = vpack.c.b16 %v7930, %v7929
    %v7969 = vpack.c.b16 %v7932, %v7931
    %v7970 = vpack.c.b16 %v7934, %v7933
    %v7971 = vpack.c.b16 %v7936, %v7935
    %v7972 = vpack.c.b16 %v7938, %v7937
    %v7973 = vpack.c.b16 %v7940, %v7939
    %v7974 = vpack.c.b16 %v7942, %v7941
    %v8071 = vunpack.c.l.b16 %v6535
    %v8072 = vunpack.c.l.b16 %v6536
    %v8073 = vunpack.c.l.b16 %v6537
    %v8074 = vunpack.c.l.b16 %v6538
    %v8075 = vunpack.c.l.b16 %v6539
    %v8076 = vunpack.c.l.b16 %v6540
    %v8077 = vunpack.c.l.b16 %v6541
    %v8078 = vunpack.c.l.b16 %v6542
    %v8079 = vunpack.c.l.b16 %v6543
    %v8080 = vunpack.c.l.b16 %v6544
    %v8081 = vunpack.c.l.b16 %v6545
    %v8082 = vunpack.c.l.b16 %v6546
    %v8083 = vunpack.c.l.b16 %v6547
    %v8084 = vunpack.c.l.b16 %v6548
    %v8085 = vunpack.c.l.b16 %v6549
    %v8086 = vunpack.c.l.b16 %v6550
    %v8087 = vunpack.c.l.b16 %v6551
    %v8088 = vunpack.c.l.b16 %v6552
    %v8089 = vunpack.c.l.b16 %v6553
    %v8090 = vunpack.c.l.b16 %v6554
    %v8091 = vunpack.c.l.b16 %v6555
    %v8092 = vunpack.c.l.b16 %v6556
    %v8093 = vunpack.c.l.b16 %v6557
    %v8094 = vunpack.c.l.b16 %v6558
    %v8095 = vunpack.c.l.b16 %v6559
    %v8096 = vunpack.c.l.b16 %v6560
    %v8097 = vunpack.c.l.b16 %v6561
    %v8098 = vunpack.c.l.b16 %v6562
    %v8099 = vunpack.c.l.b16 %v6563
    %v8100 = vunpack.c.l.b16 %v6564
    %v8101 = vunpack.c.l.b16 %v6565
    %v8102 = vunpack.c.l.b16 %v6566
    %v8103 = vunpack.c.l.b16 %v6567
    %v8104 = vunpack.c.l.b16 %v6568
    %v8105 = vunpack.c.l.b16 %v6569
    %v8106 = vunpack.c.l.b16 %v6570
    %v8107 = vunpack.c.l.b16 %v6571
    %v8108 = vunpack.c.l.b16 %v6572
    %v8109 = vunpack.c.l.b16 %v6573
    %v8110 = vunpack.c.l.b16 %v6574
    %v8111 = vunpack.c.l.b16 %v6575
    %v8112 = vunpack.c.l.b16 %v6576
    %v8113 = vunpack.c.l.b16 %v6577
    %v8114 = vunpack.c.l.b16 %v6578
    %v8115 = vunpack.c.l.b16 %v6579
    %v8116 = vunpack.c.l.b16 %v6580
    %v8117 = vunpack.c.l.b16 %v6581
    %v8118 = vunpack.c.l.b16 %v6582
    %v8119 = vunpack.c.l.b16 %v6583
    %v8120 = vunpack.c.l.b16 %v6584
    %v8121 = vunpack.c.l.b16 %v6585
    %v8122 = vunpack.c.l.b16 %v6586
    %v8123 = vunpack.c.l.b16 %v6587
    %v8124 = vunpack.c.l.b16 %v6588
    %v8125 = vunpack.c.l.b16 %v6589
    %v8126 = vunpack.c.l.b16 %v6590
    %v8127 = vunpack.c.l.b16 %v6591
    %v8128 = vunpack.c.l.b16 %v6592
    %v8129 = vunpack.c.l.b16 %v6593
    %v8130 = vunpack.c.l.b16 %v6594
    %v8131 = vunpack.c.l.b16 %v6595
    %v8132 = vunpack.c.l.b16 %v6596
    %v8133 = vunpack.c.l.b16 %v6597
    %v8134 = vunpack.c.l.b16 %v6598
    %v8135 = vpack.c.b16 %v8072, %v8071
    %v8136 = vpack.c.b16 %v8074, %v8073
    %v8137 = vpack.c.b16 %v8076, %v8075
    %v8138 = vpack.c.b16 %v8078, %v8077
    %v8139 = vpack.c.b16 %v8080, %v8079
    %v8140 = vpack.c.b16 %v8082, %v8081
    %v8141 = vpack.c.b16 %v8084, %v8083
    %v8142 = vpack.c.b16 %v8086, %v8085
    %v8143 = vpack.c.b16 %v8088, %v8087
    %v8144 = vpack.c.b16 %v8090, %v8089
    %v8145 = vpack.c.b16 %v8092, %v8091
    %v8146 = vpack.c.b16 %v8094, %v8093
    %v8147 = vpack.c.b16 %v8096, %v8095
    %v8148 = vpack.c.b16 %v8098, %v8097
    %v8149 = vpack.c.b16 %v8100, %v8099
    %v8150 = vpack.c.b16 %v8102, %v8101
    %v8151 = vpack.c.b16 %v8104, %v8103
    %v8152 = vpack.c.b16 %v8106, %v8105
    %v8153 = vpack.c.b16 %v8108, %v8107
    %v8154 = vpack.c.b16 %v8110, %v8109
    %v8155 = vpack.c.b16 %v8112, %v8111
    %v8156 = vpack.c.b16 %v8114, %v8113
    %v8157 = vpack.c.b16 %v8116, %v8115
    %v8158 = vpack.c.b16 %v8118, %v8117
    %v8159 = vpack.c.b16 %v8120, %v8119
    %v8160 = vpack.c.b16 %v8122, %v8121
    %v8161 = vpack.c.b16 %v8124, %v8123
    %v8162 = vpack.c.b16 %v8126, %v8125
    %v8163 = vpack.c.b16 %v8128, %v8127
    %v8164 = vpack.c.b16 %v8130, %v8129
    %v8165 = vpack.c.b16 %v8132, %v8131
    %v8166 = vpack.c.b16 %v8134, %v8133
    %v8263 = vunpack.c.l.b16 %v6663
    %v8264 = vunpack.c.l.b16 %v6664
    %v8265 = vunpack.c.l.b16 %v6665
    %v8266 = vunpack.c.l.b16 %v6666
    %v8267 = vunpack.c.l.b16 %v6667
    %v8268 = vunpack.c.l.b16 %v6668
    %v8269 = vunpack.c.l.b16 %v6669
    %v8270 = vunpack.c.l.b16 %v6670
    %v8271 = vunpack.c.l.b16 %v6671
    %v8272 = vunpack.c.l.b16 %v6672
    %v8273 = vunpack.c.l.b16 %v6673
    %v8274 = vunpack.c.l.b16 %v6674
    %v8275 = vunpack.c.l.b16 %v6675
    %v8276 = vunpack.c.l.b16 %v6676
    %v8277 = vunpack.c.l.b16 %v6677
    %v8278 = vunpack.c.l.b16 %v6678
    %v8279 = vunpack.c.l.b16 %v6679
    %v8280 = vunpack.c.l.b16 %v6680
    %v8281 = vunpack.c.l.b16 %v6681
    %v8282 = vunpack.c.l.b16 %v6682
    %v8283 = vunpack.c.l.b16 %v6683
    %v8284 = vunpack.c.l.b16 %v6684
    %v8285 = vunpack.c.l.b16 %v6685
    %v8286 = vunpack.c.l.b16 %v6686
    %v8287 = vunpack.c.l.b16 %v6687
    %v8288 = vunpack.c.l.b16 %v6688
    %v8289 = vunpack.c.l.b16 %v6689
    %v8290 = vunpack.c.l.b16 %v6690
    %v8291 = vunpack.c.l.b16 %v6691
    %v8292 = vunpack.c.l.b16 %v6692
    %v8293 = vunpack.c.l.b16 %v6693
    %v8294 = vunpack.c.l.b16 %v6694
    %v8295 = vunpack.c.l.b16 %v6695
    %v8296 = vunpack.c.l.b16 %v6696
    %v8297 = vunpack.c.l.b16 %v6697
    %v8298 = vunpack.c.l.b16 %v6698
    %v8299 = vunpack.c.l.b16 %v6699
    %v8300 = vunpack.c.l.b16 %v6700
    %v8301 = vunpack.c.l.b16 %v6701
    %v8302 = vunpack.c.l.b16 %v6702
    %v8303 = vunpack.c.l.b16 %v6703
    %v8304 = vunpack.c.l.b16 %v6704
    %v8305 = vunpack.c.l.b16 %v6705
    %v8306 = vunpack.c.l.b16 %v6706
    %v8307 = vunpack.c.l.b16 %v6707
    %v8308 = vunpack.c.l.b16 %v6708
    %v8309 = vunpack.c.l.b16 %v6709
    %v8310 = vunpack.c.l.b16 %v6710
    %v8311 = vunpack.c.l.b16 %v6711
    %v8312 = vunpack.c.l.b16 %v6712
    %v8313 = vunpack.c.l.b16 %v6713
    %v8314 = vunpack.c.l.b16 %v6714
    %v8315 = vunpack.c.l.b16 %v6715
    %v8316 = vunpack.c.l.b16 %v6716
    %v8317 = vunpack.c.l.b16 %v6717
    %v8318 = vunpack.c.l.b16 %v6718
    %v8319 = vunpack.c.l.b16 %v6719
    %v8320 = vunpack.c.l.b16 %v6720
    %v8321 = vunpack.c.l.b16 %v6721
    %v8322 = vunpack.c.l.b16 %v6722
    %v8323 = vunpack.c.l.b16 %v6723
    %v8324 = vunpack.c.l.b16 %v6724
    %v8325 = vunpack.c.l.b16 %v6725
    %v8326 = vunpack.c.l.b16 %v6726
    %v8327 = vpack.c.b16 %v8264, %v8263
    %v8328 = vpack.c.b16 %v8266, %v8265
    %v8329 = vpack.c.b16 %v8268, %v8267
    %v8330 = vpack.c.b16 %v8270, %v8269
    %v8331 = vpack.c.b16 %v8272, %v8271
    %v8332 = vpack.c.b16 %v8274, %v8273
    %v8333 = vpack.c.b16 %v8276, %v8275
    %v8334 = vpack.c.b16 %v8278, %v8277
    %v8335 = vpack.c.b16 %v8280, %v8279
    %v8336 = vpack.c.b16 %v8282, %v8281
    %v8337 = vpack.c.b16 %v8284, %v8283
    %v8338 = vpack.c.b16 %v8286, %v8285
    %v8339 = vpack.c.b16 %v8288, %v8287
    %v8340 = vpack.c.b16 %v8290, %v8289
    %v8341 = vpack.c.b16 %v8292, %v8291
    %v8342 = vpack.c.b16 %v8294, %v8293
    %v8343 = vpack.c.b16 %v8296, %v8295
    %v8344 = vpack.c.b16 %v8298, %v8297
    %v8345 = vpack.c.b16 %v8300, %v8299
    %v8346 = vpack.c.b16 %v8302, %v8301
    %v8347 = vpack.c.b16 %v8304, %v8303
    %v8348 = vpack.c.b16 %v8306, %v8305
    %v8349 = vpack.c.b16 %v8308, %v8307
    %v8350 = vpack.c.b16 %v8310, %v8309
    %v8351 = vpack.c.b16 %v8312, %v8311
    %v8352 = vpack.c.b16 %v8314, %v8313
    %v8353 = vpack.c.b16 %v8316, %v8315
    %v8354 = vpack.c.b16 %v8318, %v8317
    %v8355 = vpack.c.b16 %v8320, %v8319
    %v8356 = vpack.c.b16 %v8322, %v8321
    %v8357 = vpack.c.b16 %v8324, %v8323
    %v8358 = vpack.c.b16 %v8326, %v8325
    %v8455 = vunpack.c.l.b16 %v6791
    %v8456 = vunpack.c.l.b16 %v6792
    %v8457 = vunpack.c.l.b16 %v6793
    %v8458 = vunpack.c.l.b16 %v6794
    %v8459 = vunpack.c.l.b16 %v6795
    %v8460 = vunpack.c.l.b16 %v6796
    %v8461 = vunpack.c.l.b16 %v6797
    %v8462 = vunpack.c.l.b16 %v6798
    %v8463 = vunpack.c.l.b16 %v6799
    %v8464 = vunpack.c.l.b16 %v6800
    %v8465 = vunpack.c.l.b16 %v6801
    %v8466 = vunpack.c.l.b16 %v6802
    %v8467 = vunpack.c.l.b16 %v6803
    %v8468 = vunpack.c.l.b16 %v6804
    %v8469 = vunpack.c.l.b16 %v6805
    %v8470 = vunpack.c.l.b16 %v6806
    %v8471 = vunpack.c.l.b16 %v6807
    %v8472 = vunpack.c.l.b16 %v6808
    %v8473 = vunpack.c.l.b16 %v6809
    %v8474 = vunpack.c.l.b16 %v6810
    %v8475 = vunpack.c.l.b16 %v6811
    %v8476 = vunpack.c.l.b16 %v6812
    %v8477 = vunpack.c.l.b16 %v6813
    %v8478 = vunpack.c.l.b16 %v6814
    %v8479 = vunpack.c.l.b16 %v6815
    %v8480 = vunpack.c.l.b16 %v6816
    %v8481 = vunpack.c.l.b16 %v6817
    %v8482 = vunpack.c.l.b16 %v6818
    %v8483 = vunpack.c.l.b16 %v6819
    %v8484 = vunpack.c.l.b16 %v6820
    %v8485 = vunpack.c.l.b16 %v6821
    %v8486 = vunpack.c.l.b16 %v6822
    %v8487 = vunpack.c.l.b16 %v6823
    %v8488 = vunpack.c.l.b16 %v6824
    %v8489 = vunpack.c.l.b16 %v6825
    %v8490 = vunpack.c.l.b16 %v6826
    %v8491 = vunpack.c.l.b16 %v6827
    %v8492 = vunpack.c.l.b16 %v6828
    %v8493 = vunpack.c.l.b16 %v6829
    %v8494 = vunpack.c.l.b16 %v6830
    %v8495 = vunpack.c.l.b16 %v6831
    %v8496 = vunpack.c.l.b16 %v6832
    %v8497 = vunpack.c.l.b16 %v6833
    %v8498 = vunpack.c.l.b16 %v6834
    %v8499 = vunpack.c.l.b16 %v6835
    %v8500 = vunpack.c.l.b16 %v6836
    %v8501 = vunpack.c.l.b16 %v6837
    %v8502 = vunpack.c.l.b16 %v6838
    %v8503 = vunpack.c.l.b16 %v6839
    %v8504 = vunpack.c.l.b16 %v6840
    %v8505 = vunpack.c.l.b16 %v6841
    %v8506 = vunpack.c.l.b16 %v6842
    %v8507 = vunpack.c.l.b16 %v6843
    %v8508 = vunpack.c.l.b16 %v6844
    %v8509 = vunpack.c.l.b16 %v6845
    %v8510 = vunpack.c.l.b16 %v6846
    %v8511 = vunpack.c.l.b16 %v6847
    %v8512 = vunpack.c.l.b16 %v6848
    %v8513 = vunpack.c.l.b16 %v6849
    %v8514 = vunpack.c.l.b16 %v6850
    %v8515 = vunpack.c.l.b16 %v6851
    %v8516 = vunpack.c.l.b16 %v6852
    %v8517 = vunpack.c.l.b16 %v6853
    %v8518 = vunpack.c.l.b16 %v6854
    %v8519 = vpack.c.b16 %v8456, %v8455
    %v8520 = vpack.c.b16 %v8458, %v8457
    %v8521 = vpack.c.b16 %v8460, %v8459
    %v8522 = vpack.c.b16 %v8462, %v8461
    %v8523 = vpack.c.b16 %v8464, %v8463
    %v8524 = vpack.c.b16 %v8466, %v8465
    %v8525 = vpack.c.b16 %v8468, %v8467
    %v8526 = vpack.c.b16 %v8470, %v8469
    %v8527 = vpack.c.b16 %v8472, %v8471
    %v8528 = vpack.c.b16 %v8474, %v8473
    %v8529 = vpack.c.b16 %v8476, %v8475
    %v8530 = vpack.c.b16 %v8478, %v8477
    %v8531 = vpack.c.b16 %v8480, %v8479
    %v8532 = vpack.c.b16 %v8482, %v8481
    %v8533 = vpack.c.b16 %v8484, %v8483
    %v8534 = vpack.c.b16 %v8486, %v8485
    %v8535 = vpack.c.b16 %v8488, %v8487
    %v8536 = vpack.c.b16 %v8490, %v8489
    %v8537 = vpack.c.b16 %v8492, %v8491
    %v8538 = vpack.c.b16 %v8494, %v8493
    %v8539 = vpack.c.b16 %v8496, %v8495
    %v8540 = vpack.c.b16 %v8498, %v8497
    %v8541 = vpack.c.b16 %v8500, %v8499
    %v8542 = vpack.c.b16 %v8502, %v8501
    %v8543 = vpack.c.b16 %v8504, %v8503
    %v8544 = vpack.c.b16 %v8506, %v8505
    %v8545 = vpack.c.b16 %v8508, %v8507
    %v8546 = vpack.c.b16 %v8510, %v8509
    %v8547 = vpack.c.b16 %v8512, %v8511
    %v8548 = vpack.c.b16 %v8514, %v8513
    %v8549 = vpack.c.b16 %v8516, %v8515
    %v8550 = vpack.c.b16 %v8518, %v8517
    %v8583 = vld [vmem:[%s2] sm:$0xf]
    %v8584 = vld [vmem:[%s2 + $0x4] sm:$0xf]
    %v8585 = vld [vmem:[%s2 + $0x8] sm:$0xf]
    %v8586 = vld [vmem:[%s2 + $0xc] sm:$0xf]
    %v8587 = vld [vmem:[%s2 + $0x10] sm:$0xf]
    %v8588 = vld [vmem:[%s2 + $0x14] sm:$0xf]
    %v8589 = vld [vmem:[%s2 + $0x18] sm:$0xf]
    %v8590 = vld [vmem:[%s2 + $0x1c] sm:$0xf]
    %v8591 = vld [vmem:[%s2 + $0x20] sm:$0xf]
    %v8592 = vld [vmem:[%s2 + $0x24] sm:$0xf]
    %v8593 = vld [vmem:[%s2 + $0x28] sm:$0xf]
    %v8594 = vld [vmem:[%s2 + $0x2c] sm:$0xf]
    %v8595 = vld [vmem:[%s2 + $0x30] sm:$0xf]
    %v8596 = vld [vmem:[%s2 + $0x34] sm:$0xf]
    %v8597 = vld [vmem:[%s2 + $0x38] sm:$0xf]
    %v8598 = vld [vmem:[%s2 + $0x3c] sm:$0xf]
    %v8599 = vld [vmem:[%s2 + $0x40] sm:$0xf]
    %v8600 = vld [vmem:[%s2 + $0x44] sm:$0xf]
    %v8601 = vld [vmem:[%s2 + $0x48] sm:$0xf]
    %v8602 = vld [vmem:[%s2 + $0x4c] sm:$0xf]
    %v8603 = vld [vmem:[%s2 + $0x50] sm:$0xf]
    %v8604 = vld [vmem:[%s2 + $0x54] sm:$0xf]
    %v8605 = vld [vmem:[%s2 + $0x58] sm:$0xf]
    %v8606 = vld [vmem:[%s2 + $0x5c] sm:$0xf]
    %v8607 = vld [vmem:[%s2 + $0x60] sm:$0xf]
    %v8608 = vld [vmem:[%s2 + $0x64] sm:$0xf]
    %v8609 = vld [vmem:[%s2 + $0x68] sm:$0xf]
    %v8610 = vld [vmem:[%s2 + $0x6c] sm:$0xf]
    %v8611 = vld [vmem:[%s2 + $0x70] sm:$0xf]
    %v8612 = vld [vmem:[%s2 + $0x74] sm:$0xf]
    %v8613 = vld [vmem:[%s2 + $0x78] sm:$0xf]
    %v8614 = vld [vmem:[%s2 + $0x7c] sm:$0xf]
    %v8615 = vld [vmem:[%s2 + $0x80] sm:$0xf]
    %v8616 = vld [vmem:[%s2 + $0x84] sm:$0xf]
    %v8617 = vld [vmem:[%s2 + $0x88] sm:$0xf]
    %v8618 = vld [vmem:[%s2 + $0x8c] sm:$0xf]
    %v8619 = vld [vmem:[%s2 + $0x90] sm:$0xf]
    %v8620 = vld [vmem:[%s2 + $0x94] sm:$0xf]
    %v8621 = vld [vmem:[%s2 + $0x98] sm:$0xf]
    %v8622 = vld [vmem:[%s2 + $0x9c] sm:$0xf]
    %v8623 = vld [vmem:[%s2 + $0xa0] sm:$0xf]
    %v8624 = vld [vmem:[%s2 + $0xa4] sm:$0xf]
    %v8625 = vld [vmem:[%s2 + $0xa8] sm:$0xf]
    %v8626 = vld [vmem:[%s2 + $0xac] sm:$0xf]
    %v8627 = vld [vmem:[%s2 + $0xb0] sm:$0xf]
    %v8628 = vld [vmem:[%s2 + $0xb4] sm:$0xf]
    %v8629 = vld [vmem:[%s2 + $0xb8] sm:$0xf]
    %v8630 = vld [vmem:[%s2 + $0xbc] sm:$0xf]
    %v8631 = vld [vmem:[%s2 + $0xc0] sm:$0xf]
    %v8632 = vld [vmem:[%s2 + $0xc4] sm:$0xf]
    %v8633 = vld [vmem:[%s2 + $0xc8] sm:$0xf]
    %v8634 = vld [vmem:[%s2 + $0xcc] sm:$0xf]
    %v8635 = vld [vmem:[%s2 + $0xd0] sm:$0xf]
    %v8636 = vld [vmem:[%s2 + $0xd4] sm:$0xf]
    %v8637 = vld [vmem:[%s2 + $0xd8] sm:$0xf]
    %v8638 = vld [vmem:[%s2 + $0xdc] sm:$0xf]
    %v8639 = vld [vmem:[%s2 + $0xe0] sm:$0xf]
    %v8640 = vld [vmem:[%s2 + $0xe4] sm:$0xf]
    %v8641 = vld [vmem:[%s2 + $0xe8] sm:$0xf]
    %v8642 = vld [vmem:[%s2 + $0xec] sm:$0xf]
    %v8643 = vld [vmem:[%s2 + $0xf0] sm:$0xf]
    %v8644 = vld [vmem:[%s2 + $0xf4] sm:$0xf]
    %v8645 = vld [vmem:[%s2 + $0xf8] sm:$0xf]
    %v8646 = vld [vmem:[%s2 + $0xfc] sm:$0xf]
    %v8647 = vld [vmem:[%s2 + $0x100] sm:$0xf]
    %v8648 = vld [vmem:[%s2 + $0x104] sm:$0xf]
    %v8649 = vld [vmem:[%s2 + $0x108] sm:$0xf]
    %v8650 = vld [vmem:[%s2 + $0x10c] sm:$0xf]
    %v8651 = vld [vmem:[%s2 + $0x110] sm:$0xf]
    %v8652 = vld [vmem:[%s2 + $0x114] sm:$0xf]
    %v8653 = vld [vmem:[%s2 + $0x118] sm:$0xf]
    %v8654 = vld [vmem:[%s2 + $0x11c] sm:$0xf]
    %v8655 = vld [vmem:[%s2 + $0x120] sm:$0xf]
    %v8656 = vld [vmem:[%s2 + $0x124] sm:$0xf]
    %v8657 = vld [vmem:[%s2 + $0x128] sm:$0xf]
    %v8658 = vld [vmem:[%s2 + $0x12c] sm:$0xf]
    %v8659 = vld [vmem:[%s2 + $0x130] sm:$0xf]
    %v8660 = vld [vmem:[%s2 + $0x134] sm:$0xf]
    %v8661 = vld [vmem:[%s2 + $0x138] sm:$0xf]
    %v8662 = vld [vmem:[%s2 + $0x13c] sm:$0xf]
    %v8663 = vld [vmem:[%s2 + $0x140] sm:$0xf]
    %v8664 = vld [vmem:[%s2 + $0x144] sm:$0xf]
    %v8665 = vld [vmem:[%s2 + $0x148] sm:$0xf]
    %v8666 = vld [vmem:[%s2 + $0x14c] sm:$0xf]
    %v8667 = vld [vmem:[%s2 + $0x150] sm:$0xf]
    %v8668 = vld [vmem:[%s2 + $0x154] sm:$0xf]
    %v8669 = vld [vmem:[%s2 + $0x158] sm:$0xf]
    %v8670 = vld [vmem:[%s2 + $0x15c] sm:$0xf]
    %v8671 = vld [vmem:[%s2 + $0x160] sm:$0xf]
    %v8672 = vld [vmem:[%s2 + $0x164] sm:$0xf]
    %v8673 = vld [vmem:[%s2 + $0x168] sm:$0xf]
    %v8674 = vld [vmem:[%s2 + $0x16c] sm:$0xf]
    %v8675 = vld [vmem:[%s2 + $0x170] sm:$0xf]
    %v8676 = vld [vmem:[%s2 + $0x174] sm:$0xf]
    %v8677 = vld [vmem:[%s2 + $0x178] sm:$0xf]
    %v8678 = vld [vmem:[%s2 + $0x17c] sm:$0xf]
    %v8679 = vld [vmem:[%s2 + $0x180] sm:$0xf]
    %v8680 = vld [vmem:[%s2 + $0x184] sm:$0xf]
    %v8681 = vld [vmem:[%s2 + $0x188] sm:$0xf]
    %v8682 = vld [vmem:[%s2 + $0x18c] sm:$0xf]
    %v8683 = vld [vmem:[%s2 + $0x190] sm:$0xf]
    %v8684 = vld [vmem:[%s2 + $0x194] sm:$0xf]
    %v8685 = vld [vmem:[%s2 + $0x198] sm:$0xf]
    %v8686 = vld [vmem:[%s2 + $0x19c] sm:$0xf]
    %v8687 = vld [vmem:[%s2 + $0x1a0] sm:$0xf]
    %v8688 = vld [vmem:[%s2 + $0x1a4] sm:$0xf]
    %v8689 = vld [vmem:[%s2 + $0x1a8] sm:$0xf]
    %v8690 = vld [vmem:[%s2 + $0x1ac] sm:$0xf]
    %v8691 = vld [vmem:[%s2 + $0x1b0] sm:$0xf]
    %v8692 = vld [vmem:[%s2 + $0x1b4] sm:$0xf]
    %v8693 = vld [vmem:[%s2 + $0x1b8] sm:$0xf]
    %v8694 = vld [vmem:[%s2 + $0x1bc] sm:$0xf]
    %v8695 = vld [vmem:[%s2 + $0x1c0] sm:$0xf]
    %v8696 = vld [vmem:[%s2 + $0x1c4] sm:$0xf]
    %v8697 = vld [vmem:[%s2 + $0x1c8] sm:$0xf]
    %v8698 = vld [vmem:[%s2 + $0x1cc] sm:$0xf]
    %v8699 = vld [vmem:[%s2 + $0x1d0] sm:$0xf]
    %v8700 = vld [vmem:[%s2 + $0x1d4] sm:$0xf]
    %v8701 = vld [vmem:[%s2 + $0x1d8] sm:$0xf]
    %v8702 = vld [vmem:[%s2 + $0x1dc] sm:$0xf]
    %v8703 = vld [vmem:[%s2 + $0x1e0] sm:$0xf]
    %v8704 = vld [vmem:[%s2 + $0x1e4] sm:$0xf]
    %v8705 = vld [vmem:[%s2 + $0x1e8] sm:$0xf]
    %v8706 = vld [vmem:[%s2 + $0x1ec] sm:$0xf]
    %v8707 = vld [vmem:[%s2 + $0x1f0] sm:$0xf]
    %v8708 = vld [vmem:[%s2 + $0x1f4] sm:$0xf]
    %v8709 = vld [vmem:[%s2 + $0x1f8] sm:$0xf]
    %v8710 = vld [vmem:[%s2 + $0x1fc] sm:$0xf]
    %v8711 = vld [vmem:[%s2 + $0x200] sm:$0xf]
    %v8712 = vld [vmem:[%s2 + $0x204] sm:$0xf]
    %v8713 = vld [vmem:[%s2 + $0x208] sm:$0xf]
    %v8714 = vld [vmem:[%s2 + $0x20c] sm:$0xf]
    %v8715 = vld [vmem:[%s2 + $0x210] sm:$0xf]
    %v8716 = vld [vmem:[%s2 + $0x214] sm:$0xf]
    %v8717 = vld [vmem:[%s2 + $0x218] sm:$0xf]
    %v8718 = vld [vmem:[%s2 + $0x21c] sm:$0xf]
    %v8719 = vld [vmem:[%s2 + $0x220] sm:$0xf]
    %v8720 = vld [vmem:[%s2 + $0x224] sm:$0xf]
    %v8721 = vld [vmem:[%s2 + $0x228] sm:$0xf]
    %v8722 = vld [vmem:[%s2 + $0x22c] sm:$0xf]
    %v8723 = vld [vmem:[%s2 + $0x230] sm:$0xf]
    %v8724 = vld [vmem:[%s2 + $0x234] sm:$0xf]
    %v8725 = vld [vmem:[%s2 + $0x238] sm:$0xf]
    %v8726 = vld [vmem:[%s2 + $0x23c] sm:$0xf]
    %v8871 = vunpack.c.l.b16 %v8583
    %v8872 = vunpack.c.l.b16 %v8584
    %v8873 = vunpack.c.l.b16 %v8585
    %v8874 = vunpack.c.l.b16 %v8586
    %v8875 = vunpack.c.l.b16 %v8587
    %v8876 = vunpack.c.l.b16 %v8588
    %v8877 = vunpack.c.l.b16 %v8589
    %v8878 = vunpack.c.l.b16 %v8590
    %v8879 = vunpack.c.l.b16 %v8591
    %v8880 = vunpack.c.l.b16 %v8592
    %v8881 = vunpack.c.l.b16 %v8593
    %v8882 = vunpack.c.l.b16 %v8594
    %v8883 = vunpack.c.l.b16 %v8595
    %v8884 = vunpack.c.l.b16 %v8596
    %v8885 = vunpack.c.l.b16 %v8597
    %v8886 = vunpack.c.l.b16 %v8598
    %v8887 = vunpack.c.l.b16 %v8599
    %v8888 = vunpack.c.l.b16 %v8600
    %v8889 = vunpack.c.l.b16 %v8601
    %v8890 = vunpack.c.l.b16 %v8602
    %v8891 = vunpack.c.l.b16 %v8603
    %v8892 = vunpack.c.l.b16 %v8604
    %v8893 = vunpack.c.l.b16 %v8605
    %v8894 = vunpack.c.l.b16 %v8606
    %v8895 = vunpack.c.l.b16 %v8607
    %v8896 = vunpack.c.l.b16 %v8608
    %v8897 = vunpack.c.l.b16 %v8609
    %v8898 = vunpack.c.l.b16 %v8610
    %v8899 = vunpack.c.l.b16 %v8611
    %v8900 = vunpack.c.l.b16 %v8612
    %v8901 = vunpack.c.l.b16 %v8613
    %v8902 = vunpack.c.l.b16 %v8614
    %v8903 = vunpack.c.l.b16 %v8615
    %v8904 = vunpack.c.l.b16 %v8616
    %v8905 = vunpack.c.l.b16 %v8617
    %v8906 = vunpack.c.l.b16 %v8618
    %v8907 = vunpack.c.l.b16 %v8619
    %v8908 = vunpack.c.l.b16 %v8620
    %v8909 = vunpack.c.l.b16 %v8621
    %v8910 = vunpack.c.l.b16 %v8622
    %v8911 = vunpack.c.l.b16 %v8623
    %v8912 = vunpack.c.l.b16 %v8624
    %v8913 = vunpack.c.l.b16 %v8625
    %v8914 = vunpack.c.l.b16 %v8626
    %v8915 = vunpack.c.l.b16 %v8627
    %v8916 = vunpack.c.l.b16 %v8628
    %v8917 = vunpack.c.l.b16 %v8629
    %v8918 = vunpack.c.l.b16 %v8630
    %v8919 = vunpack.c.l.b16 %v8631
    %v8920 = vunpack.c.l.b16 %v8632
    %v8921 = vunpack.c.l.b16 %v8633
    %v8922 = vunpack.c.l.b16 %v8634
    %v8923 = vunpack.c.l.b16 %v8635
    %v8924 = vunpack.c.l.b16 %v8636
    %v8925 = vunpack.c.l.b16 %v8637
    %v8926 = vunpack.c.l.b16 %v8638
    %v8927 = vunpack.c.l.b16 %v8639
    %v8928 = vunpack.c.l.b16 %v8640
    %v8929 = vunpack.c.l.b16 %v8641
    %v8930 = vunpack.c.l.b16 %v8642
    %v8931 = vunpack.c.l.b16 %v8643
    %v8932 = vunpack.c.l.b16 %v8644
    %v8933 = vunpack.c.l.b16 %v8645
    %v8934 = vunpack.c.l.b16 %v8646
    %v8935 = vunpack.c.l.b16 %v8647
    %v8936 = vunpack.c.l.b16 %v8648
    %v8937 = vunpack.c.l.b16 %v8649
    %v8938 = vunpack.c.l.b16 %v8650
    %v8939 = vunpack.c.l.b16 %v8651
    %v8940 = vunpack.c.l.b16 %v8652
    %v8941 = vunpack.c.l.b16 %v8653
    %v8942 = vunpack.c.l.b16 %v8654
    %v8943 = vunpack.c.l.b16 %v8655
    %v8944 = vunpack.c.l.b16 %v8656
    %v8945 = vunpack.c.l.b16 %v8657
    %v8946 = vunpack.c.l.b16 %v8658
    %v8947 = vunpack.c.l.b16 %v8659
    %v8948 = vunpack.c.l.b16 %v8660
    %v8949 = vunpack.c.l.b16 %v8661
    %v8950 = vunpack.c.l.b16 %v8662
    %v8951 = vunpack.c.l.b16 %v8663
    %v8952 = vunpack.c.l.b16 %v8664
    %v8953 = vunpack.c.l.b16 %v8665
    %v8954 = vunpack.c.l.b16 %v8666
    %v8955 = vunpack.c.l.b16 %v8667
    %v8956 = vunpack.c.l.b16 %v8668
    %v8957 = vunpack.c.l.b16 %v8669
    %v8958 = vunpack.c.l.b16 %v8670
    %v8959 = vunpack.c.l.b16 %v8671
    %v8960 = vunpack.c.l.b16 %v8672
    %v8961 = vunpack.c.l.b16 %v8673
    %v8962 = vunpack.c.l.b16 %v8674
    %v8963 = vunpack.c.l.b16 %v8675
    %v8964 = vunpack.c.l.b16 %v8676
    %v8965 = vunpack.c.l.b16 %v8677
    %v8966 = vunpack.c.l.b16 %v8678
    %v8967 = vunpack.c.l.b16 %v8679
    %v8968 = vunpack.c.l.b16 %v8680
    %v8969 = vunpack.c.l.b16 %v8681
    %v8970 = vunpack.c.l.b16 %v8682
    %v8971 = vunpack.c.l.b16 %v8683
    %v8972 = vunpack.c.l.b16 %v8684
    %v8973 = vunpack.c.l.b16 %v8685
    %v8974 = vunpack.c.l.b16 %v8686
    %v8975 = vunpack.c.l.b16 %v8687
    %v8976 = vunpack.c.l.b16 %v8688
    %v8977 = vunpack.c.l.b16 %v8689
    %v8978 = vunpack.c.l.b16 %v8690
    %v8979 = vunpack.c.l.b16 %v8691
    %v8980 = vunpack.c.l.b16 %v8692
    %v8981 = vunpack.c.l.b16 %v8693
    %v8982 = vunpack.c.l.b16 %v8694
    %v8983 = vunpack.c.l.b16 %v8695
    %v8984 = vunpack.c.l.b16 %v8696
    %v8985 = vunpack.c.l.b16 %v8697
    %v8986 = vunpack.c.l.b16 %v8698
    %v8987 = vunpack.c.l.b16 %v8699
    %v8988 = vunpack.c.l.b16 %v8700
    %v8989 = vunpack.c.l.b16 %v8701
    %v8990 = vunpack.c.l.b16 %v8702
    %v8991 = vunpack.c.l.b16 %v8703
    %v8992 = vunpack.c.l.b16 %v8704
    %v8993 = vunpack.c.l.b16 %v8705
    %v8994 = vunpack.c.l.b16 %v8706
    %v8995 = vunpack.c.l.b16 %v8707
    %v8996 = vunpack.c.l.b16 %v8708
    %v8997 = vunpack.c.l.b16 %v8709
    %v8998 = vunpack.c.l.b16 %v8710
    %v8999 = vunpack.c.l.b16 %v8711
    %v9000 = vunpack.c.l.b16 %v8712
    %v9001 = vunpack.c.l.b16 %v8713
    %v9002 = vunpack.c.l.b16 %v8714
    %v9003 = vunpack.c.l.b16 %v8715
    %v9004 = vunpack.c.l.b16 %v8716
    %v9005 = vunpack.c.l.b16 %v8717
    %v9006 = vunpack.c.l.b16 %v8718
    %v9007 = vunpack.c.l.b16 %v8719
    %v9008 = vunpack.c.l.b16 %v8720
    %v9009 = vunpack.c.l.b16 %v8721
    %v9010 = vunpack.c.l.b16 %v8722
    %v9011 = vunpack.c.l.b16 %v8723
    %v9012 = vunpack.c.l.b16 %v8724
    %v9013 = vunpack.c.l.b16 %v8725
    %v9014 = vunpack.c.l.b16 %v8726
    %v9015 = vpack.c.b16 %v8872, %v8871
    %v9016 = vpack.c.b16 %v8874, %v8873
    %v9017 = vpack.c.b16 %v8876, %v8875
    %v9018 = vpack.c.b16 %v8878, %v8877
    %v9019 = vpack.c.b16 %v8880, %v8879
    %v9020 = vpack.c.b16 %v8882, %v8881
    %v9021 = vpack.c.b16 %v8884, %v8883
    %v9022 = vpack.c.b16 %v8886, %v8885
    %v9023 = vpack.c.b16 %v8888, %v8887
    %v9024 = vpack.c.b16 %v8890, %v8889
    %v9025 = vpack.c.b16 %v8892, %v8891
    %v9026 = vpack.c.b16 %v8894, %v8893
    %v9027 = vpack.c.b16 %v8896, %v8895
    %v9028 = vpack.c.b16 %v8898, %v8897
    %v9029 = vpack.c.b16 %v8900, %v8899
    %v9030 = vpack.c.b16 %v8902, %v8901
    %v9031 = vpack.c.b16 %v8904, %v8903
    %v9032 = vpack.c.b16 %v8906, %v8905
    %v9033 = vpack.c.b16 %v8908, %v8907
    %v9034 = vpack.c.b16 %v8910, %v8909
    %v9035 = vpack.c.b16 %v8912, %v8911
    %v9036 = vpack.c.b16 %v8914, %v8913
    %v9037 = vpack.c.b16 %v8916, %v8915
    %v9038 = vpack.c.b16 %v8918, %v8917
    %v9039 = vpack.c.b16 %v8920, %v8919
    %v9040 = vpack.c.b16 %v8922, %v8921
    %v9041 = vpack.c.b16 %v8924, %v8923
    %v9042 = vpack.c.b16 %v8926, %v8925
    %v9043 = vpack.c.b16 %v8928, %v8927
    %v9044 = vpack.c.b16 %v8930, %v8929
    %v9045 = vpack.c.b16 %v8932, %v8931
    %v9046 = vpack.c.b16 %v8934, %v8933
    %v9047 = vpack.c.b16 %v8936, %v8935
    %v9048 = vpack.c.b16 %v8938, %v8937
    %v9049 = vpack.c.b16 %v8940, %v8939
    %v9050 = vpack.c.b16 %v8942, %v8941
    %v9051 = vpack.c.b16 %v8944, %v8943
    %v9052 = vpack.c.b16 %v8946, %v8945
    %v9053 = vpack.c.b16 %v8948, %v8947
    %v9054 = vpack.c.b16 %v8950, %v8949
    %v9055 = vpack.c.b16 %v8952, %v8951
    %v9056 = vpack.c.b16 %v8954, %v8953
    %v9057 = vpack.c.b16 %v8956, %v8955
    %v9058 = vpack.c.b16 %v8958, %v8957
    %v9059 = vpack.c.b16 %v8960, %v8959
    %v9060 = vpack.c.b16 %v8962, %v8961
    %v9061 = vpack.c.b16 %v8964, %v8963
    %v9062 = vpack.c.b16 %v8966, %v8965
    %v9063 = vpack.c.b16 %v8968, %v8967
    %v9064 = vpack.c.b16 %v8970, %v8969
    %v9065 = vpack.c.b16 %v8972, %v8971
    %v9066 = vpack.c.b16 %v8974, %v8973
    %v9067 = vpack.c.b16 %v8976, %v8975
    %v9068 = vpack.c.b16 %v8978, %v8977
    %v9069 = vpack.c.b16 %v8980, %v8979
    %v9070 = vpack.c.b16 %v8982, %v8981
    %v9071 = vpack.c.b16 %v8984, %v8983
    %v9072 = vpack.c.b16 %v8986, %v8985
    %v9073 = vpack.c.b16 %v8988, %v8987
    %v9074 = vpack.c.b16 %v8990, %v8989
    %v9075 = vpack.c.b16 %v8992, %v8991
    %v9076 = vpack.c.b16 %v8994, %v8993
    %v9077 = vpack.c.b16 %v8996, %v8995
    %v9078 = vpack.c.b16 %v8998, %v8997
    %v9079 = vpack.c.b16 %v9000, %v8999
    %v9080 = vpack.c.b16 %v9002, %v9001
    %v9081 = vpack.c.b16 %v9004, %v9003
    %v9082 = vpack.c.b16 %v9006, %v9005
    %v9083 = vpack.c.b16 %v9008, %v9007
    %v9084 = vpack.c.b16 %v9010, %v9009
    %v9085 = vpack.c.b16 %v9012, %v9011
    %v9086 = vpack.c.b16 %v9014, %v9013
    %9159 = vmatpush.bf16.msra.mxu0 %v9022
    %9160 = vmatpush.bf16.msra.mxu0 %v9021
    %9161 = vmatpush.bf16.msra.mxu0 %v9020
    %9162 = vmatpush.bf16.msra.mxu0 %v9019
    %9163 = vmatpush.bf16.msra.mxu0 %v9018
    %9164 = vmatpush.bf16.msra.mxu0 %v9017
    %9165 = vmatpush.bf16.msra.mxu0 %v9016
    %9166 = vmatpush.bf16.msra.mxu0 %v9015
    %9167 = vmatmul.bf16.gmra.mxu0 %v6983
    %v9168 = vpop.f32.mrf.mxu0
    %v9169 = vadd.f32 0.0, %v9168
    %v9170 = vpop.f32.mrf.mxu0
    %v9171 = vadd.f32 0.0, %v9170
    %9172 = vmatmul.bf16.gmra.mxu0 %v6984
    %v9173 = vpop.f32.mrf.mxu0
    %v9174 = vadd.f32 0.0, %v9173
    %v9175 = vpop.f32.mrf.mxu0
    %v9176 = vadd.f32 0.0, %v9175
    %9177 = vmatmul.bf16.gmra.mxu0 %v6985
    %v9178 = vpop.f32.mrf.mxu0
    %v9179 = vadd.f32 0.0, %v9178
    %v9180 = vpop.f32.mrf.mxu0
    %v9181 = vadd.f32 0.0, %v9180
    %9182 = vmatmul.bf16.gmra.mxu0 %v6986
    %v9183 = vpop.f32.mrf.mxu0
    %v9184 = vadd.f32 0.0, %v9183
    %v9185 = vpop.f32.mrf.mxu0
    %v9186 = vadd.f32 0.0, %v9185
    %9187 = vmatmul.bf16.gmra.mxu0 %v6987
    %v9188 = vpop.f32.mrf.mxu0
    %v9189 = vadd.f32 0.0, %v9188
    %v9190 = vpop.f32.mrf.mxu0
    %v9191 = vadd.f32 0.0, %v9190
    %9192 = vmatmul.bf16.gmra.mxu0 %v6988
    %v9193 = vpop.f32.mrf.mxu0
    %v9194 = vadd.f32 0.0, %v9193
    %v9195 = vpop.f32.mrf.mxu0
    %v9196 = vadd.f32 0.0, %v9195
    %9197 = vmatmul.bf16.gmra.mxu0 %v6989
    %v9198 = vpop.f32.mrf.mxu0
    %v9199 = vadd.f32 0.0, %v9198
    %v9200 = vpop.f32.mrf.mxu0
    %v9201 = vadd.f32 0.0, %v9200
    %9202 = vmatmul.bf16.gmra.mxu0 %v6990
    %v9203 = vpop.f32.mrf.mxu0
    %v9204 = vadd.f32 0.0, %v9203
    %v9205 = vpop.f32.mrf.mxu0
    %v9206 = vadd.f32 0.0, %v9205
    %9207 = vmatmul.bf16.gmra.mxu0 %v6991
    %v9208 = vpop.f32.mrf.mxu0
    %v9209 = vadd.f32 0.0, %v9208
    %v9210 = vpop.f32.mrf.mxu0
    %v9211 = vadd.f32 0.0, %v9210
    %9212 = vmatmul.bf16.gmra.mxu0 %v6992
    %v9213 = vpop.f32.mrf.mxu0
    %v9214 = vadd.f32 0.0, %v9213
    %v9215 = vpop.f32.mrf.mxu0
    %v9216 = vadd.f32 0.0, %v9215
    %9217 = vmatmul.bf16.gmra.mxu0 %v6993
    %v9218 = vpop.f32.mrf.mxu0
    %v9219 = vadd.f32 0.0, %v9218
    %v9220 = vpop.f32.mrf.mxu0
    %v9221 = vadd.f32 0.0, %v9220
    %9222 = vmatmul.bf16.gmra.mxu0 %v6994
    %v9223 = vpop.f32.mrf.mxu0
    %v9224 = vadd.f32 0.0, %v9223
    %v9225 = vpop.f32.mrf.mxu0
    %v9226 = vadd.f32 0.0, %v9225
    %9227 = vmatmul.bf16.gmra.mxu0 %v6995
    %v9228 = vpop.f32.mrf.mxu0
    %v9229 = vadd.f32 0.0, %v9228
    %v9230 = vpop.f32.mrf.mxu0
    %v9231 = vadd.f32 0.0, %v9230
    %9232 = vmatmul.bf16.gmra.mxu0 %v6996
    %v9233 = vpop.f32.mrf.mxu0
    %v9234 = vadd.f32 0.0, %v9233
    %v9235 = vpop.f32.mrf.mxu0
    %v9236 = vadd.f32 0.0, %v9235
    %9237 = vmatmul.bf16.gmra.mxu0 %v6997
    %v9238 = vpop.f32.mrf.mxu0
    %v9239 = vadd.f32 0.0, %v9238
    %v9240 = vpop.f32.mrf.mxu0
    %v9241 = vadd.f32 0.0, %v9240
    %9242 = vmatmul.bf16.gmra.mxu0 %v6998
    %v9243 = vpop.f32.mrf.mxu0
    %v9244 = vadd.f32 0.0, %v9243
    %v9245 = vpop.f32.mrf.mxu0
    %v9246 = vadd.f32 0.0, %v9245
    %9247 = vmatmul.bf16.gmra.mxu0 %v6999
    %v9248 = vpop.f32.mrf.mxu0
    %v9249 = vadd.f32 0.0, %v9248
    %v9250 = vpop.f32.mrf.mxu0
    %v9251 = vadd.f32 0.0, %v9250
    %9252 = vmatmul.bf16.gmra.mxu0 %v7000
    %v9253 = vpop.f32.mrf.mxu0
    %v9254 = vadd.f32 0.0, %v9253
    %v9255 = vpop.f32.mrf.mxu0
    %v9256 = vadd.f32 0.0, %v9255
    %9257 = vmatmul.bf16.gmra.mxu0 %v7001
    %v9258 = vpop.f32.mrf.mxu0
    %v9259 = vadd.f32 0.0, %v9258
    %v9260 = vpop.f32.mrf.mxu0
    %v9261 = vadd.f32 0.0, %v9260
    %9262 = vmatmul.bf16.gmra.mxu0 %v7002
    %v9263 = vpop.f32.mrf.mxu0
    %v9264 = vadd.f32 0.0, %v9263
    %v9265 = vpop.f32.mrf.mxu0
    %v9266 = vadd.f32 0.0, %v9265
    %9267 = vmatmul.bf16.gmra.mxu0 %v7003
    %v9268 = vpop.f32.mrf.mxu0
    %v9269 = vadd.f32 0.0, %v9268
    %v9270 = vpop.f32.mrf.mxu0
    %v9271 = vadd.f32 0.0, %v9270
    %9272 = vmatmul.bf16.gmra.mxu0 %v7004
    %v9273 = vpop.f32.mrf.mxu0
    %v9274 = vadd.f32 0.0, %v9273
    %v9275 = vpop.f32.mrf.mxu0
    %v9276 = vadd.f32 0.0, %v9275
    %9277 = vmatmul.bf16.gmra.mxu0 %v7005
    %v9278 = vpop.f32.mrf.mxu0
    %v9279 = vadd.f32 0.0, %v9278
    %v9280 = vpop.f32.mrf.mxu0
    %v9281 = vadd.f32 0.0, %v9280
    %9282 = vmatmul.bf16.gmra.mxu0 %v7006
    %v9283 = vpop.f32.mrf.mxu0
    %v9284 = vadd.f32 0.0, %v9283
    %v9285 = vpop.f32.mrf.mxu0
    %v9286 = vadd.f32 0.0, %v9285
    %9287 = vmatmul.bf16.gmra.mxu0 %v7007
    %v9288 = vpop.f32.mrf.mxu0
    %v9289 = vadd.f32 0.0, %v9288
    %v9290 = vpop.f32.mrf.mxu0
    %v9291 = vadd.f32 0.0, %v9290
    %9292 = vmatmul.bf16.gmra.mxu0 %v7008
    %v9293 = vpop.f32.mrf.mxu0
    %v9294 = vadd.f32 0.0, %v9293
    %v9295 = vpop.f32.mrf.mxu0
    %v9296 = vadd.f32 0.0, %v9295
    %9297 = vmatmul.bf16.gmra.mxu0 %v7009
    %v9298 = vpop.f32.mrf.mxu0
    %v9299 = vadd.f32 0.0, %v9298
    %v9300 = vpop.f32.mrf.mxu0
    %v9301 = vadd.f32 0.0, %v9300
    %9302 = vmatmul.bf16.gmra.mxu0 %v7010
    %v9303 = vpop.f32.mrf.mxu0
    %v9304 = vadd.f32 0.0, %v9303
    %v9305 = vpop.f32.mrf.mxu0
    %v9306 = vadd.f32 0.0, %v9305
    %9307 = vmatmul.bf16.gmra.mxu0 %v7011
    %v9308 = vpop.f32.mrf.mxu0
    %v9309 = vadd.f32 0.0, %v9308
    %v9310 = vpop.f32.mrf.mxu0
    %v9311 = vadd.f32 0.0, %v9310
    %9312 = vmatmul.bf16.gmra.mxu0 %v7012
    %v9313 = vpop.f32.mrf.mxu0
    %v9314 = vadd.f32 0.0, %v9313
    %v9315 = vpop.f32.mrf.mxu0
    %v9316 = vadd.f32 0.0, %v9315
    %9317 = vmatmul.bf16.gmra.mxu0 %v7013
    %v9318 = vpop.f32.mrf.mxu0
    %v9319 = vadd.f32 0.0, %v9318
    %v9320 = vpop.f32.mrf.mxu0
    %v9321 = vadd.f32 0.0, %v9320
    %9322 = vmatmul.bf16.gmra.mxu0 %v7014
    %v9323 = vpop.f32.mrf.mxu0
    %v9324 = vadd.f32 0.0, %v9323
    %v9325 = vpop.f32.mrf.mxu0
    %v9326 = vadd.f32 0.0, %v9325
    %9327 = vdwg.mxu0
    %9328 = vmatpush.bf16.msra.mxu0 %v9030
    %9329 = vmatpush.bf16.msra.mxu0 %v9029
    %9330 = vmatpush.bf16.msra.mxu0 %v9028
    %9331 = vmatpush.bf16.msra.mxu0 %v9027
    %9332 = vmatpush.bf16.msra.mxu0 %v9026
    %9333 = vmatpush.bf16.msra.mxu0 %v9025
    %9334 = vmatpush.bf16.msra.mxu0 %v9024
    %9335 = vmatpush.bf16.msra.mxu0 %v9023
    %9336 = vmatmul.bf16.gmra.mxu0 %v7175
    %v9337 = vpop.f32.mrf.mxu0
    %v9338 = vadd.f32 %v9169, %v9337
    %v9339 = vpop.f32.mrf.mxu0
    %v9340 = vadd.f32 %v9171, %v9339
    %9341 = vmatmul.bf16.gmra.mxu0 %v7176
    %v9342 = vpop.f32.mrf.mxu0
    %v9343 = vadd.f32 %v9174, %v9342
    %v9344 = vpop.f32.mrf.mxu0
    %v9345 = vadd.f32 %v9176, %v9344
    %9346 = vmatmul.bf16.gmra.mxu0 %v7177
    %v9347 = vpop.f32.mrf.mxu0
    %v9348 = vadd.f32 %v9179, %v9347
    %v9349 = vpop.f32.mrf.mxu0
    %v9350 = vadd.f32 %v9181, %v9349
    %9351 = vmatmul.bf16.gmra.mxu0 %v7178
    %v9352 = vpop.f32.mrf.mxu0
    %v9353 = vadd.f32 %v9184, %v9352
    %v9354 = vpop.f32.mrf.mxu0
    %v9355 = vadd.f32 %v9186, %v9354
    %9356 = vmatmul.bf16.gmra.mxu0 %v7179
    %v9357 = vpop.f32.mrf.mxu0
    %v9358 = vadd.f32 %v9189, %v9357
    %v9359 = vpop.f32.mrf.mxu0
    %v9360 = vadd.f32 %v9191, %v9359
    %9361 = vmatmul.bf16.gmra.mxu0 %v7180
    %v9362 = vpop.f32.mrf.mxu0
    %v9363 = vadd.f32 %v9194, %v9362
    %v9364 = vpop.f32.mrf.mxu0
    %v9365 = vadd.f32 %v9196, %v9364
    %9366 = vmatmul.bf16.gmra.mxu0 %v7181
    %v9367 = vpop.f32.mrf.mxu0
    %v9368 = vadd.f32 %v9199, %v9367
    %v9369 = vpop.f32.mrf.mxu0
    %v9370 = vadd.f32 %v9201, %v9369
    %9371 = vmatmul.bf16.gmra.mxu0 %v7182
    %v9372 = vpop.f32.mrf.mxu0
    %v9373 = vadd.f32 %v9204, %v9372
    %v9374 = vpop.f32.mrf.mxu0
    %v9375 = vadd.f32 %v9206, %v9374
    %9376 = vmatmul.bf16.gmra.mxu0 %v7183
    %v9377 = vpop.f32.mrf.mxu0
    %v9378 = vadd.f32 %v9209, %v9377
    %v9379 = vpop.f32.mrf.mxu0
    %v9380 = vadd.f32 %v9211, %v9379
    %9381 = vmatmul.bf16.gmra.mxu0 %v7184
    %v9382 = vpop.f32.mrf.mxu0
    %v9383 = vadd.f32 %v9214, %v9382
    %v9384 = vpop.f32.mrf.mxu0
    %v9385 = vadd.f32 %v9216, %v9384
    %9386 = vmatmul.bf16.gmra.mxu0 %v7185
    %v9387 = vpop.f32.mrf.mxu0
    %v9388 = vadd.f32 %v9219, %v9387
    %v9389 = vpop.f32.mrf.mxu0
    %v9390 = vadd.f32 %v9221, %v9389
    %9391 = vmatmul.bf16.gmra.mxu0 %v7186
    %v9392 = vpop.f32.mrf.mxu0
    %v9393 = vadd.f32 %v9224, %v9392
    %v9394 = vpop.f32.mrf.mxu0
    %v9395 = vadd.f32 %v9226, %v9394
    %9396 = vmatmul.bf16.gmra.mxu0 %v7187
    %v9397 = vpop.f32.mrf.mxu0
    %v9398 = vadd.f32 %v9229, %v9397
    %v9399 = vpop.f32.mrf.mxu0
    %v9400 = vadd.f32 %v9231, %v9399
    %9401 = vmatmul.bf16.gmra.mxu0 %v7188
    %v9402 = vpop.f32.mrf.mxu0
    %v9403 = vadd.f32 %v9234, %v9402
    %v9404 = vpop.f32.mrf.mxu0
    %v9405 = vadd.f32 %v9236, %v9404
    %9406 = vmatmul.bf16.gmra.mxu0 %v7189
    %v9407 = vpop.f32.mrf.mxu0
    %v9408 = vadd.f32 %v9239, %v9407
    %v9409 = vpop.f32.mrf.mxu0
    %v9410 = vadd.f32 %v9241, %v9409
    %9411 = vmatmul.bf16.gmra.mxu0 %v7190
    %v9412 = vpop.f32.mrf.mxu0
    %v9413 = vadd.f32 %v9244, %v9412
    %v9414 = vpop.f32.mrf.mxu0
    %v9415 = vadd.f32 %v9246, %v9414
    %9416 = vmatmul.bf16.gmra.mxu0 %v7191
    %v9417 = vpop.f32.mrf.mxu0
    %v9418 = vadd.f32 %v9249, %v9417
    %v9419 = vpop.f32.mrf.mxu0
    %v9420 = vadd.f32 %v9251, %v9419
    %9421 = vmatmul.bf16.gmra.mxu0 %v7192
    %v9422 = vpop.f32.mrf.mxu0
    %v9423 = vadd.f32 %v9254, %v9422
    %v9424 = vpop.f32.mrf.mxu0
    %v9425 = vadd.f32 %v9256, %v9424
    %9426 = vmatmul.bf16.gmra.mxu0 %v7193
    %v9427 = vpop.f32.mrf.mxu0
    %v9428 = vadd.f32 %v9259, %v9427
    %v9429 = vpop.f32.mrf.mxu0
    %v9430 = vadd.f32 %v9261, %v9429
    %9431 = vmatmul.bf16.gmra.mxu0 %v7194
    %v9432 = vpop.f32.mrf.mxu0
    %v9433 = vadd.f32 %v9264, %v9432
    %v9434 = vpop.f32.mrf.mxu0
    %v9435 = vadd.f32 %v9266, %v9434
    %9436 = vmatmul.bf16.gmra.mxu0 %v7195
    %v9437 = vpop.f32.mrf.mxu0
    %v9438 = vadd.f32 %v9269, %v9437
    %v9439 = vpop.f32.mrf.mxu0
    %v9440 = vadd.f32 %v9271, %v9439
    %9441 = vmatmul.bf16.gmra.mxu0 %v7196
    %v9442 = vpop.f32.mrf.mxu0
    %v9443 = vadd.f32 %v9274, %v9442
    %v9444 = vpop.f32.mrf.mxu0
    %v9445 = vadd.f32 %v9276, %v9444
    %9446 = vmatmul.bf16.gmra.mxu0 %v7197
    %v9447 = vpop.f32.mrf.mxu0
    %v9448 = vadd.f32 %v9279, %v9447
    %v9449 = vpop.f32.mrf.mxu0
    %v9450 = vadd.f32 %v9281, %v9449
    %9451 = vmatmul.bf16.gmra.mxu0 %v7198
    %v9452 = vpop.f32.mrf.mxu0
    %v9453 = vadd.f32 %v9284, %v9452
    %v9454 = vpop.f32.mrf.mxu0
    %v9455 = vadd.f32 %v9286, %v9454
    %9456 = vmatmul.bf16.gmra.mxu0 %v7199
    %v9457 = vpop.f32.mrf.mxu0
    %v9458 = vadd.f32 %v9289, %v9457
    %v9459 = vpop.f32.mrf.mxu0
    %v9460 = vadd.f32 %v9291, %v9459
    %9461 = vmatmul.bf16.gmra.mxu0 %v7200
    %v9462 = vpop.f32.mrf.mxu0
    %v9463 = vadd.f32 %v9294, %v9462
    %v9464 = vpop.f32.mrf.mxu0
    %v9465 = vadd.f32 %v9296, %v9464
    %9466 = vmatmul.bf16.gmra.mxu0 %v7201
    %v9467 = vpop.f32.mrf.mxu0
    %v9468 = vadd.f32 %v9299, %v9467
    %v9469 = vpop.f32.mrf.mxu0
    %v9470 = vadd.f32 %v9301, %v9469
    %9471 = vmatmul.bf16.gmra.mxu0 %v7202
    %v9472 = vpop.f32.mrf.mxu0
    %v9473 = vadd.f32 %v9304, %v9472
    %v9474 = vpop.f32.mrf.mxu0
    %v9475 = vadd.f32 %v9306, %v9474
    %9476 = vmatmul.bf16.gmra.mxu0 %v7203
    %v9477 = vpop.f32.mrf.mxu0
    %v9478 = vadd.f32 %v9309, %v9477
    %v9479 = vpop.f32.mrf.mxu0
    %v9480 = vadd.f32 %v9311, %v9479
    %9481 = vmatmul.bf16.gmra.mxu0 %v7204
    %v9482 = vpop.f32.mrf.mxu0
    %v9483 = vadd.f32 %v9314, %v9482
    %v9484 = vpop.f32.mrf.mxu0
    %v9485 = vadd.f32 %v9316, %v9484
    %9486 = vmatmul.bf16.gmra.mxu0 %v7205
    %v9487 = vpop.f32.mrf.mxu0
    %v9488 = vadd.f32 %v9319, %v9487
    %v9489 = vpop.f32.mrf.mxu0
    %v9490 = vadd.f32 %v9321, %v9489
    %9491 = vmatmul.bf16.gmra.mxu0 %v7206
    %v9492 = vpop.f32.mrf.mxu0
    %v9493 = vadd.f32 %v9324, %v9492
    %v9494 = vpop.f32.mrf.mxu0
    %v9495 = vadd.f32 %v9326, %v9494
    %9496 = vdwg.mxu0
    %9497 = vmatpush.bf16.msra.mxu0 %v9038
    %9498 = vmatpush.bf16.msra.mxu0 %v9037
    %9499 = vmatpush.bf16.msra.mxu0 %v9036
    %9500 = vmatpush.bf16.msra.mxu0 %v9035
    %9501 = vmatpush.bf16.msra.mxu0 %v9034
    %9502 = vmatpush.bf16.msra.mxu0 %v9033
    %9503 = vmatpush.bf16.msra.mxu0 %v9032
    %9504 = vmatpush.bf16.msra.mxu0 %v9031
    %9505 = vmatmul.bf16.gmra.mxu0 %v7367
    %v9506 = vpop.f32.mrf.mxu0
    %v9507 = vadd.f32 %v9338, %v9506
    %v9508 = vpop.f32.mrf.mxu0
    %v9509 = vadd.f32 %v9340, %v9508
    %9510 = vmatmul.bf16.gmra.mxu0 %v7368
    %v9511 = vpop.f32.mrf.mxu0
    %v9512 = vadd.f32 %v9343, %v9511
    %v9513 = vpop.f32.mrf.mxu0
    %v9514 = vadd.f32 %v9345, %v9513
    %9515 = vmatmul.bf16.gmra.mxu0 %v7369
    %v9516 = vpop.f32.mrf.mxu0
    %v9517 = vadd.f32 %v9348, %v9516
    %v9518 = vpop.f32.mrf.mxu0
    %v9519 = vadd.f32 %v9350, %v9518
    %9520 = vmatmul.bf16.gmra.mxu0 %v7370
    %v9521 = vpop.f32.mrf.mxu0
    %v9522 = vadd.f32 %v9353, %v9521
    %v9523 = vpop.f32.mrf.mxu0
    %v9524 = vadd.f32 %v9355, %v9523
    %9525 = vmatmul.bf16.gmra.mxu0 %v7371
    %v9526 = vpop.f32.mrf.mxu0
    %v9527 = vadd.f32 %v9358, %v9526
    %v9528 = vpop.f32.mrf.mxu0
    %v9529 = vadd.f32 %v9360, %v9528
    %9530 = vmatmul.bf16.gmra.mxu0 %v7372
    %v9531 = vpop.f32.mrf.mxu0
    %v9532 = vadd.f32 %v9363, %v9531
    %v9533 = vpop.f32.mrf.mxu0
    %v9534 = vadd.f32 %v9365, %v9533
    %9535 = vmatmul.bf16.gmra.mxu0 %v7373
    %v9536 = vpop.f32.mrf.mxu0
    %v9537 = vadd.f32 %v9368, %v9536
    %v9538 = vpop.f32.mrf.mxu0
    %v9539 = vadd.f32 %v9370, %v9538
    %9540 = vmatmul.bf16.gmra.mxu0 %v7374
    %v9541 = vpop.f32.mrf.mxu0
    %v9542 = vadd.f32 %v9373, %v9541
    %v9543 = vpop.f32.mrf.mxu0
    %v9544 = vadd.f32 %v9375, %v9543
    %9545 = vmatmul.bf16.gmra.mxu0 %v7375
    %v9546 = vpop.f32.mrf.mxu0
    %v9547 = vadd.f32 %v9378, %v9546
    %v9548 = vpop.f32.mrf.mxu0
    %v9549 = vadd.f32 %v9380, %v9548
    %9550 = vmatmul.bf16.gmra.mxu0 %v7376
    %v9551 = vpop.f32.mrf.mxu0
    %v9552 = vadd.f32 %v9383, %v9551
    %v9553 = vpop.f32.mrf.mxu0
    %v9554 = vadd.f32 %v9385, %v9553
    %9555 = vmatmul.bf16.gmra.mxu0 %v7377
    %v9556 = vpop.f32.mrf.mxu0
    %v9557 = vadd.f32 %v9388, %v9556
    %v9558 = vpop.f32.mrf.mxu0
    %v9559 = vadd.f32 %v9390, %v9558
    %9560 = vmatmul.bf16.gmra.mxu0 %v7378
    %v9561 = vpop.f32.mrf.mxu0
    %v9562 = vadd.f32 %v9393, %v9561
    %v9563 = vpop.f32.mrf.mxu0
    %v9564 = vadd.f32 %v9395, %v9563
    %9565 = vmatmul.bf16.gmra.mxu0 %v7379
    %v9566 = vpop.f32.mrf.mxu0
    %v9567 = vadd.f32 %v9398, %v9566
    %v9568 = vpop.f32.mrf.mxu0
    %v9569 = vadd.f32 %v9400, %v9568
    %9570 = vmatmul.bf16.gmra.mxu0 %v7380
    %v9571 = vpop.f32.mrf.mxu0
    %v9572 = vadd.f32 %v9403, %v9571
    %v9573 = vpop.f32.mrf.mxu0
    %v9574 = vadd.f32 %v9405, %v9573
    %9575 = vmatmul.bf16.gmra.mxu0 %v7381
    %v9576 = vpop.f32.mrf.mxu0
    %v9577 = vadd.f32 %v9408, %v9576
    %v9578 = vpop.f32.mrf.mxu0
    %v9579 = vadd.f32 %v9410, %v9578
    %9580 = vmatmul.bf16.gmra.mxu0 %v7382
    %v9581 = vpop.f32.mrf.mxu0
    %v9582 = vadd.f32 %v9413, %v9581
    %v9583 = vpop.f32.mrf.mxu0
    %v9584 = vadd.f32 %v9415, %v9583
    %9585 = vmatmul.bf16.gmra.mxu0 %v7383
    %v9586 = vpop.f32.mrf.mxu0
    %v9587 = vadd.f32 %v9418, %v9586
    %v9588 = vpop.f32.mrf.mxu0
    %v9589 = vadd.f32 %v9420, %v9588
    %9590 = vmatmul.bf16.gmra.mxu0 %v7384
    %v9591 = vpop.f32.mrf.mxu0
    %v9592 = vadd.f32 %v9423, %v9591
    %v9593 = vpop.f32.mrf.mxu0
    %v9594 = vadd.f32 %v9425, %v9593
    %9595 = vmatmul.bf16.gmra.mxu0 %v7385
    %v9596 = vpop.f32.mrf.mxu0
    %v9597 = vadd.f32 %v9428, %v9596
    %v9598 = vpop.f32.mrf.mxu0
    %v9599 = vadd.f32 %v9430, %v9598
    %9600 = vmatmul.bf16.gmra.mxu0 %v7386
    %v9601 = vpop.f32.mrf.mxu0
    %v9602 = vadd.f32 %v9433, %v9601
    %v9603 = vpop.f32.mrf.mxu0
    %v9604 = vadd.f32 %v9435, %v9603
    %9605 = vmatmul.bf16.gmra.mxu0 %v7387
    %v9606 = vpop.f32.mrf.mxu0
    %v9607 = vadd.f32 %v9438, %v9606
    %v9608 = vpop.f32.mrf.mxu0
    %v9609 = vadd.f32 %v9440, %v9608
    %9610 = vmatmul.bf16.gmra.mxu0 %v7388
    %v9611 = vpop.f32.mrf.mxu0
    %v9612 = vadd.f32 %v9443, %v9611
    %v9613 = vpop.f32.mrf.mxu0
    %v9614 = vadd.f32 %v9445, %v9613
    %9615 = vmatmul.bf16.gmra.mxu0 %v7389
    %v9616 = vpop.f32.mrf.mxu0
    %v9617 = vadd.f32 %v9448, %v9616
    %v9618 = vpop.f32.mrf.mxu0
    %v9619 = vadd.f32 %v9450, %v9618
    %9620 = vmatmul.bf16.gmra.mxu0 %v7390
    %v9621 = vpop.f32.mrf.mxu0
    %v9622 = vadd.f32 %v9453, %v9621
    %v9623 = vpop.f32.mrf.mxu0
    %v9624 = vadd.f32 %v9455, %v9623
    %9625 = vmatmul.bf16.gmra.mxu0 %v7391
    %v9626 = vpop.f32.mrf.mxu0
    %v9627 = vadd.f32 %v9458, %v9626
    %v9628 = vpop.f32.mrf.mxu0
    %v9629 = vadd.f32 %v9460, %v9628
    %9630 = vmatmul.bf16.gmra.mxu0 %v7392
    %v9631 = vpop.f32.mrf.mxu0
    %v9632 = vadd.f32 %v9463, %v9631
    %v9633 = vpop.f32.mrf.mxu0
    %v9634 = vadd.f32 %v9465, %v9633
    %9635 = vmatmul.bf16.gmra.mxu0 %v7393
    %v9636 = vpop.f32.mrf.mxu0
    %v9637 = vadd.f32 %v9468, %v9636
    %v9638 = vpop.f32.mrf.mxu0
    %v9639 = vadd.f32 %v9470, %v9638
    %9640 = vmatmul.bf16.gmra.mxu0 %v7394
    %v9641 = vpop.f32.mrf.mxu0
    %v9642 = vadd.f32 %v9473, %v9641
    %v9643 = vpop.f32.mrf.mxu0
    %v9644 = vadd.f32 %v9475, %v9643
    %9645 = vmatmul.bf16.gmra.mxu0 %v7395
    %v9646 = vpop.f32.mrf.mxu0
    %v9647 = vadd.f32 %v9478, %v9646
    %v9648 = vpop.f32.mrf.mxu0
    %v9649 = vadd.f32 %v9480, %v9648
    %9650 = vmatmul.bf16.gmra.mxu0 %v7396
    %v9651 = vpop.f32.mrf.mxu0
    %v9652 = vadd.f32 %v9483, %v9651
    %v9653 = vpop.f32.mrf.mxu0
    %v9654 = vadd.f32 %v9485, %v9653
    %9655 = vmatmul.bf16.gmra.mxu0 %v7397
    %v9656 = vpop.f32.mrf.mxu0
    %v9657 = vadd.f32 %v9488, %v9656
    %v9658 = vpop.f32.mrf.mxu0
    %v9659 = vadd.f32 %v9490, %v9658
    %9660 = vmatmul.bf16.gmra.mxu0 %v7398
    %v9661 = vpop.f32.mrf.mxu0
    %v9662 = vadd.f32 %v9493, %v9661
    %v9663 = vpop.f32.mrf.mxu0
    %v9664 = vadd.f32 %v9495, %v9663
    %9665 = vdwg.mxu0
    %9666 = vmatpush.bf16.msra.mxu0 %v9046
    %9667 = vmatpush.bf16.msra.mxu0 %v9045
    %9668 = vmatpush.bf16.msra.mxu0 %v9044
    %9669 = vmatpush.bf16.msra.mxu0 %v9043
    %9670 = vmatpush.bf16.msra.mxu0 %v9042
    %9671 = vmatpush.bf16.msra.mxu0 %v9041
    %9672 = vmatpush.bf16.msra.mxu0 %v9040
    %9673 = vmatpush.bf16.msra.mxu0 %v9039
    %9674 = vmatmul.bf16.gmra.mxu0 %v7559
    %v9675 = vpop.f32.mrf.mxu0
    %v9676 = vadd.f32 %v9507, %v9675
    %v9677 = vpop.f32.mrf.mxu0
    %v9678 = vadd.f32 %v9509, %v9677
    %9679 = vmatmul.bf16.gmra.mxu0 %v7560
    %v9680 = vpop.f32.mrf.mxu0
    %v9681 = vadd.f32 %v9512, %v9680
    %v9682 = vpop.f32.mrf.mxu0
    %v9683 = vadd.f32 %v9514, %v9682
    %9684 = vmatmul.bf16.gmra.mxu0 %v7561
    %v9685 = vpop.f32.mrf.mxu0
    %v9686 = vadd.f32 %v9517, %v9685
    %v9687 = vpop.f32.mrf.mxu0
    %v9688 = vadd.f32 %v9519, %v9687
    %9689 = vmatmul.bf16.gmra.mxu0 %v7562
    %v9690 = vpop.f32.mrf.mxu0
    %v9691 = vadd.f32 %v9522, %v9690
    %v9692 = vpop.f32.mrf.mxu0
    %v9693 = vadd.f32 %v9524, %v9692
    %9694 = vmatmul.bf16.gmra.mxu0 %v7563
    %v9695 = vpop.f32.mrf.mxu0
    %v9696 = vadd.f32 %v9527, %v9695
    %v9697 = vpop.f32.mrf.mxu0
    %v9698 = vadd.f32 %v9529, %v9697
    %9699 = vmatmul.bf16.gmra.mxu0 %v7564
    %v9700 = vpop.f32.mrf.mxu0
    %v9701 = vadd.f32 %v9532, %v9700
    %v9702 = vpop.f32.mrf.mxu0
    %v9703 = vadd.f32 %v9534, %v9702
    %9704 = vmatmul.bf16.gmra.mxu0 %v7565
    %v9705 = vpop.f32.mrf.mxu0
    %v9706 = vadd.f32 %v9537, %v9705
    %v9707 = vpop.f32.mrf.mxu0
    %v9708 = vadd.f32 %v9539, %v9707
    %9709 = vmatmul.bf16.gmra.mxu0 %v7566
    %v9710 = vpop.f32.mrf.mxu0
    %v9711 = vadd.f32 %v9542, %v9710
    %v9712 = vpop.f32.mrf.mxu0
    %v9713 = vadd.f32 %v9544, %v9712
    %9714 = vmatmul.bf16.gmra.mxu0 %v7567
    %v9715 = vpop.f32.mrf.mxu0
    %v9716 = vadd.f32 %v9547, %v9715
    %v9717 = vpop.f32.mrf.mxu0
    %v9718 = vadd.f32 %v9549, %v9717
    %9719 = vmatmul.bf16.gmra.mxu0 %v7568
    %v9720 = vpop.f32.mrf.mxu0
    %v9721 = vadd.f32 %v9552, %v9720
    %v9722 = vpop.f32.mrf.mxu0
    %v9723 = vadd.f32 %v9554, %v9722
    %9724 = vmatmul.bf16.gmra.mxu0 %v7569
    %v9725 = vpop.f32.mrf.mxu0
    %v9726 = vadd.f32 %v9557, %v9725
    %v9727 = vpop.f32.mrf.mxu0
    %v9728 = vadd.f32 %v9559, %v9727
    %9729 = vmatmul.bf16.gmra.mxu0 %v7570
    %v9730 = vpop.f32.mrf.mxu0
    %v9731 = vadd.f32 %v9562, %v9730
    %v9732 = vpop.f32.mrf.mxu0
    %v9733 = vadd.f32 %v9564, %v9732
    %9734 = vmatmul.bf16.gmra.mxu0 %v7571
    %v9735 = vpop.f32.mrf.mxu0
    %v9736 = vadd.f32 %v9567, %v9735
    %v9737 = vpop.f32.mrf.mxu0
    %v9738 = vadd.f32 %v9569, %v9737
    %9739 = vmatmul.bf16.gmra.mxu0 %v7572
    %v9740 = vpop.f32.mrf.mxu0
    %v9741 = vadd.f32 %v9572, %v9740
    %v9742 = vpop.f32.mrf.mxu0
    %v9743 = vadd.f32 %v9574, %v9742
    %9744 = vmatmul.bf16.gmra.mxu0 %v7573
    %v9745 = vpop.f32.mrf.mxu0
    %v9746 = vadd.f32 %v9577, %v9745
    %v9747 = vpop.f32.mrf.mxu0
    %v9748 = vadd.f32 %v9579, %v9747
    %9749 = vmatmul.bf16.gmra.mxu0 %v7574
    %v9750 = vpop.f32.mrf.mxu0
    %v9751 = vadd.f32 %v9582, %v9750
    %v9752 = vpop.f32.mrf.mxu0
    %v9753 = vadd.f32 %v9584, %v9752
    %9754 = vmatmul.bf16.gmra.mxu0 %v7575
    %v9755 = vpop.f32.mrf.mxu0
    %v9756 = vadd.f32 %v9587, %v9755
    %v9757 = vpop.f32.mrf.mxu0
    %v9758 = vadd.f32 %v9589, %v9757
    %9759 = vmatmul.bf16.gmra.mxu0 %v7576
    %v9760 = vpop.f32.mrf.mxu0
    %v9761 = vadd.f32 %v9592, %v9760
    %v9762 = vpop.f32.mrf.mxu0
    %v9763 = vadd.f32 %v9594, %v9762
    %9764 = vmatmul.bf16.gmra.mxu0 %v7577
    %v9765 = vpop.f32.mrf.mxu0
    %v9766 = vadd.f32 %v9597, %v9765
    %v9767 = vpop.f32.mrf.mxu0
    %v9768 = vadd.f32 %v9599, %v9767
    %9769 = vmatmul.bf16.gmra.mxu0 %v7578
    %v9770 = vpop.f32.mrf.mxu0
    %v9771 = vadd.f32 %v9602, %v9770
    %v9772 = vpop.f32.mrf.mxu0
    %v9773 = vadd.f32 %v9604, %v9772
    %9774 = vmatmul.bf16.gmra.mxu0 %v7579
    %v9775 = vpop.f32.mrf.mxu0
    %v9776 = vadd.f32 %v9607, %v9775
    %v9777 = vpop.f32.mrf.mxu0
    %v9778 = vadd.f32 %v9609, %v9777
    %9779 = vmatmul.bf16.gmra.mxu0 %v7580
    %v9780 = vpop.f32.mrf.mxu0
    %v9781 = vadd.f32 %v9612, %v9780
    %v9782 = vpop.f32.mrf.mxu0
    %v9783 = vadd.f32 %v9614, %v9782
    %9784 = vmatmul.bf16.gmra.mxu0 %v7581
    %v9785 = vpop.f32.mrf.mxu0
    %v9786 = vadd.f32 %v9617, %v9785
    %v9787 = vpop.f32.mrf.mxu0
    %v9788 = vadd.f32 %v9619, %v9787
    %9789 = vmatmul.bf16.gmra.mxu0 %v7582
    %v9790 = vpop.f32.mrf.mxu0
    %v9791 = vadd.f32 %v9622, %v9790
    %v9792 = vpop.f32.mrf.mxu0
    %v9793 = vadd.f32 %v9624, %v9792
    %9794 = vmatmul.bf16.gmra.mxu0 %v7583
    %v9795 = vpop.f32.mrf.mxu0
    %v9796 = vadd.f32 %v9627, %v9795
    %v9797 = vpop.f32.mrf.mxu0
    %v9798 = vadd.f32 %v9629, %v9797
    %9799 = vmatmul.bf16.gmra.mxu0 %v7584
    %v9800 = vpop.f32.mrf.mxu0
    %v9801 = vadd.f32 %v9632, %v9800
    %v9802 = vpop.f32.mrf.mxu0
    %v9803 = vadd.f32 %v9634, %v9802
    %9804 = vmatmul.bf16.gmra.mxu0 %v7585
    %v9805 = vpop.f32.mrf.mxu0
    %v9806 = vadd.f32 %v9637, %v9805
    %v9807 = vpop.f32.mrf.mxu0
    %v9808 = vadd.f32 %v9639, %v9807
    %9809 = vmatmul.bf16.gmra.mxu0 %v7586
    %v9810 = vpop.f32.mrf.mxu0
    %v9811 = vadd.f32 %v9642, %v9810
    %v9812 = vpop.f32.mrf.mxu0
    %v9813 = vadd.f32 %v9644, %v9812
    %9814 = vmatmul.bf16.gmra.mxu0 %v7587
    %v9815 = vpop.f32.mrf.mxu0
    %v9816 = vadd.f32 %v9647, %v9815
    %v9817 = vpop.f32.mrf.mxu0
    %v9818 = vadd.f32 %v9649, %v9817
    %9819 = vmatmul.bf16.gmra.mxu0 %v7588
    %v9820 = vpop.f32.mrf.mxu0
    %v9821 = vadd.f32 %v9652, %v9820
    %v9822 = vpop.f32.mrf.mxu0
    %v9823 = vadd.f32 %v9654, %v9822
    %9824 = vmatmul.bf16.gmra.mxu0 %v7589
    %v9825 = vpop.f32.mrf.mxu0
    %v9826 = vadd.f32 %v9657, %v9825
    %v9827 = vpop.f32.mrf.mxu0
    %v9828 = vadd.f32 %v9659, %v9827
    %9829 = vmatmul.bf16.gmra.mxu0 %v7590
    %v9830 = vpop.f32.mrf.mxu0
    %v9831 = vadd.f32 %v9662, %v9830
    %v9832 = vpop.f32.mrf.mxu0
    %v9833 = vadd.f32 %v9664, %v9832
    %9834 = vdwg.mxu0
    %9835 = vmatpush.bf16.msra.mxu0 %v9054
    %9836 = vmatpush.bf16.msra.mxu0 %v9053
    %9837 = vmatpush.bf16.msra.mxu0 %v9052
    %9838 = vmatpush.bf16.msra.mxu0 %v9051
    %9839 = vmatpush.bf16.msra.mxu0 %v9050
    %9840 = vmatpush.bf16.msra.mxu0 %v9049
    %9841 = vmatpush.bf16.msra.mxu0 %v9048
    %9842 = vmatpush.bf16.msra.mxu0 %v9047
    %9843 = vmatmul.bf16.gmra.mxu0 %v7751
    %v9844 = vpop.f32.mrf.mxu0
    %v9845 = vadd.f32 %v9676, %v9844
    %v9846 = vpop.f32.mrf.mxu0
    %v9847 = vadd.f32 %v9678, %v9846
    %9848 = vmatmul.bf16.gmra.mxu0 %v7752
    %v9849 = vpop.f32.mrf.mxu0
    %v9850 = vadd.f32 %v9681, %v9849
    %v9851 = vpop.f32.mrf.mxu0
    %v9852 = vadd.f32 %v9683, %v9851
    %9853 = vmatmul.bf16.gmra.mxu0 %v7753
    %v9854 = vpop.f32.mrf.mxu0
    %v9855 = vadd.f32 %v9686, %v9854
    %v9856 = vpop.f32.mrf.mxu0
    %v9857 = vadd.f32 %v9688, %v9856
    %9858 = vmatmul.bf16.gmra.mxu0 %v7754
    %v9859 = vpop.f32.mrf.mxu0
    %v9860 = vadd.f32 %v9691, %v9859
    %v9861 = vpop.f32.mrf.mxu0
    %v9862 = vadd.f32 %v9693, %v9861
    %9863 = vmatmul.bf16.gmra.mxu0 %v7755
    %v9864 = vpop.f32.mrf.mxu0
    %v9865 = vadd.f32 %v9696, %v9864
    %v9866 = vpop.f32.mrf.mxu0
    %v9867 = vadd.f32 %v9698, %v9866
    %9868 = vmatmul.bf16.gmra.mxu0 %v7756
    %v9869 = vpop.f32.mrf.mxu0
    %v9870 = vadd.f32 %v9701, %v9869
    %v9871 = vpop.f32.mrf.mxu0
    %v9872 = vadd.f32 %v9703, %v9871
    %9873 = vmatmul.bf16.gmra.mxu0 %v7757
    %v9874 = vpop.f32.mrf.mxu0
    %v9875 = vadd.f32 %v9706, %v9874
    %v9876 = vpop.f32.mrf.mxu0
    %v9877 = vadd.f32 %v9708, %v9876
    %9878 = vmatmul.bf16.gmra.mxu0 %v7758
    %v9879 = vpop.f32.mrf.mxu0
    %v9880 = vadd.f32 %v9711, %v9879
    %v9881 = vpop.f32.mrf.mxu0
    %v9882 = vadd.f32 %v9713, %v9881
    %9883 = vmatmul.bf16.gmra.mxu0 %v7759
    %v9884 = vpop.f32.mrf.mxu0
    %v9885 = vadd.f32 %v9716, %v9884
    %v9886 = vpop.f32.mrf.mxu0
    %v9887 = vadd.f32 %v9718, %v9886
    %9888 = vmatmul.bf16.gmra.mxu0 %v7760
    %v9889 = vpop.f32.mrf.mxu0
    %v9890 = vadd.f32 %v9721, %v9889
    %v9891 = vpop.f32.mrf.mxu0
    %v9892 = vadd.f32 %v9723, %v9891
    %9893 = vmatmul.bf16.gmra.mxu0 %v7761
    %v9894 = vpop.f32.mrf.mxu0
    %v9895 = vadd.f32 %v9726, %v9894
    %v9896 = vpop.f32.mrf.mxu0
    %v9897 = vadd.f32 %v9728, %v9896
    %9898 = vmatmul.bf16.gmra.mxu0 %v7762
    %v9899 = vpop.f32.mrf.mxu0
    %v9900 = vadd.f32 %v9731, %v9899
    %v9901 = vpop.f32.mrf.mxu0
    %v9902 = vadd.f32 %v9733, %v9901
    %9903 = vmatmul.bf16.gmra.mxu0 %v7763
    %v9904 = vpop.f32.mrf.mxu0
    %v9905 = vadd.f32 %v9736, %v9904
    %v9906 = vpop.f32.mrf.mxu0
    %v9907 = vadd.f32 %v9738, %v9906
    %9908 = vmatmul.bf16.gmra.mxu0 %v7764
    %v9909 = vpop.f32.mrf.mxu0
    %v9910 = vadd.f32 %v9741, %v9909
    %v9911 = vpop.f32.mrf.mxu0
    %v9912 = vadd.f32 %v9743, %v9911
    %9913 = vmatmul.bf16.gmra.mxu0 %v7765
    %v9914 = vpop.f32.mrf.mxu0
    %v9915 = vadd.f32 %v9746, %v9914
    %v9916 = vpop.f32.mrf.mxu0
    %v9917 = vadd.f32 %v9748, %v9916
    %9918 = vmatmul.bf16.gmra.mxu0 %v7766
    %v9919 = vpop.f32.mrf.mxu0
    %v9920 = vadd.f32 %v9751, %v9919
    %v9921 = vpop.f32.mrf.mxu0
    %v9922 = vadd.f32 %v9753, %v9921
    %9923 = vmatmul.bf16.gmra.mxu0 %v7767
    %v9924 = vpop.f32.mrf.mxu0
    %v9925 = vadd.f32 %v9756, %v9924
    %v9926 = vpop.f32.mrf.mxu0
    %v9927 = vadd.f32 %v9758, %v9926
    %9928 = vmatmul.bf16.gmra.mxu0 %v7768
    %v9929 = vpop.f32.mrf.mxu0
    %v9930 = vadd.f32 %v9761, %v9929
    %v9931 = vpop.f32.mrf.mxu0
    %v9932 = vadd.f32 %v9763, %v9931
    %9933 = vmatmul.bf16.gmra.mxu0 %v7769
    %v9934 = vpop.f32.mrf.mxu0
    %v9935 = vadd.f32 %v9766, %v9934
    %v9936 = vpop.f32.mrf.mxu0
    %v9937 = vadd.f32 %v9768, %v9936
    %9938 = vmatmul.bf16.gmra.mxu0 %v7770
    %v9939 = vpop.f32.mrf.mxu0
    %v9940 = vadd.f32 %v9771, %v9939
    %v9941 = vpop.f32.mrf.mxu0
    %v9942 = vadd.f32 %v9773, %v9941
    %9943 = vmatmul.bf16.gmra.mxu0 %v7771
    %v9944 = vpop.f32.mrf.mxu0
    %v9945 = vadd.f32 %v9776, %v9944
    %v9946 = vpop.f32.mrf.mxu0
    %v9947 = vadd.f32 %v9778, %v9946
    %9948 = vmatmul.bf16.gmra.mxu0 %v7772
    %v9949 = vpop.f32.mrf.mxu0
    %v9950 = vadd.f32 %v9781, %v9949
    %v9951 = vpop.f32.mrf.mxu0
    %v9952 = vadd.f32 %v9783, %v9951
    %9953 = vmatmul.bf16.gmra.mxu0 %v7773
    %v9954 = vpop.f32.mrf.mxu0
    %v9955 = vadd.f32 %v9786, %v9954
    %v9956 = vpop.f32.mrf.mxu0
    %v9957 = vadd.f32 %v9788, %v9956
    %9958 = vmatmul.bf16.gmra.mxu0 %v7774
    %v9959 = vpop.f32.mrf.mxu0
    %v9960 = vadd.f32 %v9791, %v9959
    %v9961 = vpop.f32.mrf.mxu0
    %v9962 = vadd.f32 %v9793, %v9961
    %9963 = vmatmul.bf16.gmra.mxu0 %v7775
    %v9964 = vpop.f32.mrf.mxu0
    %v9965 = vadd.f32 %v9796, %v9964
    %v9966 = vpop.f32.mrf.mxu0
    %v9967 = vadd.f32 %v9798, %v9966
    %9968 = vmatmul.bf16.gmra.mxu0 %v7776
    %v9969 = vpop.f32.mrf.mxu0
    %v9970 = vadd.f32 %v9801, %v9969
    %v9971 = vpop.f32.mrf.mxu0
    %v9972 = vadd.f32 %v9803, %v9971
    %9973 = vmatmul.bf16.gmra.mxu0 %v7777
    %v9974 = vpop.f32.mrf.mxu0
    %v9975 = vadd.f32 %v9806, %v9974
    %v9976 = vpop.f32.mrf.mxu0
    %v9977 = vadd.f32 %v9808, %v9976
    %9978 = vmatmul.bf16.gmra.mxu0 %v7778
    %v9979 = vpop.f32.mrf.mxu0
    %v9980 = vadd.f32 %v9811, %v9979
    %v9981 = vpop.f32.mrf.mxu0
    %v9982 = vadd.f32 %v9813, %v9981
    %9983 = vmatmul.bf16.gmra.mxu0 %v7779
    %v9984 = vpop.f32.mrf.mxu0
    %v9985 = vadd.f32 %v9816, %v9984
    %v9986 = vpop.f32.mrf.mxu0
    %v9987 = vadd.f32 %v9818, %v9986
    %9988 = vmatmul.bf16.gmra.mxu0 %v7780
    %v9989 = vpop.f32.mrf.mxu0
    %v9990 = vadd.f32 %v9821, %v9989
    %v9991 = vpop.f32.mrf.mxu0
    %v9992 = vadd.f32 %v9823, %v9991
    %9993 = vmatmul.bf16.gmra.mxu0 %v7781
    %v9994 = vpop.f32.mrf.mxu0
    %v9995 = vadd.f32 %v9826, %v9994
    %v9996 = vpop.f32.mrf.mxu0
    %v9997 = vadd.f32 %v9828, %v9996
    %9998 = vmatmul.bf16.gmra.mxu0 %v7782
    %v9999 = vpop.f32.mrf.mxu0
    %v10000 = vadd.f32 %v9831, %v9999
    %v10001 = vpop.f32.mrf.mxu0
    %v10002 = vadd.f32 %v9833, %v10001
    %10003 = vdwg.mxu0
    %10004 = vmatpush.bf16.msra.mxu0 %v9062
    %10005 = vmatpush.bf16.msra.mxu0 %v9061
    %10006 = vmatpush.bf16.msra.mxu0 %v9060
    %10007 = vmatpush.bf16.msra.mxu0 %v9059
    %10008 = vmatpush.bf16.msra.mxu0 %v9058
    %10009 = vmatpush.bf16.msra.mxu0 %v9057
    %10010 = vmatpush.bf16.msra.mxu0 %v9056
    %10011 = vmatpush.bf16.msra.mxu0 %v9055
    %10012 = vmatmul.bf16.gmra.mxu0 %v7943
    %v10013 = vpop.f32.mrf.mxu0
    %v10014 = vadd.f32 %v9845, %v10013
    %v10015 = vpop.f32.mrf.mxu0
    %v10016 = vadd.f32 %v9847, %v10015
    %10017 = vmatmul.bf16.gmra.mxu0 %v7944
    %v10018 = vpop.f32.mrf.mxu0
    %v10019 = vadd.f32 %v9850, %v10018
    %v10020 = vpop.f32.mrf.mxu0
    %v10021 = vadd.f32 %v9852, %v10020
    %10022 = vmatmul.bf16.gmra.mxu0 %v7945
    %v10023 = vpop.f32.mrf.mxu0
    %v10024 = vadd.f32 %v9855, %v10023
    %v10025 = vpop.f32.mrf.mxu0
    %v10026 = vadd.f32 %v9857, %v10025
    %10027 = vmatmul.bf16.gmra.mxu0 %v7946
    %v10028 = vpop.f32.mrf.mxu0
    %v10029 = vadd.f32 %v9860, %v10028
    %v10030 = vpop.f32.mrf.mxu0
    %v10031 = vadd.f32 %v9862, %v10030
    %10032 = vmatmul.bf16.gmra.mxu0 %v7947
    %v10033 = vpop.f32.mrf.mxu0
    %v10034 = vadd.f32 %v9865, %v10033
    %v10035 = vpop.f32.mrf.mxu0
    %v10036 = vadd.f32 %v9867, %v10035
    %10037 = vmatmul.bf16.gmra.mxu0 %v7948
    %v10038 = vpop.f32.mrf.mxu0
    %v10039 = vadd.f32 %v9870, %v10038
    %v10040 = vpop.f32.mrf.mxu0
    %v10041 = vadd.f32 %v9872, %v10040
    %10042 = vmatmul.bf16.gmra.mxu0 %v7949
    %v10043 = vpop.f32.mrf.mxu0
    %v10044 = vadd.f32 %v9875, %v10043
    %v10045 = vpop.f32.mrf.mxu0
    %v10046 = vadd.f32 %v9877, %v10045
    %10047 = vmatmul.bf16.gmra.mxu0 %v7950
    %v10048 = vpop.f32.mrf.mxu0
    %v10049 = vadd.f32 %v9880, %v10048
    %v10050 = vpop.f32.mrf.mxu0
    %v10051 = vadd.f32 %v9882, %v10050
    %10052 = vmatmul.bf16.gmra.mxu0 %v7951
    %v10053 = vpop.f32.mrf.mxu0
    %v10054 = vadd.f32 %v9885, %v10053
    %v10055 = vpop.f32.mrf.mxu0
    %v10056 = vadd.f32 %v9887, %v10055
    %10057 = vmatmul.bf16.gmra.mxu0 %v7952
    %v10058 = vpop.f32.mrf.mxu0
    %v10059 = vadd.f32 %v9890, %v10058
    %v10060 = vpop.f32.mrf.mxu0
    %v10061 = vadd.f32 %v9892, %v10060
    %10062 = vmatmul.bf16.gmra.mxu0 %v7953
    %v10063 = vpop.f32.mrf.mxu0
    %v10064 = vadd.f32 %v9895, %v10063
    %v10065 = vpop.f32.mrf.mxu0
    %v10066 = vadd.f32 %v9897, %v10065
    %10067 = vmatmul.bf16.gmra.mxu0 %v7954
    %v10068 = vpop.f32.mrf.mxu0
    %v10069 = vadd.f32 %v9900, %v10068
    %v10070 = vpop.f32.mrf.mxu0
    %v10071 = vadd.f32 %v9902, %v10070
    %10072 = vmatmul.bf16.gmra.mxu0 %v7955
    %v10073 = vpop.f32.mrf.mxu0
    %v10074 = vadd.f32 %v9905, %v10073
    %v10075 = vpop.f32.mrf.mxu0
    %v10076 = vadd.f32 %v9907, %v10075
    %10077 = vmatmul.bf16.gmra.mxu0 %v7956
    %v10078 = vpop.f32.mrf.mxu0
    %v10079 = vadd.f32 %v9910, %v10078
    %v10080 = vpop.f32.mrf.mxu0
    %v10081 = vadd.f32 %v9912, %v10080
    %10082 = vmatmul.bf16.gmra.mxu0 %v7957
    %v10083 = vpop.f32.mrf.mxu0
    %v10084 = vadd.f32 %v9915, %v10083
    %v10085 = vpop.f32.mrf.mxu0
    %v10086 = vadd.f32 %v9917, %v10085
    %10087 = vmatmul.bf16.gmra.mxu0 %v7958
    %v10088 = vpop.f32.mrf.mxu0
    %v10089 = vadd.f32 %v9920, %v10088
    %v10090 = vpop.f32.mrf.mxu0
    %v10091 = vadd.f32 %v9922, %v10090
    %10092 = vmatmul.bf16.gmra.mxu0 %v7959
    %v10093 = vpop.f32.mrf.mxu0
    %v10094 = vadd.f32 %v9925, %v10093
    %v10095 = vpop.f32.mrf.mxu0
    %v10096 = vadd.f32 %v9927, %v10095
    %10097 = vmatmul.bf16.gmra.mxu0 %v7960
    %v10098 = vpop.f32.mrf.mxu0
    %v10099 = vadd.f32 %v9930, %v10098
    %v10100 = vpop.f32.mrf.mxu0
    %v10101 = vadd.f32 %v9932, %v10100
    %10102 = vmatmul.bf16.gmra.mxu0 %v7961
    %v10103 = vpop.f32.mrf.mxu0
    %v10104 = vadd.f32 %v9935, %v10103
    %v10105 = vpop.f32.mrf.mxu0
    %v10106 = vadd.f32 %v9937, %v10105
    %10107 = vmatmul.bf16.gmra.mxu0 %v7962
    %v10108 = vpop.f32.mrf.mxu0
    %v10109 = vadd.f32 %v9940, %v10108
    %v10110 = vpop.f32.mrf.mxu0
    %v10111 = vadd.f32 %v9942, %v10110
    %10112 = vmatmul.bf16.gmra.mxu0 %v7963
    %v10113 = vpop.f32.mrf.mxu0
    %v10114 = vadd.f32 %v9945, %v10113
    %v10115 = vpop.f32.mrf.mxu0
    %v10116 = vadd.f32 %v9947, %v10115
    %10117 = vmatmul.bf16.gmra.mxu0 %v7964
    %v10118 = vpop.f32.mrf.mxu0
    %v10119 = vadd.f32 %v9950, %v10118
    %v10120 = vpop.f32.mrf.mxu0
    %v10121 = vadd.f32 %v9952, %v10120
    %10122 = vmatmul.bf16.gmra.mxu0 %v7965
    %v10123 = vpop.f32.mrf.mxu0
    %v10124 = vadd.f32 %v9955, %v10123
    %v10125 = vpop.f32.mrf.mxu0
    %v10126 = vadd.f32 %v9957, %v10125
    %10127 = vmatmul.bf16.gmra.mxu0 %v7966
    %v10128 = vpop.f32.mrf.mxu0
    %v10129 = vadd.f32 %v9960, %v10128
    %v10130 = vpop.f32.mrf.mxu0
    %v10131 = vadd.f32 %v9962, %v10130
    %10132 = vmatmul.bf16.gmra.mxu0 %v7967
    %v10133 = vpop.f32.mrf.mxu0
    %v10134 = vadd.f32 %v9965, %v10133
    %v10135 = vpop.f32.mrf.mxu0
    %v10136 = vadd.f32 %v9967, %v10135
    %10137 = vmatmul.bf16.gmra.mxu0 %v7968
    %v10138 = vpop.f32.mrf.mxu0
    %v10139 = vadd.f32 %v9970, %v10138
    %v10140 = vpop.f32.mrf.mxu0
    %v10141 = vadd.f32 %v9972, %v10140
    %10142 = vmatmul.bf16.gmra.mxu0 %v7969
    %v10143 = vpop.f32.mrf.mxu0
    %v10144 = vadd.f32 %v9975, %v10143
    %v10145 = vpop.f32.mrf.mxu0
    %v10146 = vadd.f32 %v9977, %v10145
    %10147 = vmatmul.bf16.gmra.mxu0 %v7970
    %v10148 = vpop.f32.mrf.mxu0
    %v10149 = vadd.f32 %v9980, %v10148
    %v10150 = vpop.f32.mrf.mxu0
    %v10151 = vadd.f32 %v9982, %v10150
    %10152 = vmatmul.bf16.gmra.mxu0 %v7971
    %v10153 = vpop.f32.mrf.mxu0
    %v10154 = vadd.f32 %v9985, %v10153
    %v10155 = vpop.f32.mrf.mxu0
    %v10156 = vadd.f32 %v9987, %v10155
    %10157 = vmatmul.bf16.gmra.mxu0 %v7972
    %v10158 = vpop.f32.mrf.mxu0
    %v10159 = vadd.f32 %v9990, %v10158
    %v10160 = vpop.f32.mrf.mxu0
    %v10161 = vadd.f32 %v9992, %v10160
    %10162 = vmatmul.bf16.gmra.mxu0 %v7973
    %v10163 = vpop.f32.mrf.mxu0
    %v10164 = vadd.f32 %v9995, %v10163
    %v10165 = vpop.f32.mrf.mxu0
    %v10166 = vadd.f32 %v9997, %v10165
    %10167 = vmatmul.bf16.gmra.mxu0 %v7974
    %v10168 = vpop.f32.mrf.mxu0
    %v10169 = vadd.f32 %v10000, %v10168
    %v10170 = vpop.f32.mrf.mxu0
    %v10171 = vadd.f32 %v10002, %v10170
    %10172 = vdwg.mxu0
    %10173 = vmatpush.bf16.msra.mxu0 %v9070
    %10174 = vmatpush.bf16.msra.mxu0 %v9069
    %10175 = vmatpush.bf16.msra.mxu0 %v9068
    %10176 = vmatpush.bf16.msra.mxu0 %v9067
    %10177 = vmatpush.bf16.msra.mxu0 %v9066
    %10178 = vmatpush.bf16.msra.mxu0 %v9065
    %10179 = vmatpush.bf16.msra.mxu0 %v9064
    %10180 = vmatpush.bf16.msra.mxu0 %v9063
    %10181 = vmatmul.bf16.gmra.mxu0 %v8135
    %v10182 = vpop.f32.mrf.mxu0
    %v10183 = vadd.f32 %v10014, %v10182
    %v10184 = vpop.f32.mrf.mxu0
    %v10185 = vadd.f32 %v10016, %v10184
    %10186 = vmatmul.bf16.gmra.mxu0 %v8136
    %v10187 = vpop.f32.mrf.mxu0
    %v10188 = vadd.f32 %v10019, %v10187
    %v10189 = vpop.f32.mrf.mxu0
    %v10190 = vadd.f32 %v10021, %v10189
    %10191 = vmatmul.bf16.gmra.mxu0 %v8137
    %v10192 = vpop.f32.mrf.mxu0
    %v10193 = vadd.f32 %v10024, %v10192
    %v10194 = vpop.f32.mrf.mxu0
    %v10195 = vadd.f32 %v10026, %v10194
    %10196 = vmatmul.bf16.gmra.mxu0 %v8138
    %v10197 = vpop.f32.mrf.mxu0
    %v10198 = vadd.f32 %v10029, %v10197
    %v10199 = vpop.f32.mrf.mxu0
    %v10200 = vadd.f32 %v10031, %v10199
    %10201 = vmatmul.bf16.gmra.mxu0 %v8139
    %v10202 = vpop.f32.mrf.mxu0
    %v10203 = vadd.f32 %v10034, %v10202
    %v10204 = vpop.f32.mrf.mxu0
    %v10205 = vadd.f32 %v10036, %v10204
    %10206 = vmatmul.bf16.gmra.mxu0 %v8140
    %v10207 = vpop.f32.mrf.mxu0
    %v10208 = vadd.f32 %v10039, %v10207
    %v10209 = vpop.f32.mrf.mxu0
    %v10210 = vadd.f32 %v10041, %v10209
    %10211 = vmatmul.bf16.gmra.mxu0 %v8141
    %v10212 = vpop.f32.mrf.mxu0
    %v10213 = vadd.f32 %v10044, %v10212
    %v10214 = vpop.f32.mrf.mxu0
    %v10215 = vadd.f32 %v10046, %v10214
    %10216 = vmatmul.bf16.gmra.mxu0 %v8142
    %v10217 = vpop.f32.mrf.mxu0
    %v10218 = vadd.f32 %v10049, %v10217
    %v10219 = vpop.f32.mrf.mxu0
    %v10220 = vadd.f32 %v10051, %v10219
    %10221 = vmatmul.bf16.gmra.mxu0 %v8143
    %v10222 = vpop.f32.mrf.mxu0
    %v10223 = vadd.f32 %v10054, %v10222
    %v10224 = vpop.f32.mrf.mxu0
    %v10225 = vadd.f32 %v10056, %v10224
    %10226 = vmatmul.bf16.gmra.mxu0 %v8144
    %v10227 = vpop.f32.mrf.mxu0
    %v10228 = vadd.f32 %v10059, %v10227
    %v10229 = vpop.f32.mrf.mxu0
    %v10230 = vadd.f32 %v10061, %v10229
    %10231 = vmatmul.bf16.gmra.mxu0 %v8145
    %v10232 = vpop.f32.mrf.mxu0
    %v10233 = vadd.f32 %v10064, %v10232
    %v10234 = vpop.f32.mrf.mxu0
    %v10235 = vadd.f32 %v10066, %v10234
    %10236 = vmatmul.bf16.gmra.mxu0 %v8146
    %v10237 = vpop.f32.mrf.mxu0
    %v10238 = vadd.f32 %v10069, %v10237
    %v10239 = vpop.f32.mrf.mxu0
    %v10240 = vadd.f32 %v10071, %v10239
    %10241 = vmatmul.bf16.gmra.mxu0 %v8147
    %v10242 = vpop.f32.mrf.mxu0
    %v10243 = vadd.f32 %v10074, %v10242
    %v10244 = vpop.f32.mrf.mxu0
    %v10245 = vadd.f32 %v10076, %v10244
    %10246 = vmatmul.bf16.gmra.mxu0 %v8148
    %v10247 = vpop.f32.mrf.mxu0
    %v10248 = vadd.f32 %v10079, %v10247
    %v10249 = vpop.f32.mrf.mxu0
    %v10250 = vadd.f32 %v10081, %v10249
    %10251 = vmatmul.bf16.gmra.mxu0 %v8149
    %v10252 = vpop.f32.mrf.mxu0
    %v10253 = vadd.f32 %v10084, %v10252
    %v10254 = vpop.f32.mrf.mxu0
    %v10255 = vadd.f32 %v10086, %v10254
    %10256 = vmatmul.bf16.gmra.mxu0 %v8150
    %v10257 = vpop.f32.mrf.mxu0
    %v10258 = vadd.f32 %v10089, %v10257
    %v10259 = vpop.f32.mrf.mxu0
    %v10260 = vadd.f32 %v10091, %v10259
    %10261 = vmatmul.bf16.gmra.mxu0 %v8151
    %v10262 = vpop.f32.mrf.mxu0
    %v10263 = vadd.f32 %v10094, %v10262
    %v10264 = vpop.f32.mrf.mxu0
    %v10265 = vadd.f32 %v10096, %v10264
    %10266 = vmatmul.bf16.gmra.mxu0 %v8152
    %v10267 = vpop.f32.mrf.mxu0
    %v10268 = vadd.f32 %v10099, %v10267
    %v10269 = vpop.f32.mrf.mxu0
    %v10270 = vadd.f32 %v10101, %v10269
    %10271 = vmatmul.bf16.gmra.mxu0 %v8153
    %v10272 = vpop.f32.mrf.mxu0
    %v10273 = vadd.f32 %v10104, %v10272
    %v10274 = vpop.f32.mrf.mxu0
    %v10275 = vadd.f32 %v10106, %v10274
    %10276 = vmatmul.bf16.gmra.mxu0 %v8154
    %v10277 = vpop.f32.mrf.mxu0
    %v10278 = vadd.f32 %v10109, %v10277
    %v10279 = vpop.f32.mrf.mxu0
    %v10280 = vadd.f32 %v10111, %v10279
    %10281 = vmatmul.bf16.gmra.mxu0 %v8155
    %v10282 = vpop.f32.mrf.mxu0
    %v10283 = vadd.f32 %v10114, %v10282
    %v10284 = vpop.f32.mrf.mxu0
    %v10285 = vadd.f32 %v10116, %v10284
    %10286 = vmatmul.bf16.gmra.mxu0 %v8156
    %v10287 = vpop.f32.mrf.mxu0
    %v10288 = vadd.f32 %v10119, %v10287
    %v10289 = vpop.f32.mrf.mxu0
    %v10290 = vadd.f32 %v10121, %v10289
    %10291 = vmatmul.bf16.gmra.mxu0 %v8157
    %v10292 = vpop.f32.mrf.mxu0
    %v10293 = vadd.f32 %v10124, %v10292
    %v10294 = vpop.f32.mrf.mxu0
    %v10295 = vadd.f32 %v10126, %v10294
    %10296 = vmatmul.bf16.gmra.mxu0 %v8158
    %v10297 = vpop.f32.mrf.mxu0
    %v10298 = vadd.f32 %v10129, %v10297
    %v10299 = vpop.f32.mrf.mxu0
    %v10300 = vadd.f32 %v10131, %v10299
    %10301 = vmatmul.bf16.gmra.mxu0 %v8159
    %v10302 = vpop.f32.mrf.mxu0
    %v10303 = vadd.f32 %v10134, %v10302
    %v10304 = vpop.f32.mrf.mxu0
    %v10305 = vadd.f32 %v10136, %v10304
    %10306 = vmatmul.bf16.gmra.mxu0 %v8160
    %v10307 = vpop.f32.mrf.mxu0
    %v10308 = vadd.f32 %v10139, %v10307
    %v10309 = vpop.f32.mrf.mxu0
    %v10310 = vadd.f32 %v10141, %v10309
    %10311 = vmatmul.bf16.gmra.mxu0 %v8161
    %v10312 = vpop.f32.mrf.mxu0
    %v10313 = vadd.f32 %v10144, %v10312
    %v10314 = vpop.f32.mrf.mxu0
    %v10315 = vadd.f32 %v10146, %v10314
    %10316 = vmatmul.bf16.gmra.mxu0 %v8162
    %v10317 = vpop.f32.mrf.mxu0
    %v10318 = vadd.f32 %v10149, %v10317
    %v10319 = vpop.f32.mrf.mxu0
    %v10320 = vadd.f32 %v10151, %v10319
    %10321 = vmatmul.bf16.gmra.mxu0 %v8163
    %v10322 = vpop.f32.mrf.mxu0
    %v10323 = vadd.f32 %v10154, %v10322
    %v10324 = vpop.f32.mrf.mxu0
    %v10325 = vadd.f32 %v10156, %v10324
    %10326 = vmatmul.bf16.gmra.mxu0 %v8164
    %v10327 = vpop.f32.mrf.mxu0
    %v10328 = vadd.f32 %v10159, %v10327
    %v10329 = vpop.f32.mrf.mxu0
    %v10330 = vadd.f32 %v10161, %v10329
    %10331 = vmatmul.bf16.gmra.mxu0 %v8165
    %v10332 = vpop.f32.mrf.mxu0
    %v10333 = vadd.f32 %v10164, %v10332
    %v10334 = vpop.f32.mrf.mxu0
    %v10335 = vadd.f32 %v10166, %v10334
    %10336 = vmatmul.bf16.gmra.mxu0 %v8166
    %v10337 = vpop.f32.mrf.mxu0
    %v10338 = vadd.f32 %v10169, %v10337
    %v10339 = vpop.f32.mrf.mxu0
    %v10340 = vadd.f32 %v10171, %v10339
    %10341 = vdwg.mxu0
    %10342 = vmatpush.bf16.msra.mxu0 %v9078
    %10343 = vmatpush.bf16.msra.mxu0 %v9077
    %10344 = vmatpush.bf16.msra.mxu0 %v9076
    %10345 = vmatpush.bf16.msra.mxu0 %v9075
    %10346 = vmatpush.bf16.msra.mxu0 %v9074
    %10347 = vmatpush.bf16.msra.mxu0 %v9073
    %10348 = vmatpush.bf16.msra.mxu0 %v9072
    %10349 = vmatpush.bf16.msra.mxu0 %v9071
    %10350 = vmatmul.bf16.gmra.mxu0 %v8327
    %v10351 = vpop.f32.mrf.mxu0
    %v10352 = vadd.f32 %v10183, %v10351
    %v10353 = vpop.f32.mrf.mxu0
    %v10354 = vadd.f32 %v10185, %v10353
    %10355 = vmatmul.bf16.gmra.mxu0 %v8328
    %v10356 = vpop.f32.mrf.mxu0
    %v10357 = vadd.f32 %v10188, %v10356
    %v10358 = vpop.f32.mrf.mxu0
    %v10359 = vadd.f32 %v10190, %v10358
    %10360 = vmatmul.bf16.gmra.mxu0 %v8329
    %v10361 = vpop.f32.mrf.mxu0
    %v10362 = vadd.f32 %v10193, %v10361
    %v10363 = vpop.f32.mrf.mxu0
    %v10364 = vadd.f32 %v10195, %v10363
    %10365 = vmatmul.bf16.gmra.mxu0 %v8330
    %v10366 = vpop.f32.mrf.mxu0
    %v10367 = vadd.f32 %v10198, %v10366
    %v10368 = vpop.f32.mrf.mxu0
    %v10369 = vadd.f32 %v10200, %v10368
    %10370 = vmatmul.bf16.gmra.mxu0 %v8331
    %v10371 = vpop.f32.mrf.mxu0
    %v10372 = vadd.f32 %v10203, %v10371
    %v10373 = vpop.f32.mrf.mxu0
    %v10374 = vadd.f32 %v10205, %v10373
    %10375 = vmatmul.bf16.gmra.mxu0 %v8332
    %v10376 = vpop.f32.mrf.mxu0
    %v10377 = vadd.f32 %v10208, %v10376
    %v10378 = vpop.f32.mrf.mxu0
    %v10379 = vadd.f32 %v10210, %v10378
    %10380 = vmatmul.bf16.gmra.mxu0 %v8333
    %v10381 = vpop.f32.mrf.mxu0
    %v10382 = vadd.f32 %v10213, %v10381
    %v10383 = vpop.f32.mrf.mxu0
    %v10384 = vadd.f32 %v10215, %v10383
    %10385 = vmatmul.bf16.gmra.mxu0 %v8334
    %v10386 = vpop.f32.mrf.mxu0
    %v10387 = vadd.f32 %v10218, %v10386
    %v10388 = vpop.f32.mrf.mxu0
    %v10389 = vadd.f32 %v10220, %v10388
    %10390 = vmatmul.bf16.gmra.mxu0 %v8335
    %v10391 = vpop.f32.mrf.mxu0
    %v10392 = vadd.f32 %v10223, %v10391
    %v10393 = vpop.f32.mrf.mxu0
    %v10394 = vadd.f32 %v10225, %v10393
    %10395 = vmatmul.bf16.gmra.mxu0 %v8336
    %v10396 = vpop.f32.mrf.mxu0
    %v10397 = vadd.f32 %v10228, %v10396
    %v10398 = vpop.f32.mrf.mxu0
    %v10399 = vadd.f32 %v10230, %v10398
    %10400 = vmatmul.bf16.gmra.mxu0 %v8337
    %v10401 = vpop.f32.mrf.mxu0
    %v10402 = vadd.f32 %v10233, %v10401
    %v10403 = vpop.f32.mrf.mxu0
    %v10404 = vadd.f32 %v10235, %v10403
    %10405 = vmatmul.bf16.gmra.mxu0 %v8338
    %v10406 = vpop.f32.mrf.mxu0
    %v10407 = vadd.f32 %v10238, %v10406
    %v10408 = vpop.f32.mrf.mxu0
    %v10409 = vadd.f32 %v10240, %v10408
    %10410 = vmatmul.bf16.gmra.mxu0 %v8339
    %v10411 = vpop.f32.mrf.mxu0
    %v10412 = vadd.f32 %v10243, %v10411
    %v10413 = vpop.f32.mrf.mxu0
    %v10414 = vadd.f32 %v10245, %v10413
    %10415 = vmatmul.bf16.gmra.mxu0 %v8340
    %v10416 = vpop.f32.mrf.mxu0
    %v10417 = vadd.f32 %v10248, %v10416
    %v10418 = vpop.f32.mrf.mxu0
    %v10419 = vadd.f32 %v10250, %v10418
    %10420 = vmatmul.bf16.gmra.mxu0 %v8341
    %v10421 = vpop.f32.mrf.mxu0
    %v10422 = vadd.f32 %v10253, %v10421
    %v10423 = vpop.f32.mrf.mxu0
    %v10424 = vadd.f32 %v10255, %v10423
    %10425 = vmatmul.bf16.gmra.mxu0 %v8342
    %v10426 = vpop.f32.mrf.mxu0
    %v10427 = vadd.f32 %v10258, %v10426
    %v10428 = vpop.f32.mrf.mxu0
    %v10429 = vadd.f32 %v10260, %v10428
    %10430 = vmatmul.bf16.gmra.mxu0 %v8343
    %v10431 = vpop.f32.mrf.mxu0
    %v10432 = vadd.f32 %v10263, %v10431
    %v10433 = vpop.f32.mrf.mxu0
    %v10434 = vadd.f32 %v10265, %v10433
    %10435 = vmatmul.bf16.gmra.mxu0 %v8344
    %v10436 = vpop.f32.mrf.mxu0
    %v10437 = vadd.f32 %v10268, %v10436
    %v10438 = vpop.f32.mrf.mxu0
    %v10439 = vadd.f32 %v10270, %v10438
    %10440 = vmatmul.bf16.gmra.mxu0 %v8345
    %v10441 = vpop.f32.mrf.mxu0
    %v10442 = vadd.f32 %v10273, %v10441
    %v10443 = vpop.f32.mrf.mxu0
    %v10444 = vadd.f32 %v10275, %v10443
    %10445 = vmatmul.bf16.gmra.mxu0 %v8346
    %v10446 = vpop.f32.mrf.mxu0
    %v10447 = vadd.f32 %v10278, %v10446
    %v10448 = vpop.f32.mrf.mxu0
    %v10449 = vadd.f32 %v10280, %v10448
    %10450 = vmatmul.bf16.gmra.mxu0 %v8347
    %v10451 = vpop.f32.mrf.mxu0
    %v10452 = vadd.f32 %v10283, %v10451
    %v10453 = vpop.f32.mrf.mxu0
    %v10454 = vadd.f32 %v10285, %v10453
    %10455 = vmatmul.bf16.gmra.mxu0 %v8348
    %v10456 = vpop.f32.mrf.mxu0
    %v10457 = vadd.f32 %v10288, %v10456
    %v10458 = vpop.f32.mrf.mxu0
    %v10459 = vadd.f32 %v10290, %v10458
    %10460 = vmatmul.bf16.gmra.mxu0 %v8349
    %v10461 = vpop.f32.mrf.mxu0
    %v10462 = vadd.f32 %v10293, %v10461
    %v10463 = vpop.f32.mrf.mxu0
    %v10464 = vadd.f32 %v10295, %v10463
    %10465 = vmatmul.bf16.gmra.mxu0 %v8350
    %v10466 = vpop.f32.mrf.mxu0
    %v10467 = vadd.f32 %v10298, %v10466
    %v10468 = vpop.f32.mrf.mxu0
    %v10469 = vadd.f32 %v10300, %v10468
    %10470 = vmatmul.bf16.gmra.mxu0 %v8351
    %v10471 = vpop.f32.mrf.mxu0
    %v10472 = vadd.f32 %v10303, %v10471
    %v10473 = vpop.f32.mrf.mxu0
    %v10474 = vadd.f32 %v10305, %v10473
    %10475 = vmatmul.bf16.gmra.mxu0 %v8352
    %v10476 = vpop.f32.mrf.mxu0
    %v10477 = vadd.f32 %v10308, %v10476
    %v10478 = vpop.f32.mrf.mxu0
    %v10479 = vadd.f32 %v10310, %v10478
    %10480 = vmatmul.bf16.gmra.mxu0 %v8353
    %v10481 = vpop.f32.mrf.mxu0
    %v10482 = vadd.f32 %v10313, %v10481
    %v10483 = vpop.f32.mrf.mxu0
    %v10484 = vadd.f32 %v10315, %v10483
    %10485 = vmatmul.bf16.gmra.mxu0 %v8354
    %v10486 = vpop.f32.mrf.mxu0
    %v10487 = vadd.f32 %v10318, %v10486
    %v10488 = vpop.f32.mrf.mxu0
    %v10489 = vadd.f32 %v10320, %v10488
    %10490 = vmatmul.bf16.gmra.mxu0 %v8355
    %v10491 = vpop.f32.mrf.mxu0
    %v10492 = vadd.f32 %v10323, %v10491
    %v10493 = vpop.f32.mrf.mxu0
    %v10494 = vadd.f32 %v10325, %v10493
    %10495 = vmatmul.bf16.gmra.mxu0 %v8356
    %v10496 = vpop.f32.mrf.mxu0
    %v10497 = vadd.f32 %v10328, %v10496
    %v10498 = vpop.f32.mrf.mxu0
    %v10499 = vadd.f32 %v10330, %v10498
    %10500 = vmatmul.bf16.gmra.mxu0 %v8357
    %v10501 = vpop.f32.mrf.mxu0
    %v10502 = vadd.f32 %v10333, %v10501
    %v10503 = vpop.f32.mrf.mxu0
    %v10504 = vadd.f32 %v10335, %v10503
    %10505 = vmatmul.bf16.gmra.mxu0 %v8358
    %v10506 = vpop.f32.mrf.mxu0
    %v10507 = vadd.f32 %v10338, %v10506
    %v10508 = vpop.f32.mrf.mxu0
    %v10509 = vadd.f32 %v10340, %v10508
    %10510 = vdwg.mxu0
    %10511 = vmatpush.bf16.msra.mxu0 %v9086
    %10512 = vmatpush.bf16.msra.mxu0 %v9085
    %10513 = vmatpush.bf16.msra.mxu0 %v9084
    %10514 = vmatpush.bf16.msra.mxu0 %v9083
    %10515 = vmatpush.bf16.msra.mxu0 %v9082
    %10516 = vmatpush.bf16.msra.mxu0 %v9081
    %10517 = vmatpush.bf16.msra.mxu0 %v9080
    %10518 = vmatpush.bf16.msra.mxu0 %v9079
    %10519 = vmatmul.bf16.gmra.mxu0 %v8519
    %v10520 = vpop.f32.mrf.mxu0
    %v10521 = vadd.f32 %v10352, %v10520
    %v10522 = vpop.f32.mrf.mxu0
    %v10523 = vadd.f32 %v10354, %v10522
    %10524 = vmatmul.bf16.gmra.mxu0 %v8520
    %v10525 = vpop.f32.mrf.mxu0
    %v10526 = vadd.f32 %v10357, %v10525
    %v10527 = vpop.f32.mrf.mxu0
    %v10528 = vadd.f32 %v10359, %v10527
    %10529 = vmatmul.bf16.gmra.mxu0 %v8521
    %v10530 = vpop.f32.mrf.mxu0
    %v10531 = vadd.f32 %v10362, %v10530
    %v10532 = vpop.f32.mrf.mxu0
    %v10533 = vadd.f32 %v10364, %v10532
    %10534 = vmatmul.bf16.gmra.mxu0 %v8522
    %v10535 = vpop.f32.mrf.mxu0
    %v10536 = vadd.f32 %v10367, %v10535
    %v10537 = vpop.f32.mrf.mxu0
    %v10538 = vadd.f32 %v10369, %v10537
    %10539 = vmatmul.bf16.gmra.mxu0 %v8523
    %v10540 = vpop.f32.mrf.mxu0
    %v10541 = vadd.f32 %v10372, %v10540
    %v10542 = vpop.f32.mrf.mxu0
    %v10543 = vadd.f32 %v10374, %v10542
    %10544 = vmatmul.bf16.gmra.mxu0 %v8524
    %v10545 = vpop.f32.mrf.mxu0
    %v10546 = vadd.f32 %v10377, %v10545
    %v10547 = vpop.f32.mrf.mxu0
    %v10548 = vadd.f32 %v10379, %v10547
    %10549 = vmatmul.bf16.gmra.mxu0 %v8525
    %v10550 = vpop.f32.mrf.mxu0
    %v10551 = vadd.f32 %v10382, %v10550
    %v10552 = vpop.f32.mrf.mxu0
    %v10553 = vadd.f32 %v10384, %v10552
    %10554 = vmatmul.bf16.gmra.mxu0 %v8526
    %v10555 = vpop.f32.mrf.mxu0
    %v10556 = vadd.f32 %v10387, %v10555
    %v10557 = vpop.f32.mrf.mxu0
    %v10558 = vadd.f32 %v10389, %v10557
    %10559 = vmatmul.bf16.gmra.mxu0 %v8527
    %v10560 = vpop.f32.mrf.mxu0
    %v10561 = vadd.f32 %v10392, %v10560
    %v10562 = vpop.f32.mrf.mxu0
    %v10563 = vadd.f32 %v10394, %v10562
    %10564 = vmatmul.bf16.gmra.mxu0 %v8528
    %v10565 = vpop.f32.mrf.mxu0
    %v10566 = vadd.f32 %v10397, %v10565
    %v10567 = vpop.f32.mrf.mxu0
    %v10568 = vadd.f32 %v10399, %v10567
    %10569 = vmatmul.bf16.gmra.mxu0 %v8529
    %v10570 = vpop.f32.mrf.mxu0
    %v10571 = vadd.f32 %v10402, %v10570
    %v10572 = vpop.f32.mrf.mxu0
    %v10573 = vadd.f32 %v10404, %v10572
    %10574 = vmatmul.bf16.gmra.mxu0 %v8530
    %v10575 = vpop.f32.mrf.mxu0
    %v10576 = vadd.f32 %v10407, %v10575
    %v10577 = vpop.f32.mrf.mxu0
    %v10578 = vadd.f32 %v10409, %v10577
    %10579 = vmatmul.bf16.gmra.mxu0 %v8531
    %v10580 = vpop.f32.mrf.mxu0
    %v10581 = vadd.f32 %v10412, %v10580
    %v10582 = vpop.f32.mrf.mxu0
    %v10583 = vadd.f32 %v10414, %v10582
    %10584 = vmatmul.bf16.gmra.mxu0 %v8532
    %v10585 = vpop.f32.mrf.mxu0
    %v10586 = vadd.f32 %v10417, %v10585
    %v10587 = vpop.f32.mrf.mxu0
    %v10588 = vadd.f32 %v10419, %v10587
    %10589 = vmatmul.bf16.gmra.mxu0 %v8533
    %v10590 = vpop.f32.mrf.mxu0
    %v10591 = vadd.f32 %v10422, %v10590
    %v10592 = vpop.f32.mrf.mxu0
    %v10593 = vadd.f32 %v10424, %v10592
    %10594 = vmatmul.bf16.gmra.mxu0 %v8534
    %v10595 = vpop.f32.mrf.mxu0
    %v10596 = vadd.f32 %v10427, %v10595
    %v10597 = vpop.f32.mrf.mxu0
    %v10598 = vadd.f32 %v10429, %v10597
    %10599 = vmatmul.bf16.gmra.mxu0 %v8535
    %v10600 = vpop.f32.mrf.mxu0
    %v10601 = vadd.f32 %v10432, %v10600
    %v10602 = vpop.f32.mrf.mxu0
    %v10603 = vadd.f32 %v10434, %v10602
    %10604 = vmatmul.bf16.gmra.mxu0 %v8536
    %v10605 = vpop.f32.mrf.mxu0
    %v10606 = vadd.f32 %v10437, %v10605
    %v10607 = vpop.f32.mrf.mxu0
    %v10608 = vadd.f32 %v10439, %v10607
    %10609 = vmatmul.bf16.gmra.mxu0 %v8537
    %v10610 = vpop.f32.mrf.mxu0
    %v10611 = vadd.f32 %v10442, %v10610
    %v10612 = vpop.f32.mrf.mxu0
    %v10613 = vadd.f32 %v10444, %v10612
    %10614 = vmatmul.bf16.gmra.mxu0 %v8538
    %v10615 = vpop.f32.mrf.mxu0
    %v10616 = vadd.f32 %v10447, %v10615
    %v10617 = vpop.f32.mrf.mxu0
    %v10618 = vadd.f32 %v10449, %v10617
    %10619 = vmatmul.bf16.gmra.mxu0 %v8539
    %v10620 = vpop.f32.mrf.mxu0
    %v10621 = vadd.f32 %v10452, %v10620
    %v10622 = vpop.f32.mrf.mxu0
    %v10623 = vadd.f32 %v10454, %v10622
    %10624 = vmatmul.bf16.gmra.mxu0 %v8540
    %v10625 = vpop.f32.mrf.mxu0
    %v10626 = vadd.f32 %v10457, %v10625
    %v10627 = vpop.f32.mrf.mxu0
    %v10628 = vadd.f32 %v10459, %v10627
    %10629 = vmatmul.bf16.gmra.mxu0 %v8541
    %v10630 = vpop.f32.mrf.mxu0
    %v10631 = vadd.f32 %v10462, %v10630
    %v10632 = vpop.f32.mrf.mxu0
    %v10633 = vadd.f32 %v10464, %v10632
    %10634 = vmatmul.bf16.gmra.mxu0 %v8542
    %v10635 = vpop.f32.mrf.mxu0
    %v10636 = vadd.f32 %v10467, %v10635
    %v10637 = vpop.f32.mrf.mxu0
    %v10638 = vadd.f32 %v10469, %v10637
    %10639 = vmatmul.bf16.gmra.mxu0 %v8543
    %v10640 = vpop.f32.mrf.mxu0
    %v10641 = vadd.f32 %v10472, %v10640
    %v10642 = vpop.f32.mrf.mxu0
    %v10643 = vadd.f32 %v10474, %v10642
    %10644 = vmatmul.bf16.gmra.mxu0 %v8544
    %v10645 = vpop.f32.mrf.mxu0
    %v10646 = vadd.f32 %v10477, %v10645
    %v10647 = vpop.f32.mrf.mxu0
    %v10648 = vadd.f32 %v10479, %v10647
    %10649 = vmatmul.bf16.gmra.mxu0 %v8545
    %v10650 = vpop.f32.mrf.mxu0
    %v10651 = vadd.f32 %v10482, %v10650
    %v10652 = vpop.f32.mrf.mxu0
    %v10653 = vadd.f32 %v10484, %v10652
    %10654 = vmatmul.bf16.gmra.mxu0 %v8546
    %v10655 = vpop.f32.mrf.mxu0
    %v10656 = vadd.f32 %v10487, %v10655
    %v10657 = vpop.f32.mrf.mxu0
    %v10658 = vadd.f32 %v10489, %v10657
    %10659 = vmatmul.bf16.gmra.mxu0 %v8547
    %v10660 = vpop.f32.mrf.mxu0
    %v10661 = vadd.f32 %v10492, %v10660
    %v10662 = vpop.f32.mrf.mxu0
    %v10663 = vadd.f32 %v10494, %v10662
    %10664 = vmatmul.bf16.gmra.mxu0 %v8548
    %v10665 = vpop.f32.mrf.mxu0
    %v10666 = vadd.f32 %v10497, %v10665
    %v10667 = vpop.f32.mrf.mxu0
    %v10668 = vadd.f32 %v10499, %v10667
    %10669 = vmatmul.bf16.gmra.mxu0 %v8549
    %v10670 = vpop.f32.mrf.mxu0
    %v10671 = vadd.f32 %v10502, %v10670
    %v10672 = vpop.f32.mrf.mxu0
    %v10673 = vadd.f32 %v10504, %v10672
    %10674 = vmatmul.bf16.gmra.mxu0 %v8550
    %v10675 = vpop.f32.mrf.mxu0
    %v10676 = vadd.f32 %v10507, %v10675
    %v10677 = vpop.f32.mrf.mxu0
    %v10678 = vadd.f32 %v10509, %v10677
    %10679 = vdwg.mxu0
    %v10680 = vld [vmem:[%s5] sm:$0x1]
    %v10681 = vld [vmem:[%s6] sm:$0x1]
    %v10682 = vadd.f32 %v10521, %v10523
    %v10683 = vadd.f32 %v10682, %v10526
    %v10684 = vadd.f32 %v10683, %v10528
    %v10685 = vadd.f32 %v10684, %v10531
    %v10686 = vadd.f32 %v10685, %v10533
    %v10687 = vadd.f32 %v10686, %v10536
    %v10688 = vadd.f32 %v10687, %v10538
    %v10689 = vadd.f32 %v10688, %v10541
    %v10690 = vadd.f32 %v10689, %v10543
    %v10691 = vadd.f32 %v10690, %v10546
    %v10692 = vadd.f32 %v10691, %v10548
    %v10693 = vadd.f32 %v10692, %v10551
    %v10694 = vadd.f32 %v10693, %v10553
    %v10695 = vadd.f32 %v10694, %v10556
    %v10696 = vadd.f32 %v10695, %v10558
    %v10697 = vadd.f32 %v10696, %v10561
    %v10698 = vadd.f32 %v10697, %v10563
    %v10699 = vadd.f32 %v10698, %v10566
    %v10700 = vadd.f32 %v10699, %v10568
    %v10701 = vadd.f32 %v10700, %v10571
    %v10702 = vadd.f32 %v10701, %v10573
    %v10703 = vadd.f32 %v10702, %v10576
    %v10704 = vadd.f32 %v10703, %v10578
    %v10705 = vadd.f32 %v10704, %v10581
    %v10706 = vadd.f32 %v10705, %v10583
    %v10707 = vadd.f32 %v10706, %v10586
    %v10708 = vadd.f32 %v10707, %v10588
    %v10709 = vadd.f32 %v10708, %v10591
    %v10710 = vadd.f32 %v10709, %v10593
    %v10711 = vadd.f32 %v10710, %v10596
    %v10712 = vadd.f32 %v10711, %v10598
    %v10713 = vadd.f32 %v10712, %v10601
    %v10714 = vadd.f32 %v10713, %v10603
    %v10715 = vadd.f32 %v10714, %v10606
    %v10716 = vadd.f32 %v10715, %v10608
    %v10717 = vadd.f32 %v10716, %v10611
    %v10718 = vadd.f32 %v10717, %v10613
    %v10719 = vadd.f32 %v10718, %v10616
    %v10720 = vadd.f32 %v10719, %v10618
    %v10721 = vadd.f32 %v10720, %v10621
    %v10722 = vadd.f32 %v10721, %v10623
    %v10723 = vadd.f32 %v10722, %v10626
    %v10724 = vadd.f32 %v10723, %v10628
    %v10725 = vadd.f32 %v10724, %v10631
    %v10726 = vadd.f32 %v10725, %v10633
    %v10727 = vadd.f32 %v10726, %v10636
    %v10728 = vadd.f32 %v10727, %v10638
    %v10729 = vadd.f32 %v10728, %v10641
    %v10730 = vadd.f32 %v10729, %v10643
    %v10731 = vadd.f32 %v10730, %v10646
    %v10732 = vadd.f32 %v10731, %v10648
    %v10733 = vadd.f32 %v10732, %v10651
    %v10734 = vadd.f32 %v10733, %v10653
    %v10735 = vadd.f32 %v10734, %v10656
    %v10736 = vadd.f32 %v10735, %v10658
    %v10737 = vadd.f32 %v10736, %v10661
    %v10738 = vadd.f32 %v10737, %v10663
    %v10739 = vadd.f32 %v10738, %v10666
    %v10740 = vadd.f32 %v10739, %v10668
    %v10741 = vadd.f32 %v10740, %v10671
    %v10742 = vadd.f32 %v10741, %v10673
    %v10743 = vadd.f32 %v10742, %v10676
    %v10744 = vadd.f32 %v10743, %v10678
    %v10745 = vrot.slane %v10744, 4
    %v10746 = vadd.f32 %v10744, %v10745
    %v10747 = vrot.slane %v10746, 2
    %v10748 = vadd.f32 %v10746, %v10747
    %v10749 = vrot.slane %v10748, 1
    %v10750 = vadd.f32 %v10748, %v10749
    %v10751 = vmul.f32 %v10750, 0.001953125
    %v10752 = vmul.f32 %v10521, %v10521
    %v10753 = vmul.f32 %v10523, %v10523
    %v10754 = vmul.f32 %v10526, %v10526
    %v10755 = vmul.f32 %v10528, %v10528
    %v10756 = vmul.f32 %v10531, %v10531
    %v10757 = vmul.f32 %v10533, %v10533
    %v10758 = vmul.f32 %v10536, %v10536
    %v10759 = vmul.f32 %v10538, %v10538
    %v10760 = vmul.f32 %v10541, %v10541
    %v10761 = vmul.f32 %v10543, %v10543
    %v10762 = vmul.f32 %v10546, %v10546
    %v10763 = vmul.f32 %v10548, %v10548
    %v10764 = vmul.f32 %v10551, %v10551
    %v10765 = vmul.f32 %v10553, %v10553
    %v10766 = vmul.f32 %v10556, %v10556
    %v10767 = vmul.f32 %v10558, %v10558
    %v10768 = vmul.f32 %v10561, %v10561
    %v10769 = vmul.f32 %v10563, %v10563
    %v10770 = vmul.f32 %v10566, %v10566
    %v10771 = vmul.f32 %v10568, %v10568
    %v10772 = vmul.f32 %v10571, %v10571
    %v10773 = vmul.f32 %v10573, %v10573
    %v10774 = vmul.f32 %v10576, %v10576
    %v10775 = vmul.f32 %v10578, %v10578
    %v10776 = vmul.f32 %v10581, %v10581
    %v10777 = vmul.f32 %v10583, %v10583
    %v10778 = vmul.f32 %v10586, %v10586
    %v10779 = vmul.f32 %v10588, %v10588
    %v10780 = vmul.f32 %v10591, %v10591
    %v10781 = vmul.f32 %v10593, %v10593
    %v10782 = vmul.f32 %v10596, %v10596
    %v10783 = vmul.f32 %v10598, %v10598
    %v10784 = vmul.f32 %v10601, %v10601
    %v10785 = vmul.f32 %v10603, %v10603
    %v10786 = vmul.f32 %v10606, %v10606
    %v10787 = vmul.f32 %v10608, %v10608
    %v10788 = vmul.f32 %v10611, %v10611
    %v10789 = vmul.f32 %v10613, %v10613
    %v10790 = vmul.f32 %v10616, %v10616
    %v10791 = vmul.f32 %v10618, %v10618
    %v10792 = vmul.f32 %v10621, %v10621
    %v10793 = vmul.f32 %v10623, %v10623
    %v10794 = vmul.f32 %v10626, %v10626
    %v10795 = vmul.f32 %v10628, %v10628
    %v10796 = vmul.f32 %v10631, %v10631
    %v10797 = vmul.f32 %v10633, %v10633
    %v10798 = vmul.f32 %v10636, %v10636
    %v10799 = vmul.f32 %v10638, %v10638
    %v10800 = vmul.f32 %v10641, %v10641
    %v10801 = vmul.f32 %v10643, %v10643
    %v10802 = vmul.f32 %v10646, %v10646
    %v10803 = vmul.f32 %v10648, %v10648
    %v10804 = vmul.f32 %v10651, %v10651
    %v10805 = vmul.f32 %v10653, %v10653
    %v10806 = vmul.f32 %v10656, %v10656
    %v10807 = vmul.f32 %v10658, %v10658
    %v10808 = vmul.f32 %v10661, %v10661
    %v10809 = vmul.f32 %v10663, %v10663
    %v10810 = vmul.f32 %v10666, %v10666
    %v10811 = vmul.f32 %v10668, %v10668
    %v10812 = vmul.f32 %v10671, %v10671
    %v10813 = vmul.f32 %v10673, %v10673
    %v10814 = vmul.f32 %v10676, %v10676
    %v10815 = vmul.f32 %v10678, %v10678
    %v10816 = vadd.f32 %v10752, %v10753
    %v10817 = vadd.f32 %v10816, %v10754
    %v10818 = vadd.f32 %v10817, %v10755
    %v10819 = vadd.f32 %v10818, %v10756
    %v10820 = vadd.f32 %v10819, %v10757
    %v10821 = vadd.f32 %v10820, %v10758
    %v10822 = vadd.f32 %v10821, %v10759
    %v10823 = vadd.f32 %v10822, %v10760
    %v10824 = vadd.f32 %v10823, %v10761
    %v10825 = vadd.f32 %v10824, %v10762
    %v10826 = vadd.f32 %v10825, %v10763
    %v10827 = vadd.f32 %v10826, %v10764
    %v10828 = vadd.f32 %v10827, %v10765
    %v10829 = vadd.f32 %v10828, %v10766
    %v10830 = vadd.f32 %v10829, %v10767
    %v10831 = vadd.f32 %v10830, %v10768
    %v10832 = vadd.f32 %v10831, %v10769
    %v10833 = vadd.f32 %v10832, %v10770
    %v10834 = vadd.f32 %v10833, %v10771
    %v10835 = vadd.f32 %v10834, %v10772
    %v10836 = vadd.f32 %v10835, %v10773
    %v10837 = vadd.f32 %v10836, %v10774
    %v10838 = vadd.f32 %v10837, %v10775
    %v10839 = vadd.f32 %v10838, %v10776
    %v10840 = vadd.f32 %v10839, %v10777
    %v10841 = vadd.f32 %v10840, %v10778
    %v10842 = vadd.f32 %v10841, %v10779
    %v10843 = vadd.f32 %v10842, %v10780
    %v10844 = vadd.f32 %v10843, %v10781
    %v10845 = vadd.f32 %v10844, %v10782
    %v10846 = vadd.f32 %v10845, %v10783
    %v10847 = vadd.f32 %v10846, %v10784
    %v10848 = vadd.f32 %v10847, %v10785
    %v10849 = vadd.f32 %v10848, %v10786
    %v10850 = vadd.f32 %v10849, %v10787
    %v10851 = vadd.f32 %v10850, %v10788
    %v10852 = vadd.f32 %v10851, %v10789
    %v10853 = vadd.f32 %v10852, %v10790
    %v10854 = vadd.f32 %v10853, %v10791
    %v10855 = vadd.f32 %v10854, %v10792
    %v10856 = vadd.f32 %v10855, %v10793
    %v10857 = vadd.f32 %v10856, %v10794
    %v10858 = vadd.f32 %v10857, %v10795
    %v10859 = vadd.f32 %v10858, %v10796
    %v10860 = vadd.f32 %v10859, %v10797
    %v10861 = vadd.f32 %v10860, %v10798
    %v10862 = vadd.f32 %v10861, %v10799
    %v10863 = vadd.f32 %v10862, %v10800
    %v10864 = vadd.f32 %v10863, %v10801
    %v10865 = vadd.f32 %v10864, %v10802
    %v10866 = vadd.f32 %v10865, %v10803
    %v10867 = vadd.f32 %v10866, %v10804
    %v10868 = vadd.f32 %v10867, %v10805
    %v10869 = vadd.f32 %v10868, %v10806
    %v10870 = vadd.f32 %v10869, %v10807
    %v10871 = vadd.f32 %v10870, %v10808
    %v10872 = vadd.f32 %v10871, %v10809
    %v10873 = vadd.f32 %v10872, %v10810
    %v10874 = vadd.f32 %v10873, %v10811
    %v10875 = vadd.f32 %v10874, %v10812
    %v10876 = vadd.f32 %v10875, %v10813
    %v10877 = vadd.f32 %v10876, %v10814
    %v10878 = vadd.f32 %v10877, %v10815
    %v10879 = vrot.slane %v10878, 4
    %v10880 = vadd.f32 %v10878, %v10879
    %v10881 = vrot.slane %v10880, 2
    %v10882 = vadd.f32 %v10880, %v10881
    %v10883 = vrot.slane %v10882, 1
    %v10884 = vadd.f32 %v10882, %v10883
    %v10885 = vmul.f32 %v10884, 0.001953125
    %v10886 = vmul.f32 %v10751, %v10751
    %v10887 = vsub.f32 %v10885, %v10886
    %v10888 = vmax.f32 %v10887, 0.0
    %v10889 = vsub.f32 %v10521, %v10751
    %v10890 = vsub.f32 %v10523, %v10751
    %v10891 = vsub.f32 %v10526, %v10751
    %v10892 = vsub.f32 %v10528, %v10751
    %v10893 = vsub.f32 %v10531, %v10751
    %v10894 = vsub.f32 %v10533, %v10751
    %v10895 = vsub.f32 %v10536, %v10751
    %v10896 = vsub.f32 %v10538, %v10751
    %v10897 = vsub.f32 %v10541, %v10751
    %v10898 = vsub.f32 %v10543, %v10751
    %v10899 = vsub.f32 %v10546, %v10751
    %v10900 = vsub.f32 %v10548, %v10751
    %v10901 = vsub.f32 %v10551, %v10751
    %v10902 = vsub.f32 %v10553, %v10751
    %v10903 = vsub.f32 %v10556, %v10751
    %v10904 = vsub.f32 %v10558, %v10751
    %v10905 = vsub.f32 %v10561, %v10751
    %v10906 = vsub.f32 %v10563, %v10751
    %v10907 = vsub.f32 %v10566, %v10751
    %v10908 = vsub.f32 %v10568, %v10751
    %v10909 = vsub.f32 %v10571, %v10751
    %v10910 = vsub.f32 %v10573, %v10751
    %v10911 = vsub.f32 %v10576, %v10751
    %v10912 = vsub.f32 %v10578, %v10751
    %v10913 = vsub.f32 %v10581, %v10751
    %v10914 = vsub.f32 %v10583, %v10751
    %v10915 = vsub.f32 %v10586, %v10751
    %v10916 = vsub.f32 %v10588, %v10751
    %v10917 = vsub.f32 %v10591, %v10751
    %v10918 = vsub.f32 %v10593, %v10751
    %v10919 = vsub.f32 %v10596, %v10751
    %v10920 = vsub.f32 %v10598, %v10751
    %v10921 = vsub.f32 %v10601, %v10751
    %v10922 = vsub.f32 %v10603, %v10751
    %v10923 = vsub.f32 %v10606, %v10751
    %v10924 = vsub.f32 %v10608, %v10751
    %v10925 = vsub.f32 %v10611, %v10751
    %v10926 = vsub.f32 %v10613, %v10751
    %v10927 = vsub.f32 %v10616, %v10751
    %v10928 = vsub.f32 %v10618, %v10751
    %v10929 = vsub.f32 %v10621, %v10751
    %v10930 = vsub.f32 %v10623, %v10751
    %v10931 = vsub.f32 %v10626, %v10751
    %v10932 = vsub.f32 %v10628, %v10751
    %v10933 = vsub.f32 %v10631, %v10751
    %v10934 = vsub.f32 %v10633, %v10751
    %v10935 = vsub.f32 %v10636, %v10751
    %v10936 = vsub.f32 %v10638, %v10751
    %v10937 = vsub.f32 %v10641, %v10751
    %v10938 = vsub.f32 %v10643, %v10751
    %v10939 = vsub.f32 %v10646, %v10751
    %v10940 = vsub.f32 %v10648, %v10751
    %v10941 = vsub.f32 %v10651, %v10751
    %v10942 = vsub.f32 %v10653, %v10751
    %v10943 = vsub.f32 %v10656, %v10751
    %v10944 = vsub.f32 %v10658, %v10751
    %v10945 = vsub.f32 %v10661, %v10751
    %v10946 = vsub.f32 %v10663, %v10751
    %v10947 = vsub.f32 %v10666, %v10751
    %v10948 = vsub.f32 %v10668, %v10751
    %v10949 = vsub.f32 %v10671, %v10751
    %v10950 = vsub.f32 %v10673, %v10751
    %v10951 = vsub.f32 %v10676, %v10751
    %v10952 = vsub.f32 %v10678, %v10751
    %v10953 = vadd.f32 %v10888, 1e-05
    %v10954 = vrsqrt.pop %v10953
    %v10955 = vmul.f32 %v10954, %v10953
    %v10956 = vmul.f32 %v10955, %v10954
    %v10957 = vmul.f32 0.5, %v10956
    %v10958 = vsub.f32 1.5, %v10957
    %v10959 = vmul.f32 %v10954, %v10958
    %vm10960 = vweird.f32 %v10953
    %vm10961 = vweird.f32 %v10954
    %vm10962 = vmor %vm10960, %vm10961
    %v10963 = vsel %vm10962, %v10954, %v10959
    %v10964 = vmul.f32 %v10889, %v10963
    %v10965 = vmul.f32 %v10890, %v10963
    %v10966 = vmul.f32 %v10891, %v10963
    %v10967 = vmul.f32 %v10892, %v10963
    %v10968 = vmul.f32 %v10893, %v10963
    %v10969 = vmul.f32 %v10894, %v10963
    %v10970 = vmul.f32 %v10895, %v10963
    %v10971 = vmul.f32 %v10896, %v10963
    %v10972 = vmul.f32 %v10897, %v10963
    %v10973 = vmul.f32 %v10898, %v10963
    %v10974 = vmul.f32 %v10899, %v10963
    %v10975 = vmul.f32 %v10900, %v10963
    %v10976 = vmul.f32 %v10901, %v10963
    %v10977 = vmul.f32 %v10902, %v10963
    %v10978 = vmul.f32 %v10903, %v10963
    %v10979 = vmul.f32 %v10904, %v10963
    %v10980 = vmul.f32 %v10905, %v10963
    %v10981 = vmul.f32 %v10906, %v10963
    %v10982 = vmul.f32 %v10907, %v10963
    %v10983 = vmul.f32 %v10908, %v10963
    %v10984 = vmul.f32 %v10909, %v10963
    %v10985 = vmul.f32 %v10910, %v10963
    %v10986 = vmul.f32 %v10911, %v10963
    %v10987 = vmul.f32 %v10912, %v10963
    %v10988 = vmul.f32 %v10913, %v10963
    %v10989 = vmul.f32 %v10914, %v10963
    %v10990 = vmul.f32 %v10915, %v10963
    %v10991 = vmul.f32 %v10916, %v10963
    %v10992 = vmul.f32 %v10917, %v10963
    %v10993 = vmul.f32 %v10918, %v10963
    %v10994 = vmul.f32 %v10919, %v10963
    %v10995 = vmul.f32 %v10920, %v10963
    %v10996 = vmul.f32 %v10921, %v10963
    %v10997 = vmul.f32 %v10922, %v10963
    %v10998 = vmul.f32 %v10923, %v10963
    %v10999 = vmul.f32 %v10924, %v10963
    %v11000 = vmul.f32 %v10925, %v10963
    %v11001 = vmul.f32 %v10926, %v10963
    %v11002 = vmul.f32 %v10927, %v10963
    %v11003 = vmul.f32 %v10928, %v10963
    %v11004 = vmul.f32 %v10929, %v10963
    %v11005 = vmul.f32 %v10930, %v10963
    %v11006 = vmul.f32 %v10931, %v10963
    %v11007 = vmul.f32 %v10932, %v10963
    %v11008 = vmul.f32 %v10933, %v10963
    %v11009 = vmul.f32 %v10934, %v10963
    %v11010 = vmul.f32 %v10935, %v10963
    %v11011 = vmul.f32 %v10936, %v10963
    %v11012 = vmul.f32 %v10937, %v10963
    %v11013 = vmul.f32 %v10938, %v10963
    %v11014 = vmul.f32 %v10939, %v10963
    %v11015 = vmul.f32 %v10940, %v10963
    %v11016 = vmul.f32 %v10941, %v10963
    %v11017 = vmul.f32 %v10942, %v10963
    %v11018 = vmul.f32 %v10943, %v10963
    %v11019 = vmul.f32 %v10944, %v10963
    %v11020 = vmul.f32 %v10945, %v10963
    %v11021 = vmul.f32 %v10946, %v10963
    %v11022 = vmul.f32 %v10947, %v10963
    %v11023 = vmul.f32 %v10948, %v10963
    %v11024 = vmul.f32 %v10949, %v10963
    %v11025 = vmul.f32 %v10950, %v10963
    %v11026 = vmul.f32 %v10951, %v10963
    %v11027 = vmul.f32 %v10952, %v10963
    %v11029 = vperm.slane %v10680, 0
    %v11031 = vmul.f32 %v10964, %v11029
    %v11032 = vmul.f32 %v10965, %v11029
    %v11033 = vmul.f32 %v10966, %v11029
    %v11034 = vmul.f32 %v10967, %v11029
    %v11035 = vmul.f32 %v10968, %v11029
    %v11036 = vmul.f32 %v10969, %v11029
    %v11037 = vmul.f32 %v10970, %v11029
    %v11038 = vmul.f32 %v10971, %v11029
    %v11039 = vmul.f32 %v10972, %v11029
    %v11040 = vmul.f32 %v10973, %v11029
    %v11041 = vmul.f32 %v10974, %v11029
    %v11042 = vmul.f32 %v10975, %v11029
    %v11043 = vmul.f32 %v10976, %v11029
    %v11044 = vmul.f32 %v10977, %v11029
    %v11045 = vmul.f32 %v10978, %v11029
    %v11046 = vmul.f32 %v10979, %v11029
    %v11047 = vmul.f32 %v10980, %v11029
    %v11048 = vmul.f32 %v10981, %v11029
    %v11049 = vmul.f32 %v10982, %v11029
    %v11050 = vmul.f32 %v10983, %v11029
    %v11051 = vmul.f32 %v10984, %v11029
    %v11052 = vmul.f32 %v10985, %v11029
    %v11053 = vmul.f32 %v10986, %v11029
    %v11054 = vmul.f32 %v10987, %v11029
    %v11055 = vmul.f32 %v10988, %v11029
    %v11056 = vmul.f32 %v10989, %v11029
    %v11057 = vmul.f32 %v10990, %v11029
    %v11058 = vmul.f32 %v10991, %v11029
    %v11059 = vmul.f32 %v10992, %v11029
    %v11060 = vmul.f32 %v10993, %v11029
    %v11061 = vmul.f32 %v10994, %v11029
    %v11062 = vmul.f32 %v10995, %v11029
    %v11063 = vmul.f32 %v10996, %v11029
    %v11064 = vmul.f32 %v10997, %v11029
    %v11065 = vmul.f32 %v10998, %v11029
    %v11066 = vmul.f32 %v10999, %v11029
    %v11067 = vmul.f32 %v11000, %v11029
    %v11068 = vmul.f32 %v11001, %v11029
    %v11069 = vmul.f32 %v11002, %v11029
    %v11070 = vmul.f32 %v11003, %v11029
    %v11071 = vmul.f32 %v11004, %v11029
    %v11072 = vmul.f32 %v11005, %v11029
    %v11073 = vmul.f32 %v11006, %v11029
    %v11074 = vmul.f32 %v11007, %v11029
    %v11075 = vmul.f32 %v11008, %v11029
    %v11076 = vmul.f32 %v11009, %v11029
    %v11077 = vmul.f32 %v11010, %v11029
    %v11078 = vmul.f32 %v11011, %v11029
    %v11079 = vmul.f32 %v11012, %v11029
    %v11080 = vmul.f32 %v11013, %v11029
    %v11081 = vmul.f32 %v11014, %v11029
    %v11082 = vmul.f32 %v11015, %v11029
    %v11083 = vmul.f32 %v11016, %v11029
    %v11084 = vmul.f32 %v11017, %v11029
    %v11085 = vmul.f32 %v11018, %v11029
    %v11086 = vmul.f32 %v11019, %v11029
    %v11087 = vmul.f32 %v11020, %v11029
    %v11088 = vmul.f32 %v11021, %v11029
    %v11089 = vmul.f32 %v11022, %v11029
    %v11090 = vmul.f32 %v11023, %v11029
    %v11091 = vmul.f32 %v11024, %v11029
    %v11092 = vmul.f32 %v11025, %v11029
    %v11093 = vmul.f32 %v11026, %v11029
    %v11094 = vmul.f32 %v11027, %v11029
    %v11096 = vperm.slane %v10681, 0
    %v11098 = vadd.f32 %v11031, %v11096
    %v11099 = vadd.f32 %v11032, %v11096
    %v11100 = vadd.f32 %v11033, %v11096
    %v11101 = vadd.f32 %v11034, %v11096
    %v11102 = vadd.f32 %v11035, %v11096
    %v11103 = vadd.f32 %v11036, %v11096
    %v11104 = vadd.f32 %v11037, %v11096
    %v11105 = vadd.f32 %v11038, %v11096
    %v11106 = vadd.f32 %v11039, %v11096
    %v11107 = vadd.f32 %v11040, %v11096
    %v11108 = vadd.f32 %v11041, %v11096
    %v11109 = vadd.f32 %v11042, %v11096
    %v11110 = vadd.f32 %v11043, %v11096
    %v11111 = vadd.f32 %v11044, %v11096
    %v11112 = vadd.f32 %v11045, %v11096
    %v11113 = vadd.f32 %v11046, %v11096
    %v11114 = vadd.f32 %v11047, %v11096
    %v11115 = vadd.f32 %v11048, %v11096
    %v11116 = vadd.f32 %v11049, %v11096
    %v11117 = vadd.f32 %v11050, %v11096
    %v11118 = vadd.f32 %v11051, %v11096
    %v11119 = vadd.f32 %v11052, %v11096
    %v11120 = vadd.f32 %v11053, %v11096
    %v11121 = vadd.f32 %v11054, %v11096
    %v11122 = vadd.f32 %v11055, %v11096
    %v11123 = vadd.f32 %v11056, %v11096
    %v11124 = vadd.f32 %v11057, %v11096
    %v11125 = vadd.f32 %v11058, %v11096
    %v11126 = vadd.f32 %v11059, %v11096
    %v11127 = vadd.f32 %v11060, %v11096
    %v11128 = vadd.f32 %v11061, %v11096
    %v11129 = vadd.f32 %v11062, %v11096
    %v11130 = vadd.f32 %v11063, %v11096
    %v11131 = vadd.f32 %v11064, %v11096
    %v11132 = vadd.f32 %v11065, %v11096
    %v11133 = vadd.f32 %v11066, %v11096
    %v11134 = vadd.f32 %v11067, %v11096
    %v11135 = vadd.f32 %v11068, %v11096
    %v11136 = vadd.f32 %v11069, %v11096
    %v11137 = vadd.f32 %v11070, %v11096
    %v11138 = vadd.f32 %v11071, %v11096
    %v11139 = vadd.f32 %v11072, %v11096
    %v11140 = vadd.f32 %v11073, %v11096
    %v11141 = vadd.f32 %v11074, %v11096
    %v11142 = vadd.f32 %v11075, %v11096
    %v11143 = vadd.f32 %v11076, %v11096
    %v11144 = vadd.f32 %v11077, %v11096
    %v11145 = vadd.f32 %v11078, %v11096
    %v11146 = vadd.f32 %v11079, %v11096
    %v11147 = vadd.f32 %v11080, %v11096
    %v11148 = vadd.f32 %v11081, %v11096
    %v11149 = vadd.f32 %v11082, %v11096
    %v11150 = vadd.f32 %v11083, %v11096
    %v11151 = vadd.f32 %v11084, %v11096
    %v11152 = vadd.f32 %v11085, %v11096
    %v11153 = vadd.f32 %v11086, %v11096
    %v11154 = vadd.f32 %v11087, %v11096
    %v11155 = vadd.f32 %v11088, %v11096
    %v11156 = vadd.f32 %v11089, %v11096
    %v11157 = vadd.f32 %v11090, %v11096
    %v11158 = vadd.f32 %v11091, %v11096
    %v11159 = vadd.f32 %v11092, %v11096
    %v11160 = vadd.f32 %v11093, %v11096
    %v11161 = vadd.f32 %v11094, %v11096
    %v11162 = vld [vmem:[%s411 + $0x1] sm:$0xff]
    %v11163 = vld [vmem:[%s411 + $0x9] sm:$0xff]
    %v11164 = vld [vmem:[%s411 + $0x19] sm:$0xff]
    %v11165 = vld [vmem:[%s411 + $0x21] sm:$0xff]
    %v11166 = vld [vmem:[%s411 + $0x31] sm:$0xff]
    %v11167 = vld [vmem:[%s411 + $0x39] sm:$0xff]
    %v11168 = vld [vmem:[%s411 + $0x49] sm:$0xff]
    %v11169 = vld [vmem:[%s411 + $0x51] sm:$0xff]
    %v11170 = vld [vmem:[%s411 + $0x61] sm:$0xff]
    %v11171 = vld [vmem:[%s411 + $0x69] sm:$0xff]
    %v11172 = vld [vmem:[%s411 + $0x79] sm:$0xff]
    %v11173 = vld [vmem:[%s411 + $0x81] sm:$0xff]
    %v11174 = vld [vmem:[%s411 + $0x91] sm:$0xff]
    %v11175 = vld [vmem:[%s411 + $0x99] sm:$0xff]
    %v11176 = vld [vmem:[%s411 + $0xa9] sm:$0xff]
    %v11177 = vld [vmem:[%s411 + $0xb1] sm:$0xff]
    %v11178 = vld [vmem:[%s411 + $0xc1] sm:$0xff]
    %v11179 = vld [vmem:[%s411 + $0xc9] sm:$0xff]
    %v11180 = vld [vmem:[%s411 + $0xd9] sm:$0xff]
    %v11181 = vld [vmem:[%s411 + $0xe1] sm:$0xff]
    %v11182 = vld [vmem:[%s411 + $0xf1] sm:$0xff]
    %v11183 = vld [vmem:[%s411 + $0xf9] sm:$0xff]
    %v11184 = vld [vmem:[%s411 + $0x109] sm:$0xff]
    %v11185 = vld [vmem:[%s411 + $0x111] sm:$0xff]
    %v11186 = vld [vmem:[%s411 + $0x121] sm:$0xff]
    %v11187 = vld [vmem:[%s411 + $0x129] sm:$0xff]
    %v11188 = vld [vmem:[%s411 + $0x139] sm:$0xff]
    %v11189 = vld [vmem:[%s411 + $0x141] sm:$0xff]
    %v11190 = vld [vmem:[%s411 + $0x151] sm:$0xff]
    %v11191 = vld [vmem:[%s411 + $0x159] sm:$0xff]
    %v11192 = vld [vmem:[%s411 + $0x169] sm:$0xff]
    %v11193 = vld [vmem:[%s411 + $0x171] sm:$0xff]
    %v11194 = vld [vmem:[%s411 + $0x1b1] sm:$0xff]
    %v11195 = vld [vmem:[%s411 + $0x1b9] sm:$0xff]
    %v11196 = vld [vmem:[%s411 + $0x1c9] sm:$0xff]
    %v11197 = vld [vmem:[%s411 + $0x1d1] sm:$0xff]
    %v11198 = vld [vmem:[%s411 + $0x1e1] sm:$0xff]
    %v11199 = vld [vmem:[%s411 + $0x1e9] sm:$0xff]
    %v11200 = vld [vmem:[%s411 + $0x1f9] sm:$0xff]
    %v11201 = vld [vmem:[%s411 + $0x201] sm:$0xff]
    %v11202 = vld [vmem:[%s411 + $0x211] sm:$0xff]
    %v11203 = vld [vmem:[%s411 + $0x219] sm:$0xff]
    %v11204 = vld [vmem:[%s411 + $0x229] sm:$0xff]
    %v11205 = vld [vmem:[%s411 + $0x231] sm:$0xff]
    %v11206 = vld [vmem:[%s411 + $0x241] sm:$0xff]
    %v11207 = vld [vmem:[%s411 + $0x249] sm:$0xff]
    %v11208 = vld [vmem:[%s411 + $0x259] sm:$0xff]
    %v11209 = vld [vmem:[%s411 + $0x261] sm:$0xff]
    %v11210 = vld [vmem:[%s411 + $0x271] sm:$0xff]
    %v11211 = vld [vmem:[%s411 + $0x279] sm:$0xff]
    %v11212 = vld [vmem:[%s411 + $0x289] sm:$0xff]
    %v11213 = vld [vmem:[%s411 + $0x291] sm:$0xff]
    %v11214 = vld [vmem:[%s411 + $0x2a1] sm:$0xff]
    %v11215 = vld [vmem:[%s411 + $0x2a9] sm:$0xff]
    %v11216 = vld [vmem:[%s411 + $0x2b9] sm:$0xff]
    %v11217 = vld [vmem:[%s411 + $0x2c1] sm:$0xff]
    %v11218 = vld [vmem:[%s411 + $0x2d1] sm:$0xff]
    %v11219 = vld [vmem:[%s411 + $0x2d9] sm:$0xff]
    %v11220 = vld [vmem:[%s411 + $0x2e9] sm:$0xff]
    %v11221 = vld [vmem:[%s411 + $0x2f1] sm:$0xff]
    %v11222 = vld [vmem:[%s411 + $0x301] sm:$0xff]
    %v11223 = vld [vmem:[%s411 + $0x309] sm:$0xff]
    %v11224 = vld [vmem:[%s411 + $0x319] sm:$0xff]
    %v11225 = vld [vmem:[%s411 + $0x321] sm:$0xff]
    %v11226 = vadd.f32 %v11098, %v11162
    %v11227 = vadd.f32 %v11099, %v11163
    %v11228 = vadd.f32 %v11100, %v11164
    %v11229 = vadd.f32 %v11101, %v11165
    %v11230 = vadd.f32 %v11102, %v11166
    %v11231 = vadd.f32 %v11103, %v11167
    %v11232 = vadd.f32 %v11104, %v11168
    %v11233 = vadd.f32 %v11105, %v11169
    %v11234 = vadd.f32 %v11106, %v11170
    %v11235 = vadd.f32 %v11107, %v11171
    %v11236 = vadd.f32 %v11108, %v11172
    %v11237 = vadd.f32 %v11109, %v11173
    %v11238 = vadd.f32 %v11110, %v11174
    %v11239 = vadd.f32 %v11111, %v11175
    %v11240 = vadd.f32 %v11112, %v11176
    %v11241 = vadd.f32 %v11113, %v11177
    %v11242 = vadd.f32 %v11114, %v11178
    %v11243 = vadd.f32 %v11115, %v11179
    %v11244 = vadd.f32 %v11116, %v11180
    %v11245 = vadd.f32 %v11117, %v11181
    %v11246 = vadd.f32 %v11118, %v11182
    %v11247 = vadd.f32 %v11119, %v11183
    %v11248 = vadd.f32 %v11120, %v11184
    %v11249 = vadd.f32 %v11121, %v11185
    %v11250 = vadd.f32 %v11122, %v11186
    %v11251 = vadd.f32 %v11123, %v11187
    %v11252 = vadd.f32 %v11124, %v11188
    %v11253 = vadd.f32 %v11125, %v11189
    %v11254 = vadd.f32 %v11126, %v11190
    %v11255 = vadd.f32 %v11127, %v11191
    %v11256 = vadd.f32 %v11128, %v11192
    %v11257 = vadd.f32 %v11129, %v11193
    %v11258 = vadd.f32 %v11130, %v11194
    %v11259 = vadd.f32 %v11131, %v11195
    %v11260 = vadd.f32 %v11132, %v11196
    %v11261 = vadd.f32 %v11133, %v11197
    %v11262 = vadd.f32 %v11134, %v11198
    %v11263 = vadd.f32 %v11135, %v11199
    %v11264 = vadd.f32 %v11136, %v11200
    %v11265 = vadd.f32 %v11137, %v11201
    %v11266 = vadd.f32 %v11138, %v11202
    %v11267 = vadd.f32 %v11139, %v11203
    %v11268 = vadd.f32 %v11140, %v11204
    %v11269 = vadd.f32 %v11141, %v11205
    %v11270 = vadd.f32 %v11142, %v11206
    %v11271 = vadd.f32 %v11143, %v11207
    %v11272 = vadd.f32 %v11144, %v11208
    %v11273 = vadd.f32 %v11145, %v11209
    %v11274 = vadd.f32 %v11146, %v11210
    %v11275 = vadd.f32 %v11147, %v11211
    %v11276 = vadd.f32 %v11148, %v11212
    %v11277 = vadd.f32 %v11149, %v11213
    %v11278 = vadd.f32 %v11150, %v11214
    %v11279 = vadd.f32 %v11151, %v11215
    %v11280 = vadd.f32 %v11152, %v11216
    %v11281 = vadd.f32 %v11153, %v11217
    %v11282 = vadd.f32 %v11154, %v11218
    %v11283 = vadd.f32 %v11155, %v11219
    %v11284 = vadd.f32 %v11156, %v11220
    %v11285 = vadd.f32 %v11157, %v11221
    %v11286 = vadd.f32 %v11158, %v11222
    %v11287 = vadd.f32 %v11159, %v11223
    %v11288 = vadd.f32 %v11160, %v11224
    %v11289 = vadd.f32 %v11161, %v11225
    %v11290 = vmax.f32 %v11226, 0.0
    %v11291 = vmax.f32 %v11227, 0.0
    %v11292 = vmax.f32 %v11228, 0.0
    %v11293 = vmax.f32 %v11229, 0.0
    %v11294 = vmax.f32 %v11230, 0.0
    %v11295 = vmax.f32 %v11231, 0.0
    %v11296 = vmax.f32 %v11232, 0.0
    %v11297 = vmax.f32 %v11233, 0.0
    %v11298 = vmax.f32 %v11234, 0.0
    %v11299 = vmax.f32 %v11235, 0.0
    %v11300 = vmax.f32 %v11236, 0.0
    %v11301 = vmax.f32 %v11237, 0.0
    %v11302 = vmax.f32 %v11238, 0.0
    %v11303 = vmax.f32 %v11239, 0.0
    %v11304 = vmax.f32 %v11240, 0.0
    %v11305 = vmax.f32 %v11241, 0.0
    %v11306 = vmax.f32 %v11242, 0.0
    %v11307 = vmax.f32 %v11243, 0.0
    %v11308 = vmax.f32 %v11244, 0.0
    %v11309 = vmax.f32 %v11245, 0.0
    %v11310 = vmax.f32 %v11246, 0.0
    %v11311 = vmax.f32 %v11247, 0.0
    %v11312 = vmax.f32 %v11248, 0.0
    %v11313 = vmax.f32 %v11249, 0.0
    %v11314 = vmax.f32 %v11250, 0.0
    %v11315 = vmax.f32 %v11251, 0.0
    %v11316 = vmax.f32 %v11252, 0.0
    %v11317 = vmax.f32 %v11253, 0.0
    %v11318 = vmax.f32 %v11254, 0.0
    %v11319 = vmax.f32 %v11255, 0.0
    %v11320 = vmax.f32 %v11256, 0.0
    %v11321 = vmax.f32 %v11257, 0.0
    %v11322 = vmax.f32 %v11258, 0.0
    %v11323 = vmax.f32 %v11259, 0.0
    %v11324 = vmax.f32 %v11260, 0.0
    %v11325 = vmax.f32 %v11261, 0.0
    %v11326 = vmax.f32 %v11262, 0.0
    %v11327 = vmax.f32 %v11263, 0.0
    %v11328 = vmax.f32 %v11264, 0.0
    %v11329 = vmax.f32 %v11265, 0.0
    %v11330 = vmax.f32 %v11266, 0.0
    %v11331 = vmax.f32 %v11267, 0.0
    %v11332 = vmax.f32 %v11268, 0.0
    %v11333 = vmax.f32 %v11269, 0.0
    %v11334 = vmax.f32 %v11270, 0.0
    %v11335 = vmax.f32 %v11271, 0.0
    %v11336 = vmax.f32 %v11272, 0.0
    %v11337 = vmax.f32 %v11273, 0.0
    %v11338 = vmax.f32 %v11274, 0.0
    %v11339 = vmax.f32 %v11275, 0.0
    %v11340 = vmax.f32 %v11276, 0.0
    %v11341 = vmax.f32 %v11277, 0.0
    %v11342 = vmax.f32 %v11278, 0.0
    %v11343 = vmax.f32 %v11279, 0.0
    %v11344 = vmax.f32 %v11280, 0.0
    %v11345 = vmax.f32 %v11281, 0.0
    %v11346 = vmax.f32 %v11282, 0.0
    %v11347 = vmax.f32 %v11283, 0.0
    %v11348 = vmax.f32 %v11284, 0.0
    %v11349 = vmax.f32 %v11285, 0.0
    %v11350 = vmax.f32 %v11286, 0.0
    %v11351 = vmax.f32 %v11287, 0.0
    %v11352 = vmax.f32 %v11288, 0.0
    %v11353 = vmax.f32 %v11289, 0.0
    %11354 = vst [vmem:[#allocation3] sm:$0xff] %v11290
    %11355 = vst [vmem:[#allocation3 + $0x8] sm:$0xff] %v11291
    %11356 = vst [vmem:[#allocation3 + $0x10] sm:$0xff] %v11292
    %11357 = vst [vmem:[#allocation3 + $0x18] sm:$0xff] %v11293
    %11358 = vst [vmem:[#allocation3 + $0x20] sm:$0xff] %v11294
    %11359 = vst [vmem:[#allocation3 + $0x28] sm:$0xff] %v11295
    %11360 = vst [vmem:[#allocation3 + $0x30] sm:$0xff] %v11296
    %11361 = vst [vmem:[#allocation3 + $0x38] sm:$0xff] %v11297
    %11362 = vst [vmem:[#allocation3 + $0x40] sm:$0xff] %v11298
    %11363 = vst [vmem:[#allocation3 + $0x48] sm:$0xff] %v11299
    %11364 = vst [vmem:[#allocation3 + $0x50] sm:$0xff] %v11300
    %11365 = vst [vmem:[#allocation3 + $0x58] sm:$0xff] %v11301
    %11366 = vst [vmem:[#allocation3 + $0x60] sm:$0xff] %v11302
    %11367 = vst [vmem:[#allocation3 + $0x68] sm:$0xff] %v11303
    %11368 = vst [vmem:[#allocation3 + $0x70] sm:$0xff] %v11304
    %11369 = vst [vmem:[#allocation3 + $0x78] sm:$0xff] %v11305
    %11370 = vst [vmem:[#allocation3 + $0x80] sm:$0xff] %v11306
    %11371 = vst [vmem:[#allocation3 + $0x88] sm:$0xff] %v11307
    %11372 = vst [vmem:[#allocation3 + $0x90] sm:$0xff] %v11308
    %11373 = vst [vmem:[#allocation3 + $0x98] sm:$0xff] %v11309
    %11374 = vst [vmem:[#allocation3 + $0xa0] sm:$0xff] %v11310
    %11375 = vst [vmem:[#allocation3 + $0xa8] sm:$0xff] %v11311
    %11376 = vst [vmem:[#allocation3 + $0xb0] sm:$0xff] %v11312
    %11377 = vst [vmem:[#allocation3 + $0xb8] sm:$0xff] %v11313
    %11378 = vst [vmem:[#allocation3 + $0xc0] sm:$0xff] %v11314
    %11379 = vst [vmem:[#allocation3 + $0xc8] sm:$0xff] %v11315
    %11380 = vst [vmem:[#allocation3 + $0xd0] sm:$0xff] %v11316
    %11381 = vst [vmem:[#allocation3 + $0xd8] sm:$0xff] %v11317
    %11382 = vst [vmem:[#allocation3 + $0xe0] sm:$0xff] %v11318
    %11383 = vst [vmem:[#allocation3 + $0xe8] sm:$0xff] %v11319
    %11384 = vst [vmem:[#allocation3 + $0xf0] sm:$0xff] %v11320
    %11385 = vst [vmem:[#allocation3 + $0xf8] sm:$0xff] %v11321
    %11386 = vst [vmem:[#allocation3 + $0x100] sm:$0xff] %v11322
    %11387 = vst [vmem:[#allocation3 + $0x108] sm:$0xff] %v11323
    %11388 = vst [vmem:[#allocation3 + $0x110] sm:$0xff] %v11324
    %11389 = vst [vmem:[#allocation3 + $0x118] sm:$0xff] %v11325
    %11390 = vst [vmem:[#allocation3 + $0x120] sm:$0xff] %v11326
    %11391 = vst [vmem:[#allocation3 + $0x128] sm:$0xff] %v11327
    %11392 = vst [vmem:[#allocation3 + $0x130] sm:$0xff] %v11328
    %11393 = vst [vmem:[#allocation3 + $0x138] sm:$0xff] %v11329
    %11394 = vst [vmem:[#allocation3 + $0x140] sm:$0xff] %v11330
    %11395 = vst [vmem:[#allocation3 + $0x148] sm:$0xff] %v11331
    %11396 = vst [vmem:[#allocation3 + $0x150] sm:$0xff] %v11332
    %11397 = vst [vmem:[#allocation3 + $0x158] sm:$0xff] %v11333
    %11398 = vst [vmem:[#allocation3 + $0x160] sm:$0xff] %v11334
    %11399 = vst [vmem:[#allocation3 + $0x168] sm:$0xff] %v11335
    %11400 = vst [vmem:[#allocation3 + $0x170] sm:$0xff] %v11336
    %11401 = vst [vmem:[#allocation3 + $0x178] sm:$0xff] %v11337
    %11402 = vst [vmem:[#allocation3 + $0x180] sm:$0xff] %v11338
    %11403 = vst [vmem:[#allocation3 + $0x188] sm:$0xff] %v11339
    %11404 = vst [vmem:[#allocation3 + $0x190] sm:$0xff] %v11340
    %11405 = vst [vmem:[#allocation3 + $0x198] sm:$0xff] %v11341
    %11406 = vst [vmem:[#allocation3 + $0x1a0] sm:$0xff] %v11342
    %11407 = vst [vmem:[#allocation3 + $0x1a8] sm:$0xff] %v11343
    %11408 = vst [vmem:[#allocation3 + $0x1b0] sm:$0xff] %v11344
    %11409 = vst [vmem:[#allocation3 + $0x1b8] sm:$0xff] %v11345
    %11410 = vst [vmem:[#allocation3 + $0x1c0] sm:$0xff] %v11346
    %11411 = vst [vmem:[#allocation3 + $0x1c8] sm:$0xff] %v11347
    %11412 = vst [vmem:[#allocation3 + $0x1d0] sm:$0xff] %v11348
    %11413 = vst [vmem:[#allocation3 + $0x1d8] sm:$0xff] %v11349
    %11414 = vst [vmem:[#allocation3 + $0x1e0] sm:$0xff] %v11350
    %11415 = vst [vmem:[#allocation3 + $0x1e8] sm:$0xff] %v11351
    %11416 = vst [vmem:[#allocation3 + $0x1f0] sm:$0xff] %v11352
    %11417 = vst [vmem:[#allocation3 + $0x1f8] sm:$0xff] %v11353
    // Predicated region
    $region30: #{tpu_custom_call.1} parent=1 // pred_check
      _
    $region31: #{tpu_custom_call.1} parent=1 // pred_check_branch
      %11419 = sbr.rel (0) target = $region33
    $region32: #{tpu_custom_call.1} parent=1 // pred_region
      %11421 = vsyncadd [#allocation4], 0
      %s11422 = sshll.u32 [#allocation3], 4
      %s11423 = int_to_ptr.vmem [resolvable:$true] %s11422
      %s11424 = sshll.u32 %s7, 4
      %s11425 = int_to_ptr.hbm [resolvable:$true] %s11424
      %11430 = dma.vmem_to_hbm [thread:$0]  %s11423, 8192, %s11425, [#allocation4], 128, 128, 8
    $region33: #{tpu_custom_call.1} parent=1 // pred_fallthru
      _
    // Predicated region
    $region34: #{tpu_custom_call.1} parent=1 // pred_check
      _
    $region35: #{tpu_custom_call.1} parent=1 // pred_check_branch
      %11432 = sbr.rel (0) target = $region37
    $region36: #{tpu_custom_call.1} parent=1 // pred_region
      %11434 = dma.done [#allocation4], 8192
    $region37: #{tpu_custom_call.1} parent=1 // pred_fallthru
      _
    %11435 = vsyncpa [#allocation4], 1

</llo_original>
